<compile_context>
chip_gen: v5e
topology: v5e:2x2
jax: 0.10.0
libtpu: 0.0.40
codegen_flags: <defaults>
</compile_context>

<pallas_src>
import numpy as np
import jax
import jax.numpy as jnp
from jax import lax
from jax.experimental import pallas as pl
from jax.experimental.pallas import tpu as pltpu


# ----------------------------------------------------------------------------
# hardware-aware configuration helpers
# ----------------------------------------------------------------------------
def _tpu_vmem_capacity():
    try:
        return int(pltpu.get_tpu_info().vmem_capacity_bytes)
    except Exception:
        return 64 * 1024 * 1024          # conservative (v7x per-TC VMEM)


def _multi_tensorcore():
    """Best-effort: does one chip expose >1 schedulable TensorCore?"""
    try:
        kind = jax.devices()[0].device_kind.lower()
        return ("v7" in kind) or ("v4" in kind) or ("v5p" in kind)
    except Exception:
        return False


def _estimate_vmem(T, Bb, H, in_widths, kpad):
    """Rough per-grid-step VMEM footprint (bytes) of one BiLSTM layer kernel."""
    TB = T * Bb
    gi = 2 * TB * 4 * H * 2                               # two bf16 gate scratches
    xin = 2 * sum(TB * w * 2 for w in in_widths)          # double-buffered bf16 in
    if kpad:                                              # fused hidden2tag layer
        out = 2 * TB * kpad * 4                           # double-buffered f32 out
        ysc = 2 * TB * H * 2                              # yf / yb scratch
    else:
        out = 2 * 2 * TB * H * 2                          # two double-buffered outs
        ysc = 0
    weights = 2 * 2 * (sum(w * 4 * H for w in in_widths)  # wif+wib (dbuf, bf16)
                       + 2 * H * 4 * H                    # whf+whb
                       + (2 * H * kpad if kpad else 0))   # hidden2tag
    lens = 2 * Bb * 128 * 4
    return gi + xin + out + ysc + weights + lens + (1 << 20)


def _select_b_block(Bp, T, H, layer_cfgs, vmem_cap):
    """Largest batch block that divides Bp and fits the VMEM budget; keep >=2
    blocks on multi-TensorCore chips so dimension_semantics='parallel' helps."""
    budget = int(vmem_cap * 0.6)
    chosen = 8
    for cand in (256, 128, 64, 32, 16, 8):
        if Bp % cand:
            continue
        need = max(_estimate_vmem(T, cand, H, widths, kp) for widths, kp in layer_cfgs)
        if need <= budget or cand == 8:
            chosen = cand
            break
    if _multi_tensorcore():
        while Bp // chosen < 2 and chosen > 8 and Bp % (chosen // 2) == 0:
            chosen //= 2
    return chosen


def _pick_unroll(T, Bb, H):
    """Spill-aware unroll: four (Bb,H) f32 carries plus in-flight gates must stay
    well inside the 64 x 4KiB vreg file."""
    if T <= 16:
        return True
    live = 4 * Bb * H * 4
    if live <= 32 * 1024:
        return 8
    if live <= 96 * 1024:
        return 4
    return 2


def _mosaic_params(vmem_limit_bytes):
    return pltpu.CompilerParams(
        dimension_semantics=("parallel",),      # batch blocks are independent
        vmem_limit_bytes=int(vmem_limit_bytes),
    )


# ----------------------------------------------------------------------------
# BiLSTM layer kernel (last layer optionally fused with hidden2tag)
# ----------------------------------------------------------------------------
def _make_bilstm_kernel(num_inputs, fused, T, Bb, H):
    def kernel(*refs):
        p = 0
        x_refs = refs[p:p + num_inputs]; p += num_inputs        # [(T*Bb, In_i)] bf16
        len_ref = refs[p]; p += 1                                # [Bb, 1] int32
        wif_refs = refs[p:p + num_inputs]; p += num_inputs       # [(In_i, 4H)] bf16
        wib_refs = refs[p:p + num_inputs]; p += num_inputs
        bf_ref, bb_ref, whf_ref, whb_ref = refs[p:p + 4]; p += 4  # [1,4H]x2, [H,4H]x2
        if fused:
            wtf_ref, wtb_ref, bt_ref = refs[p:p + 3]; p += 3      # [H,Kpad]x2, [1,Kpad]
            em_ref = refs[p]; p += 1                              # [T*Bb, Kpad] f32
            gif_s, gib_s, yf_dst, yb_dst = refs[p:p + 4]          # scratch
        else:
            yf_dst, yb_dst = refs[p:p + 2]; p += 2                # [T*Bb, H] bf16 out
            gif_s, gib_s = refs[p:p + 2]                          # scratch

        # ---- (1) input projection: one large-M matmul per direction ---------
        # M = T*Bb rows keeps the MXU full (vs M=Bb per-timestep); stays in-kernel
        # so the [T*Bb, 4H] gate pre-activations never round-trip through HBM.
        accf = bf_ref[...]                                        # [1, 4H] f32
        accb = bb_ref[...]
        for x_ref, wf_ref, wb_ref in zip(x_refs, wif_refs, wib_refs):
            x = x_ref[...]                                        # [T*Bb, In] bf16
            accf = accf + jnp.dot(x, wf_ref[...], preferred_element_type=jnp.float32)
            accb = accb + jnp.dot(x, wb_ref[...], preferred_element_type=jnp.float32)
        gif_s[...] = accf.astype(gif_s.dtype)                     # bf16 storage
        gib_s[...] = accb.astype(gib_s.dtype)

        lens = len_ref[...]                                       # [Bb, 1] int32
        whf = whf_ref[...]                                        # [H, 4H] bf16
        whb = whb_ref[...]

        def cell(g_in, h, c, whh):
            gates = g_in + jnp.dot(h.astype(whh.dtype), whh,
                                   preferred_element_type=jnp.float32)
            sig = jax.nn.sigmoid(gates[:, 0:3 * H])               # (i, f, o) fused
            i_g = sig[:, 0:H]
            f_g = sig[:, H:2 * H]
            o_g = sig[:, 2 * H:3 * H]
            g_g = jnp.tanh(gates[:, 3 * H:4 * H])
            c_n = f_g * c + i_g * g_g
            h_n = o_g * jnp.tanh(c_n)
            return h_n, c_n

        zeros = jnp.zeros((Bb, H), jnp.float32)

        # ---- (2) merged fwd/bwd recurrence: two independent dependency chains
        #          per iteration; only h @ W_hh is on the serial path. ---------
        def body(it, carry):
            hf, cf, hb, cb = carry
            tb = T - 1 - it
            rf = pl.multiple_of(it * Bb, Bb)
            rb = pl.multiple_of(tb * Bb, Bb)

            mf = lens > it                                        # [Bb, 1] bool
            gf = gif_s[pl.ds(rf, Bb), :].astype(jnp.float32)
            hf_n, cf_n = cell(gf, hf, cf, whf)
            yf_dst[pl.ds(rf, Bb), :] = jnp.where(mf, hf_n, 0.0).astype(yf_dst.dtype)
            hf = jnp.where(mf, hf_n, hf)
            cf = jnp.where(mf, cf_n, cf)

            mb = lens > tb
            gb = gib_s[pl.ds(rb, Bb), :].astype(jnp.float32)
            hb_n, cb_n = cell(gb, hb, cb, whb)
            yb_dst[pl.ds(rb, Bb), :] = jnp.where(mb, hb_n, 0.0).astype(yb_dst.dtype)
            hb = jnp.where(mb, hb_n, hb)
            cb = jnp.where(mb, cb_n, cb)
            return hf, cf, hb, cb

        lax.fori_loop(0, T, body, (zeros, zeros, zeros, zeros),
                      unroll=_pick_unroll(T, Bb, H))

        # ---- (3) hidden2tag fused epilogue: one matmul per direction and a
        #          single long unmasked lane-dense (Kpad=128k) store. ----------
        if fused:
            em = (jnp.dot(yf_dst[...], wtf_ref[...], preferred_element_type=jnp.float32)
                  + jnp.dot(yb_dst[...], wtb_ref[...], preferred_element_type=jnp.float32)
                  + bt_ref[...])
            em_ref[...] = em

    return kernel


def _bilstm_layer(xs, lens_col, layer, *, T, Bb, vmem_limit, tag=None):
    """One BiLSTM layer over block-layout inputs.

    xs: tuple of [nb*T*Bb, In_i] bf16 arrays in (block, t, local-batch) row order.
    lens_col: [nb*Bb, 1] int32 sequence lengths.
    Returns (yf, yb) blocked bf16 arrays, or blocked padded emissions (f32) when
    tag=(wtag_f, wtag_b, btag) is given (hidden2tag fused into the epilogue)."""
    Bp = lens_col.shape[0]
    nb = Bp // Bb
    H = layer['whf'].shape[0]
    TB = T * Bb
    fused = tag is not None

    args, in_specs = [], []
    for x in xs:
        args.append(x)
        in_specs.append(pl.BlockSpec((TB, x.shape[-1]), lambda b: (b, 0)))
    args.append(lens_col)
    in_specs.append(pl.BlockSpec((Bb, 1), lambda b: (b, 0)))
    for w in (*layer['wif'], *layer['wib'], layer['bf'], layer['bb'],
              layer['whf'], layer['whb']):
        args.append(w)
        in_specs.append(pl.BlockSpec(w.shape, lambda b: (0, 0)))

    scratch = [pltpu.VMEM((TB, 4 * H), jnp.bfloat16),
               pltpu.VMEM((TB, 4 * H), jnp.bfloat16)]
    if fused:
        wtf, wtb, bt = tag
        kpad = wtf.shape[1]
        for w in (wtf, wtb, bt):
            args.append(w)
            in_specs.append(pl.BlockSpec(w.shape, lambda b: (0, 0)))
        out_shape = jax.ShapeDtypeStruct((nb * TB, kpad), jnp.float32)
        out_specs = pl.BlockSpec((TB, kpad), lambda b: (b, 0))
        scratch += [pltpu.VMEM((TB, H), jnp.bfloat16),
                    pltpu.VMEM((TB, H), jnp.bfloat16)]
    else:
        out_shape = (jax.ShapeDtypeStruct((nb * TB, H), jnp.bfloat16),) * 2
        out_specs = (pl.BlockSpec((TB, H), lambda b: (b, 0)),) * 2

    kernel = _make_bilstm_kernel(len(xs), fused, T, Bb, H)
    return pl.pallas_call(
        kernel,
        out_shape=out_shape,
        grid=(nb,),
        in_specs=in_specs,
        out_specs=out_specs,
        scratch_shapes=scratch,
        compiler_params=_mosaic_params(vmem_limit),
    )(*args)


# ----------------------------------------------------------------------------
# CRF (plain JAX; tag space is tiny -- K=5)
# ----------------------------------------------------------------------------
# TODO(synk): CRF recursion over num_tags=5 and Viterbi backtracking have no
# clean Pallas mapping at this size; kept as (fused) lax.scan under jit.
def crf_nll(emissions, labels, mask, start, end, trans):
    """Fused scan over gold score and log-partition.  emissions [T,B,K] f32,
    labels [T,B] int, mask [T,B] bool.  Assumes mask[0,:] is True (torchcrf)."""
    maskf = mask.astype(emissions.dtype)
    bar = jnp.arange(emissions.shape[1])
    alpha = start[None, :] + emissions[0]                          # [B, K]
    score = start[labels[0]] + emissions[0, bar, labels[0]]        # [B]

    def step(carry, inp):
        alpha, score = carry
        em_t, lab_t, lab_prev, m_t = inp
        nxt = jax.nn.logsumexp(
            alpha[:, :, None] + trans[None, :, :] + em_t[:, None, :], axis=1)
        alpha = jnp.where(m_t[:, None] > 0, nxt, alpha)
        score = score + (trans[lab_prev, lab_t] + em_t[bar, lab_t]) * m_t
        return (alpha, score), None

    (alpha, score), _ = lax.scan(
        step, (alpha, score),
        (emissions[1:], labels[1:], labels[:-1], maskf[1:]))

    seq_ends = jnp.maximum(mask.astype(jnp.int32).sum(0) - 1, 0)
    last_tags = labels[seq_ends, bar]
    score = score + end[last_tags]
    log_z = jax.nn.logsumexp(alpha + end[None, :], axis=1)
    return -jnp.sum(score - log_z)                                 # reduction='sum'


def crf_decode(emissions, start, end, trans):
    # Viterbi, no mask (matches `self.crf.decode(out)` in the reference).
    T, B, K = emissions.shape
    score = start[None, :] + emissions[0]                          # [B, K]

    def step(score, em_t):
        broadcast = score[:, :, None] + trans[None, :, :] + em_t[:, None, :]
        return broadcast.max(axis=1), broadcast.argmax(axis=1)

    score, history = lax.scan(step, score, emissions[1:])          # [T-1, B, K]
    score = score + end[None, :]
    last_tag = jnp.argmax(score, axis=-1)                          # [B]
    bar = jnp.arange(B)

    def back(tag_next, hist_t):
        tag_prev = hist_t[bar, tag_next]
        return tag_prev, tag_prev

    _, prev_tags = lax.scan(back, last_tag, history, reverse=True)
    tags = jnp.concatenate([prev_tags, last_tag[None, :]], axis=0)
    return tags.T                                                  # [B, T]


# ----------------------------------------------------------------------------
# Model forward (glue)
# ----------------------------------------------------------------------------
def lstm_crf_forward(params, input_ids, labels=None, mask=None):
    B, T = input_ids.shape
    E = params['embedding'].shape[1]
    H = params['lstm'][0]['whf'].shape[0]
    K = params['crf_start'].shape[0]
    kpad = params['btag'].shape[1]
    layers = params['lstm']

    # Pad batch to a multiple of 16 so bf16 sublane tiles stay exact everywhere.
    Bp = -(-B // 16) * 16
    if Bp != B:
        pad = ((0, Bp - B), (0, 0))
        input_ids_p = jnp.pad(input_ids, pad)
        mask_p = jnp.pad(mask, pad)
    else:
        input_ids_p, mask_p = input_ids, mask

    # Generation-aware blocking / VMEM budget.
    vmem_cap = _tpu_vmem_capacity()
    vmem_limit = max(32 << 20, min(int(vmem_cap * 0.75), 100 << 20))
    layer_cfgs = [((E,), kpad if len(layers) == 1 else 0)]
    if len(layers) > 1:
        layer_cfgs.append(((H, H), kpad))
    Bb = _select_b_block(Bp, T, H, layer_cfgs, vmem_cap)
    nb = Bp // Bb

    emb = jnp.take(params['embedding'], input_ids_p, axis=0)       # [Bp, T, E]
    # nn.Dropout: identity (eval). torch.sort / pack_padded_sequence /
    # pad_packed_sequence / desort: semantic no-op under the length-masked
    # recurrence (prefix masks).
    lens_col = mask_p.sum(-1).astype(jnp.int32)[:, None]           # [Bp, 1]

    # Block layout: [Bp,T,E] -> [nb, T, Bb, E] -> [nb*T*Bb, E] (layout plumbing
    # in XLA so kernel blocks are contiguous 2-D tiles, no in-kernel reshapes).
    x = jnp.transpose(emb.astype(jnp.bfloat16).reshape(nb, Bb, T, E),
                      (0, 2, 1, 3)).reshape(nb * T * Bb, E)

    tag = (params['wtag_f'], params['wtag_b'], params['btag'])
    if len(layers) == 1:
        em_blk = _bilstm_layer((x,), lens_col, layers[0], T=T, Bb=Bb,
                               vmem_limit=vmem_limit, tag=tag)
    else:
        yf, yb = _bilstm_layer((x,), lens_col, layers[0], T=T, Bb=Bb,
                               vmem_limit=vmem_limit)
        for layer in layers[1:-1]:
            yf, yb = _bilstm_layer((yf, yb), lens_col, layer, T=T, Bb=Bb,
                                   vmem_limit=vmem_limit)
        em_blk = _bilstm_layer((yf, yb), lens_col, layers[-1], T=T, Bb=Bb,
                               vmem_limit=vmem_limit, tag=tag)

    # Un-block the emissions and drop padding: [nb*T*Bb, Kpad] -> [T, B, K].
    em = jnp.transpose(em_blk.reshape(nb, T, Bb, kpad),
                       (1, 0, 2, 3)).reshape(T, Bp, kpad)
    emissions = em[:, :B, :K]                                      # f32

    preds = crf_decode(emissions, params['crf_start'],
                       params['crf_end'], params['crf_trans'])     # [B, T]
    results = {'preds': preds}

    if labels is not None:
        results['loss'] = crf_nll(
            emissions, jnp.transpose(labels, (1, 0)),
            jnp.transpose(mask, (1, 0)).astype(bool),
            params['crf_start'], params['crf_end'], params['crf_trans'])
    return results


# ----------------------------------------------------------------------------
# Deterministic parameter init (shapes per nn.Module __init__)
# ----------------------------------------------------------------------------
def init_params(key, vocab_size, emb_size, hidden_size, num_layers, num_tags):
    H = hidden_size
    kpad = 128 * int(np.ceil(num_tags / 128))
    keys = iter(jax.random.split(key, 8 * num_layers + 8))

    def uni(k, shape, bound):
        return jax.random.uniform(k, shape, jnp.float32, -bound, bound)

    def reorder(w):
        # last-axis gate blocks [i|f|g|o] (PyTorch) -> [i|f|o|g] so the three
        # sigmoid gates are contiguous inside the kernel's cell().
        return jnp.concatenate([w[..., :2 * H], w[..., 3 * H:4 * H],
                                w[..., 2 * H:3 * H]], axis=-1)

    params = {'embedding': jax.random.normal(next(keys), (vocab_size, emb_size),
                                             jnp.float32)}

    bound = 1.0 / np.sqrt(H)
    layers = []
    in_size = emb_size
    for li in range(num_layers):
        layer = {}
        for wk, bk, hk in (('wif', 'bf', 'whf'), ('wib', 'bb', 'whb')):
            wih = uni(next(keys), (4 * H, in_size), bound)
            whh = uni(next(keys), (4 * H, H), bound)
            bih = uni(next(keys), (4 * H,), bound)
            bhh = uni(next(keys), (4 * H,), bound)
            wi = reorder(jnp.transpose(wih)).astype(jnp.bfloat16)      # [in, 4H]
            wh = reorder(jnp.transpose(whh)).astype(jnp.bfloat16)      # [H, 4H]
            b = reorder(bih + bhh)[None, :].astype(jnp.float32)        # [1, 4H]
            if li == 0:
                layer[wk] = (wi,)
            else:
                # input of layer l>0 is [fwd, bwd]; split weight rows so the
                # kernel consumes yf / yb separately (no HBM concat pass).
                layer[wk] = (wi[:H], wi[H:])
            layer[bk] = b
            layer[hk] = wh
        layers.append(layer)
        in_size = 2 * H
    params['lstm'] = layers

    lb = 1.0 / np.sqrt(2 * H)
    w = uni(next(keys), (num_tags, 2 * H), lb)                     # [K, 2H]
    b = uni(next(keys), (num_tags,), lb)
    w_t = jnp.zeros((2 * H, kpad), jnp.float32).at[:, :num_tags].set(jnp.transpose(w))
    params['wtag_f'] = w_t[:H].astype(jnp.bfloat16)                # [H, Kpad]
    params['wtag_b'] = w_t[H:].astype(jnp.bfloat16)                # [H, Kpad]
    params['btag'] = jnp.zeros((1, kpad), jnp.float32).at[0, :num_tags].set(b)

    params['crf_start'] = uni(next(keys), (num_tags,), 0.1)
    params['crf_end'] = uni(next(keys), (num_tags,), 0.1)
    params['crf_trans'] = uni(next(keys), (num_tags, num_tags), 0.1)
    return params


# ----------------------------------------------------------------------------
if __name__ == "__main__":
    vocab_size, emb_size, hidden_size = 50, 16, 32
    num_lstm_layers, num_tags = 2, 5        # 2 layers exercises both kernel paths
    B, T = 2, 8

    key = jax.random.PRNGKey(0)
    pkey, ikey, lkey = jax.random.split(key, 3)

    params = init_params(pkey, vocab_size, emb_size, hidden_size,
                         num_lstm_layers, num_tags)

    input_ids = jax.random.randint(ikey, (B, T), 0, vocab_size, dtype=jnp.int32)
    lengths = jnp.array([T, 5], dtype=jnp.int32)
    mask = (jnp.arange(T)[None, :] < lengths[:, None]).astype(jnp.int32)  # [B, T]
    labels = jax.random.randint(lkey, (B, T), 0, num_tags, dtype=jnp.int32)

    fwd = jax.jit(lstm_crf_forward)
    out = fwd(params, input_ids, labels=labels, mask=mask)
    out = jax.block_until_ready(out)

    assert out['preds'].shape == (B, T)
    assert out['loss'].shape == ()
    assert bool(jnp.isfinite(out['loss']))
    print("KERNEL_OK")
</pallas_src>

<mosaic_0001>
module attributes {stable_mosaic.version = 11 : i64} {
  func.func @kernel(%arg0: i32, %arg1: memref<128x16xbf16, #tpu.memory_space<vmem>>, %arg2: memref<16x1xi32, #tpu.memory_space<vmem>>, %arg3: memref<16x128xbf16, #tpu.memory_space<vmem>>, %arg4: memref<16x128xbf16, #tpu.memory_space<vmem>>, %arg5: memref<1x128xf32, #tpu.memory_space<vmem>>, %arg6: memref<1x128xf32, #tpu.memory_space<vmem>>, %arg7: memref<32x128xbf16, #tpu.memory_space<vmem>>, %arg8: memref<32x128xbf16, #tpu.memory_space<vmem>>, %arg9: memref<128x32xbf16, #tpu.memory_space<vmem>>, %arg10: memref<128x32xbf16, #tpu.memory_space<vmem>>, %arg11: memref<128x128xbf16, #tpu.memory_space<vmem>>, %arg12: memref<128x128xbf16, #tpu.memory_space<vmem>>) attributes {dimension_semantics = [#tpu.dimension_semantics<parallel>], iteration_bounds = array<i64: 1>, scalar_prefetch = 0 : i64, scratch_operands = 2 : i64, tpu.core_type = #tpu.core_type<tc>, window_params = [{transform_indices = @transform_0, window_bounds = array<i64: 128, 16>}, {transform_indices = @transform_1, window_bounds = array<i64: 16, 1>}, {pipeline_mode = #tpu.pipeline_mode<synchronous>, transform_indices = @transform_2, window_bounds = array<i64: 16, 128>}, {pipeline_mode = #tpu.pipeline_mode<synchronous>, transform_indices = @transform_3, window_bounds = array<i64: 16, 128>}, {pipeline_mode = #tpu.pipeline_mode<synchronous>, transform_indices = @transform_4, window_bounds = array<i64: 1, 128>}, {pipeline_mode = #tpu.pipeline_mode<synchronous>, transform_indices = @transform_5, window_bounds = array<i64: 1, 128>}, {pipeline_mode = #tpu.pipeline_mode<synchronous>, transform_indices = @transform_6, window_bounds = array<i64: 32, 128>}, {pipeline_mode = #tpu.pipeline_mode<synchronous>, transform_indices = @transform_7, window_bounds = array<i64: 32, 128>}, {transform_indices = @transform_8, window_bounds = array<i64: 128, 32>}, {transform_indices = @transform_9, window_bounds = array<i64: 128, 32>}]} {
    %c0 = arith.constant 0 : index
    %c0_0 = arith.constant 0 : index
    %0 = vector.load %arg5[%c0, %c0_0] : memref<1x128xf32, #tpu.memory_space<vmem>>, vector<1x128xf32>
    %c0_1 = arith.constant 0 : index
    %c0_2 = arith.constant 0 : index
    %1 = vector.load %arg6[%c0_1, %c0_2] : memref<1x128xf32, #tpu.memory_space<vmem>>, vector<1x128xf32>
    %c0_3 = arith.constant 0 : index
    %c0_4 = arith.constant 0 : index
    %2 = vector.load %arg1[%c0_3, %c0_4] : memref<128x16xbf16, #tpu.memory_space<vmem>>, vector<128x16xbf16>
    %c0_5 = arith.constant 0 : index
    %c0_6 = arith.constant 0 : index
    %3 = vector.load %arg3[%c0_5, %c0_6] : memref<16x128xbf16, #tpu.memory_space<vmem>>, vector<16x128xbf16>
    %cst = arith.constant dense<0.000000e+00> : vector<128x128xf32>
    %4 = tpu.matmul %2, %3, %cst {dimension_numbers = #tpu.dot_dimension_numbers<[1], [0], [0], [1], [0, 0, 1, 1], [], []>} : vector<128x16xbf16>, vector<16x128xbf16>, vector<128x128xf32> -> vector<128x128xf32>
    %5 = vector.broadcast %0 : vector<1x128xf32> to vector<128x128xf32>
    %6 = arith.addf %5, %4 : vector<128x128xf32>
    %c0_7 = arith.constant 0 : index
    %c0_8 = arith.constant 0 : index
    %7 = vector.load %arg4[%c0_7, %c0_8] : memref<16x128xbf16, #tpu.memory_space<vmem>>, vector<16x128xbf16>
    %cst_9 = arith.constant dense<0.000000e+00> : vector<128x128xf32>
    %8 = tpu.matmul %2, %7, %cst_9 {dimension_numbers = #tpu.dot_dimension_numbers<[1], [0], [0], [1], [0, 0, 1, 1], [], []>} : vector<128x16xbf16>, vector<16x128xbf16>, vector<128x128xf32> -> vector<128x128xf32>
    %9 = vector.broadcast %1 : vector<1x128xf32> to vector<128x128xf32>
    %10 = arith.addf %9, %8 : vector<128x128xf32>
    %11 = arith.truncf %6 : vector<128x128xf32> to vector<128x128xbf16>
    %c0_10 = arith.constant 0 : index
    %c0_11 = arith.constant 0 : index
    %12 = vector.load %arg11[%c0_10, %c0_11] : memref<128x128xbf16, #tpu.memory_space<vmem>>, vector<128x128xbf16>
    tpu.vector_store %arg11[%c0_10, %c0_11], %11 {strides = array<i32>} : memref<128x128xbf16, #tpu.memory_space<vmem>>, vector<128x128xbf16>,
    %13 = arith.truncf %10 : vector<128x128xf32> to vector<128x128xbf16>
    %c0_12 = arith.constant 0 : index
    %c0_13 = arith.constant 0 : index
    %14 = vector.load %arg12[%c0_12, %c0_13] : memref<128x128xbf16, #tpu.memory_space<vmem>>, vector<128x128xbf16>
    tpu.vector_store %arg12[%c0_12, %c0_13], %13 {strides = array<i32>} : memref<128x128xbf16, #tpu.memory_space<vmem>>, vector<128x128xbf16>,
    %c0_14 = arith.constant 0 : index
    %c0_15 = arith.constant 0 : index
    %15 = vector.load %arg2[%c0_14, %c0_15] : memref<16x1xi32, #tpu.memory_space<vmem>>, vector<16x1xi32>
    %c0_16 = arith.constant 0 : index
    %c0_17 = arith.constant 0 : index
    %16 = vector.load %arg7[%c0_16, %c0_17] : memref<32x128xbf16, #tpu.memory_space<vmem>>, vector<32x128xbf16>
    %c0_18 = arith.constant 0 : index
    %c0_19 = arith.constant 0 : index
    %17 = vector.load %arg8[%c0_18, %c0_19] : memref<32x128xbf16, #tpu.memory_space<vmem>>, vector<32x128xbf16>
    %cst_20 = arith.constant 0.000000e+00 : f32
    %18 = vector.broadcast %cst_20 : f32 to vector<16x32xf32>
    %c0_i32 = arith.constant 0 : i32
    %c7_i32 = arith.constant 7 : i32
    %19 = arith.subi %c7_i32, %c0_i32 : i32
    %c16_i32 = arith.constant 16 : i32
    %20 = arith.muli %c0_i32, %c16_i32 : i32
    %21 = tpu.assume_multiple %20, 16 : i32
    %c16_i32_21 = arith.constant 16 : i32
    %22 = arith.muli %19, %c16_i32_21 : i32
    %23 = tpu.assume_multiple %22, 16 : i32
    %24 = vector.broadcast %c0_i32 : i32 to vector<16x1xi32>
    %25 = arith.cmpi sgt, %15, %24 : vector<16x1xi32>
    %26 = arith.index_cast %21 : i32 to index
    %c0_22 = arith.constant 0 : index
    %27 = vector.load %arg11[%26, %c0_22] : memref<128x128xbf16, #tpu.memory_space<vmem>>, vector<16x128xbf16>
    %28 = arith.extf %27 : vector<16x128xbf16> to vector<16x128xf32>
    %29 = arith.truncf %18 : vector<16x32xf32> to vector<16x32xbf16>
    %cst_23 = arith.constant dense<0.000000e+00> : vector<16x128xf32>
    %30 = tpu.matmul %29, %16, %cst_23 {dimension_numbers = #tpu.dot_dimension_numbers<[1], [0], [0], [1], [0, 0, 1, 1], [], []>} : vector<16x32xbf16>, vector<32x128xbf16>, vector<16x128xf32> -> vector<16x128xf32>
    %31 = arith.addf %28, %30 : vector<16x128xf32>
    %32 = vector.extract_strided_slice %31 {offsets = [0, 0], sizes = [16, 96], strides = [1, 1]} : vector<16x128xf32> to vector<16x96xf32>
    %33 = arith.negf %32 : vector<16x96xf32>
    %34 = math.exp %33 : vector<16x96xf32>
    %cst_24 = arith.constant 1.000000e+00 : f32
    %35 = vector.broadcast %cst_24 : f32 to vector<16x96xf32>
    %36 = arith.addf %35, %34 : vector<16x96xf32>
    %37 = arith.divf %35, %36 : vector<16x96xf32>
    %38 = vector.extract_strided_slice %37 {offsets = [0, 0], sizes = [16, 32], strides = [1, 1]} : vector<16x96xf32> to vector<16x32xf32>
    %39 = vector.extract_strided_slice %37 {offsets = [0, 32], sizes = [16, 32], strides = [1, 1]} : vector<16x96xf32> to vector<16x32xf32>
    %40 = vector.extract_strided_slice %37 {offsets = [0, 64], sizes = [16, 32], strides = [1, 1]} : vector<16x96xf32> to vector<16x32xf32>
    %41 = vector.extract_strided_slice %31 {offsets = [0, 96], sizes = [16, 32], strides = [1, 1]} : vector<16x128xf32> to vector<16x32xf32>
    %42 = math.tanh %41 : vector<16x32xf32>
    %43 = arith.mulf %39, %18 : vector<16x32xf32>
    %44 = arith.mulf %38, %42 : vector<16x32xf32>
    %45 = arith.addf %43, %44 : vector<16x32xf32>
    %46 = math.tanh %45 : vector<16x32xf32>
    %47 = arith.mulf %40, %46 : vector<16x32xf32>
    %cst_25 = arith.constant 0.000000e+00 : f32
    %48 = vector.shape_cast %25 : vector<16x1xi1> to vector<16x1xi1>
    %49 = vector.broadcast %48 : vector<16x1xi1> to vector<16x32xi1>
    %50 = vector.broadcast %cst_25 : f32 to vector<16x32xf32>
    %51 = arith.select %49, %47, %50 : vector<16x32xi1>, vector<16x32xf32>
    %52 = arith.truncf %51 : vector<16x32xf32> to vector<16x32xbf16>
    %53 = arith.index_cast %21 : i32 to index
    %c0_26 = arith.constant 0 : index
    %54 = vector.load %arg9[%53, %c0_26] : memref<128x32xbf16, #tpu.memory_space<vmem>>, vector<16x32xbf16>
    tpu.vector_store %arg9[%53, %c0_26], %52 {strides = array<i32>} : memref<128x32xbf16, #tpu.memory_space<vmem>>, vector<16x32xbf16>,
    %55 = vector.shape_cast %25 : vector<16x1xi1> to vector<16x1xi1>
    %56 = vector.broadcast %55 : vector<16x1xi1> to vector<16x32xi1>
    %57 = arith.select %56, %47, %18 : vector<16x32xi1>, vector<16x32xf32>
    %58 = vector.shape_cast %25 : vector<16x1xi1> to vector<16x1xi1>
    %59 = vector.broadcast %58 : vector<16x1xi1> to vector<16x32xi1>
    %60 = arith.select %59, %45, %18 : vector<16x32xi1>, vector<16x32xf32>
    %61 = vector.broadcast %19 : i32 to vector<16x1xi32>
    %62 = arith.cmpi sgt, %15, %61 : vector<16x1xi32>
    %63 = arith.index_cast %23 : i32 to index
    %c0_27 = arith.constant 0 : index
    %64 = vector.load %arg12[%63, %c0_27] : memref<128x128xbf16, #tpu.memory_space<vmem>>, vector<16x128xbf16>
    %65 = arith.extf %64 : vector<16x128xbf16> to vector<16x128xf32>
    %66 = arith.truncf %18 : vector<16x32xf32> to vector<16x32xbf16>
    %cst_28 = arith.constant dense<0.000000e+00> : vector<16x128xf32>
    %67 = tpu.matmul %66, %17, %cst_28 {dimension_numbers = #tpu.dot_dimension_numbers<[1], [0], [0], [1], [0, 0, 1, 1], [], []>} : vector<16x32xbf16>, vector<32x128xbf16>, vector<16x128xf32> -> vector<16x128xf32>
    %68 = arith.addf %65, %67 : vector<16x128xf32>
    %69 = vector.extract_strided_slice %68 {offsets = [0, 0], sizes = [16, 96], strides = [1, 1]} : vector<16x128xf32> to vector<16x96xf32>
    %70 = arith.negf %69 : vector<16x96xf32>
    %71 = math.exp %70 : vector<16x96xf32>
    %cst_29 = arith.constant 1.000000e+00 : f32
    %72 = vector.broadcast %cst_29 : f32 to vector<16x96xf32>
    %73 = arith.addf %72, %71 : vector<16x96xf32>
    %74 = arith.divf %72, %73 : vector<16x96xf32>
    %75 = vector.extract_strided_slice %74 {offsets = [0, 0], sizes = [16, 32], strides = [1, 1]} : vector<16x96xf32> to vector<16x32xf32>
    %76 = vector.extract_strided_slice %74 {offsets = [0, 32], sizes = [16, 32], strides = [1, 1]} : vector<16x96xf32> to vector<16x32xf32>
    %77 = vector.extract_strided_slice %74 {offsets = [0, 64], sizes = [16, 32], strides = [1, 1]} : vector<16x96xf32> to vector<16x32xf32>
    %78 = vector.extract_strided_slice %68 {offsets = [0, 96], sizes = [16, 32], strides = [1, 1]} : vector<16x128xf32> to vector<16x32xf32>
    %79 = math.tanh %78 : vector<16x32xf32>
    %80 = arith.mulf %76, %18 : vector<16x32xf32>
    %81 = arith.mulf %75, %79 : vector<16x32xf32>
    %82 = arith.addf %80, %81 : vector<16x32xf32>
    %83 = math.tanh %82 : vector<16x32xf32>
    %84 = arith.mulf %77, %83 : vector<16x32xf32>
    %cst_30 = arith.constant 0.000000e+00 : f32
    %85 = vector.shape_cast %62 : vector<16x1xi1> to vector<16x1xi1>
    %86 = vector.broadcast %85 : vector<16x1xi1> to vector<16x32xi1>
    %87 = vector.broadcast %cst_30 : f32 to vector<16x32xf32>
    %88 = arith.select %86, %84, %87 : vector<16x32xi1>, vector<16x32xf32>
    %89 = arith.truncf %88 : vector<16x32xf32> to vector<16x32xbf16>
    %90 = arith.index_cast %23 : i32 to index
    %c0_31 = arith.constant 0 : index
    %91 = vector.load %arg10[%90, %c0_31] : memref<128x32xbf16, #tpu.memory_space<vmem>>, vector<16x32xbf16>
    tpu.vector_store %arg10[%90, %c0_31], %89 {strides = array<i32>} : memref<128x32xbf16, #tpu.memory_space<vmem>>, vector<16x32xbf16>,
    %92 = vector.shape_cast %62 : vector<16x1xi1> to vector<16x1xi1>
    %93 = vector.broadcast %92 : vector<16x1xi1> to vector<16x32xi1>
    %94 = arith.select %93, %84, %18 : vector<16x32xi1>, vector<16x32xf32>
    %95 = vector.shape_cast %62 : vector<16x1xi1> to vector<16x1xi1>
    %96 = vector.broadcast %95 : vector<16x1xi1> to vector<16x32xi1>
    %97 = arith.select %96, %82, %18 : vector<16x32xi1>, vector<16x32xf32>
    %c1_i32 = arith.constant 1 : i32
    %c7_i32_32 = arith.constant 7 : i32
    %98 = arith.subi %c7_i32_32, %c1_i32 : i32
    %c16_i32_33 = arith.constant 16 : i32
    %99 = arith.muli %c1_i32, %c16_i32_33 : i32
    %100 = tpu.assume_multiple %99, 16 : i32
    %c16_i32_34 = arith.constant 16 : i32
    %101 = arith.muli %98, %c16_i32_34 : i32
    %102 = tpu.assume_multiple %101, 16 : i32
    %103 = vector.broadcast %c1_i32 : i32 to vector<16x1xi32>
    %104 = arith.cmpi sgt, %15, %103 : vector<16x1xi32>
    %105 = arith.index_cast %100 : i32 to index
    %c0_35 = arith.constant 0 : index
    %106 = vector.load %arg11[%105, %c0_35] : memref<128x128xbf16, #tpu.memory_space<vmem>>, vector<16x128xbf16>
    %107 = arith.extf %106 : vector<16x128xbf16> to vector<16x128xf32>
    %108 = arith.truncf %57 : vector<16x32xf32> to vector<16x32xbf16>
    %cst_36 = arith.constant dense<0.000000e+00> : vector<16x128xf32>
    %109 = tpu.matmul %108, %16, %cst_36 {dimension_numbers = #tpu.dot_dimension_numbers<[1], [0], [0], [1], [0, 0, 1, 1], [], []>} : vector<16x32xbf16>, vector<32x128xbf16>, vector<16x128xf32> -> vector<16x128xf32>
    %110 = arith.addf %107, %109 : vector<16x128xf32>
    %111 = vector.extract_strided_slice %110 {offsets = [0, 0], sizes = [16, 96], strides = [1, 1]} : vector<16x128xf32> to vector<16x96xf32>
    %112 = arith.negf %111 : vector<16x96xf32>
    %113 = math.exp %112 : vector<16x96xf32>
    %cst_37 = arith.constant 1.000000e+00 : f32
    %114 = vector.broadcast %cst_37 : f32 to vector<16x96xf32>
    %115 = arith.addf %114, %113 : vector<16x96xf32>
    %116 = arith.divf %114, %115 : vector<16x96xf32>
    %117 = vector.extract_strided_slice %116 {offsets = [0, 0], sizes = [16, 32], strides = [1, 1]} : vector<16x96xf32> to vector<16x32xf32>
    %118 = vector.extract_strided_slice %116 {offsets = [0, 32], sizes = [16, 32], strides = [1, 1]} : vector<16x96xf32> to vector<16x32xf32>
    %119 = vector.extract_strided_slice %116 {offsets = [0, 64], sizes = [16, 32], strides = [1, 1]} : vector<16x96xf32> to vector<16x32xf32>
    %120 = vector.extract_strided_slice %110 {offsets = [0, 96], sizes = [16, 32], strides = [1, 1]} : vector<16x128xf32> to vector<16x32xf32>
    %121 = math.tanh %120 : vector<16x32xf32>
    %122 = arith.mulf %118, %60 : vector<16x32xf32>
    %123 = arith.mulf %117, %121 : vector<16x32xf32>
    %124 = arith.addf %122, %123 : vector<16x32xf32>
    %125 = math.tanh %124 : vector<16x32xf32>
    %126 = arith.mulf %119, %125 : vector<16x32xf32>
    %cst_38 = arith.constant 0.000000e+00 : f32
    %127 = vector.shape_cast %104 : vector<16x1xi1> to vector<16x1xi1>
    %128 = vector.broadcast %127 : vector<16x1xi1> to vector<16x32xi1>
    %129 = vector.broadcast %cst_38 : f32 to vector<16x32xf32>
    %130 = arith.select %128, %126, %129 : vector<16x32xi1>, vector<16x32xf32>
    %131 = arith.truncf %130 : vector<16x32xf32> to vector<16x32xbf16>
    %132 = arith.index_cast %100 : i32 to index
    %c0_39 = arith.constant 0 : index
    %133 = vector.load %arg9[%132, %c0_39] : memref<128x32xbf16, #tpu.memory_space<vmem>>, vector<16x32xbf16>
    tpu.vector_store %arg9[%132, %c0_39], %131 {strides = array<i32>} : memref<128x32xbf16, #tpu.memory_space<vmem>>, vector<16x32xbf16>,
    %134 = vector.shape_cast %104 : vector<16x1xi1> to vector<16x1xi1>
    %135 = vector.broadcast %134 : vector<16x1xi1> to vector<16x32xi1>
    %136 = arith.select %135, %126, %57 : vector<16x32xi1>, vector<16x32xf32>
    %137 = vector.shape_cast %104 : vector<16x1xi1> to vector<16x1xi1>
    %138 = vector.broadcast %137 : vector<16x1xi1> to vector<16x32xi1>
    %139 = arith.select %138, %124, %60 : vector<16x32xi1>, vector<16x32xf32>
    %140 = vector.broadcast %98 : i32 to vector<16x1xi32>
    %141 = arith.cmpi sgt, %15, %140 : vector<16x1xi32>
    %142 = arith.index_cast %102 : i32 to index
    %c0_40 = arith.constant 0 : index
    %143 = vector.load %arg12[%142, %c0_40] : memref<128x128xbf16, #tpu.memory_space<vmem>>, vector<16x128xbf16>
    %144 = arith.extf %143 : vector<16x128xbf16> to vector<16x128xf32>
    %145 = arith.truncf %94 : vector<16x32xf32> to vector<16x32xbf16>
    %cst_41 = arith.constant dense<0.000000e+00> : vector<16x128xf32>
    %146 = tpu.matmul %145, %17, %cst_41 {dimension_numbers = #tpu.dot_dimension_numbers<[1], [0], [0], [1], [0, 0, 1, 1], [], []>} : vector<16x32xbf16>, vector<32x128xbf16>, vector<16x128xf32> -> vector<16x128xf32>
    %147 = arith.addf %144, %146 : vector<16x128xf32>
    %148 = vector.extract_strided_slice %147 {offsets = [0, 0], sizes = [16, 96], strides = [1, 1]} : vector<16x128xf32> to vector<16x96xf32>
    %149 = arith.negf %148 : vector<16x96xf32>
    %150 = math.exp %149 : vector<16x96xf32>
    %cst_42 = arith.constant 1.000000e+00 : f32
    %151 = vector.broadcast %cst_42 : f32 to vector<16x96xf32>
    %152 = arith.addf %151, %150 : vector<16x96xf32>
    %153 = arith.divf %151, %152 : vector<16x96xf32>
    %154 = vector.extract_strided_slice %153 {offsets = [0, 0], sizes = [16, 32], strides = [1, 1]} : vector<16x96xf32> to vector<16x32xf32>
    %155 = vector.extract_strided_slice %153 {offsets = [0, 32], sizes = [16, 32], strides = [1, 1]} : vector<16x96xf32> to vector<16x32xf32>
    %156 = vector.extract_strided_slice %153 {offsets = [0, 64], sizes = [16, 32], strides = [1, 1]} : vector<16x96xf32> to vector<16x32xf32>
    %157 = vector.extract_strided_slice %147 {offsets = [0, 96], sizes = [16, 32], strides = [1, 1]} : vector<16x128xf32> to vector<16x32xf32>
    %158 = math.tanh %157 : vector<16x32xf32>
    %159 = arith.mulf %155, %97 : vector<16x32xf32>
    %160 = arith.mulf %154, %158 : vector<16x32xf32>
    %161 = arith.addf %159, %160 : vector<16x32xf32>
    %162 = math.tanh %161 : vector<16x32xf32>
    %163 = arith.mulf %156, %162 : vector<16x32xf32>
    %cst_43 = arith.constant 0.000000e+00 : f32
    %164 = vector.shape_cast %141 : vector<16x1xi1> to vector<16x1xi1>
    %165 = vector.broadcast %164 : vector<16x1xi1> to vector<16x32xi1>
    %166 = vector.broadcast %cst_43 : f32 to vector<16x32xf32>
    %167 = arith.select %165, %163, %166 : vector<16x32xi1>, vector<16x32xf32>
    %168 = arith.truncf %167 : vector<16x32xf32> to vector<16x32xbf16>
    %169 = arith.index_cast %102 : i32 to index
    %c0_44 = arith.constant 0 : index
    %170 = vector.load %arg10[%169, %c0_44] : memref<128x32xbf16, #tpu.memory_space<vmem>>, vector<16x32xbf16>
    tpu.vector_store %arg10[%169, %c0_44], %168 {strides = array<i32>} : memref<128x32xbf16, #tpu.memory_space<vmem>>, vector<16x32xbf16>,
    %171 = vector.shape_cast %141 : vector<16x1xi1> to vector<16x1xi1>
    %172 = vector.broadcast %171 : vector<16x1xi1> to vector<16x32xi1>
    %173 = arith.select %172, %163, %94 : vector<16x32xi1>, vector<16x32xf32>
    %174 = vector.shape_cast %141 : vector<16x1xi1> to vector<16x1xi1>
    %175 = vector.broadcast %174 : vector<16x1xi1> to vector<16x32xi1>
    %176 = arith.select %175, %161, %97 : vector<16x32xi1>, vector<16x32xf32>
    %c2_i32 = arith.constant 2 : i32
    %c7_i32_45 = arith.constant 7 : i32
    %177 = arith.subi %c7_i32_45, %c2_i32 : i32
    %c16_i32_46 = arith.constant 16 : i32
    %178 = arith.muli %c2_i32, %c16_i32_46 : i32
    %179 = tpu.assume_multiple %178, 16 : i32
    %c16_i32_47 = arith.constant 16 : i32
    %180 = arith.muli %177, %c16_i32_47 : i32
    %181 = tpu.assume_multiple %180, 16 : i32
    %182 = vector.broadcast %c2_i32 : i32 to vector<16x1xi32>
    %183 = arith.cmpi sgt, %15, %182 : vector<16x1xi32>
    %184 = arith.index_cast %179 : i32 to index
    %c0_48 = arith.constant 0 : index
    %185 = vector.load %arg11[%184, %c0_48] : memref<128x128xbf16, #tpu.memory_space<vmem>>, vector<16x128xbf16>
    %186 = arith.extf %185 : vector<16x128xbf16> to vector<16x128xf32>
    %187 = arith.truncf %136 : vector<16x32xf32> to vector<16x32xbf16>
    %cst_49 = arith.constant dense<0.000000e+00> : vector<16x128xf32>
    %188 = tpu.matmul %187, %16, %cst_49 {dimension_numbers = #tpu.dot_dimension_numbers<[1], [0], [0], [1], [0, 0, 1, 1], [], []>} : vector<16x32xbf16>, vector<32x128xbf16>, vector<16x128xf32> -> vector<16x128xf32>
    %189 = arith.addf %186, %188 : vector<16x128xf32>
    %190 = vector.extract_strided_slice %189 {offsets = [0, 0], sizes = [16, 96], strides = [1, 1]} : vector<16x128xf32> to vector<16x96xf32>
    %191 = arith.negf %190 : vector<16x96xf32>
    %192 = math.exp %191 : vector<16x96xf32>
    %cst_50 = arith.constant 1.000000e+00 : f32
    %193 = vector.broadcast %cst_50 : f32 to vector<16x96xf32>
    %194 = arith.addf %193, %192 : vector<16x96xf32>
    %195 = arith.divf %193, %194 : vector<16x96xf32>
    %196 = vector.extract_strided_slice %195 {offsets = [0, 0], sizes = [16, 32], strides = [1, 1]} : vector<16x96xf32> to vector<16x32xf32>
    %197 = vector.extract_strided_slice %195 {offsets = [0, 32], sizes = [16, 32], strides = [1, 1]} : vector<16x96xf32> to vector<16x32xf32>
    %198 = vector.extract_strided_slice %195 {offsets = [0, 64], sizes = [16, 32], strides = [1, 1]} : vector<16x96xf32> to vector<16x32xf32>
    %199 = vector.extract_strided_slice %189 {offsets = [0, 96], sizes = [16, 32], strides = [1, 1]} : vector<16x128xf32> to vector<16x32xf32>
    %200 = math.tanh %199 : vector<16x32xf32>
    %201 = arith.mulf %197, %139 : vector<16x32xf32>
    %202 = arith.mulf %196, %200 : vector<16x32xf32>
    %203 = arith.addf %201, %202 : vector<16x32xf32>
    %204 = math.tanh %203 : vector<16x32xf32>
    %205 = arith.mulf %198, %204 : vector<16x32xf32>
    %cst_51 = arith.constant 0.000000e+00 : f32
    %206 = vector.shape_cast %183 : vector<16x1xi1> to vector<16x1xi1>
    %207 = vector.broadcast %206 : vector<16x1xi1> to vector<16x32xi1>
    %208 = vector.broadcast %cst_51 : f32 to vector<16x32xf32>
    %209 = arith.select %207, %205, %208 : vector<16x32xi1>, vector<16x32xf32>
    %210 = arith.truncf %209 : vector<16x32xf32> to vector<16x32xbf16>
    %211 = arith.index_cast %179 : i32 to index
    %c0_52 = arith.constant 0 : index
    %212 = vector.load %arg9[%211, %c0_52] : memref<128x32xbf16, #tpu.memory_space<vmem>>, vector<16x32xbf16>
    tpu.vector_store %arg9[%211, %c0_52], %210 {strides = array<i32>} : memref<128x32xbf16, #tpu.memory_space<vmem>>, vector<16x32xbf16>,
    %213 = vector.shape_cast %183 : vector<16x1xi1> to vector<16x1xi1>
    %214 = vector.broadcast %213 : vector<16x1xi1> to vector<16x32xi1>
    %215 = arith.select %214, %205, %136 : vector<16x32xi1>, vector<16x32xf32>
    %216 = vector.shape_cast %183 : vector<16x1xi1> to vector<16x1xi1>
    %217 = vector.broadcast %216 : vector<16x1xi1> to vector<16x32xi1>
    %218 = arith.select %217, %203, %139 : vector<16x32xi1>, vector<16x32xf32>
    %219 = vector.broadcast %177 : i32 to vector<16x1xi32>
    %220 = arith.cmpi sgt, %15, %219 : vector<16x1xi32>
    %221 = arith.index_cast %181 : i32 to index
    %c0_53 = arith.constant 0 : index
    %222 = vector.load %arg12[%221, %c0_53] : memref<128x128xbf16, #tpu.memory_space<vmem>>, vector<16x128xbf16>
    %223 = arith.extf %222 : vector<16x128xbf16> to vector<16x128xf32>
    %224 = arith.truncf %173 : vector<16x32xf32> to vector<16x32xbf16>
    %cst_54 = arith.constant dense<0.000000e+00> : vector<16x128xf32>
    %225 = tpu.matmul %224, %17, %cst_54 {dimension_numbers = #tpu.dot_dimension_numbers<[1], [0], [0], [1], [0, 0, 1, 1], [], []>} : vector<16x32xbf16>, vector<32x128xbf16>, vector<16x128xf32> -> vector<16x128xf32>
    %226 = arith.addf %223, %225 : vector<16x128xf32>
    %227 = vector.extract_strided_slice %226 {offsets = [0, 0], sizes = [16, 96], strides = [1, 1]} : vector<16x128xf32> to vector<16x96xf32>
    %228 = arith.negf %227 : vector<16x96xf32>
    %229 = math.exp %228 : vector<16x96xf32>
    %cst_55 = arith.constant 1.000000e+00 : f32
    %230 = vector.broadcast %cst_55 : f32 to vector<16x96xf32>
    %231 = arith.addf %230, %229 : vector<16x96xf32>
    %232 = arith.divf %230, %231 : vector<16x96xf32>
    %233 = vector.extract_strided_slice %232 {offsets = [0, 0], sizes = [16, 32], strides = [1, 1]} : vector<16x96xf32> to vector<16x32xf32>
    %234 = vector.extract_strided_slice %232 {offsets = [0, 32], sizes = [16, 32], strides = [1, 1]} : vector<16x96xf32> to vector<16x32xf32>
    %235 = vector.extract_strided_slice %232 {offsets = [0, 64], sizes = [16, 32], strides = [1, 1]} : vector<16x96xf32> to vector<16x32xf32>
    %236 = vector.extract_strided_slice %226 {offsets = [0, 96], sizes = [16, 32], strides = [1, 1]} : vector<16x128xf32> to vector<16x32xf32>
    %237 = math.tanh %236 : vector<16x32xf32>
    %238 = arith.mulf %234, %176 : vector<16x32xf32>
    %239 = arith.mulf %233, %237 : vector<16x32xf32>
    %240 = arith.addf %238, %239 : vector<16x32xf32>
    %241 = math.tanh %240 : vector<16x32xf32>
    %242 = arith.mulf %235, %241 : vector<16x32xf32>
    %cst_56 = arith.constant 0.000000e+00 : f32
    %243 = vector.shape_cast %220 : vector<16x1xi1> to vector<16x1xi1>
    %244 = vector.broadcast %243 : vector<16x1xi1> to vector<16x32xi1>
    %245 = vector.broadcast %cst_56 : f32 to vector<16x32xf32>
    %246 = arith.select %244, %242, %245 : vector<16x32xi1>, vector<16x32xf32>
    %247 = arith.truncf %246 : vector<16x32xf32> to vector<16x32xbf16>
    %248 = arith.index_cast %181 : i32 to index
    %c0_57 = arith.constant 0 : index
    %249 = vector.load %arg10[%248, %c0_57] : memref<128x32xbf16, #tpu.memory_space<vmem>>, vector<16x32xbf16>
    tpu.vector_store %arg10[%248, %c0_57], %247 {strides = array<i32>} : memref<128x32xbf16, #tpu.memory_space<vmem>>, vector<16x32xbf16>,
    %250 = vector.shape_cast %220 : vector<16x1xi1> to vector<16x1xi1>
    %251 = vector.broadcast %250 : vector<16x1xi1> to vector<16x32xi1>
    %252 = arith.select %251, %242, %173 : vector<16x32xi1>, vector<16x32xf32>
    %253 = vector.shape_cast %220 : vector<16x1xi1> to vector<16x1xi1>
    %254 = vector.broadcast %253 : vector<16x1xi1> to vector<16x32xi1>
    %255 = arith.select %254, %240, %176 : vector<16x32xi1>, vector<16x32xf32>
    %c3_i32 = arith.constant 3 : i32
    %c7_i32_58 = arith.constant 7 : i32
    %256 = arith.subi %c7_i32_58, %c3_i32 : i32
    %c16_i32_59 = arith.constant 16 : i32
    %257 = arith.muli %c3_i32, %c16_i32_59 : i32
    %258 = tpu.assume_multiple %257, 16 : i32
    %c16_i32_60 = arith.constant 16 : i32
    %259 = arith.muli %256, %c16_i32_60 : i32
    %260 = tpu.assume_multiple %259, 16 : i32
    %261 = vector.broadcast %c3_i32 : i32 to vector<16x1xi32>
    %262 = arith.cmpi sgt, %15, %261 : vector<16x1xi32>
    %263 = arith.index_cast %258 : i32 to index
    %c0_61 = arith.constant 0 : index
    %264 = vector.load %arg11[%263, %c0_61] : memref<128x128xbf16, #tpu.memory_space<vmem>>, vector<16x128xbf16>
    %265 = arith.extf %264 : vector<16x128xbf16> to vector<16x128xf32>
    %266 = arith.truncf %215 : vector<16x32xf32> to vector<16x32xbf16>
    %cst_62 = arith.constant dense<0.000000e+00> : vector<16x128xf32>
    %267 = tpu.matmul %266, %16, %cst_62 {dimension_numbers = #tpu.dot_dimension_numbers<[1], [0], [0], [1], [0, 0, 1, 1], [], []>} : vector<16x32xbf16>, vector<32x128xbf16>, vector<16x128xf32> -> vector<16x128xf32>
    %268 = arith.addf %265, %267 : vector<16x128xf32>
    %269 = vector.extract_strided_slice %268 {offsets = [0, 0], sizes = [16, 96], strides = [1, 1]} : vector<16x128xf32> to vector<16x96xf32>
    %270 = arith.negf %269 : vector<16x96xf32>
    %271 = math.exp %270 : vector<16x96xf32>
    %cst_63 = arith.constant 1.000000e+00 : f32
    %272 = vector.broadcast %cst_63 : f32 to vector<16x96xf32>
    %273 = arith.addf %272, %271 : vector<16x96xf32>
    %274 = arith.divf %272, %273 : vector<16x96xf32>
    %275 = vector.extract_strided_slice %274 {offsets = [0, 0], sizes = [16, 32], strides = [1, 1]} : vector<16x96xf32> to vector<16x32xf32>
    %276 = vector.extract_strided_slice %274 {offsets = [0, 32], sizes = [16, 32], strides = [1, 1]} : vector<16x96xf32> to vector<16x32xf32>
    %277 = vector.extract_strided_slice %274 {offsets = [0, 64], sizes = [16, 32], strides = [1, 1]} : vector<16x96xf32> to vector<16x32xf32>
    %278 = vector.extract_strided_slice %268 {offsets = [0, 96], sizes = [16, 32], strides = [1, 1]} : vector<16x128xf32> to vector<16x32xf32>
    %279 = math.tanh %278 : vector<16x32xf32>
    %280 = arith.mulf %276, %218 : vector<16x32xf32>
    %281 = arith.mulf %275, %279 : vector<16x32xf32>
    %282 = arith.addf %280, %281 : vector<16x32xf32>
    %283 = math.tanh %282 : vector<16x32xf32>
    %284 = arith.mulf %277, %283 : vector<16x32xf32>
    %cst_64 = arith.constant 0.000000e+00 : f32
    %285 = vector.shape_cast %262 : vector<16x1xi1> to vector<16x1xi1>
    %286 = vector.broadcast %285 : vector<16x1xi1> to vector<16x32xi1>
    %287 = vector.broadcast %cst_64 : f32 to vector<16x32xf32>
    %288 = arith.select %286, %284, %287 : vector<16x32xi1>, vector<16x32xf32>
    %289 = arith.truncf %288 : vector<16x32xf32> to vector<16x32xbf16>
    %290 = arith.index_cast %258 : i32 to index
    %c0_65 = arith.constant 0 : index
    %291 = vector.load %arg9[%290, %c0_65] : memref<128x32xbf16, #tpu.memory_space<vmem>>, vector<16x32xbf16>
    tpu.vector_store %arg9[%290, %c0_65], %289 {strides = array<i32>} : memref<128x32xbf16, #tpu.memory_space<vmem>>, vector<16x32xbf16>,
    %292 = vector.shape_cast %262 : vector<16x1xi1> to vector<16x1xi1>
    %293 = vector.broadcast %292 : vector<16x1xi1> to vector<16x32xi1>
    %294 = arith.select %293, %284, %215 : vector<16x32xi1>, vector<16x32xf32>
    %295 = vector.shape_cast %262 : vector<16x1xi1> to vector<16x1xi1>
    %296 = vector.broadcast %295 : vector<16x1xi1> to vector<16x32xi1>
    %297 = arith.select %296, %282, %218 : vector<16x32xi1>, vector<16x32xf32>
    %298 = vector.broadcast %256 : i32 to vector<16x1xi32>
    %299 = arith.cmpi sgt, %15, %298 : vector<16x1xi32>
    %300 = arith.index_cast %260 : i32 to index
    %c0_66 = arith.constant 0 : index
    %301 = vector.load %arg12[%300, %c0_66] : memref<128x128xbf16, #tpu.memory_space<vmem>>, vector<16x128xbf16>
    %302 = arith.extf %301 : vector<16x128xbf16> to vector<16x128xf32>
    %303 = arith.truncf %252 : vector<16x32xf32> to vector<16x32xbf16>
    %cst_67 = arith.constant dense<0.000000e+00> : vector<16x128xf32>
    %304 = tpu.matmul %303, %17, %cst_67 {dimension_numbers = #tpu.dot_dimension_numbers<[1], [0], [0], [1], [0, 0, 1, 1], [], []>} : vector<16x32xbf16>, vector<32x128xbf16>, vector<16x128xf32> -> vector<16x128xf32>
    %305 = arith.addf %302, %304 : vector<16x128xf32>
    %306 = vector.extract_strided_slice %305 {offsets = [0, 0], sizes = [16, 96], strides = [1, 1]} : vector<16x128xf32> to vector<16x96xf32>
    %307 = arith.negf %306 : vector<16x96xf32>
    %308 = math.exp %307 : vector<16x96xf32>
    %cst_68 = arith.constant 1.000000e+00 : f32
    %309 = vector.broadcast %cst_68 : f32 to vector<16x96xf32>
    %310 = arith.addf %309, %308 : vector<16x96xf32>
    %311 = arith.divf %309, %310 : vector<16x96xf32>
    %312 = vector.extract_strided_slice %311 {offsets = [0, 0], sizes = [16, 32], strides = [1, 1]} : vector<16x96xf32> to vector<16x32xf32>
    %313 = vector.extract_strided_slice %311 {offsets = [0, 32], sizes = [16, 32], strides = [1, 1]} : vector<16x96xf32> to vector<16x32xf32>
    %314 = vector.extract_strided_slice %311 {offsets = [0, 64], sizes = [16, 32], strides = [1, 1]} : vector<16x96xf32> to vector<16x32xf32>
    %315 = vector.extract_strided_slice %305 {offsets = [0, 96], sizes = [16, 32], strides = [1, 1]} : vector<16x128xf32> to vector<16x32xf32>
    %316 = math.tanh %315 : vector<16x32xf32>
    %317 = arith.mulf %313, %255 : vector<16x32xf32>
    %318 = arith.mulf %312, %316 : vector<16x32xf32>
    %319 = arith.addf %317, %318 : vector<16x32xf32>
    %320 = math.tanh %319 : vector<16x32xf32>
    %321 = arith.mulf %314, %320 : vector<16x32xf32>
    %cst_69 = arith.constant 0.000000e+00 : f32
    %322 = vector.shape_cast %299 : vector<16x1xi1> to vector<16x1xi1>
    %323 = vector.broadcast %322 : vector<16x1xi1> to vector<16x32xi1>
    %324 = vector.broadcast %cst_69 : f32 to vector<16x32xf32>
    %325 = arith.select %323, %321, %324 : vector<16x32xi1>, vector<16x32xf32>
    %326 = arith.truncf %325 : vector<16x32xf32> to vector<16x32xbf16>
    %327 = arith.index_cast %260 : i32 to index
    %c0_70 = arith.constant 0 : index
    %328 = vector.load %arg10[%327, %c0_70] : memref<128x32xbf16, #tpu.memory_space<vmem>>, vector<16x32xbf16>
    tpu.vector_store %arg10[%327, %c0_70], %326 {strides = array<i32>} : memref<128x32xbf16, #tpu.memory_space<vmem>>, vector<16x32xbf16>,
    %329 = vector.shape_cast %299 : vector<16x1xi1> to vector<16x1xi1>
    %330 = vector.broadcast %329 : vector<16x1xi1> to vector<16x32xi1>
    %331 = arith.select %330, %321, %252 : vector<16x32xi1>, vector<16x32xf32>
    %332 = vector.shape_cast %299 : vector<16x1xi1> to vector<16x1xi1>
    %333 = vector.broadcast %332 : vector<16x1xi1> to vector<16x32xi1>
    %334 = arith.select %333, %319, %255 : vector<16x32xi1>, vector<16x32xf32>
    %c4_i32 = arith.constant 4 : i32
    %c7_i32_71 = arith.constant 7 : i32
    %335 = arith.subi %c7_i32_71, %c4_i32 : i32
    %c16_i32_72 = arith.constant 16 : i32
    %336 = arith.muli %c4_i32, %c16_i32_72 : i32
    %337 = tpu.assume_multiple %336, 16 : i32
    %c16_i32_73 = arith.constant 16 : i32
    %338 = arith.muli %335, %c16_i32_73 : i32
    %339 = tpu.assume_multiple %338, 16 : i32
    %340 = vector.broadcast %c4_i32 : i32 to vector<16x1xi32>
    %341 = arith.cmpi sgt, %15, %340 : vector<16x1xi32>
    %342 = arith.index_cast %337 : i32 to index
    %c0_74 = arith.constant 0 : index
    %343 = vector.load %arg11[%342, %c0_74] : memref<128x128xbf16, #tpu.memory_space<vmem>>, vector<16x128xbf16>
    %344 = arith.extf %343 : vector<16x128xbf16> to vector<16x128xf32>
    %345 = arith.truncf %294 : vector<16x32xf32> to vector<16x32xbf16>
    %cst_75 = arith.constant dense<0.000000e+00> : vector<16x128xf32>
    %346 = tpu.matmul %345, %16, %cst_75 {dimension_numbers = #tpu.dot_dimension_numbers<[1], [0], [0], [1], [0, 0, 1, 1], [], []>} : vector<16x32xbf16>, vector<32x128xbf16>, vector<16x128xf32> -> vector<16x128xf32>
    %347 = arith.addf %344, %346 : vector<16x128xf32>
    %348 = vector.extract_strided_slice %347 {offsets = [0, 0], sizes = [16, 96], strides = [1, 1]} : vector<16x128xf32> to vector<16x96xf32>
    %349 = arith.negf %348 : vector<16x96xf32>
    %350 = math.exp %349 : vector<16x96xf32>
    %cst_76 = arith.constant 1.000000e+00 : f32
    %351 = vector.broadcast %cst_76 : f32 to vector<16x96xf32>
    %352 = arith.addf %351, %350 : vector<16x96xf32>
    %353 = arith.divf %351, %352 : vector<16x96xf32>
    %354 = vector.extract_strided_slice %353 {offsets = [0, 0], sizes = [16, 32], strides = [1, 1]} : vector<16x96xf32> to vector<16x32xf32>
    %355 = vector.extract_strided_slice %353 {offsets = [0, 32], sizes = [16, 32], strides = [1, 1]} : vector<16x96xf32> to vector<16x32xf32>
    %356 = vector.extract_strided_slice %353 {offsets = [0, 64], sizes = [16, 32], strides = [1, 1]} : vector<16x96xf32> to vector<16x32xf32>
    %357 = vector.extract_strided_slice %347 {offsets = [0, 96], sizes = [16, 32], strides = [1, 1]} : vector<16x128xf32> to vector<16x32xf32>
    %358 = math.tanh %357 : vector<16x32xf32>
    %359 = arith.mulf %355, %297 : vector<16x32xf32>
    %360 = arith.mulf %354, %358 : vector<16x32xf32>
    %361 = arith.addf %359, %360 : vector<16x32xf32>
    %362 = math.tanh %361 : vector<16x32xf32>
    %363 = arith.mulf %356, %362 : vector<16x32xf32>
    %cst_77 = arith.constant 0.000000e+00 : f32
    %364 = vector.shape_cast %341 : vector<16x1xi1> to vector<16x1xi1>
    %365 = vector.broadcast %364 : vector<16x1xi1> to vector<16x32xi1>
    %366 = vector.broadcast %cst_77 : f32 to vector<16x32xf32>
    %367 = arith.select %365, %363, %366 : vector<16x32xi1>, vector<16x32xf32>
    %368 = arith.truncf %367 : vector<16x32xf32> to vector<16x32xbf16>
    %369 = arith.index_cast %337 : i32 to index
    %c0_78 = arith.constant 0 : index
    %370 = vector.load %arg9[%369, %c0_78] : memref<128x32xbf16, #tpu.memory_space<vmem>>, vector<16x32xbf16>
    tpu.vector_store %arg9[%369, %c0_78], %368 {strides = array<i32>} : memref<128x32xbf16, #tpu.memory_space<vmem>>, vector<16x32xbf16>,
    %371 = vector.shape_cast %341 : vector<16x1xi1> to vector<16x1xi1>
    %372 = vector.broadcast %371 : vector<16x1xi1> to vector<16x32xi1>
    %373 = arith.select %372, %363, %294 : vector<16x32xi1>, vector<16x32xf32>
    %374 = vector.shape_cast %341 : vector<16x1xi1> to vector<16x1xi1>
    %375 = vector.broadcast %374 : vector<16x1xi1> to vector<16x32xi1>
    %376 = arith.select %375, %361, %297 : vector<16x32xi1>, vector<16x32xf32>
    %377 = vector.broadcast %335 : i32 to vector<16x1xi32>
    %378 = arith.cmpi sgt, %15, %377 : vector<16x1xi32>
    %379 = arith.index_cast %339 : i32 to index
    %c0_79 = arith.constant 0 : index
    %380 = vector.load %arg12[%379, %c0_79] : memref<128x128xbf16, #tpu.memory_space<vmem>>, vector<16x128xbf16>
    %381 = arith.extf %380 : vector<16x128xbf16> to vector<16x128xf32>
    %382 = arith.truncf %331 : vector<16x32xf32> to vector<16x32xbf16>
    %cst_80 = arith.constant dense<0.000000e+00> : vector<16x128xf32>
    %383 = tpu.matmul %382, %17, %cst_80 {dimension_numbers = #tpu.dot_dimension_numbers<[1], [0], [0], [1], [0, 0, 1, 1], [], []>} : vector<16x32xbf16>, vector<32x128xbf16>, vector<16x128xf32> -> vector<16x128xf32>
    %384 = arith.addf %381, %383 : vector<16x128xf32>
    %385 = vector.extract_strided_slice %384 {offsets = [0, 0], sizes = [16, 96], strides = [1, 1]} : vector<16x128xf32> to vector<16x96xf32>
    %386 = arith.negf %385 : vector<16x96xf32>
    %387 = math.exp %386 : vector<16x96xf32>
    %cst_81 = arith.constant 1.000000e+00 : f32
    %388 = vector.broadcast %cst_81 : f32 to vector<16x96xf32>
    %389 = arith.addf %388, %387 : vector<16x96xf32>
    %390 = arith.divf %388, %389 : vector<16x96xf32>
    %391 = vector.extract_strided_slice %390 {offsets = [0, 0], sizes = [16, 32], strides = [1, 1]} : vector<16x96xf32> to vector<16x32xf32>
    %392 = vector.extract_strided_slice %390 {offsets = [0, 32], sizes = [16, 32], strides = [1, 1]} : vector<16x96xf32> to vector<16x32xf32>
    %393 = vector.extract_strided_slice %390 {offsets = [0, 64], sizes = [16, 32], strides = [1, 1]} : vector<16x96xf32> to vector<16x32xf32>
    %394 = vector.extract_strided_slice %384 {offsets = [0, 96], sizes = [16, 32], strides = [1, 1]} : vector<16x128xf32> to vector<16x32xf32>
    %395 = math.tanh %394 : vector<16x32xf32>
    %396 = arith.mulf %392, %334 : vector<16x32xf32>
    %397 = arith.mulf %391, %395 : vector<16x32xf32>
    %398 = arith.addf %396, %397 : vector<16x32xf32>
    %399 = math.tanh %398 : vector<16x32xf32>
    %400 = arith.mulf %393, %399 : vector<16x32xf32>
    %cst_82 = arith.constant 0.000000e+00 : f32
    %401 = vector.shape_cast %378 : vector<16x1xi1> to vector<16x1xi1>
    %402 = vector.broadcast %401 : vector<16x1xi1> to vector<16x32xi1>
    %403 = vector.broadcast %cst_82 : f32 to vector<16x32xf32>
    %404 = arith.select %402, %400, %403 : vector<16x32xi1>, vector<16x32xf32>
    %405 = arith.truncf %404 : vector<16x32xf32> to vector<16x32xbf16>
    %406 = arith.index_cast %339 : i32 to index
    %c0_83 = arith.constant 0 : index
    %407 = vector.load %arg10[%406, %c0_83] : memref<128x32xbf16, #tpu.memory_space<vmem>>, vector<16x32xbf16>
    tpu.vector_store %arg10[%406, %c0_83], %405 {strides = array<i32>} : memref<128x32xbf16, #tpu.memory_space<vmem>>, vector<16x32xbf16>,
    %408 = vector.shape_cast %378 : vector<16x1xi1> to vector<16x1xi1>
    %409 = vector.broadcast %408 : vector<16x1xi1> to vector<16x32xi1>
    %410 = arith.select %409, %400, %331 : vector<16x32xi1>, vector<16x32xf32>
    %411 = vector.shape_cast %378 : vector<16x1xi1> to vector<16x1xi1>
    %412 = vector.broadcast %411 : vector<16x1xi1> to vector<16x32xi1>
    %413 = arith.select %412, %398, %334 : vector<16x32xi1>, vector<16x32xf32>
    %c5_i32 = arith.constant 5 : i32
    %c7_i32_84 = arith.constant 7 : i32
    %414 = arith.subi %c7_i32_84, %c5_i32 : i32
    %c16_i32_85 = arith.constant 16 : i32
    %415 = arith.muli %c5_i32, %c16_i32_85 : i32
    %416 = tpu.assume_multiple %415, 16 : i32
    %c16_i32_86 = arith.constant 16 : i32
    %417 = arith.muli %414, %c16_i32_86 : i32
    %418 = tpu.assume_multiple %417, 16 : i32
    %419 = vector.broadcast %c5_i32 : i32 to vector<16x1xi32>
    %420 = arith.cmpi sgt, %15, %419 : vector<16x1xi32>
    %421 = arith.index_cast %416 : i32 to index
    %c0_87 = arith.constant 0 : index
    %422 = vector.load %arg11[%421, %c0_87] : memref<128x128xbf16, #tpu.memory_space<vmem>>, vector<16x128xbf16>
    %423 = arith.extf %422 : vector<16x128xbf16> to vector<16x128xf32>
    %424 = arith.truncf %373 : vector<16x32xf32> to vector<16x32xbf16>
    %cst_88 = arith.constant dense<0.000000e+00> : vector<16x128xf32>
    %425 = tpu.matmul %424, %16, %cst_88 {dimension_numbers = #tpu.dot_dimension_numbers<[1], [0], [0], [1], [0, 0, 1, 1], [], []>} : vector<16x32xbf16>, vector<32x128xbf16>, vector<16x128xf32> -> vector<16x128xf32>
    %426 = arith.addf %423, %425 : vector<16x128xf32>
    %427 = vector.extract_strided_slice %426 {offsets = [0, 0], sizes = [16, 96], strides = [1, 1]} : vector<16x128xf32> to vector<16x96xf32>
    %428 = arith.negf %427 : vector<16x96xf32>
    %429 = math.exp %428 : vector<16x96xf32>
    %cst_89 = arith.constant 1.000000e+00 : f32
    %430 = vector.broadcast %cst_89 : f32 to vector<16x96xf32>
    %431 = arith.addf %430, %429 : vector<16x96xf32>
    %432 = arith.divf %430, %431 : vector<16x96xf32>
    %433 = vector.extract_strided_slice %432 {offsets = [0, 0], sizes = [16, 32], strides = [1, 1]} : vector<16x96xf32> to vector<16x32xf32>
    %434 = vector.extract_strided_slice %432 {offsets = [0, 32], sizes = [16, 32], strides = [1, 1]} : vector<16x96xf32> to vector<16x32xf32>
    %435 = vector.extract_strided_slice %432 {offsets = [0, 64], sizes = [16, 32], strides = [1, 1]} : vector<16x96xf32> to vector<16x32xf32>
    %436 = vector.extract_strided_slice %426 {offsets = [0, 96], sizes = [16, 32], strides = [1, 1]} : vector<16x128xf32> to vector<16x32xf32>
    %437 = math.tanh %436 : vector<16x32xf32>
    %438 = arith.mulf %434, %376 : vector<16x32xf32>
    %439 = arith.mulf %433, %437 : vector<16x32xf32>
    %440 = arith.addf %438, %439 : vector<16x32xf32>
    %441 = math.tanh %440 : vector<16x32xf32>
    %442 = arith.mulf %435, %441 : vector<16x32xf32>
    %cst_90 = arith.constant 0.000000e+00 : f32
    %443 = vector.shape_cast %420 : vector<16x1xi1> to vector<16x1xi1>
    %444 = vector.broadcast %443 : vector<16x1xi1> to vector<16x32xi1>
    %445 = vector.broadcast %cst_90 : f32 to vector<16x32xf32>
    %446 = arith.select %444, %442, %445 : vector<16x32xi1>, vector<16x32xf32>
    %447 = arith.truncf %446 : vector<16x32xf32> to vector<16x32xbf16>
    %448 = arith.index_cast %416 : i32 to index
    %c0_91 = arith.constant 0 : index
    %449 = vector.load %arg9[%448, %c0_91] : memref<128x32xbf16, #tpu.memory_space<vmem>>, vector<16x32xbf16>
    tpu.vector_store %arg9[%448, %c0_91], %447 {strides = array<i32>} : memref<128x32xbf16, #tpu.memory_space<vmem>>, vector<16x32xbf16>,
    %450 = vector.shape_cast %420 : vector<16x1xi1> to vector<16x1xi1>
    %451 = vector.broadcast %450 : vector<16x1xi1> to vector<16x32xi1>
    %452 = arith.select %451, %442, %373 : vector<16x32xi1>, vector<16x32xf32>
    %453 = vector.shape_cast %420 : vector<16x1xi1> to vector<16x1xi1>
    %454 = vector.broadcast %453 : vector<16x1xi1> to vector<16x32xi1>
    %455 = arith.select %454, %440, %376 : vector<16x32xi1>, vector<16x32xf32>
    %456 = vector.broadcast %414 : i32 to vector<16x1xi32>
    %457 = arith.cmpi sgt, %15, %456 : vector<16x1xi32>
    %458 = arith.index_cast %418 : i32 to index
    %c0_92 = arith.constant 0 : index
    %459 = vector.load %arg12[%458, %c0_92] : memref<128x128xbf16, #tpu.memory_space<vmem>>, vector<16x128xbf16>
    %460 = arith.extf %459 : vector<16x128xbf16> to vector<16x128xf32>
    %461 = arith.truncf %410 : vector<16x32xf32> to vector<16x32xbf16>
    %cst_93 = arith.constant dense<0.000000e+00> : vector<16x128xf32>
    %462 = tpu.matmul %461, %17, %cst_93 {dimension_numbers = #tpu.dot_dimension_numbers<[1], [0], [0], [1], [0, 0, 1, 1], [], []>} : vector<16x32xbf16>, vector<32x128xbf16>, vector<16x128xf32> -> vector<16x128xf32>
    %463 = arith.addf %460, %462 : vector<16x128xf32>
    %464 = vector.extract_strided_slice %463 {offsets = [0, 0], sizes = [16, 96], strides = [1, 1]} : vector<16x128xf32> to vector<16x96xf32>
    %465 = arith.negf %464 : vector<16x96xf32>
    %466 = math.exp %465 : vector<16x96xf32>
    %cst_94 = arith.constant 1.000000e+00 : f32
    %467 = vector.broadcast %cst_94 : f32 to vector<16x96xf32>
    %468 = arith.addf %467, %466 : vector<16x96xf32>
    %469 = arith.divf %467, %468 : vector<16x96xf32>
    %470 = vector.extract_strided_slice %469 {offsets = [0, 0], sizes = [16, 32], strides = [1, 1]} : vector<16x96xf32> to vector<16x32xf32>
    %471 = vector.extract_strided_slice %469 {offsets = [0, 32], sizes = [16, 32], strides = [1, 1]} : vector<16x96xf32> to vector<16x32xf32>
    %472 = vector.extract_strided_slice %469 {offsets = [0, 64], sizes = [16, 32], strides = [1, 1]} : vector<16x96xf32> to vector<16x32xf32>
    %473 = vector.extract_strided_slice %463 {offsets = [0, 96], sizes = [16, 32], strides = [1, 1]} : vector<16x128xf32> to vector<16x32xf32>
    %474 = math.tanh %473 : vector<16x32xf32>
    %475 = arith.mulf %471, %413 : vector<16x32xf32>
    %476 = arith.mulf %470, %474 : vector<16x32xf32>
    %477 = arith.addf %475, %476 : vector<16x32xf32>
    %478 = math.tanh %477 : vector<16x32xf32>
    %479 = arith.mulf %472, %478 : vector<16x32xf32>
    %cst_95 = arith.constant 0.000000e+00 : f32
    %480 = vector.shape_cast %457 : vector<16x1xi1> to vector<16x1xi1>
    %481 = vector.broadcast %480 : vector<16x1xi1> to vector<16x32xi1>
    %482 = vector.broadcast %cst_95 : f32 to vector<16x32xf32>
    %483 = arith.select %481, %479, %482 : vector<16x32xi1>, vector<16x32xf32>
    %484 = arith.truncf %483 : vector<16x32xf32> to vector<16x32xbf16>
    %485 = arith.index_cast %418 : i32 to index
    %c0_96 = arith.constant 0 : index
    %486 = vector.load %arg10[%485, %c0_96] : memref<128x32xbf16, #tpu.memory_space<vmem>>, vector<16x32xbf16>
    tpu.vector_store %arg10[%485, %c0_96], %484 {strides = array<i32>} : memref<128x32xbf16, #tpu.memory_space<vmem>>, vector<16x32xbf16>,
    %487 = vector.shape_cast %457 : vector<16x1xi1> to vector<16x1xi1>
    %488 = vector.broadcast %487 : vector<16x1xi1> to vector<16x32xi1>
    %489 = arith.select %488, %479, %410 : vector<16x32xi1>, vector<16x32xf32>
    %490 = vector.shape_cast %457 : vector<16x1xi1> to vector<16x1xi1>
    %491 = vector.broadcast %490 : vector<16x1xi1> to vector<16x32xi1>
    %492 = arith.select %491, %477, %413 : vector<16x32xi1>, vector<16x32xf32>
    %c6_i32 = arith.constant 6 : i32
    %c7_i32_97 = arith.constant 7 : i32
    %493 = arith.subi %c7_i32_97, %c6_i32 : i32
    %c16_i32_98 = arith.constant 16 : i32
    %494 = arith.muli %c6_i32, %c16_i32_98 : i32
    %495 = tpu.assume_multiple %494, 16 : i32
    %c16_i32_99 = arith.constant 16 : i32
    %496 = arith.muli %493, %c16_i32_99 : i32
    %497 = tpu.assume_multiple %496, 16 : i32
    %498 = vector.broadcast %c6_i32 : i32 to vector<16x1xi32>
    %499 = arith.cmpi sgt, %15, %498 : vector<16x1xi32>
    %500 = arith.index_cast %495 : i32 to index
    %c0_100 = arith.constant 0 : index
    %501 = vector.load %arg11[%500, %c0_100] : memref<128x128xbf16, #tpu.memory_space<vmem>>, vector<16x128xbf16>
    %502 = arith.extf %501 : vector<16x128xbf16> to vector<16x128xf32>
    %503 = arith.truncf %452 : vector<16x32xf32> to vector<16x32xbf16>
    %cst_101 = arith.constant dense<0.000000e+00> : vector<16x128xf32>
    %504 = tpu.matmul %503, %16, %cst_101 {dimension_numbers = #tpu.dot_dimension_numbers<[1], [0], [0], [1], [0, 0, 1, 1], [], []>} : vector<16x32xbf16>, vector<32x128xbf16>, vector<16x128xf32> -> vector<16x128xf32>
    %505 = arith.addf %502, %504 : vector<16x128xf32>
    %506 = vector.extract_strided_slice %505 {offsets = [0, 0], sizes = [16, 96], strides = [1, 1]} : vector<16x128xf32> to vector<16x96xf32>
    %507 = arith.negf %506 : vector<16x96xf32>
    %508 = math.exp %507 : vector<16x96xf32>
    %cst_102 = arith.constant 1.000000e+00 : f32
    %509 = vector.broadcast %cst_102 : f32 to vector<16x96xf32>
    %510 = arith.addf %509, %508 : vector<16x96xf32>
    %511 = arith.divf %509, %510 : vector<16x96xf32>
    %512 = vector.extract_strided_slice %511 {offsets = [0, 0], sizes = [16, 32], strides = [1, 1]} : vector<16x96xf32> to vector<16x32xf32>
    %513 = vector.extract_strided_slice %511 {offsets = [0, 32], sizes = [16, 32], strides = [1, 1]} : vector<16x96xf32> to vector<16x32xf32>
    %514 = vector.extract_strided_slice %511 {offsets = [0, 64], sizes = [16, 32], strides = [1, 1]} : vector<16x96xf32> to vector<16x32xf32>
    %515 = vector.extract_strided_slice %505 {offsets = [0, 96], sizes = [16, 32], strides = [1, 1]} : vector<16x128xf32> to vector<16x32xf32>
    %516 = math.tanh %515 : vector<16x32xf32>
    %517 = arith.mulf %513, %455 : vector<16x32xf32>
    %518 = arith.mulf %512, %516 : vector<16x32xf32>
    %519 = arith.addf %517, %518 : vector<16x32xf32>
    %520 = math.tanh %519 : vector<16x32xf32>
    %521 = arith.mulf %514, %520 : vector<16x32xf32>
    %cst_103 = arith.constant 0.000000e+00 : f32
    %522 = vector.shape_cast %499 : vector<16x1xi1> to vector<16x1xi1>
    %523 = vector.broadcast %522 : vector<16x1xi1> to vector<16x32xi1>
    %524 = vector.broadcast %cst_103 : f32 to vector<16x32xf32>
    %525 = arith.select %523, %521, %524 : vector<16x32xi1>, vector<16x32xf32>
    %526 = arith.truncf %525 : vector<16x32xf32> to vector<16x32xbf16>
    %527 = arith.index_cast %495 : i32 to index
    %c0_104 = arith.constant 0 : index
    %528 = vector.load %arg9[%527, %c0_104] : memref<128x32xbf16, #tpu.memory_space<vmem>>, vector<16x32xbf16>
    tpu.vector_store %arg9[%527, %c0_104], %526 {strides = array<i32>} : memref<128x32xbf16, #tpu.memory_space<vmem>>, vector<16x32xbf16>,
    %529 = vector.shape_cast %499 : vector<16x1xi1> to vector<16x1xi1>
    %530 = vector.broadcast %529 : vector<16x1xi1> to vector<16x32xi1>
    %531 = arith.select %530, %521, %452 : vector<16x32xi1>, vector<16x32xf32>
    %532 = vector.shape_cast %499 : vector<16x1xi1> to vector<16x1xi1>
    %533 = vector.broadcast %532 : vector<16x1xi1> to vector<16x32xi1>
    %534 = arith.select %533, %519, %455 : vector<16x32xi1>, vector<16x32xf32>
    %535 = vector.broadcast %493 : i32 to vector<16x1xi32>
    %536 = arith.cmpi sgt, %15, %535 : vector<16x1xi32>
    %537 = arith.index_cast %497 : i32 to index
    %c0_105 = arith.constant 0 : index
    %538 = vector.load %arg12[%537, %c0_105] : memref<128x128xbf16, #tpu.memory_space<vmem>>, vector<16x128xbf16>
    %539 = arith.extf %538 : vector<16x128xbf16> to vector<16x128xf32>
    %540 = arith.truncf %489 : vector<16x32xf32> to vector<16x32xbf16>
    %cst_106 = arith.constant dense<0.000000e+00> : vector<16x128xf32>
    %541 = tpu.matmul %540, %17, %cst_106 {dimension_numbers = #tpu.dot_dimension_numbers<[1], [0], [0], [1], [0, 0, 1, 1], [], []>} : vector<16x32xbf16>, vector<32x128xbf16>, vector<16x128xf32> -> vector<16x128xf32>
    %542 = arith.addf %539, %541 : vector<16x128xf32>
    %543 = vector.extract_strided_slice %542 {offsets = [0, 0], sizes = [16, 96], strides = [1, 1]} : vector<16x128xf32> to vector<16x96xf32>
    %544 = arith.negf %543 : vector<16x96xf32>
    %545 = math.exp %544 : vector<16x96xf32>
    %cst_107 = arith.constant 1.000000e+00 : f32
    %546 = vector.broadcast %cst_107 : f32 to vector<16x96xf32>
    %547 = arith.addf %546, %545 : vector<16x96xf32>
    %548 = arith.divf %546, %547 : vector<16x96xf32>
    %549 = vector.extract_strided_slice %548 {offsets = [0, 0], sizes = [16, 32], strides = [1, 1]} : vector<16x96xf32> to vector<16x32xf32>
    %550 = vector.extract_strided_slice %548 {offsets = [0, 32], sizes = [16, 32], strides = [1, 1]} : vector<16x96xf32> to vector<16x32xf32>
    %551 = vector.extract_strided_slice %548 {offsets = [0, 64], sizes = [16, 32], strides = [1, 1]} : vector<16x96xf32> to vector<16x32xf32>
    %552 = vector.extract_strided_slice %542 {offsets = [0, 96], sizes = [16, 32], strides = [1, 1]} : vector<16x128xf32> to vector<16x32xf32>
    %553 = math.tanh %552 : vector<16x32xf32>
    %554 = arith.mulf %550, %492 : vector<16x32xf32>
    %555 = arith.mulf %549, %553 : vector<16x32xf32>
    %556 = arith.addf %554, %555 : vector<16x32xf32>
    %557 = math.tanh %556 : vector<16x32xf32>
    %558 = arith.mulf %551, %557 : vector<16x32xf32>
    %cst_108 = arith.constant 0.000000e+00 : f32
    %559 = vector.shape_cast %536 : vector<16x1xi1> to vector<16x1xi1>
    %560 = vector.broadcast %559 : vector<16x1xi1> to vector<16x32xi1>
    %561 = vector.broadcast %cst_108 : f32 to vector<16x32xf32>
    %562 = arith.select %560, %558, %561 : vector<16x32xi1>, vector<16x32xf32>
    %563 = arith.truncf %562 : vector<16x32xf32> to vector<16x32xbf16>
    %564 = arith.index_cast %497 : i32 to index
    %c0_109 = arith.constant 0 : index
    %565 = vector.load %arg10[%564, %c0_109] : memref<128x32xbf16, #tpu.memory_space<vmem>>, vector<16x32xbf16>
    tpu.vector_store %arg10[%564, %c0_109], %563 {strides = array<i32>} : memref<128x32xbf16, #tpu.memory_space<vmem>>, vector<16x32xbf16>,
    %566 = vector.shape_cast %536 : vector<16x1xi1> to vector<16x1xi1>
    %567 = vector.broadcast %566 : vector<16x1xi1> to vector<16x32xi1>
    %568 = arith.select %567, %558, %489 : vector<16x32xi1>, vector<16x32xf32>
    %569 = vector.shape_cast %536 : vector<16x1xi1> to vector<16x1xi1>
    %570 = vector.broadcast %569 : vector<16x1xi1> to vector<16x32xi1>
    %571 = arith.select %570, %556, %492 : vector<16x32xi1>, vector<16x32xf32>
    %c7_i32_110 = arith.constant 7 : i32
    %c7_i32_111 = arith.constant 7 : i32
    %572 = arith.subi %c7_i32_111, %c7_i32_110 : i32
    %c16_i32_112 = arith.constant 16 : i32
    %573 = arith.muli %c7_i32_110, %c16_i32_112 : i32
    %574 = tpu.assume_multiple %573, 16 : i32
    %c16_i32_113 = arith.constant 16 : i32
    %575 = arith.muli %572, %c16_i32_113 : i32
    %576 = tpu.assume_multiple %575, 16 : i32
    %577 = vector.broadcast %c7_i32_110 : i32 to vector<16x1xi32>
    %578 = arith.cmpi sgt, %15, %577 : vector<16x1xi32>
    %579 = arith.index_cast %574 : i32 to index
    %c0_114 = arith.constant 0 : index
    %580 = vector.load %arg11[%579, %c0_114] : memref<128x128xbf16, #tpu.memory_space<vmem>>, vector<16x128xbf16>
    %581 = arith.extf %580 : vector<16x128xbf16> to vector<16x128xf32>
    %582 = arith.truncf %531 : vector<16x32xf32> to vector<16x32xbf16>
    %cst_115 = arith.constant dense<0.000000e+00> : vector<16x128xf32>
    %583 = tpu.matmul %582, %16, %cst_115 {dimension_numbers = #tpu.dot_dimension_numbers<[1], [0], [0], [1], [0, 0, 1, 1], [], []>} : vector<16x32xbf16>, vector<32x128xbf16>, vector<16x128xf32> -> vector<16x128xf32>
    %584 = arith.addf %581, %583 : vector<16x128xf32>
    %585 = vector.extract_strided_slice %584 {offsets = [0, 0], sizes = [16, 96], strides = [1, 1]} : vector<16x128xf32> to vector<16x96xf32>
    %586 = arith.negf %585 : vector<16x96xf32>
    %587 = math.exp %586 : vector<16x96xf32>
    %cst_116 = arith.constant 1.000000e+00 : f32
    %588 = vector.broadcast %cst_116 : f32 to vector<16x96xf32>
    %589 = arith.addf %588, %587 : vector<16x96xf32>
    %590 = arith.divf %588, %589 : vector<16x96xf32>
    %591 = vector.extract_strided_slice %590 {offsets = [0, 0], sizes = [16, 32], strides = [1, 1]} : vector<16x96xf32> to vector<16x32xf32>
    %592 = vector.extract_strided_slice %590 {offsets = [0, 32], sizes = [16, 32], strides = [1, 1]} : vector<16x96xf32> to vector<16x32xf32>
    %593 = vector.extract_strided_slice %590 {offsets = [0, 64], sizes = [16, 32], strides = [1, 1]} : vector<16x96xf32> to vector<16x32xf32>
    %594 = vector.extract_strided_slice %584 {offsets = [0, 96], sizes = [16, 32], strides = [1, 1]} : vector<16x128xf32> to vector<16x32xf32>
    %595 = math.tanh %594 : vector<16x32xf32>
    %596 = arith.mulf %592, %534 : vector<16x32xf32>
    %597 = arith.mulf %591, %595 : vector<16x32xf32>
    %598 = arith.addf %596, %597 : vector<16x32xf32>
    %599 = math.tanh %598 : vector<16x32xf32>
    %600 = arith.mulf %593, %599 : vector<16x32xf32>
    %cst_117 = arith.constant 0.000000e+00 : f32
    %601 = vector.shape_cast %578 : vector<16x1xi1> to vector<16x1xi1>
    %602 = vector.broadcast %601 : vector<16x1xi1> to vector<16x32xi1>
    %603 = vector.broadcast %cst_117 : f32 to vector<16x32xf32>
    %604 = arith.select %602, %600, %603 : vector<16x32xi1>, vector<16x32xf32>
    %605 = arith.truncf %604 : vector<16x32xf32> to vector<16x32xbf16>
    %606 = arith.index_cast %574 : i32 to index
    %c0_118 = arith.constant 0 : index
    %607 = vector.load %arg9[%606, %c0_118] : memref<128x32xbf16, #tpu.memory_space<vmem>>, vector<16x32xbf16>
    tpu.vector_store %arg9[%606, %c0_118], %605 {strides = array<i32>} : memref<128x32xbf16, #tpu.memory_space<vmem>>, vector<16x32xbf16>,
    %608 = vector.shape_cast %578 : vector<16x1xi1> to vector<16x1xi1>
    %609 = vector.broadcast %608 : vector<16x1xi1> to vector<16x32xi1>
    %610 = arith.select %609, %600, %531 : vector<16x32xi1>, vector<16x32xf32>
    %611 = vector.shape_cast %578 : vector<16x1xi1> to vector<16x1xi1>
    %612 = vector.broadcast %611 : vector<16x1xi1> to vector<16x32xi1>
    %613 = arith.select %612, %598, %534 : vector<16x32xi1>, vector<16x32xf32>
    %614 = vector.broadcast %572 : i32 to vector<16x1xi32>
    %615 = arith.cmpi sgt, %15, %614 : vector<16x1xi32>
    %616 = arith.index_cast %576 : i32 to index
    %c0_119 = arith.constant 0 : index
    %617 = vector.load %arg12[%616, %c0_119] : memref<128x128xbf16, #tpu.memory_space<vmem>>, vector<16x128xbf16>
    %618 = arith.extf %617 : vector<16x128xbf16> to vector<16x128xf32>
    %619 = arith.truncf %568 : vector<16x32xf32> to vector<16x32xbf16>
    %cst_120 = arith.constant dense<0.000000e+00> : vector<16x128xf32>
    %620 = tpu.matmul %619, %17, %cst_120 {dimension_numbers = #tpu.dot_dimension_numbers<[1], [0], [0], [1], [0, 0, 1, 1], [], []>} : vector<16x32xbf16>, vector<32x128xbf16>, vector<16x128xf32> -> vector<16x128xf32>
    %621 = arith.addf %618, %620 : vector<16x128xf32>
    %622 = vector.extract_strided_slice %621 {offsets = [0, 0], sizes = [16, 96], strides = [1, 1]} : vector<16x128xf32> to vector<16x96xf32>
    %623 = arith.negf %622 : vector<16x96xf32>
    %624 = math.exp %623 : vector<16x96xf32>
    %cst_121 = arith.constant 1.000000e+00 : f32
    %625 = vector.broadcast %cst_121 : f32 to vector<16x96xf32>
    %626 = arith.addf %625, %624 : vector<16x96xf32>
    %627 = arith.divf %625, %626 : vector<16x96xf32>
    %628 = vector.extract_strided_slice %627 {offsets = [0, 0], sizes = [16, 32], strides = [1, 1]} : vector<16x96xf32> to vector<16x32xf32>
    %629 = vector.extract_strided_slice %627 {offsets = [0, 32], sizes = [16, 32], strides = [1, 1]} : vector<16x96xf32> to vector<16x32xf32>
    %630 = vector.extract_strided_slice %627 {offsets = [0, 64], sizes = [16, 32], strides = [1, 1]} : vector<16x96xf32> to vector<16x32xf32>
    %631 = vector.extract_strided_slice %621 {offsets = [0, 96], sizes = [16, 32], strides = [1, 1]} : vector<16x128xf32> to vector<16x32xf32>
    %632 = math.tanh %631 : vector<16x32xf32>
    %633 = arith.mulf %629, %571 : vector<16x32xf32>
    %634 = arith.mulf %628, %632 : vector<16x32xf32>
    %635 = arith.addf %633, %634 : vector<16x32xf32>
    %636 = math.tanh %635 : vector<16x32xf32>
    %637 = arith.mulf %630, %636 : vector<16x32xf32>
    %cst_122 = arith.constant 0.000000e+00 : f32
    %638 = vector.shape_cast %615 : vector<16x1xi1> to vector<16x1xi1>
    %639 = vector.broadcast %638 : vector<16x1xi1> to vector<16x32xi1>
    %640 = vector.broadcast %cst_122 : f32 to vector<16x32xf32>
    %641 = arith.select %639, %637, %640 : vector<16x32xi1>, vector<16x32xf32>
    %642 = arith.truncf %641 : vector<16x32xf32> to vector<16x32xbf16>
    %643 = arith.index_cast %576 : i32 to index
    %c0_123 = arith.constant 0 : index
    %644 = vector.load %arg10[%643, %c0_123] : memref<128x32xbf16, #tpu.memory_space<vmem>>, vector<16x32xbf16>
    tpu.vector_store %arg10[%643, %c0_123], %642 {strides = array<i32>} : memref<128x32xbf16, #tpu.memory_space<vmem>>, vector<16x32xbf16>,
    %645 = vector.shape_cast %615 : vector<16x1xi1> to vector<16x1xi1>
    %646 = vector.broadcast %645 : vector<16x1xi1> to vector<16x32xi1>
    %647 = arith.select %646, %637, %568 : vector<16x32xi1>, vector<16x32xf32>
    %648 = vector.shape_cast %615 : vector<16x1xi1> to vector<16x1xi1>
    %649 = vector.broadcast %648 : vector<16x1xi1> to vector<16x32xi1>
    %650 = arith.select %649, %635, %571 : vector<16x32xi1>, vector<16x32xf32>
    %c8_i32 = arith.constant 8 : i32
    return
  }
  func.func @transform_0(%arg0: i32) -> (i32, i32) {
    %c0_i32 = arith.constant 0 : i32
    %c0_i32_0 = arith.constant 0 : i32
    return %arg0, %c0_i32 : i32, i32
  }
  func.func @transform_1(%arg0: i32) -> (i32, i32) {
    %c0_i32 = arith.constant 0 : i32
    %c0_i32_0 = arith.constant 0 : i32
    return %arg0, %c0_i32 : i32, i32
  }
  func.func @transform_2(%arg0: i32) -> (i32, i32) {
    %c0_i32 = arith.constant 0 : i32
    %c0_i32_0 = arith.constant 0 : i32
    %c0_i32_1 = arith.constant 0 : i32
    return %c0_i32, %c0_i32_0 : i32, i32
  }
  func.func @transform_3(%arg0: i32) -> (i32, i32) {
    %c0_i32 = arith.constant 0 : i32
    %c0_i32_0 = arith.constant 0 : i32
    %c0_i32_1 = arith.constant 0 : i32
    return %c0_i32, %c0_i32_0 : i32, i32
  }
  func.func @transform_4(%arg0: i32) -> (i32, i32) {
    %c0_i32 = arith.constant 0 : i32
    %c0_i32_0 = arith.constant 0 : i32
    %c0_i32_1 = arith.constant 0 : i32
    return %c0_i32, %c0_i32_0 : i32, i32
  }
  func.func @transform_5(%arg0: i32) -> (i32, i32) {
    %c0_i32 = arith.constant 0 : i32
    %c0_i32_0 = arith.constant 0 : i32
    %c0_i32_1 = arith.constant 0 : i32
    return %c0_i32, %c0_i32_0 : i32, i32
  }
  func.func @transform_6(%arg0: i32) -> (i32, i32) {
    %c0_i32 = arith.constant 0 : i32
    %c0_i32_0 = arith.constant 0 : i32
    %c0_i32_1 = arith.constant 0 : i32
    return %c0_i32, %c0_i32_0 : i32, i32
  }
  func.func @transform_7(%arg0: i32) -> (i32, i32) {
    %c0_i32 = arith.constant 0 : i32
    %c0_i32_0 = arith.constant 0 : i32
    %c0_i32_1 = arith.constant 0 : i32
    return %c0_i32, %c0_i32_0 : i32, i32
  }
  func.func @transform_8(%arg0: i32) -> (i32, i32) {
    %c0_i32 = arith.constant 0 : i32
    %c0_i32_0 = arith.constant 0 : i32
    return %arg0, %c0_i32 : i32, i32
  }
  func.func @transform_9(%arg0: i32) -> (i32, i32) {
    %c0_i32 = arith.constant 0 : i32
    %c0_i32_0 = arith.constant 0 : i32
    return %arg0, %c0_i32 : i32, i32
  }
}

module attributes {stable_mosaic.version = 11 : i64} {
  func.func @kernel(%arg0: i32, %arg1: memref<128x32xbf16, #tpu.memory_space<vmem>>, %arg2: memref<128x32xbf16, #tpu.memory_space<vmem>>, %arg3: memref<16x1xi32, #tpu.memory_space<vmem>>, %arg4: memref<32x128xbf16, #tpu.memory_space<vmem>>, %arg5: memref<32x128xbf16, #tpu.memory_space<vmem>>, %arg6: memref<32x128xbf16, #tpu.memory_space<vmem>>, %arg7: memref<32x128xbf16, #tpu.memory_space<vmem>>, %arg8: memref<1x128xf32, #tpu.memory_space<vmem>>, %arg9: memref<1x128xf32, #tpu.memory_space<vmem>>, %arg10: memref<32x128xbf16, #tpu.memory_space<vmem>>, %arg11: memref<32x128xbf16, #tpu.memory_space<vmem>>, %arg12: memref<32x128xbf16, #tpu.memory_space<vmem>>, %arg13: memref<32x128xbf16, #tpu.memory_space<vmem>>, %arg14: memref<1x128xf32, #tpu.memory_space<vmem>>, %arg15: memref<128x128xf32, #tpu.memory_space<vmem>>, %arg16: memref<128x128xbf16, #tpu.memory_space<vmem>>, %arg17: memref<128x128xbf16, #tpu.memory_space<vmem>>, %arg18: memref<128x32xbf16, #tpu.memory_space<vmem>>, %arg19: memref<128x32xbf16, #tpu.memory_space<vmem>>) attributes {dimension_semantics = [#tpu.dimension_semantics<parallel>], iteration_bounds = array<i64: 1>, scalar_prefetch = 0 : i64, scratch_operands = 4 : i64, tpu.core_type = #tpu.core_type<tc>, window_params = [{transform_indices = @transform_0, window_bounds = array<i64: 128, 32>}, {transform_indices = @transform_1, window_bounds = array<i64: 128, 32>}, {transform_indices = @transform_2, window_bounds = array<i64: 16, 1>}, {pipeline_mode = #tpu.pipeline_mode<synchronous>, transform_indices = @transform_3, window_bounds = array<i64: 32, 128>}, {pipeline_mode = #tpu.pipeline_mode<synchronous>, transform_indices = @transform_4, window_bounds = array<i64: 32, 128>}, {pipeline_mode = #tpu.pipeline_mode<synchronous>, transform_indices = @transform_5, window_bounds = array<i64: 32, 128>}, {pipeline_mode = #tpu.pipeline_mode<synchronous>, transform_indices = @transform_6, window_bounds = array<i64: 32, 128>}, {pipeline_mode = #tpu.pipeline_mode<synchronous>, transform_indices = @transform_7, window_bounds = array<i64: 1, 128>}, {pipeline_mode = #tpu.pipeline_mode<synchronous>, transform_indices = @transform_8, window_bounds = array<i64: 1, 128>}, {pipeline_mode = #tpu.pipeline_mode<synchronous>, transform_indices = @transform_9, window_bounds = array<i64: 32, 128>}, {pipeline_mode = #tpu.pipeline_mode<synchronous>, transform_indices = @transform_10, window_bounds = array<i64: 32, 128>}, {pipeline_mode = #tpu.pipeline_mode<synchronous>, transform_indices = @transform_11, window_bounds = array<i64: 32, 128>}, {pipeline_mode = #tpu.pipeline_mode<synchronous>, transform_indices = @transform_12, window_bounds = array<i64: 32, 128>}, {pipeline_mode = #tpu.pipeline_mode<synchronous>, transform_indices = @transform_13, window_bounds = array<i64: 1, 128>}, {transform_indices = @transform_14, window_bounds = array<i64: 128, 128>}]} {
    %c0 = arith.constant 0 : index
    %c0_0 = arith.constant 0 : index
    %0 = vector.load %arg8[%c0, %c0_0] : memref<1x128xf32, #tpu.memory_space<vmem>>, vector<1x128xf32>
    %c0_1 = arith.constant 0 : index
    %c0_2 = arith.constant 0 : index
    %1 = vector.load %arg9[%c0_1, %c0_2] : memref<1x128xf32, #tpu.memory_space<vmem>>, vector<1x128xf32>
    %c0_3 = arith.constant 0 : index
    %c0_4 = arith.constant 0 : index
    %2 = vector.load %arg1[%c0_3, %c0_4] : memref<128x32xbf16, #tpu.memory_space<vmem>>, vector<128x32xbf16>
    %c0_5 = arith.constant 0 : index
    %c0_6 = arith.constant 0 : index
    %3 = vector.load %arg4[%c0_5, %c0_6] : memref<32x128xbf16, #tpu.memory_space<vmem>>, vector<32x128xbf16>
    %cst = arith.constant dense<0.000000e+00> : vector<128x128xf32>
    %4 = tpu.matmul %2, %3, %cst {dimension_numbers = #tpu.dot_dimension_numbers<[1], [0], [0], [1], [0, 0, 1, 1], [], []>} : vector<128x32xbf16>, vector<32x128xbf16>, vector<128x128xf32> -> vector<128x128xf32>
    %5 = vector.broadcast %0 : vector<1x128xf32> to vector<128x128xf32>
    %6 = arith.addf %5, %4 : vector<128x128xf32>
    %c0_7 = arith.constant 0 : index
    %c0_8 = arith.constant 0 : index
    %7 = vector.load %arg6[%c0_7, %c0_8] : memref<32x128xbf16, #tpu.memory_space<vmem>>, vector<32x128xbf16>
    %cst_9 = arith.constant dense<0.000000e+00> : vector<128x128xf32>
    %8 = tpu.matmul %2, %7, %cst_9 {dimension_numbers = #tpu.dot_dimension_numbers<[1], [0], [0], [1], [0, 0, 1, 1], [], []>} : vector<128x32xbf16>, vector<32x128xbf16>, vector<128x128xf32> -> vector<128x128xf32>
    %9 = vector.broadcast %1 : vector<1x128xf32> to vector<128x128xf32>
    %10 = arith.addf %9, %8 : vector<128x128xf32>
    %c0_10 = arith.constant 0 : index
    %c0_11 = arith.constant 0 : index
    %11 = vector.load %arg2[%c0_10, %c0_11] : memref<128x32xbf16, #tpu.memory_space<vmem>>, vector<128x32xbf16>
    %c0_12 = arith.constant 0 : index
    %c0_13 = arith.constant 0 : index
    %12 = vector.load %arg5[%c0_12, %c0_13] : memref<32x128xbf16, #tpu.memory_space<vmem>>, vector<32x128xbf16>
    %cst_14 = arith.constant dense<0.000000e+00> : vector<128x128xf32>
    %13 = tpu.matmul %11, %12, %cst_14 {dimension_numbers = #tpu.dot_dimension_numbers<[1], [0], [0], [1], [0, 0, 1, 1], [], []>} : vector<128x32xbf16>, vector<32x128xbf16>, vector<128x128xf32> -> vector<128x128xf32>
    %14 = arith.addf %6, %13 : vector<128x128xf32>
    %c0_15 = arith.constant 0 : index
    %c0_16 = arith.constant 0 : index
    %15 = vector.load %arg7[%c0_15, %c0_16] : memref<32x128xbf16, #tpu.memory_space<vmem>>, vector<32x128xbf16>
    %cst_17 = arith.constant dense<0.000000e+00> : vector<128x128xf32>
    %16 = tpu.matmul %11, %15, %cst_17 {dimension_numbers = #tpu.dot_dimension_numbers<[1], [0], [0], [1], [0, 0, 1, 1], [], []>} : vector<128x32xbf16>, vector<32x128xbf16>, vector<128x128xf32> -> vector<128x128xf32>
    %17 = arith.addf %10, %16 : vector<128x128xf32>
    %18 = arith.truncf %14 : vector<128x128xf32> to vector<128x128xbf16>
    %c0_18 = arith.constant 0 : index
    %c0_19 = arith.constant 0 : index
    %19 = vector.load %arg16[%c0_18, %c0_19] : memref<128x128xbf16, #tpu.memory_space<vmem>>, vector<128x128xbf16>
    tpu.vector_store %arg16[%c0_18, %c0_19], %18 {strides = array<i32>} : memref<128x128xbf16, #tpu.memory_space<vmem>>, vector<128x128xbf16>,
    %20 = arith.truncf %17 : vector<128x128xf32> to vector<128x128xbf16>
    %c0_20 = arith.constant 0 : index
    %c0_21 = arith.constant 0 : index
    %21 = vector.load %arg17[%c0_20, %c0_21] : memref<128x128xbf16, #tpu.memory_space<vmem>>, vector<128x128xbf16>
    tpu.vector_store %arg17[%c0_20, %c0_21], %20 {strides = array<i32>} : memref<128x128xbf16, #tpu.memory_space<vmem>>, vector<128x128xbf16>,
    %c0_22 = arith.constant 0 : index
    %c0_23 = arith.constant 0 : index
    %22 = vector.load %arg3[%c0_22, %c0_23] : memref<16x1xi32, #tpu.memory_space<vmem>>, vector<16x1xi32>
    %c0_24 = arith.constant 0 : index
    %c0_25 = arith.constant 0 : index
    %23 = vector.load %arg10[%c0_24, %c0_25] : memref<32x128xbf16, #tpu.memory_space<vmem>>, vector<32x128xbf16>
    %c0_26 = arith.constant 0 : index
    %c0_27 = arith.constant 0 : index
    %24 = vector.load %arg11[%c0_26, %c0_27] : memref<32x128xbf16, #tpu.memory_space<vmem>>, vector<32x128xbf16>
    %cst_28 = arith.constant 0.000000e+00 : f32
    %25 = vector.broadcast %cst_28 : f32 to vector<16x32xf32>
    %c0_i32 = arith.constant 0 : i32
    %c7_i32 = arith.constant 7 : i32
    %26 = arith.subi %c7_i32, %c0_i32 : i32
    %c16_i32 = arith.constant 16 : i32
    %27 = arith.muli %c0_i32, %c16_i32 : i32
    %28 = tpu.assume_multiple %27, 16 : i32
    %c16_i32_29 = arith.constant 16 : i32
    %29 = arith.muli %26, %c16_i32_29 : i32
    %30 = tpu.assume_multiple %29, 16 : i32
    %31 = vector.broadcast %c0_i32 : i32 to vector<16x1xi32>
    %32 = arith.cmpi sgt, %22, %31 : vector<16x1xi32>
    %33 = arith.index_cast %28 : i32 to index
    %c0_30 = arith.constant 0 : index
    %34 = vector.load %arg16[%33, %c0_30] : memref<128x128xbf16, #tpu.memory_space<vmem>>, vector<16x128xbf16>
    %35 = arith.extf %34 : vector<16x128xbf16> to vector<16x128xf32>
    %36 = arith.truncf %25 : vector<16x32xf32> to vector<16x32xbf16>
    %cst_31 = arith.constant dense<0.000000e+00> : vector<16x128xf32>
    %37 = tpu.matmul %36, %23, %cst_31 {dimension_numbers = #tpu.dot_dimension_numbers<[1], [0], [0], [1], [0, 0, 1, 1], [], []>} : vector<16x32xbf16>, vector<32x128xbf16>, vector<16x128xf32> -> vector<16x128xf32>
    %38 = arith.addf %35, %37 : vector<16x128xf32>
    %39 = vector.extract_strided_slice %38 {offsets = [0, 0], sizes = [16, 96], strides = [1, 1]} : vector<16x128xf32> to vector<16x96xf32>
    %40 = arith.negf %39 : vector<16x96xf32>
    %41 = math.exp %40 : vector<16x96xf32>
    %cst_32 = arith.constant 1.000000e+00 : f32
    %42 = vector.broadcast %cst_32 : f32 to vector<16x96xf32>
    %43 = arith.addf %42, %41 : vector<16x96xf32>
    %44 = arith.divf %42, %43 : vector<16x96xf32>
    %45 = vector.extract_strided_slice %44 {offsets = [0, 0], sizes = [16, 32], strides = [1, 1]} : vector<16x96xf32> to vector<16x32xf32>
    %46 = vector.extract_strided_slice %44 {offsets = [0, 32], sizes = [16, 32], strides = [1, 1]} : vector<16x96xf32> to vector<16x32xf32>
    %47 = vector.extract_strided_slice %44 {offsets = [0, 64], sizes = [16, 32], strides = [1, 1]} : vector<16x96xf32> to vector<16x32xf32>
    %48 = vector.extract_strided_slice %38 {offsets = [0, 96], sizes = [16, 32], strides = [1, 1]} : vector<16x128xf32> to vector<16x32xf32>
    %49 = math.tanh %48 : vector<16x32xf32>
    %50 = arith.mulf %46, %25 : vector<16x32xf32>
    %51 = arith.mulf %45, %49 : vector<16x32xf32>
    %52 = arith.addf %50, %51 : vector<16x32xf32>
    %53 = math.tanh %52 : vector<16x32xf32>
    %54 = arith.mulf %47, %53 : vector<16x32xf32>
    %cst_33 = arith.constant 0.000000e+00 : f32
    %55 = vector.shape_cast %32 : vector<16x1xi1> to vector<16x1xi1>
    %56 = vector.broadcast %55 : vector<16x1xi1> to vector<16x32xi1>
    %57 = vector.broadcast %cst_33 : f32 to vector<16x32xf32>
    %58 = arith.select %56, %54, %57 : vector<16x32xi1>, vector<16x32xf32>
    %59 = arith.truncf %58 : vector<16x32xf32> to vector<16x32xbf16>
    %60 = arith.index_cast %28 : i32 to index
    %c0_34 = arith.constant 0 : index
    %61 = vector.load %arg18[%60, %c0_34] : memref<128x32xbf16, #tpu.memory_space<vmem>>, vector<16x32xbf16>
    tpu.vector_store %arg18[%60, %c0_34], %59 {strides = array<i32>} : memref<128x32xbf16, #tpu.memory_space<vmem>>, vector<16x32xbf16>,
    %62 = vector.shape_cast %32 : vector<16x1xi1> to vector<16x1xi1>
    %63 = vector.broadcast %62 : vector<16x1xi1> to vector<16x32xi1>
    %64 = arith.select %63, %54, %25 : vector<16x32xi1>, vector<16x32xf32>
    %65 = vector.shape_cast %32 : vector<16x1xi1> to vector<16x1xi1>
    %66 = vector.broadcast %65 : vector<16x1xi1> to vector<16x32xi1>
    %67 = arith.select %66, %52, %25 : vector<16x32xi1>, vector<16x32xf32>
    %68 = vector.broadcast %26 : i32 to vector<16x1xi32>
    %69 = arith.cmpi sgt, %22, %68 : vector<16x1xi32>
    %70 = arith.index_cast %30 : i32 to index
    %c0_35 = arith.constant 0 : index
    %71 = vector.load %arg17[%70, %c0_35] : memref<128x128xbf16, #tpu.memory_space<vmem>>, vector<16x128xbf16>
    %72 = arith.extf %71 : vector<16x128xbf16> to vector<16x128xf32>
    %73 = arith.truncf %25 : vector<16x32xf32> to vector<16x32xbf16>
    %cst_36 = arith.constant dense<0.000000e+00> : vector<16x128xf32>
    %74 = tpu.matmul %73, %24, %cst_36 {dimension_numbers = #tpu.dot_dimension_numbers<[1], [0], [0], [1], [0, 0, 1, 1], [], []>} : vector<16x32xbf16>, vector<32x128xbf16>, vector<16x128xf32> -> vector<16x128xf32>
    %75 = arith.addf %72, %74 : vector<16x128xf32>
    %76 = vector.extract_strided_slice %75 {offsets = [0, 0], sizes = [16, 96], strides = [1, 1]} : vector<16x128xf32> to vector<16x96xf32>
    %77 = arith.negf %76 : vector<16x96xf32>
    %78 = math.exp %77 : vector<16x96xf32>
    %cst_37 = arith.constant 1.000000e+00 : f32
    %79 = vector.broadcast %cst_37 : f32 to vector<16x96xf32>
    %80 = arith.addf %79, %78 : vector<16x96xf32>
    %81 = arith.divf %79, %80 : vector<16x96xf32>
    %82 = vector.extract_strided_slice %81 {offsets = [0, 0], sizes = [16, 32], strides = [1, 1]} : vector<16x96xf32> to vector<16x32xf32>
    %83 = vector.extract_strided_slice %81 {offsets = [0, 32], sizes = [16, 32], strides = [1, 1]} : vector<16x96xf32> to vector<16x32xf32>
    %84 = vector.extract_strided_slice %81 {offsets = [0, 64], sizes = [16, 32], strides = [1, 1]} : vector<16x96xf32> to vector<16x32xf32>
    %85 = vector.extract_strided_slice %75 {offsets = [0, 96], sizes = [16, 32], strides = [1, 1]} : vector<16x128xf32> to vector<16x32xf32>
    %86 = math.tanh %85 : vector<16x32xf32>
    %87 = arith.mulf %83, %25 : vector<16x32xf32>
    %88 = arith.mulf %82, %86 : vector<16x32xf32>
    %89 = arith.addf %87, %88 : vector<16x32xf32>
    %90 = math.tanh %89 : vector<16x32xf32>
    %91 = arith.mulf %84, %90 : vector<16x32xf32>
    %cst_38 = arith.constant 0.000000e+00 : f32
    %92 = vector.shape_cast %69 : vector<16x1xi1> to vector<16x1xi1>
    %93 = vector.broadcast %92 : vector<16x1xi1> to vector<16x32xi1>
    %94 = vector.broadcast %cst_38 : f32 to vector<16x32xf32>
    %95 = arith.select %93, %91, %94 : vector<16x32xi1>, vector<16x32xf32>
    %96 = arith.truncf %95 : vector<16x32xf32> to vector<16x32xbf16>
    %97 = arith.index_cast %30 : i32 to index
    %c0_39 = arith.constant 0 : index
    %98 = vector.load %arg19[%97, %c0_39] : memref<128x32xbf16, #tpu.memory_space<vmem>>, vector<16x32xbf16>
    tpu.vector_store %arg19[%97, %c0_39], %96 {strides = array<i32>} : memref<128x32xbf16, #tpu.memory_space<vmem>>, vector<16x32xbf16>,
    %99 = vector.shape_cast %69 : vector<16x1xi1> to vector<16x1xi1>
    %100 = vector.broadcast %99 : vector<16x1xi1> to vector<16x32xi1>
    %101 = arith.select %100, %91, %25 : vector<16x32xi1>, vector<16x32xf32>
    %102 = vector.shape_cast %69 : vector<16x1xi1> to vector<16x1xi1>
    %103 = vector.broadcast %102 : vector<16x1xi1> to vector<16x32xi1>
    %104 = arith.select %103, %89, %25 : vector<16x32xi1>, vector<16x32xf32>
    %c1_i32 = arith.constant 1 : i32
    %c7_i32_40 = arith.constant 7 : i32
    %105 = arith.subi %c7_i32_40, %c1_i32 : i32
    %c16_i32_41 = arith.constant 16 : i32
    %106 = arith.muli %c1_i32, %c16_i32_41 : i32
    %107 = tpu.assume_multiple %106, 16 : i32
    %c16_i32_42 = arith.constant 16 : i32
    %108 = arith.muli %105, %c16_i32_42 : i32
    %109 = tpu.assume_multiple %108, 16 : i32
    %110 = vector.broadcast %c1_i32 : i32 to vector<16x1xi32>
    %111 = arith.cmpi sgt, %22, %110 : vector<16x1xi32>
    %112 = arith.index_cast %107 : i32 to index
    %c0_43 = arith.constant 0 : index
    %113 = vector.load %arg16[%112, %c0_43] : memref<128x128xbf16, #tpu.memory_space<vmem>>, vector<16x128xbf16>
    %114 = arith.extf %113 : vector<16x128xbf16> to vector<16x128xf32>
    %115 = arith.truncf %64 : vector<16x32xf32> to vector<16x32xbf16>
    %cst_44 = arith.constant dense<0.000000e+00> : vector<16x128xf32>
    %116 = tpu.matmul %115, %23, %cst_44 {dimension_numbers = #tpu.dot_dimension_numbers<[1], [0], [0], [1], [0, 0, 1, 1], [], []>} : vector<16x32xbf16>, vector<32x128xbf16>, vector<16x128xf32> -> vector<16x128xf32>
    %117 = arith.addf %114, %116 : vector<16x128xf32>
    %118 = vector.extract_strided_slice %117 {offsets = [0, 0], sizes = [16, 96], strides = [1, 1]} : vector<16x128xf32> to vector<16x96xf32>
    %119 = arith.negf %118 : vector<16x96xf32>
    %120 = math.exp %119 : vector<16x96xf32>
    %cst_45 = arith.constant 1.000000e+00 : f32
    %121 = vector.broadcast %cst_45 : f32 to vector<16x96xf32>
    %122 = arith.addf %121, %120 : vector<16x96xf32>
    %123 = arith.divf %121, %122 : vector<16x96xf32>
    %124 = vector.extract_strided_slice %123 {offsets = [0, 0], sizes = [16, 32], strides = [1, 1]} : vector<16x96xf32> to vector<16x32xf32>
    %125 = vector.extract_strided_slice %123 {offsets = [0, 32], sizes = [16, 32], strides = [1, 1]} : vector<16x96xf32> to vector<16x32xf32>
    %126 = vector.extract_strided_slice %123 {offsets = [0, 64], sizes = [16, 32], strides = [1, 1]} : vector<16x96xf32> to vector<16x32xf32>
    %127 = vector.extract_strided_slice %117 {offsets = [0, 96], sizes = [16, 32], strides = [1, 1]} : vector<16x128xf32> to vector<16x32xf32>
    %128 = math.tanh %127 : vector<16x32xf32>
    %129 = arith.mulf %125, %67 : vector<16x32xf32>
    %130 = arith.mulf %124, %128 : vector<16x32xf32>
    %131 = arith.addf %129, %130 : vector<16x32xf32>
    %132 = math.tanh %131 : vector<16x32xf32>
    %133 = arith.mulf %126, %132 : vector<16x32xf32>
    %cst_46 = arith.constant 0.000000e+00 : f32
    %134 = vector.shape_cast %111 : vector<16x1xi1> to vector<16x1xi1>
    %135 = vector.broadcast %134 : vector<16x1xi1> to vector<16x32xi1>
    %136 = vector.broadcast %cst_46 : f32 to vector<16x32xf32>
    %137 = arith.select %135, %133, %136 : vector<16x32xi1>, vector<16x32xf32>
    %138 = arith.truncf %137 : vector<16x32xf32> to vector<16x32xbf16>
    %139 = arith.index_cast %107 : i32 to index
    %c0_47 = arith.constant 0 : index
    %140 = vector.load %arg18[%139, %c0_47] : memref<128x32xbf16, #tpu.memory_space<vmem>>, vector<16x32xbf16>
    tpu.vector_store %arg18[%139, %c0_47], %138 {strides = array<i32>} : memref<128x32xbf16, #tpu.memory_space<vmem>>, vector<16x32xbf16>,
    %141 = vector.shape_cast %111 : vector<16x1xi1> to vector<16x1xi1>
    %142 = vector.broadcast %141 : vector<16x1xi1> to vector<16x32xi1>
    %143 = arith.select %142, %133, %64 : vector<16x32xi1>, vector<16x32xf32>
    %144 = vector.shape_cast %111 : vector<16x1xi1> to vector<16x1xi1>
    %145 = vector.broadcast %144 : vector<16x1xi1> to vector<16x32xi1>
    %146 = arith.select %145, %131, %67 : vector<16x32xi1>, vector<16x32xf32>
    %147 = vector.broadcast %105 : i32 to vector<16x1xi32>
    %148 = arith.cmpi sgt, %22, %147 : vector<16x1xi32>
    %149 = arith.index_cast %109 : i32 to index
    %c0_48 = arith.constant 0 : index
    %150 = vector.load %arg17[%149, %c0_48] : memref<128x128xbf16, #tpu.memory_space<vmem>>, vector<16x128xbf16>
    %151 = arith.extf %150 : vector<16x128xbf16> to vector<16x128xf32>
    %152 = arith.truncf %101 : vector<16x32xf32> to vector<16x32xbf16>
    %cst_49 = arith.constant dense<0.000000e+00> : vector<16x128xf32>
    %153 = tpu.matmul %152, %24, %cst_49 {dimension_numbers = #tpu.dot_dimension_numbers<[1], [0], [0], [1], [0, 0, 1, 1], [], []>} : vector<16x32xbf16>, vector<32x128xbf16>, vector<16x128xf32> -> vector<16x128xf32>
    %154 = arith.addf %151, %153 : vector<16x128xf32>
    %155 = vector.extract_strided_slice %154 {offsets = [0, 0], sizes = [16, 96], strides = [1, 1]} : vector<16x128xf32> to vector<16x96xf32>
    %156 = arith.negf %155 : vector<16x96xf32>
    %157 = math.exp %156 : vector<16x96xf32>
    %cst_50 = arith.constant 1.000000e+00 : f32
    %158 = vector.broadcast %cst_50 : f32 to vector<16x96xf32>
    %159 = arith.addf %158, %157 : vector<16x96xf32>
    %160 = arith.divf %158, %159 : vector<16x96xf32>
    %161 = vector.extract_strided_slice %160 {offsets = [0, 0], sizes = [16, 32], strides = [1, 1]} : vector<16x96xf32> to vector<16x32xf32>
    %162 = vector.extract_strided_slice %160 {offsets = [0, 32], sizes = [16, 32], strides = [1, 1]} : vector<16x96xf32> to vector<16x32xf32>
    %163 = vector.extract_strided_slice %160 {offsets = [0, 64], sizes = [16, 32], strides = [1, 1]} : vector<16x96xf32> to vector<16x32xf32>
    %164 = vector.extract_strided_slice %154 {offsets = [0, 96], sizes = [16, 32], strides = [1, 1]} : vector<16x128xf32> to vector<16x32xf32>
    %165 = math.tanh %164 : vector<16x32xf32>
    %166 = arith.mulf %162, %104 : vector<16x32xf32>
    %167 = arith.mulf %161, %165 : vector<16x32xf32>
    %168 = arith.addf %166, %167 : vector<16x32xf32>
    %169 = math.tanh %168 : vector<16x32xf32>
    %170 = arith.mulf %163, %169 : vector<16x32xf32>
    %cst_51 = arith.constant 0.000000e+00 : f32
    %171 = vector.shape_cast %148 : vector<16x1xi1> to vector<16x1xi1>
    %172 = vector.broadcast %171 : vector<16x1xi1> to vector<16x32xi1>
    %173 = vector.broadcast %cst_51 : f32 to vector<16x32xf32>
    %174 = arith.select %172, %170, %173 : vector<16x32xi1>, vector<16x32xf32>
    %175 = arith.truncf %174 : vector<16x32xf32> to vector<16x32xbf16>
    %176 = arith.index_cast %109 : i32 to index
    %c0_52 = arith.constant 0 : index
    %177 = vector.load %arg19[%176, %c0_52] : memref<128x32xbf16, #tpu.memory_space<vmem>>, vector<16x32xbf16>
    tpu.vector_store %arg19[%176, %c0_52], %175 {strides = array<i32>} : memref<128x32xbf16, #tpu.memory_space<vmem>>, vector<16x32xbf16>,
    %178 = vector.shape_cast %148 : vector<16x1xi1> to vector<16x1xi1>
    %179 = vector.broadcast %178 : vector<16x1xi1> to vector<16x32xi1>
    %180 = arith.select %179, %170, %101 : vector<16x32xi1>, vector<16x32xf32>
    %181 = vector.shape_cast %148 : vector<16x1xi1> to vector<16x1xi1>
    %182 = vector.broadcast %181 : vector<16x1xi1> to vector<16x32xi1>
    %183 = arith.select %182, %168, %104 : vector<16x32xi1>, vector<16x32xf32>
    %c2_i32 = arith.constant 2 : i32
    %c7_i32_53 = arith.constant 7 : i32
    %184 = arith.subi %c7_i32_53, %c2_i32 : i32
    %c16_i32_54 = arith.constant 16 : i32
    %185 = arith.muli %c2_i32, %c16_i32_54 : i32
    %186 = tpu.assume_multiple %185, 16 : i32
    %c16_i32_55 = arith.constant 16 : i32
    %187 = arith.muli %184, %c16_i32_55 : i32
    %188 = tpu.assume_multiple %187, 16 : i32
    %189 = vector.broadcast %c2_i32 : i32 to vector<16x1xi32>
    %190 = arith.cmpi sgt, %22, %189 : vector<16x1xi32>
    %191 = arith.index_cast %186 : i32 to index
    %c0_56 = arith.constant 0 : index
    %192 = vector.load %arg16[%191, %c0_56] : memref<128x128xbf16, #tpu.memory_space<vmem>>, vector<16x128xbf16>
    %193 = arith.extf %192 : vector<16x128xbf16> to vector<16x128xf32>
    %194 = arith.truncf %143 : vector<16x32xf32> to vector<16x32xbf16>
    %cst_57 = arith.constant dense<0.000000e+00> : vector<16x128xf32>
    %195 = tpu.matmul %194, %23, %cst_57 {dimension_numbers = #tpu.dot_dimension_numbers<[1], [0], [0], [1], [0, 0, 1, 1], [], []>} : vector<16x32xbf16>, vector<32x128xbf16>, vector<16x128xf32> -> vector<16x128xf32>
    %196 = arith.addf %193, %195 : vector<16x128xf32>
    %197 = vector.extract_strided_slice %196 {offsets = [0, 0], sizes = [16, 96], strides = [1, 1]} : vector<16x128xf32> to vector<16x96xf32>
    %198 = arith.negf %197 : vector<16x96xf32>
    %199 = math.exp %198 : vector<16x96xf32>
    %cst_58 = arith.constant 1.000000e+00 : f32
    %200 = vector.broadcast %cst_58 : f32 to vector<16x96xf32>
    %201 = arith.addf %200, %199 : vector<16x96xf32>
    %202 = arith.divf %200, %201 : vector<16x96xf32>
    %203 = vector.extract_strided_slice %202 {offsets = [0, 0], sizes = [16, 32], strides = [1, 1]} : vector<16x96xf32> to vector<16x32xf32>
    %204 = vector.extract_strided_slice %202 {offsets = [0, 32], sizes = [16, 32], strides = [1, 1]} : vector<16x96xf32> to vector<16x32xf32>
    %205 = vector.extract_strided_slice %202 {offsets = [0, 64], sizes = [16, 32], strides = [1, 1]} : vector<16x96xf32> to vector<16x32xf32>
    %206 = vector.extract_strided_slice %196 {offsets = [0, 96], sizes = [16, 32], strides = [1, 1]} : vector<16x128xf32> to vector<16x32xf32>
    %207 = math.tanh %206 : vector<16x32xf32>
    %208 = arith.mulf %204, %146 : vector<16x32xf32>
    %209 = arith.mulf %203, %207 : vector<16x32xf32>
    %210 = arith.addf %208, %209 : vector<16x32xf32>
    %211 = math.tanh %210 : vector<16x32xf32>
    %212 = arith.mulf %205, %211 : vector<16x32xf32>
    %cst_59 = arith.constant 0.000000e+00 : f32
    %213 = vector.shape_cast %190 : vector<16x1xi1> to vector<16x1xi1>
    %214 = vector.broadcast %213 : vector<16x1xi1> to vector<16x32xi1>
    %215 = vector.broadcast %cst_59 : f32 to vector<16x32xf32>
    %216 = arith.select %214, %212, %215 : vector<16x32xi1>, vector<16x32xf32>
    %217 = arith.truncf %216 : vector<16x32xf32> to vector<16x32xbf16>
    %218 = arith.index_cast %186 : i32 to index
    %c0_60 = arith.constant 0 : index
    %219 = vector.load %arg18[%218, %c0_60] : memref<128x32xbf16, #tpu.memory_space<vmem>>, vector<16x32xbf16>
    tpu.vector_store %arg18[%218, %c0_60], %217 {strides = array<i32>} : memref<128x32xbf16, #tpu.memory_space<vmem>>, vector<16x32xbf16>,
    %220 = vector.shape_cast %190 : vector<16x1xi1> to vector<16x1xi1>
    %221 = vector.broadcast %220 : vector<16x1xi1> to vector<16x32xi1>
    %222 = arith.select %221, %212, %143 : vector<16x32xi1>, vector<16x32xf32>
    %223 = vector.shape_cast %190 : vector<16x1xi1> to vector<16x1xi1>
    %224 = vector.broadcast %223 : vector<16x1xi1> to vector<16x32xi1>
    %225 = arith.select %224, %210, %146 : vector<16x32xi1>, vector<16x32xf32>
    %226 = vector.broadcast %184 : i32 to vector<16x1xi32>
    %227 = arith.cmpi sgt, %22, %226 : vector<16x1xi32>
    %228 = arith.index_cast %188 : i32 to index
    %c0_61 = arith.constant 0 : index
    %229 = vector.load %arg17[%228, %c0_61] : memref<128x128xbf16, #tpu.memory_space<vmem>>, vector<16x128xbf16>
    %230 = arith.extf %229 : vector<16x128xbf16> to vector<16x128xf32>
    %231 = arith.truncf %180 : vector<16x32xf32> to vector<16x32xbf16>
    %cst_62 = arith.constant dense<0.000000e+00> : vector<16x128xf32>
    %232 = tpu.matmul %231, %24, %cst_62 {dimension_numbers = #tpu.dot_dimension_numbers<[1], [0], [0], [1], [0, 0, 1, 1], [], []>} : vector<16x32xbf16>, vector<32x128xbf16>, vector<16x128xf32> -> vector<16x128xf32>
    %233 = arith.addf %230, %232 : vector<16x128xf32>
    %234 = vector.extract_strided_slice %233 {offsets = [0, 0], sizes = [16, 96], strides = [1, 1]} : vector<16x128xf32> to vector<16x96xf32>
    %235 = arith.negf %234 : vector<16x96xf32>
    %236 = math.exp %235 : vector<16x96xf32>
    %cst_63 = arith.constant 1.000000e+00 : f32
    %237 = vector.broadcast %cst_63 : f32 to vector<16x96xf32>
    %238 = arith.addf %237, %236 : vector<16x96xf32>
    %239 = arith.divf %237, %238 : vector<16x96xf32>
    %240 = vector.extract_strided_slice %239 {offsets = [0, 0], sizes = [16, 32], strides = [1, 1]} : vector<16x96xf32> to vector<16x32xf32>
    %241 = vector.extract_strided_slice %239 {offsets = [0, 32], sizes = [16, 32], strides = [1, 1]} : vector<16x96xf32> to vector<16x32xf32>
    %242 = vector.extract_strided_slice %239 {offsets = [0, 64], sizes = [16, 32], strides = [1, 1]} : vector<16x96xf32> to vector<16x32xf32>
    %243 = vector.extract_strided_slice %233 {offsets = [0, 96], sizes = [16, 32], strides = [1, 1]} : vector<16x128xf32> to vector<16x32xf32>
    %244 = math.tanh %243 : vector<16x32xf32>
    %245 = arith.mulf %241, %183 : vector<16x32xf32>
    %246 = arith.mulf %240, %244 : vector<16x32xf32>
    %247 = arith.addf %245, %246 : vector<16x32xf32>
    %248 = math.tanh %247 : vector<16x32xf32>
    %249 = arith.mulf %242, %248 : vector<16x32xf32>
    %cst_64 = arith.constant 0.000000e+00 : f32
    %250 = vector.shape_cast %227 : vector<16x1xi1> to vector<16x1xi1>
    %251 = vector.broadcast %250 : vector<16x1xi1> to vector<16x32xi1>
    %252 = vector.broadcast %cst_64 : f32 to vector<16x32xf32>
    %253 = arith.select %251, %249, %252 : vector<16x32xi1>, vector<16x32xf32>
    %254 = arith.truncf %253 : vector<16x32xf32> to vector<16x32xbf16>
    %255 = arith.index_cast %188 : i32 to index
    %c0_65 = arith.constant 0 : index
    %256 = vector.load %arg19[%255, %c0_65] : memref<128x32xbf16, #tpu.memory_space<vmem>>, vector<16x32xbf16>
    tpu.vector_store %arg19[%255, %c0_65], %254 {strides = array<i32>} : memref<128x32xbf16, #tpu.memory_space<vmem>>, vector<16x32xbf16>,
    %257 = vector.shape_cast %227 : vector<16x1xi1> to vector<16x1xi1>
    %258 = vector.broadcast %257 : vector<16x1xi1> to vector<16x32xi1>
    %259 = arith.select %258, %249, %180 : vector<16x32xi1>, vector<16x32xf32>
    %260 = vector.shape_cast %227 : vector<16x1xi1> to vector<16x1xi1>
    %261 = vector.broadcast %260 : vector<16x1xi1> to vector<16x32xi1>
    %262 = arith.select %261, %247, %183 : vector<16x32xi1>, vector<16x32xf32>
    %c3_i32 = arith.constant 3 : i32
    %c7_i32_66 = arith.constant 7 : i32
    %263 = arith.subi %c7_i32_66, %c3_i32 : i32
    %c16_i32_67 = arith.constant 16 : i32
    %264 = arith.muli %c3_i32, %c16_i32_67 : i32
    %265 = tpu.assume_multiple %264, 16 : i32
    %c16_i32_68 = arith.constant 16 : i32
    %266 = arith.muli %263, %c16_i32_68 : i32
    %267 = tpu.assume_multiple %266, 16 : i32
    %268 = vector.broadcast %c3_i32 : i32 to vector<16x1xi32>
    %269 = arith.cmpi sgt, %22, %268 : vector<16x1xi32>
    %270 = arith.index_cast %265 : i32 to index
    %c0_69 = arith.constant 0 : index
    %271 = vector.load %arg16[%270, %c0_69] : memref<128x128xbf16, #tpu.memory_space<vmem>>, vector<16x128xbf16>
    %272 = arith.extf %271 : vector<16x128xbf16> to vector<16x128xf32>
    %273 = arith.truncf %222 : vector<16x32xf32> to vector<16x32xbf16>
    %cst_70 = arith.constant dense<0.000000e+00> : vector<16x128xf32>
    %274 = tpu.matmul %273, %23, %cst_70 {dimension_numbers = #tpu.dot_dimension_numbers<[1], [0], [0], [1], [0, 0, 1, 1], [], []>} : vector<16x32xbf16>, vector<32x128xbf16>, vector<16x128xf32> -> vector<16x128xf32>
    %275 = arith.addf %272, %274 : vector<16x128xf32>
    %276 = vector.extract_strided_slice %275 {offsets = [0, 0], sizes = [16, 96], strides = [1, 1]} : vector<16x128xf32> to vector<16x96xf32>
    %277 = arith.negf %276 : vector<16x96xf32>
    %278 = math.exp %277 : vector<16x96xf32>
    %cst_71 = arith.constant 1.000000e+00 : f32
    %279 = vector.broadcast %cst_71 : f32 to vector<16x96xf32>
    %280 = arith.addf %279, %278 : vector<16x96xf32>
    %281 = arith.divf %279, %280 : vector<16x96xf32>
    %282 = vector.extract_strided_slice %281 {offsets = [0, 0], sizes = [16, 32], strides = [1, 1]} : vector<16x96xf32> to vector<16x32xf32>
    %283 = vector.extract_strided_slice %281 {offsets = [0, 32], sizes = [16, 32], strides = [1, 1]} : vector<16x96xf32> to vector<16x32xf32>
    %284 = vector.extract_strided_slice %281 {offsets = [0, 64], sizes = [16, 32], strides = [1, 1]} : vector<16x96xf32> to vector<16x32xf32>
    %285 = vector.extract_strided_slice %275 {offsets = [0, 96], sizes = [16, 32], strides = [1, 1]} : vector<16x128xf32> to vector<16x32xf32>
    %286 = math.tanh %285 : vector<16x32xf32>
    %287 = arith.mulf %283, %225 : vector<16x32xf32>
    %288 = arith.mulf %282, %286 : vector<16x32xf32>
    %289 = arith.addf %287, %288 : vector<16x32xf32>
    %290 = math.tanh %289 : vector<16x32xf32>
    %291 = arith.mulf %284, %290 : vector<16x32xf32>
    %cst_72 = arith.constant 0.000000e+00 : f32
    %292 = vector.shape_cast %269 : vector<16x1xi1> to vector<16x1xi1>
    %293 = vector.broadcast %292 : vector<16x1xi1> to vector<16x32xi1>
    %294 = vector.broadcast %cst_72 : f32 to vector<16x32xf32>
    %295 = arith.select %293, %291, %294 : vector<16x32xi1>, vector<16x32xf32>
    %296 = arith.truncf %295 : vector<16x32xf32> to vector<16x32xbf16>
    %297 = arith.index_cast %265 : i32 to index
    %c0_73 = arith.constant 0 : index
    %298 = vector.load %arg18[%297, %c0_73] : memref<128x32xbf16, #tpu.memory_space<vmem>>, vector<16x32xbf16>
    tpu.vector_store %arg18[%297, %c0_73], %296 {strides = array<i32>} : memref<128x32xbf16, #tpu.memory_space<vmem>>, vector<16x32xbf16>,
    %299 = vector.shape_cast %269 : vector<16x1xi1> to vector<16x1xi1>
    %300 = vector.broadcast %299 : vector<16x1xi1> to vector<16x32xi1>
    %301 = arith.select %300, %291, %222 : vector<16x32xi1>, vector<16x32xf32>
    %302 = vector.shape_cast %269 : vector<16x1xi1> to vector<16x1xi1>
    %303 = vector.broadcast %302 : vector<16x1xi1> to vector<16x32xi1>
    %304 = arith.select %303, %289, %225 : vector<16x32xi1>, vector<16x32xf32>
    %305 = vector.broadcast %263 : i32 to vector<16x1xi32>
    %306 = arith.cmpi sgt, %22, %305 : vector<16x1xi32>
    %307 = arith.index_cast %267 : i32 to index
    %c0_74 = arith.constant 0 : index
    %308 = vector.load %arg17[%307, %c0_74] : memref<128x128xbf16, #tpu.memory_space<vmem>>, vector<16x128xbf16>
    %309 = arith.extf %308 : vector<16x128xbf16> to vector<16x128xf32>
    %310 = arith.truncf %259 : vector<16x32xf32> to vector<16x32xbf16>
    %cst_75 = arith.constant dense<0.000000e+00> : vector<16x128xf32>
    %311 = tpu.matmul %310, %24, %cst_75 {dimension_numbers = #tpu.dot_dimension_numbers<[1], [0], [0], [1], [0, 0, 1, 1], [], []>} : vector<16x32xbf16>, vector<32x128xbf16>, vector<16x128xf32> -> vector<16x128xf32>
    %312 = arith.addf %309, %311 : vector<16x128xf32>
    %313 = vector.extract_strided_slice %312 {offsets = [0, 0], sizes = [16, 96], strides = [1, 1]} : vector<16x128xf32> to vector<16x96xf32>
    %314 = arith.negf %313 : vector<16x96xf32>
    %315 = math.exp %314 : vector<16x96xf32>
    %cst_76 = arith.constant 1.000000e+00 : f32
    %316 = vector.broadcast %cst_76 : f32 to vector<16x96xf32>
    %317 = arith.addf %316, %315 : vector<16x96xf32>
    %318 = arith.divf %316, %317 : vector<16x96xf32>
    %319 = vector.extract_strided_slice %318 {offsets = [0, 0], sizes = [16, 32], strides = [1, 1]} : vector<16x96xf32> to vector<16x32xf32>
    %320 = vector.extract_strided_slice %318 {offsets = [0, 32], sizes = [16, 32], strides = [1, 1]} : vector<16x96xf32> to vector<16x32xf32>
    %321 = vector.extract_strided_slice %318 {offsets = [0, 64], sizes = [16, 32], strides = [1, 1]} : vector<16x96xf32> to vector<16x32xf32>
    %322 = vector.extract_strided_slice %312 {offsets = [0, 96], sizes = [16, 32], strides = [1, 1]} : vector<16x128xf32> to vector<16x32xf32>
    %323 = math.tanh %322 : vector<16x32xf32>
    %324 = arith.mulf %320, %262 : vector<16x32xf32>
    %325 = arith.mulf %319, %323 : vector<16x32xf32>
    %326 = arith.addf %324, %325 : vector<16x32xf32>
    %327 = math.tanh %326 : vector<16x32xf32>
    %328 = arith.mulf %321, %327 : vector<16x32xf32>
    %cst_77 = arith.constant 0.000000e+00 : f32
    %329 = vector.shape_cast %306 : vector<16x1xi1> to vector<16x1xi1>
    %330 = vector.broadcast %329 : vector<16x1xi1> to vector<16x32xi1>
    %331 = vector.broadcast %cst_77 : f32 to vector<16x32xf32>
    %332 = arith.select %330, %328, %331 : vector<16x32xi1>, vector<16x32xf32>
    %333 = arith.truncf %332 : vector<16x32xf32> to vector<16x32xbf16>
    %334 = arith.index_cast %267 : i32 to index
    %c0_78 = arith.constant 0 : index
    %335 = vector.load %arg19[%334, %c0_78] : memref<128x32xbf16, #tpu.memory_space<vmem>>, vector<16x32xbf16>
    tpu.vector_store %arg19[%334, %c0_78], %333 {strides = array<i32>} : memref<128x32xbf16, #tpu.memory_space<vmem>>, vector<16x32xbf16>,
    %336 = vector.shape_cast %306 : vector<16x1xi1> to vector<16x1xi1>
    %337 = vector.broadcast %336 : vector<16x1xi1> to vector<16x32xi1>
    %338 = arith.select %337, %328, %259 : vector<16x32xi1>, vector<16x32xf32>
    %339 = vector.shape_cast %306 : vector<16x1xi1> to vector<16x1xi1>
    %340 = vector.broadcast %339 : vector<16x1xi1> to vector<16x32xi1>
    %341 = arith.select %340, %326, %262 : vector<16x32xi1>, vector<16x32xf32>
    %c4_i32 = arith.constant 4 : i32
    %c7_i32_79 = arith.constant 7 : i32
    %342 = arith.subi %c7_i32_79, %c4_i32 : i32
    %c16_i32_80 = arith.constant 16 : i32
    %343 = arith.muli %c4_i32, %c16_i32_80 : i32
    %344 = tpu.assume_multiple %343, 16 : i32
    %c16_i32_81 = arith.constant 16 : i32
    %345 = arith.muli %342, %c16_i32_81 : i32
    %346 = tpu.assume_multiple %345, 16 : i32
    %347 = vector.broadcast %c4_i32 : i32 to vector<16x1xi32>
    %348 = arith.cmpi sgt, %22, %347 : vector<16x1xi32>
    %349 = arith.index_cast %344 : i32 to index
    %c0_82 = arith.constant 0 : index
    %350 = vector.load %arg16[%349, %c0_82] : memref<128x128xbf16, #tpu.memory_space<vmem>>, vector<16x128xbf16>
    %351 = arith.extf %350 : vector<16x128xbf16> to vector<16x128xf32>
    %352 = arith.truncf %301 : vector<16x32xf32> to vector<16x32xbf16>
    %cst_83 = arith.constant dense<0.000000e+00> : vector<16x128xf32>
    %353 = tpu.matmul %352, %23, %cst_83 {dimension_numbers = #tpu.dot_dimension_numbers<[1], [0], [0], [1], [0, 0, 1, 1], [], []>} : vector<16x32xbf16>, vector<32x128xbf16>, vector<16x128xf32> -> vector<16x128xf32>
    %354 = arith.addf %351, %353 : vector<16x128xf32>
    %355 = vector.extract_strided_slice %354 {offsets = [0, 0], sizes = [16, 96], strides = [1, 1]} : vector<16x128xf32> to vector<16x96xf32>
    %356 = arith.negf %355 : vector<16x96xf32>
    %357 = math.exp %356 : vector<16x96xf32>
    %cst_84 = arith.constant 1.000000e+00 : f32
    %358 = vector.broadcast %cst_84 : f32 to vector<16x96xf32>
    %359 = arith.addf %358, %357 : vector<16x96xf32>
    %360 = arith.divf %358, %359 : vector<16x96xf32>
    %361 = vector.extract_strided_slice %360 {offsets = [0, 0], sizes = [16, 32], strides = [1, 1]} : vector<16x96xf32> to vector<16x32xf32>
    %362 = vector.extract_strided_slice %360 {offsets = [0, 32], sizes = [16, 32], strides = [1, 1]} : vector<16x96xf32> to vector<16x32xf32>
    %363 = vector.extract_strided_slice %360 {offsets = [0, 64], sizes = [16, 32], strides = [1, 1]} : vector<16x96xf32> to vector<16x32xf32>
    %364 = vector.extract_strided_slice %354 {offsets = [0, 96], sizes = [16, 32], strides = [1, 1]} : vector<16x128xf32> to vector<16x32xf32>
    %365 = math.tanh %364 : vector<16x32xf32>
    %366 = arith.mulf %362, %304 : vector<16x32xf32>
    %367 = arith.mulf %361, %365 : vector<16x32xf32>
    %368 = arith.addf %366, %367 : vector<16x32xf32>
    %369 = math.tanh %368 : vector<16x32xf32>
    %370 = arith.mulf %363, %369 : vector<16x32xf32>
    %cst_85 = arith.constant 0.000000e+00 : f32
    %371 = vector.shape_cast %348 : vector<16x1xi1> to vector<16x1xi1>
    %372 = vector.broadcast %371 : vector<16x1xi1> to vector<16x32xi1>
    %373 = vector.broadcast %cst_85 : f32 to vector<16x32xf32>
    %374 = arith.select %372, %370, %373 : vector<16x32xi1>, vector<16x32xf32>
    %375 = arith.truncf %374 : vector<16x32xf32> to vector<16x32xbf16>
    %376 = arith.index_cast %344 : i32 to index
    %c0_86 = arith.constant 0 : index
    %377 = vector.load %arg18[%376, %c0_86] : memref<128x32xbf16, #tpu.memory_space<vmem>>, vector<16x32xbf16>
    tpu.vector_store %arg18[%376, %c0_86], %375 {strides = array<i32>} : memref<128x32xbf16, #tpu.memory_space<vmem>>, vector<16x32xbf16>,
    %378 = vector.shape_cast %348 : vector<16x1xi1> to vector<16x1xi1>
    %379 = vector.broadcast %378 : vector<16x1xi1> to vector<16x32xi1>
    %380 = arith.select %379, %370, %301 : vector<16x32xi1>, vector<16x32xf32>
    %381 = vector.shape_cast %348 : vector<16x1xi1> to vector<16x1xi1>
    %382 = vector.broadcast %381 : vector<16x1xi1> to vector<16x32xi1>
    %383 = arith.select %382, %368, %304 : vector<16x32xi1>, vector<16x32xf32>
    %384 = vector.broadcast %342 : i32 to vector<16x1xi32>
    %385 = arith.cmpi sgt, %22, %384 : vector<16x1xi32>
    %386 = arith.index_cast %346 : i32 to index
    %c0_87 = arith.constant 0 : index
    %387 = vector.load %arg17[%386, %c0_87] : memref<128x128xbf16, #tpu.memory_space<vmem>>, vector<16x128xbf16>
    %388 = arith.extf %387 : vector<16x128xbf16> to vector<16x128xf32>
    %389 = arith.truncf %338 : vector<16x32xf32> to vector<16x32xbf16>
    %cst_88 = arith.constant dense<0.000000e+00> : vector<16x128xf32>
    %390 = tpu.matmul %389, %24, %cst_88 {dimension_numbers = #tpu.dot_dimension_numbers<[1], [0], [0], [1], [0, 0, 1, 1], [], []>} : vector<16x32xbf16>, vector<32x128xbf16>, vector<16x128xf32> -> vector<16x128xf32>
    %391 = arith.addf %388, %390 : vector<16x128xf32>
    %392 = vector.extract_strided_slice %391 {offsets = [0, 0], sizes = [16, 96], strides = [1, 1]} : vector<16x128xf32> to vector<16x96xf32>
    %393 = arith.negf %392 : vector<16x96xf32>
    %394 = math.exp %393 : vector<16x96xf32>
    %cst_89 = arith.constant 1.000000e+00 : f32
    %395 = vector.broadcast %cst_89 : f32 to vector<16x96xf32>
    %396 = arith.addf %395, %394 : vector<16x96xf32>
    %397 = arith.divf %395, %396 : vector<16x96xf32>
    %398 = vector.extract_strided_slice %397 {offsets = [0, 0], sizes = [16, 32], strides = [1, 1]} : vector<16x96xf32> to vector<16x32xf32>
    %399 = vector.extract_strided_slice %397 {offsets = [0, 32], sizes = [16, 32], strides = [1, 1]} : vector<16x96xf32> to vector<16x32xf32>
    %400 = vector.extract_strided_slice %397 {offsets = [0, 64], sizes = [16, 32], strides = [1, 1]} : vector<16x96xf32> to vector<16x32xf32>
    %401 = vector.extract_strided_slice %391 {offsets = [0, 96], sizes = [16, 32], strides = [1, 1]} : vector<16x128xf32> to vector<16x32xf32>
    %402 = math.tanh %401 : vector<16x32xf32>
    %403 = arith.mulf %399, %341 : vector<16x32xf32>
    %404 = arith.mulf %398, %402 : vector<16x32xf32>
    %405 = arith.addf %403, %404 : vector<16x32xf32>
    %406 = math.tanh %405 : vector<16x32xf32>
    %407 = arith.mulf %400, %406 : vector<16x32xf32>
    %cst_90 = arith.constant 0.000000e+00 : f32
    %408 = vector.shape_cast %385 : vector<16x1xi1> to vector<16x1xi1>
    %409 = vector.broadcast %408 : vector<16x1xi1> to vector<16x32xi1>
    %410 = vector.broadcast %cst_90 : f32 to vector<16x32xf32>
    %411 = arith.select %409, %407, %410 : vector<16x32xi1>, vector<16x32xf32>
    %412 = arith.truncf %411 : vector<16x32xf32> to vector<16x32xbf16>
    %413 = arith.index_cast %346 : i32 to index
    %c0_91 = arith.constant 0 : index
    %414 = vector.load %arg19[%413, %c0_91] : memref<128x32xbf16, #tpu.memory_space<vmem>>, vector<16x32xbf16>
    tpu.vector_store %arg19[%413, %c0_91], %412 {strides = array<i32>} : memref<128x32xbf16, #tpu.memory_space<vmem>>, vector<16x32xbf16>,
    %415 = vector.shape_cast %385 : vector<16x1xi1> to vector<16x1xi1>
    %416 = vector.broadcast %415 : vector<16x1xi1> to vector<16x32xi1>
    %417 = arith.select %416, %407, %338 : vector<16x32xi1>, vector<16x32xf32>
    %418 = vector.shape_cast %385 : vector<16x1xi1> to vector<16x1xi1>
    %419 = vector.broadcast %418 : vector<16x1xi1> to vector<16x32xi1>
    %420 = arith.select %419, %405, %341 : vector<16x32xi1>, vector<16x32xf32>
    %c5_i32 = arith.constant 5 : i32
    %c7_i32_92 = arith.constant 7 : i32
    %421 = arith.subi %c7_i32_92, %c5_i32 : i32
    %c16_i32_93 = arith.constant 16 : i32
    %422 = arith.muli %c5_i32, %c16_i32_93 : i32
    %423 = tpu.assume_multiple %422, 16 : i32
    %c16_i32_94 = arith.constant 16 : i32
    %424 = arith.muli %421, %c16_i32_94 : i32
    %425 = tpu.assume_multiple %424, 16 : i32
    %426 = vector.broadcast %c5_i32 : i32 to vector<16x1xi32>
    %427 = arith.cmpi sgt, %22, %426 : vector<16x1xi32>
    %428 = arith.index_cast %423 : i32 to index
    %c0_95 = arith.constant 0 : index
    %429 = vector.load %arg16[%428, %c0_95] : memref<128x128xbf16, #tpu.memory_space<vmem>>, vector<16x128xbf16>
    %430 = arith.extf %429 : vector<16x128xbf16> to vector<16x128xf32>
    %431 = arith.truncf %380 : vector<16x32xf32> to vector<16x32xbf16>
    %cst_96 = arith.constant dense<0.000000e+00> : vector<16x128xf32>
    %432 = tpu.matmul %431, %23, %cst_96 {dimension_numbers = #tpu.dot_dimension_numbers<[1], [0], [0], [1], [0, 0, 1, 1], [], []>} : vector<16x32xbf16>, vector<32x128xbf16>, vector<16x128xf32> -> vector<16x128xf32>
    %433 = arith.addf %430, %432 : vector<16x128xf32>
    %434 = vector.extract_strided_slice %433 {offsets = [0, 0], sizes = [16, 96], strides = [1, 1]} : vector<16x128xf32> to vector<16x96xf32>
    %435 = arith.negf %434 : vector<16x96xf32>
    %436 = math.exp %435 : vector<16x96xf32>
    %cst_97 = arith.constant 1.000000e+00 : f32
    %437 = vector.broadcast %cst_97 : f32 to vector<16x96xf32>
    %438 = arith.addf %437, %436 : vector<16x96xf32>
    %439 = arith.divf %437, %438 : vector<16x96xf32>
    %440 = vector.extract_strided_slice %439 {offsets = [0, 0], sizes = [16, 32], strides = [1, 1]} : vector<16x96xf32> to vector<16x32xf32>
    %441 = vector.extract_strided_slice %439 {offsets = [0, 32], sizes = [16, 32], strides = [1, 1]} : vector<16x96xf32> to vector<16x32xf32>
    %442 = vector.extract_strided_slice %439 {offsets = [0, 64], sizes = [16, 32], strides = [1, 1]} : vector<16x96xf32> to vector<16x32xf32>
    %443 = vector.extract_strided_slice %433 {offsets = [0, 96], sizes = [16, 32], strides = [1, 1]} : vector<16x128xf32> to vector<16x32xf32>
    %444 = math.tanh %443 : vector<16x32xf32>
    %445 = arith.mulf %441, %383 : vector<16x32xf32>
    %446 = arith.mulf %440, %444 : vector<16x32xf32>
    %447 = arith.addf %445, %446 : vector<16x32xf32>
    %448 = math.tanh %447 : vector<16x32xf32>
    %449 = arith.mulf %442, %448 : vector<16x32xf32>
    %cst_98 = arith.constant 0.000000e+00 : f32
    %450 = vector.shape_cast %427 : vector<16x1xi1> to vector<16x1xi1>
    %451 = vector.broadcast %450 : vector<16x1xi1> to vector<16x32xi1>
    %452 = vector.broadcast %cst_98 : f32 to vector<16x32xf32>
    %453 = arith.select %451, %449, %452 : vector<16x32xi1>, vector<16x32xf32>
    %454 = arith.truncf %453 : vector<16x32xf32> to vector<16x32xbf16>
    %455 = arith.index_cast %423 : i32 to index
    %c0_99 = arith.constant 0 : index
    %456 = vector.load %arg18[%455, %c0_99] : memref<128x32xbf16, #tpu.memory_space<vmem>>, vector<16x32xbf16>
    tpu.vector_store %arg18[%455, %c0_99], %454 {strides = array<i32>} : memref<128x32xbf16, #tpu.memory_space<vmem>>, vector<16x32xbf16>,
    %457 = vector.shape_cast %427 : vector<16x1xi1> to vector<16x1xi1>
    %458 = vector.broadcast %457 : vector<16x1xi1> to vector<16x32xi1>
    %459 = arith.select %458, %449, %380 : vector<16x32xi1>, vector<16x32xf32>
    %460 = vector.shape_cast %427 : vector<16x1xi1> to vector<16x1xi1>
    %461 = vector.broadcast %460 : vector<16x1xi1> to vector<16x32xi1>
    %462 = arith.select %461, %447, %383 : vector<16x32xi1>, vector<16x32xf32>
    %463 = vector.broadcast %421 : i32 to vector<16x1xi32>
    %464 = arith.cmpi sgt, %22, %463 : vector<16x1xi32>
    %465 = arith.index_cast %425 : i32 to index
    %c0_100 = arith.constant 0 : index
    %466 = vector.load %arg17[%465, %c0_100] : memref<128x128xbf16, #tpu.memory_space<vmem>>, vector<16x128xbf16>
    %467 = arith.extf %466 : vector<16x128xbf16> to vector<16x128xf32>
    %468 = arith.truncf %417 : vector<16x32xf32> to vector<16x32xbf16>
    %cst_101 = arith.constant dense<0.000000e+00> : vector<16x128xf32>
    %469 = tpu.matmul %468, %24, %cst_101 {dimension_numbers = #tpu.dot_dimension_numbers<[1], [0], [0], [1], [0, 0, 1, 1], [], []>} : vector<16x32xbf16>, vector<32x128xbf16>, vector<16x128xf32> -> vector<16x128xf32>
    %470 = arith.addf %467, %469 : vector<16x128xf32>
    %471 = vector.extract_strided_slice %470 {offsets = [0, 0], sizes = [16, 96], strides = [1, 1]} : vector<16x128xf32> to vector<16x96xf32>
    %472 = arith.negf %471 : vector<16x96xf32>
    %473 = math.exp %472 : vector<16x96xf32>
    %cst_102 = arith.constant 1.000000e+00 : f32
    %474 = vector.broadcast %cst_102 : f32 to vector<16x96xf32>
    %475 = arith.addf %474, %473 : vector<16x96xf32>
    %476 = arith.divf %474, %475 : vector<16x96xf32>
    %477 = vector.extract_strided_slice %476 {offsets = [0, 0], sizes = [16, 32], strides = [1, 1]} : vector<16x96xf32> to vector<16x32xf32>
    %478 = vector.extract_strided_slice %476 {offsets = [0, 32], sizes = [16, 32], strides = [1, 1]} : vector<16x96xf32> to vector<16x32xf32>
    %479 = vector.extract_strided_slice %476 {offsets = [0, 64], sizes = [16, 32], strides = [1, 1]} : vector<16x96xf32> to vector<16x32xf32>
    %480 = vector.extract_strided_slice %470 {offsets = [0, 96], sizes = [16, 32], strides = [1, 1]} : vector<16x128xf32> to vector<16x32xf32>
    %481 = math.tanh %480 : vector<16x32xf32>
    %482 = arith.mulf %478, %420 : vector<16x32xf32>
    %483 = arith.mulf %477, %481 : vector<16x32xf32>
    %484 = arith.addf %482, %483 : vector<16x32xf32>
    %485 = math.tanh %484 : vector<16x32xf32>
    %486 = arith.mulf %479, %485 : vector<16x32xf32>
    %cst_103 = arith.constant 0.000000e+00 : f32
    %487 = vector.shape_cast %464 : vector<16x1xi1> to vector<16x1xi1>
    %488 = vector.broadcast %487 : vector<16x1xi1> to vector<16x32xi1>
    %489 = vector.broadcast %cst_103 : f32 to vector<16x32xf32>
    %490 = arith.select %488, %486, %489 : vector<16x32xi1>, vector<16x32xf32>
    %491 = arith.truncf %490 : vector<16x32xf32> to vector<16x32xbf16>
    %492 = arith.index_cast %425 : i32 to index
    %c0_104 = arith.constant 0 : index
    %493 = vector.load %arg19[%492, %c0_104] : memref<128x32xbf16, #tpu.memory_space<vmem>>, vector<16x32xbf16>
    tpu.vector_store %arg19[%492, %c0_104], %491 {strides = array<i32>} : memref<128x32xbf16, #tpu.memory_space<vmem>>, vector<16x32xbf16>,
    %494 = vector.shape_cast %464 : vector<16x1xi1> to vector<16x1xi1>
    %495 = vector.broadcast %494 : vector<16x1xi1> to vector<16x32xi1>
    %496 = arith.select %495, %486, %417 : vector<16x32xi1>, vector<16x32xf32>
    %497 = vector.shape_cast %464 : vector<16x1xi1> to vector<16x1xi1>
    %498 = vector.broadcast %497 : vector<16x1xi1> to vector<16x32xi1>
    %499 = arith.select %498, %484, %420 : vector<16x32xi1>, vector<16x32xf32>
    %c6_i32 = arith.constant 6 : i32
    %c7_i32_105 = arith.constant 7 : i32
    %500 = arith.subi %c7_i32_105, %c6_i32 : i32
    %c16_i32_106 = arith.constant 16 : i32
    %501 = arith.muli %c6_i32, %c16_i32_106 : i32
    %502 = tpu.assume_multiple %501, 16 : i32
    %c16_i32_107 = arith.constant 16 : i32
    %503 = arith.muli %500, %c16_i32_107 : i32
    %504 = tpu.assume_multiple %503, 16 : i32
    %505 = vector.broadcast %c6_i32 : i32 to vector<16x1xi32>
    %506 = arith.cmpi sgt, %22, %505 : vector<16x1xi32>
    %507 = arith.index_cast %502 : i32 to index
    %c0_108 = arith.constant 0 : index
    %508 = vector.load %arg16[%507, %c0_108] : memref<128x128xbf16, #tpu.memory_space<vmem>>, vector<16x128xbf16>
    %509 = arith.extf %508 : vector<16x128xbf16> to vector<16x128xf32>
    %510 = arith.truncf %459 : vector<16x32xf32> to vector<16x32xbf16>
    %cst_109 = arith.constant dense<0.000000e+00> : vector<16x128xf32>
    %511 = tpu.matmul %510, %23, %cst_109 {dimension_numbers = #tpu.dot_dimension_numbers<[1], [0], [0], [1], [0, 0, 1, 1], [], []>} : vector<16x32xbf16>, vector<32x128xbf16>, vector<16x128xf32> -> vector<16x128xf32>
    %512 = arith.addf %509, %511 : vector<16x128xf32>
    %513 = vector.extract_strided_slice %512 {offsets = [0, 0], sizes = [16, 96], strides = [1, 1]} : vector<16x128xf32> to vector<16x96xf32>
    %514 = arith.negf %513 : vector<16x96xf32>
    %515 = math.exp %514 : vector<16x96xf32>
    %cst_110 = arith.constant 1.000000e+00 : f32
    %516 = vector.broadcast %cst_110 : f32 to vector<16x96xf32>
    %517 = arith.addf %516, %515 : vector<16x96xf32>
    %518 = arith.divf %516, %517 : vector<16x96xf32>
    %519 = vector.extract_strided_slice %518 {offsets = [0, 0], sizes = [16, 32], strides = [1, 1]} : vector<16x96xf32> to vector<16x32xf32>
    %520 = vector.extract_strided_slice %518 {offsets = [0, 32], sizes = [16, 32], strides = [1, 1]} : vector<16x96xf32> to vector<16x32xf32>
    %521 = vector.extract_strided_slice %518 {offsets = [0, 64], sizes = [16, 32], strides = [1, 1]} : vector<16x96xf32> to vector<16x32xf32>
    %522 = vector.extract_strided_slice %512 {offsets = [0, 96], sizes = [16, 32], strides = [1, 1]} : vector<16x128xf32> to vector<16x32xf32>
    %523 = math.tanh %522 : vector<16x32xf32>
    %524 = arith.mulf %520, %462 : vector<16x32xf32>
    %525 = arith.mulf %519, %523 : vector<16x32xf32>
    %526 = arith.addf %524, %525 : vector<16x32xf32>
    %527 = math.tanh %526 : vector<16x32xf32>
    %528 = arith.mulf %521, %527 : vector<16x32xf32>
    %cst_111 = arith.constant 0.000000e+00 : f32
    %529 = vector.shape_cast %506 : vector<16x1xi1> to vector<16x1xi1>
    %530 = vector.broadcast %529 : vector<16x1xi1> to vector<16x32xi1>
    %531 = vector.broadcast %cst_111 : f32 to vector<16x32xf32>
    %532 = arith.select %530, %528, %531 : vector<16x32xi1>, vector<16x32xf32>
    %533 = arith.truncf %532 : vector<16x32xf32> to vector<16x32xbf16>
    %534 = arith.index_cast %502 : i32 to index
    %c0_112 = arith.constant 0 : index
    %535 = vector.load %arg18[%534, %c0_112] : memref<128x32xbf16, #tpu.memory_space<vmem>>, vector<16x32xbf16>
    tpu.vector_store %arg18[%534, %c0_112], %533 {strides = array<i32>} : memref<128x32xbf16, #tpu.memory_space<vmem>>, vector<16x32xbf16>,
    %536 = vector.shape_cast %506 : vector<16x1xi1> to vector<16x1xi1>
    %537 = vector.broadcast %536 : vector<16x1xi1> to vector<16x32xi1>
    %538 = arith.select %537, %528, %459 : vector<16x32xi1>, vector<16x32xf32>
    %539 = vector.shape_cast %506 : vector<16x1xi1> to vector<16x1xi1>
    %540 = vector.broadcast %539 : vector<16x1xi1> to vector<16x32xi1>
    %541 = arith.select %540, %526, %462 : vector<16x32xi1>, vector<16x32xf32>
    %542 = vector.broadcast %500 : i32 to vector<16x1xi32>
    %543 = arith.cmpi sgt, %22, %542 : vector<16x1xi32>
    %544 = arith.index_cast %504 : i32 to index
    %c0_113 = arith.constant 0 : index
    %545 = vector.load %arg17[%544, %c0_113] : memref<128x128xbf16, #tpu.memory_space<vmem>>, vector<16x128xbf16>
    %546 = arith.extf %545 : vector<16x128xbf16> to vector<16x128xf32>
    %547 = arith.truncf %496 : vector<16x32xf32> to vector<16x32xbf16>
    %cst_114 = arith.constant dense<0.000000e+00> : vector<16x128xf32>
    %548 = tpu.matmul %547, %24, %cst_114 {dimension_numbers = #tpu.dot_dimension_numbers<[1], [0], [0], [1], [0, 0, 1, 1], [], []>} : vector<16x32xbf16>, vector<32x128xbf16>, vector<16x128xf32> -> vector<16x128xf32>
    %549 = arith.addf %546, %548 : vector<16x128xf32>
    %550 = vector.extract_strided_slice %549 {offsets = [0, 0], sizes = [16, 96], strides = [1, 1]} : vector<16x128xf32> to vector<16x96xf32>
    %551 = arith.negf %550 : vector<16x96xf32>
    %552 = math.exp %551 : vector<16x96xf32>
    %cst_115 = arith.constant 1.000000e+00 : f32
    %553 = vector.broadcast %cst_115 : f32 to vector<16x96xf32>
    %554 = arith.addf %553, %552 : vector<16x96xf32>
    %555 = arith.divf %553, %554 : vector<16x96xf32>
    %556 = vector.extract_strided_slice %555 {offsets = [0, 0], sizes = [16, 32], strides = [1, 1]} : vector<16x96xf32> to vector<16x32xf32>
    %557 = vector.extract_strided_slice %555 {offsets = [0, 32], sizes = [16, 32], strides = [1, 1]} : vector<16x96xf32> to vector<16x32xf32>
    %558 = vector.extract_strided_slice %555 {offsets = [0, 64], sizes = [16, 32], strides = [1, 1]} : vector<16x96xf32> to vector<16x32xf32>
    %559 = vector.extract_strided_slice %549 {offsets = [0, 96], sizes = [16, 32], strides = [1, 1]} : vector<16x128xf32> to vector<16x32xf32>
    %560 = math.tanh %559 : vector<16x32xf32>
    %561 = arith.mulf %557, %499 : vector<16x32xf32>
    %562 = arith.mulf %556, %560 : vector<16x32xf32>
    %563 = arith.addf %561, %562 : vector<16x32xf32>
    %564 = math.tanh %563 : vector<16x32xf32>
    %565 = arith.mulf %558, %564 : vector<16x32xf32>
    %cst_116 = arith.constant 0.000000e+00 : f32
    %566 = vector.shape_cast %543 : vector<16x1xi1> to vector<16x1xi1>
    %567 = vector.broadcast %566 : vector<16x1xi1> to vector<16x32xi1>
    %568 = vector.broadcast %cst_116 : f32 to vector<16x32xf32>
    %569 = arith.select %567, %565, %568 : vector<16x32xi1>, vector<16x32xf32>
    %570 = arith.truncf %569 : vector<16x32xf32> to vector<16x32xbf16>
    %571 = arith.index_cast %504 : i32 to index
    %c0_117 = arith.constant 0 : index
    %572 = vector.load %arg19[%571, %c0_117] : memref<128x32xbf16, #tpu.memory_space<vmem>>, vector<16x32xbf16>
    tpu.vector_store %arg19[%571, %c0_117], %570 {strides = array<i32>} : memref<128x32xbf16, #tpu.memory_space<vmem>>, vector<16x32xbf16>,
    %573 = vector.shape_cast %543 : vector<16x1xi1> to vector<16x1xi1>
    %574 = vector.broadcast %573 : vector<16x1xi1> to vector<16x32xi1>
    %575 = arith.select %574, %565, %496 : vector<16x32xi1>, vector<16x32xf32>
    %576 = vector.shape_cast %543 : vector<16x1xi1> to vector<16x1xi1>
    %577 = vector.broadcast %576 : vector<16x1xi1> to vector<16x32xi1>
    %578 = arith.select %577, %563, %499 : vector<16x32xi1>, vector<16x32xf32>
    %c7_i32_118 = arith.constant 7 : i32
    %c7_i32_119 = arith.constant 7 : i32
    %579 = arith.subi %c7_i32_119, %c7_i32_118 : i32
    %c16_i32_120 = arith.constant 16 : i32
    %580 = arith.muli %c7_i32_118, %c16_i32_120 : i32
    %581 = tpu.assume_multiple %580, 16 : i32
    %c16_i32_121 = arith.constant 16 : i32
    %582 = arith.muli %579, %c16_i32_121 : i32
    %583 = tpu.assume_multiple %582, 16 : i32
    %584 = vector.broadcast %c7_i32_118 : i32 to vector<16x1xi32>
    %585 = arith.cmpi sgt, %22, %584 : vector<16x1xi32>
    %586 = arith.index_cast %581 : i32 to index
    %c0_122 = arith.constant 0 : index
    %587 = vector.load %arg16[%586, %c0_122] : memref<128x128xbf16, #tpu.memory_space<vmem>>, vector<16x128xbf16>
    %588 = arith.extf %587 : vector<16x128xbf16> to vector<16x128xf32>
    %589 = arith.truncf %538 : vector<16x32xf32> to vector<16x32xbf16>
    %cst_123 = arith.constant dense<0.000000e+00> : vector<16x128xf32>
    %590 = tpu.matmul %589, %23, %cst_123 {dimension_numbers = #tpu.dot_dimension_numbers<[1], [0], [0], [1], [0, 0, 1, 1], [], []>} : vector<16x32xbf16>, vector<32x128xbf16>, vector<16x128xf32> -> vector<16x128xf32>
    %591 = arith.addf %588, %590 : vector<16x128xf32>
    %592 = vector.extract_strided_slice %591 {offsets = [0, 0], sizes = [16, 96], strides = [1, 1]} : vector<16x128xf32> to vector<16x96xf32>
    %593 = arith.negf %592 : vector<16x96xf32>
    %594 = math.exp %593 : vector<16x96xf32>
    %cst_124 = arith.constant 1.000000e+00 : f32
    %595 = vector.broadcast %cst_124 : f32 to vector<16x96xf32>
    %596 = arith.addf %595, %594 : vector<16x96xf32>
    %597 = arith.divf %595, %596 : vector<16x96xf32>
    %598 = vector.extract_strided_slice %597 {offsets = [0, 0], sizes = [16, 32], strides = [1, 1]} : vector<16x96xf32> to vector<16x32xf32>
    %599 = vector.extract_strided_slice %597 {offsets = [0, 32], sizes = [16, 32], strides = [1, 1]} : vector<16x96xf32> to vector<16x32xf32>
    %600 = vector.extract_strided_slice %597 {offsets = [0, 64], sizes = [16, 32], strides = [1, 1]} : vector<16x96xf32> to vector<16x32xf32>
    %601 = vector.extract_strided_slice %591 {offsets = [0, 96], sizes = [16, 32], strides = [1, 1]} : vector<16x128xf32> to vector<16x32xf32>
    %602 = math.tanh %601 : vector<16x32xf32>
    %603 = arith.mulf %599, %541 : vector<16x32xf32>
    %604 = arith.mulf %598, %602 : vector<16x32xf32>
    %605 = arith.addf %603, %604 : vector<16x32xf32>
    %606 = math.tanh %605 : vector<16x32xf32>
    %607 = arith.mulf %600, %606 : vector<16x32xf32>
    %cst_125 = arith.constant 0.000000e+00 : f32
    %608 = vector.shape_cast %585 : vector<16x1xi1> to vector<16x1xi1>
    %609 = vector.broadcast %608 : vector<16x1xi1> to vector<16x32xi1>
    %610 = vector.broadcast %cst_125 : f32 to vector<16x32xf32>
    %611 = arith.select %609, %607, %610 : vector<16x32xi1>, vector<16x32xf32>
    %612 = arith.truncf %611 : vector<16x32xf32> to vector<16x32xbf16>
    %613 = arith.index_cast %581 : i32 to index
    %c0_126 = arith.constant 0 : index
    %614 = vector.load %arg18[%613, %c0_126] : memref<128x32xbf16, #tpu.memory_space<vmem>>, vector<16x32xbf16>
    tpu.vector_store %arg18[%613, %c0_126], %612 {strides = array<i32>} : memref<128x32xbf16, #tpu.memory_space<vmem>>, vector<16x32xbf16>,
    %615 = vector.shape_cast %585 : vector<16x1xi1> to vector<16x1xi1>
    %616 = vector.broadcast %615 : vector<16x1xi1> to vector<16x32xi1>
    %617 = arith.select %616, %607, %538 : vector<16x32xi1>, vector<16x32xf32>
    %618 = vector.shape_cast %585 : vector<16x1xi1> to vector<16x1xi1>
    %619 = vector.broadcast %618 : vector<16x1xi1> to vector<16x32xi1>
    %620 = arith.select %619, %605, %541 : vector<16x32xi1>, vector<16x32xf32>
    %621 = vector.broadcast %579 : i32 to vector<16x1xi32>
    %622 = arith.cmpi sgt, %22, %621 : vector<16x1xi32>
    %623 = arith.index_cast %583 : i32 to index
    %c0_127 = arith.constant 0 : index
    %624 = vector.load %arg17[%623, %c0_127] : memref<128x128xbf16, #tpu.memory_space<vmem>>, vector<16x128xbf16>
    %625 = arith.extf %624 : vector<16x128xbf16> to vector<16x128xf32>
    %626 = arith.truncf %575 : vector<16x32xf32> to vector<16x32xbf16>
    %cst_128 = arith.constant dense<0.000000e+00> : vector<16x128xf32>
    %627 = tpu.matmul %626, %24, %cst_128 {dimension_numbers = #tpu.dot_dimension_numbers<[1], [0], [0], [1], [0, 0, 1, 1], [], []>} : vector<16x32xbf16>, vector<32x128xbf16>, vector<16x128xf32> -> vector<16x128xf32>
    %628 = arith.addf %625, %627 : vector<16x128xf32>
    %629 = vector.extract_strided_slice %628 {offsets = [0, 0], sizes = [16, 96], strides = [1, 1]} : vector<16x128xf32> to vector<16x96xf32>
    %630 = arith.negf %629 : vector<16x96xf32>
    %631 = math.exp %630 : vector<16x96xf32>
    %cst_129 = arith.constant 1.000000e+00 : f32
    %632 = vector.broadcast %cst_129 : f32 to vector<16x96xf32>
    %633 = arith.addf %632, %631 : vector<16x96xf32>
    %634 = arith.divf %632, %633 : vector<16x96xf32>
    %635 = vector.extract_strided_slice %634 {offsets = [0, 0], sizes = [16, 32], strides = [1, 1]} : vector<16x96xf32> to vector<16x32xf32>
    %636 = vector.extract_strided_slice %634 {offsets = [0, 32], sizes = [16, 32], strides = [1, 1]} : vector<16x96xf32> to vector<16x32xf32>
    %637 = vector.extract_strided_slice %634 {offsets = [0, 64], sizes = [16, 32], strides = [1, 1]} : vector<16x96xf32> to vector<16x32xf32>
    %638 = vector.extract_strided_slice %628 {offsets = [0, 96], sizes = [16, 32], strides = [1, 1]} : vector<16x128xf32> to vector<16x32xf32>
    %639 = math.tanh %638 : vector<16x32xf32>
    %640 = arith.mulf %636, %578 : vector<16x32xf32>
    %641 = arith.mulf %635, %639 : vector<16x32xf32>
    %642 = arith.addf %640, %641 : vector<16x32xf32>
    %643 = math.tanh %642 : vector<16x32xf32>
    %644 = arith.mulf %637, %643 : vector<16x32xf32>
    %cst_130 = arith.constant 0.000000e+00 : f32
    %645 = vector.shape_cast %622 : vector<16x1xi1> to vector<16x1xi1>
    %646 = vector.broadcast %645 : vector<16x1xi1> to vector<16x32xi1>
    %647 = vector.broadcast %cst_130 : f32 to vector<16x32xf32>
    %648 = arith.select %646, %644, %647 : vector<16x32xi1>, vector<16x32xf32>
    %649 = arith.truncf %648 : vector<16x32xf32> to vector<16x32xbf16>
    %650 = arith.index_cast %583 : i32 to index
    %c0_131 = arith.constant 0 : index
    %651 = vector.load %arg19[%650, %c0_131] : memref<128x32xbf16, #tpu.memory_space<vmem>>, vector<16x32xbf16>
    tpu.vector_store %arg19[%650, %c0_131], %649 {strides = array<i32>} : memref<128x32xbf16, #tpu.memory_space<vmem>>, vector<16x32xbf16>,
    %652 = vector.shape_cast %622 : vector<16x1xi1> to vector<16x1xi1>
    %653 = vector.broadcast %652 : vector<16x1xi1> to vector<16x32xi1>
    %654 = arith.select %653, %644, %575 : vector<16x32xi1>, vector<16x32xf32>
    %655 = vector.shape_cast %622 : vector<16x1xi1> to vector<16x1xi1>
    %656 = vector.broadcast %655 : vector<16x1xi1> to vector<16x32xi1>
    %657 = arith.select %656, %642, %578 : vector<16x32xi1>, vector<16x32xf32>
    %c8_i32 = arith.constant 8 : i32
    %c0_132 = arith.constant 0 : index
    %c0_133 = arith.constant 0 : index
    %658 = vector.load %arg18[%c0_132, %c0_133] : memref<128x32xbf16, #tpu.memory_space<vmem>>, vector<128x32xbf16>
    %c0_134 = arith.constant 0 : index
    %c0_135 = arith.constant 0 : index
    %659 = vector.load %arg12[%c0_134, %c0_135] : memref<32x128xbf16, #tpu.memory_space<vmem>>, vector<32x128xbf16>
    %cst_136 = arith.constant dense<0.000000e+00> : vector<128x128xf32>
    %660 = tpu.matmul %658, %659, %cst_136 {dimension_numbers = #tpu.dot_dimension_numbers<[1], [0], [0], [1], [0, 0, 1, 1], [], []>} : vector<128x32xbf16>, vector<32x128xbf16>, vector<128x128xf32> -> vector<128x128xf32>
    %c0_137 = arith.constant 0 : index
    %c0_138 = arith.constant 0 : index
    %661 = vector.load %arg19[%c0_137, %c0_138] : memref<128x32xbf16, #tpu.memory_space<vmem>>, vector<128x32xbf16>
    %c0_139 = arith.constant 0 : index
    %c0_140 = arith.constant 0 : index
    %662 = vector.load %arg13[%c0_139, %c0_140] : memref<32x128xbf16, #tpu.memory_space<vmem>>, vector<32x128xbf16>
    %cst_141 = arith.constant dense<0.000000e+00> : vector<128x128xf32>
    %663 = tpu.matmul %661, %662, %cst_141 {dimension_numbers = #tpu.dot_dimension_numbers<[1], [0], [0], [1], [0, 0, 1, 1], [], []>} : vector<128x32xbf16>, vector<32x128xbf16>, vector<128x128xf32> -> vector<128x128xf32>
    %664 = arith.addf %660, %663 : vector<128x128xf32>
    %c0_142 = arith.constant 0 : index
    %c0_143 = arith.constant 0 : index
    %665 = vector.load %arg14[%c0_142, %c0_143] : memref<1x128xf32, #tpu.memory_space<vmem>>, vector<1x128xf32>
    %666 = vector.broadcast %665 : vector<1x128xf32> to vector<128x128xf32>
    %667 = arith.addf %664, %666 : vector<128x128xf32>
    %c0_144 = arith.constant 0 : index
    %c0_145 = arith.constant 0 : index
    %668 = vector.load %arg15[%c0_144, %c0_145] : memref<128x128xf32, #tpu.memory_space<vmem>>, vector<128x128xf32>
    tpu.vector_store %arg15[%c0_144, %c0_145], %667 {strides = array<i32>} : memref<128x128xf32, #tpu.memory_space<vmem>>, vector<128x128xf32>,
    return
  }
  func.func @transform_0(%arg0: i32) -> (i32, i32) {
    %c0_i32 = arith.constant 0 : i32
    %c0_i32_0 = arith.constant 0 : i32
    return %arg0, %c0_i32 : i32, i32
  }
  func.func @transform_1(%arg0: i32) -> (i32, i32) {
    %c0_i32 = arith.constant 0 : i32
    %c0_i32_0 = arith.constant 0 : i32
    return %arg0, %c0_i32 : i32, i32
  }
  func.func @transform_2(%arg0: i32) -> (i32, i32) {
    %c0_i32 = arith.constant 0 : i32
    %c0_i32_0 = arith.constant 0 : i32
    return %arg0, %c0_i32 : i32, i32
  }
  func.func @transform_3(%arg0: i32) -> (i32, i32) {
    %c0_i32 = arith.constant 0 : i32
    %c0_i32_0 = arith.constant 0 : i32
    %c0_i32_1 = arith.constant 0 : i32
    return %c0_i32, %c0_i32_0 : i32, i32
  }
  func.func @transform_4(%arg0: i32) -> (i32, i32) {
    %c0_i32 = arith.constant 0 : i32
    %c0_i32_0 = arith.constant 0 : i32
    %c0_i32_1 = arith.constant 0 : i32
    return %c0_i32, %c0_i32_0 : i32, i32
  }
  func.func @transform_5(%arg0: i32) -> (i32, i32) {
    %c0_i32 = arith.constant 0 : i32
    %c0_i32_0 = arith.constant 0 : i32
    %c0_i32_1 = arith.constant 0 : i32
    return %c0_i32, %c0_i32_0 : i32, i32
  }
  func.func @transform_6(%arg0: i32) -> (i32, i32) {
    %c0_i32 = arith.constant 0 : i32
    %c0_i32_0 = arith.constant 0 : i32
    %c0_i32_1 = arith.constant 0 : i32
    return %c0_i32, %c0_i32_0 : i32, i32
  }
  func.func @transform_7(%arg0: i32) -> (i32, i32) {
    %c0_i32 = arith.constant 0 : i32
    %c0_i32_0 = arith.constant 0 : i32
    %c0_i32_1 = arith.constant 0 : i32
    return %c0_i32, %c0_i32_0 : i32, i32
  }
  func.func @transform_8(%arg0: i32) -> (i32, i32) {
    %c0_i32 = arith.constant 0 : i32
    %c0_i32_0 = arith.constant 0 : i32
    %c0_i32_1 = arith.constant 0 : i32
    return %c0_i32, %c0_i32_0 : i32, i32
  }
  func.func @transform_9(%arg0: i32) -> (i32, i32) {
    %c0_i32 = arith.constant 0 : i32
    %c0_i32_0 = arith.constant 0 : i32
    %c0_i32_1 = arith.constant 0 : i32
    return %c0_i32, %c0_i32_0 : i32, i32
  }
  func.func @transform_10(%arg0: i32) -> (i32, i32) {
    %c0_i32 = arith.constant 0 : i32
    %c0_i32_0 = arith.constant 0 : i32
    %c0_i32_1 = arith.constant 0 : i32
    return %c0_i32, %c0_i32_0 : i32, i32
  }
  func.func @transform_11(%arg0: i32) -> (i32, i32) {
    %c0_i32 = arith.constant 0 : i32
    %c0_i32_0 = arith.constant 0 : i32
    %c0_i32_1 = arith.constant 0 : i32
    return %c0_i32, %c0_i32_0 : i32, i32
  }
  func.func @transform_12(%arg0: i32) -> (i32, i32) {
    %c0_i32 = arith.constant 0 : i32
    %c0_i32_0 = arith.constant 0 : i32
    %c0_i32_1 = arith.constant 0 : i32
    return %c0_i32, %c0_i32_0 : i32, i32
  }
  func.func @transform_13(%arg0: i32) -> (i32, i32) {
    %c0_i32 = arith.constant 0 : i32
    %c0_i32_0 = arith.constant 0 : i32
    %c0_i32_1 = arith.constant 0 : i32
    return %c0_i32, %c0_i32_0 : i32, i32
  }
  func.func @transform_14(%arg0: i32) -> (i32, i32) {
    %c0_i32 = arith.constant 0 : i32
    %c0_i32_0 = arith.constant 0 : i32
    return %arg0, %c0_i32 : i32, i32
  }
}

</mosaic_0001>

<llo_original>
// kernel: custom-call.19
$region0: #{custom-call.19}
  %s0 = inlined_call_operand.vmem [shape: s32[7,2,5], index: 0, kind: output, shape index: {}]

// kernel: lstm_crf_forward.2
$region0: #{lstm_crf_forward.2}
  #allocation0 [shape = 'u32[]', space=smem, size = 0x4, offset = 0x4, fixed_abs, tag = 'smem constant byte address 0x4 - core index']
  #allocation1 [shape = 'u32[72,128]{1,0:T(1,128)}', space=vmem, size = 0x9000, scoped, tag = 'internal scratch']
  #allocation2 [shape = 'bf16[128,128]{1,0:T(8,128)(2,1)}', space=vmem, size = 0x8000, scoped, tag = 'scratch operand']
  #allocation3 [shape = 'bf16[128,128]{1,0:T(8,128)(2,1)}', space=vmem, size = 0x8000, scoped, tag = 'scratch operand']
  %s0 = inlined_call_operand.vmem [shape: bf16[128,16], index: 0, kind: input, shape index: {}]
  %s1 = inlined_call_operand.vmem [shape: s32[16,1], index: 1, kind: input, shape index: {}]
  %s2 = inlined_call_operand.vmem [shape: bf16[16,128], index: 2, kind: input, shape index: {}]
  %s3 = inlined_call_operand.vmem [shape: bf16[16,128], index: 3, kind: input, shape index: {}]
  %s4 = inlined_call_operand.vmem [shape: f32[1,128], index: 4, kind: input, shape index: {}]
  %s5 = inlined_call_operand.vmem [shape: f32[1,128], index: 5, kind: input, shape index: {}]
  %s6 = inlined_call_operand.vmem [shape: bf16[32,128], index: 6, kind: input, shape index: {}]
  %s7 = inlined_call_operand.vmem [shape: bf16[32,128], index: 7, kind: input, shape index: {}]
  %s8 = inlined_call_operand.vmem [shape: bf16[128,32], index: 8, kind: output, shape index: {0}]
  %s9 = inlined_call_operand.vmem [shape: bf16[128,32], index: 9, kind: output, shape index: {1}]
  %10 = xla_tuple %s8, %s9
  %s11 = sld [smem:[#allocation0]]
  $region50: #{lstm_crf_forward.2} parent=0
    _
  %s13 = ssub.s32 1, %s11
  %s14 = scalar_select 0, %s13, %s11
  // Predicated region
  $region2: #{lstm_crf_forward.2} parent=0 // pred_check
    _
  $region3: #{lstm_crf_forward.2} parent=0 // pred_check_branch
    %16 = sbr.rel (0) target = $region5
  $region4: #{lstm_crf_forward.2} parent=0 // pred_region
    _
  $region5: #{lstm_crf_forward.2} parent=0 // pred_fallthru
    _
  // Predicated region
  $region6: #{lstm_crf_forward.2} parent=0 // pred_check
    _
  $region7: #{lstm_crf_forward.2} parent=0 // pred_check_branch
    %18 = sbr.rel (0) target = $region9
  $region8: #{lstm_crf_forward.2} parent=0 // pred_region
    _
  $region9: #{lstm_crf_forward.2} parent=0 // pred_fallthru
    _
  // Predicated region
  $region10: #{lstm_crf_forward.2} parent=0 // pred_check
    _
  $region11: #{lstm_crf_forward.2} parent=0 // pred_check_branch
    %20 = sbr.rel (0) target = $region13
  $region12: #{lstm_crf_forward.2} parent=0 // pred_region
    _
  $region13: #{lstm_crf_forward.2} parent=0 // pred_fallthru
    _
  // Predicated region
  $region14: #{lstm_crf_forward.2} parent=0 // pred_check
    _
  $region15: #{lstm_crf_forward.2} parent=0 // pred_check_branch
    %22 = sbr.rel (0) target = $region17
  $region16: #{lstm_crf_forward.2} parent=0 // pred_region
    _
  $region17: #{lstm_crf_forward.2} parent=0 // pred_fallthru
    _
  // Predicated region
  $region18: #{lstm_crf_forward.2} parent=0 // pred_check
    _
  $region19: #{lstm_crf_forward.2} parent=0 // pred_check_branch
    %24 = sbr.rel (0) target = $region21
  $region20: #{lstm_crf_forward.2} parent=0 // pred_region
    _
  $region21: #{lstm_crf_forward.2} parent=0 // pred_fallthru
    _
  // Predicated region
  $region22: #{lstm_crf_forward.2} parent=0 // pred_check
    _
  $region23: #{lstm_crf_forward.2} parent=0 // pred_check_branch
    %26 = sbr.rel (0) target = $region25
  $region24: #{lstm_crf_forward.2} parent=0 // pred_region
    _
  $region25: #{lstm_crf_forward.2} parent=0 // pred_fallthru
    _
  // Predicated region
  $region26: #{lstm_crf_forward.2} parent=0 // pred_check
    _
  $region27: #{lstm_crf_forward.2} parent=0 // pred_check_branch
    %28 = sbr.rel (0) target = $region29
  $region28: #{lstm_crf_forward.2} parent=0 // pred_region
    _
  $region29: #{lstm_crf_forward.2} parent=0 // pred_fallthru
    _
  // Predicated region
  $region30: #{lstm_crf_forward.2} parent=0 // pred_check
    _
  $region31: #{lstm_crf_forward.2} parent=0 // pred_check_branch
    %30 = sbr.rel (0) target = $region33
  $region32: #{lstm_crf_forward.2} parent=0 // pred_region
    _
  $region33: #{lstm_crf_forward.2} parent=0 // pred_fallthru
    _
  %v32 = vld [vmem:[%s4] sm:$0x1]
  %v33 = vld [vmem:[%s5] sm:$0x1]
  %v34 = vld [vmem:[%s0] sm:$0xf]
  %v35 = vld [vmem:[%s0 + $0x4] sm:$0xf]
  %v36 = vld [vmem:[%s0 + $0x8] sm:$0xf]
  %v37 = vld [vmem:[%s0 + $0xc] sm:$0xf]
  %v38 = vld [vmem:[%s0 + $0x10] sm:$0xf]
  %v39 = vld [vmem:[%s0 + $0x14] sm:$0xf]
  %v40 = vld [vmem:[%s0 + $0x18] sm:$0xf]
  %v41 = vld [vmem:[%s0 + $0x1c] sm:$0xf]
  %v42 = vld [vmem:[%s0 + $0x20] sm:$0xf]
  %v43 = vld [vmem:[%s0 + $0x24] sm:$0xf]
  %v44 = vld [vmem:[%s0 + $0x28] sm:$0xf]
  %v45 = vld [vmem:[%s0 + $0x2c] sm:$0xf]
  %v46 = vld [vmem:[%s0 + $0x30] sm:$0xf]
  %v47 = vld [vmem:[%s0 + $0x34] sm:$0xf]
  %v48 = vld [vmem:[%s0 + $0x38] sm:$0xf]
  %v49 = vld [vmem:[%s0 + $0x3c] sm:$0xf]
  %v50 = vld [vmem:[%s2] sm:$0xf]
  %v51 = vld [vmem:[%s2 + $0x4] sm:$0xf]
  %v68 = vunpack.c.l.b16 %v34
  %v69 = vunpack.c.l.b16 %v35
  %v70 = vunpack.c.l.b16 %v36
  %v71 = vunpack.c.l.b16 %v37
  %v72 = vunpack.c.l.b16 %v38
  %v73 = vunpack.c.l.b16 %v39
  %v74 = vunpack.c.l.b16 %v40
  %v75 = vunpack.c.l.b16 %v41
  %v76 = vunpack.c.l.b16 %v42
  %v77 = vunpack.c.l.b16 %v43
  %v78 = vunpack.c.l.b16 %v44
  %v79 = vunpack.c.l.b16 %v45
  %v80 = vunpack.c.l.b16 %v46
  %v81 = vunpack.c.l.b16 %v47
  %v82 = vunpack.c.l.b16 %v48
  %v83 = vunpack.c.l.b16 %v49
  %v84 = vpack.c.b16 %v69, %v68
  %v85 = vpack.c.b16 %v71, %v70
  %v86 = vpack.c.b16 %v73, %v72
  %v87 = vpack.c.b16 %v75, %v74
  %v88 = vpack.c.b16 %v77, %v76
  %v89 = vpack.c.b16 %v79, %v78
  %v90 = vpack.c.b16 %v81, %v80
  %v91 = vpack.c.b16 %v83, %v82
  %v94 = vunpack.c.l.b16 %v50
  %v95 = vunpack.c.l.b16 %v51
  %v96 = vpack.c.b16 %v95, %v94
  %vm98 = vcmask 130048
  %v100 = vsel %vm98, %v84, 0
  %v103 = vsel %vm98, %v85, 0
  %v106 = vsel %vm98, %v86, 0
  %v109 = vsel %vm98, %v87, 0
  %v112 = vsel %vm98, %v88, 0
  %v115 = vsel %vm98, %v89, 0
  %v118 = vsel %vm98, %v90, 0
  %v121 = vsel %vm98, %v91, 0
  %123 = vmatpush.bf16.msra.mxu0 0
  %124 = vmatpush.bf16.msra.mxu0 0
  %125 = vmatpush.bf16.msra.mxu0 0
  %126 = vmatpush.bf16.msra.mxu0 0
  %127 = vmatpush.bf16.msra.mxu0 0
  %128 = vmatpush.bf16.msra.mxu0 0
  %129 = vmatpush.bf16.msra.mxu0 0
  %130 = vmatpush.bf16.msra.mxu0 %v96
  %131 = vmatmul.bf16.gmra.mxu0 %v100
  %v132 = vpop.f32.mrf.mxu0
  %v133 = vadd.f32 0.0, %v132
  %v134 = vpop.f32.mrf.mxu0
  %v135 = vadd.f32 0.0, %v134
  %136 = vmatmul.bf16.gmra.mxu0 %v103
  %v137 = vpop.f32.mrf.mxu0
  %v138 = vadd.f32 0.0, %v137
  %v139 = vpop.f32.mrf.mxu0
  %v140 = vadd.f32 0.0, %v139
  %141 = vmatmul.bf16.gmra.mxu0 %v106
  %v142 = vpop.f32.mrf.mxu0
  %v143 = vadd.f32 0.0, %v142
  %v144 = vpop.f32.mrf.mxu0
  %v145 = vadd.f32 0.0, %v144
  %146 = vmatmul.bf16.gmra.mxu0 %v109
  %v147 = vpop.f32.mrf.mxu0
  %v148 = vadd.f32 0.0, %v147
  %v149 = vpop.f32.mrf.mxu0
  %v150 = vadd.f32 0.0, %v149
  %151 = vmatmul.bf16.gmra.mxu0 %v112
  %v152 = vpop.f32.mrf.mxu0
  %v153 = vadd.f32 0.0, %v152
  %v154 = vpop.f32.mrf.mxu0
  %v155 = vadd.f32 0.0, %v154
  %156 = vmatmul.bf16.gmra.mxu0 %v115
  %v157 = vpop.f32.mrf.mxu0
  %v158 = vadd.f32 0.0, %v157
  %v159 = vpop.f32.mrf.mxu0
  %v160 = vadd.f32 0.0, %v159
  %161 = vmatmul.bf16.gmra.mxu0 %v118
  %v162 = vpop.f32.mrf.mxu0
  %v163 = vadd.f32 0.0, %v162
  %v164 = vpop.f32.mrf.mxu0
  %v165 = vadd.f32 0.0, %v164
  %166 = vmatmul.bf16.gmra.mxu0 %v121
  %v167 = vpop.f32.mrf.mxu0
  %v168 = vadd.f32 0.0, %v167
  %v169 = vpop.f32.mrf.mxu0
  %v170 = vadd.f32 0.0, %v169
  %171 = vdwg.mxu0
  %v173 = vperm.slane %v32, 0
  %v175 = vadd.f32 %v173, %v133
  %v176 = vadd.f32 %v173, %v135
  %v177 = vadd.f32 %v173, %v138
  %v178 = vadd.f32 %v173, %v140
  %v179 = vadd.f32 %v173, %v143
  %v180 = vadd.f32 %v173, %v145
  %v181 = vadd.f32 %v173, %v148
  %v182 = vadd.f32 %v173, %v150
  %v183 = vadd.f32 %v173, %v153
  %v184 = vadd.f32 %v173, %v155
  %v185 = vadd.f32 %v173, %v158
  %v186 = vadd.f32 %v173, %v160
  %v187 = vadd.f32 %v173, %v163
  %v188 = vadd.f32 %v173, %v165
  %v189 = vadd.f32 %v173, %v168
  %v190 = vadd.f32 %v173, %v170
  %v191 = vld [vmem:[%s3] sm:$0xf]
  %v192 = vld [vmem:[%s3 + $0x4] sm:$0xf]
  %v195 = vunpack.c.l.b16 %v191
  %v196 = vunpack.c.l.b16 %v192
  %v197 = vpack.c.b16 %v196, %v195
  %199 = vmatpush.bf16.msra.mxu0 0
  %200 = vmatpush.bf16.msra.mxu0 0
  %201 = vmatpush.bf16.msra.mxu0 0
  %202 = vmatpush.bf16.msra.mxu0 0
  %203 = vmatpush.bf16.msra.mxu0 0
  %204 = vmatpush.bf16.msra.mxu0 0
  %205 = vmatpush.bf16.msra.mxu0 0
  %206 = vmatpush.bf16.msra.mxu0 %v197
  %207 = vmatmul.bf16.gmra.mxu0 %v100
  %v208 = vpop.f32.mrf.mxu0
  %v209 = vadd.f32 0.0, %v208
  %v210 = vpop.f32.mrf.mxu0
  %v211 = vadd.f32 0.0, %v210
  %212 = vmatmul.bf16.gmra.mxu0 %v103
  %v213 = vpop.f32.mrf.mxu0
  %v214 = vadd.f32 0.0, %v213
  %v215 = vpop.f32.mrf.mxu0
  %v216 = vadd.f32 0.0, %v215
  %217 = vmatmul.bf16.gmra.mxu0 %v106
  %v218 = vpop.f32.mrf.mxu0
  %v219 = vadd.f32 0.0, %v218
  %v220 = vpop.f32.mrf.mxu0
  %v221 = vadd.f32 0.0, %v220
  %222 = vmatmul.bf16.gmra.mxu0 %v109
  %v223 = vpop.f32.mrf.mxu0
  %v224 = vadd.f32 0.0, %v223
  %v225 = vpop.f32.mrf.mxu0
  %v226 = vadd.f32 0.0, %v225
  %227 = vmatmul.bf16.gmra.mxu0 %v112
  %v228 = vpop.f32.mrf.mxu0
  %v229 = vadd.f32 0.0, %v228
  %v230 = vpop.f32.mrf.mxu0
  %v231 = vadd.f32 0.0, %v230
  %232 = vmatmul.bf16.gmra.mxu0 %v115
  %v233 = vpop.f32.mrf.mxu0
  %v234 = vadd.f32 0.0, %v233
  %v235 = vpop.f32.mrf.mxu0
  %v236 = vadd.f32 0.0, %v235
  %237 = vmatmul.bf16.gmra.mxu0 %v118
  %v238 = vpop.f32.mrf.mxu0
  %v239 = vadd.f32 0.0, %v238
  %v240 = vpop.f32.mrf.mxu0
  %v241 = vadd.f32 0.0, %v240
  %242 = vmatmul.bf16.gmra.mxu0 %v121
  %v243 = vpop.f32.mrf.mxu0
  %v244 = vadd.f32 0.0, %v243
  %v245 = vpop.f32.mrf.mxu0
  %v246 = vadd.f32 0.0, %v245
  %247 = vdwg.mxu0
  %v249 = vperm.slane %v33, 0
  %v251 = vadd.f32 %v249, %v209
  %v252 = vadd.f32 %v249, %v211
  %v253 = vadd.f32 %v249, %v214
  %v254 = vadd.f32 %v249, %v216
  %v255 = vadd.f32 %v249, %v219
  %v256 = vadd.f32 %v249, %v221
  %v257 = vadd.f32 %v249, %v224
  %v258 = vadd.f32 %v249, %v226
  %v259 = vadd.f32 %v249, %v229
  %v260 = vadd.f32 %v249, %v231
  %v261 = vadd.f32 %v249, %v234
  %v262 = vadd.f32 %v249, %v236
  %v263 = vadd.f32 %v249, %v239
  %v264 = vadd.f32 %v249, %v241
  %v265 = vadd.f32 %v249, %v244
  %v266 = vadd.f32 %v249, %v246
  %v267 = vpack.c.bf16 %v175, %v175
  %v268 = vpack.c.bf16 %v176, %v176
  %v269 = vpack.c.bf16 %v177, %v177
  %v270 = vpack.c.bf16 %v178, %v178
  %v271 = vpack.c.bf16 %v179, %v179
  %v272 = vpack.c.bf16 %v180, %v180
  %v273 = vpack.c.bf16 %v181, %v181
  %v274 = vpack.c.bf16 %v182, %v182
  %v275 = vpack.c.bf16 %v183, %v183
  %v276 = vpack.c.bf16 %v184, %v184
  %v277 = vpack.c.bf16 %v185, %v185
  %v278 = vpack.c.bf16 %v186, %v186
  %v279 = vpack.c.bf16 %v187, %v187
  %v280 = vpack.c.bf16 %v188, %v188
  %v281 = vpack.c.bf16 %v189, %v189
  %v282 = vpack.c.bf16 %v190, %v190
  %283 = vst [vmem:[#allocation2] sm:$0xf] %v267
  %284 = vst [vmem:[#allocation2 + $0x4] sm:$0xf] %v268
  %285 = vst [vmem:[#allocation2 + $0x8] sm:$0xf] %v269
  %286 = vst [vmem:[#allocation2 + $0xc] sm:$0xf] %v270
  %287 = vst [vmem:[#allocation2 + $0x10] sm:$0xf] %v271
  %288 = vst [vmem:[#allocation2 + $0x14] sm:$0xf] %v272
  %289 = vst [vmem:[#allocation2 + $0x18] sm:$0xf] %v273
  %290 = vst [vmem:[#allocation2 + $0x1c] sm:$0xf] %v274
  %291 = vst [vmem:[#allocation2 + $0x20] sm:$0xf] %v275
  %292 = vst [vmem:[#allocation2 + $0x24] sm:$0xf] %v276
  %293 = vst [vmem:[#allocation2 + $0x28] sm:$0xf] %v277
  %294 = vst [vmem:[#allocation2 + $0x2c] sm:$0xf] %v278
  %295 = vst [vmem:[#allocation2 + $0x30] sm:$0xf] %v279
  %296 = vst [vmem:[#allocation2 + $0x34] sm:$0xf] %v280
  %297 = vst [vmem:[#allocation2 + $0x38] sm:$0xf] %v281
  %298 = vst [vmem:[#allocation2 + $0x3c] sm:$0xf] %v282
  %v299 = vpack.c.bf16 %v251, %v251
  %v300 = vpack.c.bf16 %v252, %v252
  %v301 = vpack.c.bf16 %v253, %v253
  %v302 = vpack.c.bf16 %v254, %v254
  %v303 = vpack.c.bf16 %v255, %v255
  %v304 = vpack.c.bf16 %v256, %v256
  %v305 = vpack.c.bf16 %v257, %v257
  %v306 = vpack.c.bf16 %v258, %v258
  %v307 = vpack.c.bf16 %v259, %v259
  %v308 = vpack.c.bf16 %v260, %v260
  %v309 = vpack.c.bf16 %v261, %v261
  %v310 = vpack.c.bf16 %v262, %v262
  %v311 = vpack.c.bf16 %v263, %v263
  %v312 = vpack.c.bf16 %v264, %v264
  %v313 = vpack.c.bf16 %v265, %v265
  %v314 = vpack.c.bf16 %v266, %v266
  %315 = vst [vmem:[#allocation3] sm:$0xf] %v299
  %316 = vst [vmem:[#allocation3 + $0x4] sm:$0xf] %v300
  %317 = vst [vmem:[#allocation3 + $0x8] sm:$0xf] %v301
  %318 = vst [vmem:[#allocation3 + $0xc] sm:$0xf] %v302
  %319 = vst [vmem:[#allocation3 + $0x10] sm:$0xf] %v303
  %320 = vst [vmem:[#allocation3 + $0x14] sm:$0xf] %v304
  %321 = vst [vmem:[#allocation3 + $0x18] sm:$0xf] %v305
  %322 = vst [vmem:[#allocation3 + $0x1c] sm:$0xf] %v306
  %323 = vst [vmem:[#allocation3 + $0x20] sm:$0xf] %v307
  %324 = vst [vmem:[#allocation3 + $0x24] sm:$0xf] %v308
  %325 = vst [vmem:[#allocation3 + $0x28] sm:$0xf] %v309
  %326 = vst [vmem:[#allocation3 + $0x2c] sm:$0xf] %v310
  %327 = vst [vmem:[#allocation3 + $0x30] sm:$0xf] %v311
  %328 = vst [vmem:[#allocation3 + $0x34] sm:$0xf] %v312
  %329 = vst [vmem:[#allocation3 + $0x38] sm:$0xf] %v313
  %330 = vst [vmem:[#allocation3 + $0x3c] sm:$0xf] %v314
  %v331 = vld [vmem:[%s1] sm:$0xff]
  %v332 = vld [vmem:[%s1 + $0x8] sm:$0xff]
  %v333 = vld [vmem:[%s6] sm:$0xf]
  %v334 = vld [vmem:[%s6 + $0x4] sm:$0xf]
  %v335 = vld [vmem:[%s6 + $0x8] sm:$0xf]
  %v336 = vld [vmem:[%s6 + $0xc] sm:$0xf]
  %v337 = vld [vmem:[%s7] sm:$0xf]
  %v338 = vld [vmem:[%s7 + $0x4] sm:$0xf]
  %v339 = vld [vmem:[%s7 + $0x8] sm:$0xf]
  %v340 = vld [vmem:[%s7 + $0xc] sm:$0xf]
  %vm341 = vcmp.gt.s32.totalorder %v331, 0
  %vm342 = vcmp.gt.s32.totalorder %v332, 0
  %v343 = vld [vmem:[#allocation2] sm:$0xf]
  %v344 = vld [vmem:[#allocation2 + $0x4] sm:$0xf]
  %v345 = vunpack.c.l.bf16 %v343
  %v346 = vunpack.c.l.bf16 %v344
  %v351 = vunpack.c.l.b16 %v333
  %v352 = vunpack.c.l.b16 %v334
  %v353 = vunpack.c.l.b16 %v335
  %v354 = vunpack.c.l.b16 %v336
  %v355 = vpack.c.b16 %v352, %v351
  %v356 = vpack.c.b16 %v354, %v353
  %vm359 = vcmask 261120
  %v361 = vsel %vm359, 0, 0
  %363 = vmatpush.bf16.msra.mxu0 0
  %364 = vmatpush.bf16.msra.mxu0 0
  %365 = vmatpush.bf16.msra.mxu0 0
  %366 = vmatpush.bf16.msra.mxu0 0
  %367 = vmatpush.bf16.msra.mxu0 0
  %368 = vmatpush.bf16.msra.mxu0 0
  %369 = vmatpush.bf16.msra.mxu0 %v356
  %370 = vmatpush.bf16.msra.mxu0 %v355
  %371 = vmatmul.bf16.gmra.mxu0 %v361
  %v372 = vpop.f32.mrf.mxu0
  %v373 = vadd.f32 0.0, %v372
  %v374 = vpop.f32.mrf.mxu0
  %v375 = vadd.f32 0.0, %v374
  %376 = vdwg.mxu0
  %v377 = vadd.f32 %v345, %v373
  %v378 = vadd.f32 %v346, %v375
  %v379 = vxor.u32 %v377, 2147483648
  %v380 = vxor.u32 %v378, 2147483648
  %v381 = vmul.f32 %v379, 1.442695
  %v382 = vpow.pop %v381
  %v383 = vmul.f32 %v380, 1.442695
  %v384 = vpow.pop %v383
  %v385 = vadd.f32 %v382, 1.0
  %v386 = vadd.f32 %v384, 1.0
  %v387 = vrcp.pop %v385
  %v388 = vmul.f32 %v385, %v387
  %v389 = vsub.f32 1.0, %v388
  %v390 = vmul.f32 %v387, %v389
  %v391 = vadd.f32 %v387, %v390
  %vm392 = vweird.f32 %v385
  %vm393 = vweird.f32 %v387
  %vm394 = vmor %vm392, %vm393
  %v395 = vsel %vm394, %v387, %v391
  %v396 = vand.u32 2147483647, %v385
  %vm397 = vcmp.eq.f32.partialorder %v396, 8.507059e+37
  %v398 = vand.u32 %v385, 2147483648
  %v399 = vor.u32 1.1754944e-38, %v398
  %v400 = vsel %vm397, %v399, %v395
  %v401 = vmul.f32 1.0, %v400
  %v402 = vrcp.pop %v386
  %v403 = vmul.f32 %v386, %v402
  %v404 = vsub.f32 1.0, %v403
  %v405 = vmul.f32 %v402, %v404
  %v406 = vadd.f32 %v402, %v405
  %vm407 = vweird.f32 %v386
  %vm408 = vweird.f32 %v402
  %vm409 = vmor %vm407, %vm408
  %v410 = vsel %vm409, %v402, %v406
  %v411 = vand.u32 2147483647, %v386
  %vm412 = vcmp.eq.f32.partialorder %v411, 8.507059e+37
  %v413 = vand.u32 %v386, 2147483648
  %v414 = vor.u32 1.1754944e-38, %v413
  %v415 = vsel %vm412, %v414, %v410
  %v416 = vmul.f32 1.0, %v415
  %v417 = vtanh.pop %v377
  %v418 = vtanh.pop %v378
  %v419 = vmul.f32 %v401, 0.0
  %v420 = vmul.f32 %v416, 0.0
  %423 = vrot.lane.b32.xlu0 %v417, 32
  %v424 = vpop.permute.xlu0 %423
  %425 = vrot.lane.b32.xlu0 %v418, 32
  %v426 = vpop.permute.xlu0 %425
  %v429 = vmul.f32 %v401, %v424
  %v430 = vmul.f32 %v416, %v426
  %433 = vrot.lane.b32.xlu0 %v429, 32
  %v434 = vpop.permute.xlu0 %433
  %435 = vrot.lane.b32.xlu0 %v430, 32
  %v436 = vpop.permute.xlu0 %435
  %v439 = vadd.f32 %v419, %v434
  %v440 = vadd.f32 %v420, %v436
  %v441 = vtanh.pop %v439
  %v442 = vtanh.pop %v440
  %445 = vrot.lane.b32.xlu0 %v441, 32
  %v446 = vpop.permute.xlu0 %445
  %447 = vrot.lane.b32.xlu0 %v442, 32
  %v448 = vpop.permute.xlu0 %447
  %v451 = vmul.f32 %v401, %v446
  %v452 = vmul.f32 %v416, %v448
  %v453 = vsel %vm341, 1, 0
  %v454 = vsel %vm342, 1, 0
  %455 = vset.pattern.permute.xlu0 0
  %456 = vperm.xlu0 %455, %v453
  %v457 = vpop.permute.xlu0 %456
  %458 = vset.pattern.permute.xlu0 0
  %459 = vperm.xlu0 %458, %v454
  %v460 = vpop.permute.xlu0 %459
  %vm461 = vcmp.eq.s32.totalorder %v457, 1
  %vm462 = vcmp.eq.s32.totalorder %v460, 1
  %v463 = vsel %vm461, %v451, 0.0
  %v464 = vsel %vm462, %v452, 0.0
  %v465 = vpack.c.bf16 %v463, %v463
  %v466 = vpack.c.bf16 %v464, %v464
  %469 = vrot.lane.b32.xlu0 %v465, 64
  %v470 = vpop.permute.xlu0 %469
  %471 = vrot.lane.b32.xlu0 %v466, 64
  %v472 = vpop.permute.xlu0 %471
  %vm475 = vcmask 257024
  %476 = vst.msk [vmem:[%s8] sm:$0xf] %vm475, %v470
  %477 = vst.msk [vmem:[%s8 + $0x4] sm:$0xf] %vm475, %v472
  %v478 = vsel %vm461, %v439, 0.0
  %v479 = vsel %vm462, %v440, 0.0
  %vm480 = vcmp.gt.s32.totalorder %v331, 7
  %vm481 = vcmp.gt.s32.totalorder %v332, 7
  %s482 = scalar_lea.vmem [#allocation3], 56
  %v483 = vld [vmem:[%s482] sm:$0xf]
  %v484 = vld [vmem:[%s482 + $0x4] sm:$0xf]
  %v485 = vunpack.c.l.bf16 %v483
  %v486 = vunpack.c.l.bf16 %v484
  %v491 = vunpack.c.l.b16 %v337
  %v492 = vunpack.c.l.b16 %v338
  %v493 = vunpack.c.l.b16 %v339
  %v494 = vunpack.c.l.b16 %v340
  %v495 = vpack.c.b16 %v492, %v491
  %v496 = vpack.c.b16 %v494, %v493
  %499 = vmatpush.bf16.msra.mxu0 0
  %500 = vmatpush.bf16.msra.mxu0 0
  %501 = vmatpush.bf16.msra.mxu0 0
  %502 = vmatpush.bf16.msra.mxu0 0
  %503 = vmatpush.bf16.msra.mxu0 0
  %504 = vmatpush.bf16.msra.mxu0 0
  %505 = vmatpush.bf16.msra.mxu0 %v496
  %506 = vmatpush.bf16.msra.mxu0 %v495
  %507 = vmatmul.bf16.gmra.mxu0 %v361
  %v508 = vpop.f32.mrf.mxu0
  %v509 = vadd.f32 0.0, %v508
  %v510 = vpop.f32.mrf.mxu0
  %v511 = vadd.f32 0.0, %v510
  %512 = vdwg.mxu0
  %v513 = vadd.f32 %v485, %v509
  %v514 = vadd.f32 %v486, %v511
  %v515 = vxor.u32 %v513, 2147483648
  %v516 = vxor.u32 %v514, 2147483648
  %v517 = vmul.f32 %v515, 1.442695
  %v518 = vpow.pop %v517
  %v519 = vmul.f32 %v516, 1.442695
  %v520 = vpow.pop %v519
  %v521 = vadd.f32 %v518, 1.0
  %v522 = vadd.f32 %v520, 1.0
  %v523 = vrcp.pop %v521
  %v524 = vmul.f32 %v521, %v523
  %v525 = vsub.f32 1.0, %v524
  %v526 = vmul.f32 %v523, %v525
  %v527 = vadd.f32 %v523, %v526
  %vm528 = vweird.f32 %v521
  %vm529 = vweird.f32 %v523
  %vm530 = vmor %vm528, %vm529
  %v531 = vsel %vm530, %v523, %v527
  %v532 = vand.u32 2147483647, %v521
  %vm533 = vcmp.eq.f32.partialorder %v532, 8.507059e+37
  %v534 = vand.u32 %v521, 2147483648
  %v535 = vor.u32 1.1754944e-38, %v534
  %v536 = vsel %vm533, %v535, %v531
  %v537 = vmul.f32 1.0, %v536
  %v538 = vrcp.pop %v522
  %v539 = vmul.f32 %v522, %v538
  %v540 = vsub.f32 1.0, %v539
  %v541 = vmul.f32 %v538, %v540
  %v542 = vadd.f32 %v538, %v541
  %vm543 = vweird.f32 %v522
  %vm544 = vweird.f32 %v538
  %vm545 = vmor %vm543, %vm544
  %v546 = vsel %vm545, %v538, %v542
  %v547 = vand.u32 2147483647, %v522
  %vm548 = vcmp.eq.f32.partialorder %v547, 8.507059e+37
  %v549 = vand.u32 %v522, 2147483648
  %v550 = vor.u32 1.1754944e-38, %v549
  %v551 = vsel %vm548, %v550, %v546
  %v552 = vmul.f32 1.0, %v551
  %v553 = vtanh.pop %v513
  %v554 = vtanh.pop %v514
  %v555 = vmul.f32 %v537, 0.0
  %v556 = vmul.f32 %v552, 0.0
  %559 = vrot.lane.b32.xlu0 %v553, 32
  %v560 = vpop.permute.xlu0 %559
  %561 = vrot.lane.b32.xlu0 %v554, 32
  %v562 = vpop.permute.xlu0 %561
  %v565 = vmul.f32 %v537, %v560
  %v566 = vmul.f32 %v552, %v562
  %569 = vrot.lane.b32.xlu0 %v565, 32
  %v570 = vpop.permute.xlu0 %569
  %571 = vrot.lane.b32.xlu0 %v566, 32
  %v572 = vpop.permute.xlu0 %571
  %v575 = vadd.f32 %v555, %v570
  %v576 = vadd.f32 %v556, %v572
  %v577 = vtanh.pop %v575
  %v578 = vtanh.pop %v576
  %581 = vrot.lane.b32.xlu0 %v577, 32
  %v582 = vpop.permute.xlu0 %581
  %583 = vrot.lane.b32.xlu0 %v578, 32
  %v584 = vpop.permute.xlu0 %583
  %v587 = vmul.f32 %v537, %v582
  %v588 = vmul.f32 %v552, %v584
  %v589 = vsel %vm480, 1, 0
  %v590 = vsel %vm481, 1, 0
  %591 = vset.pattern.permute.xlu0 0
  %592 = vperm.xlu0 %591, %v589
  %v593 = vpop.permute.xlu0 %592
  %594 = vset.pattern.permute.xlu0 0
  %595 = vperm.xlu0 %594, %v590
  %v596 = vpop.permute.xlu0 %595
  %vm597 = vcmp.eq.s32.totalorder %v593, 1
  %vm598 = vcmp.eq.s32.totalorder %v596, 1
  %v599 = vsel %vm597, %v587, 0.0
  %v600 = vsel %vm598, %v588, 0.0
  %v601 = vpack.c.bf16 %v599, %v599
  %v602 = vpack.c.bf16 %v600, %v600
  %605 = vrot.lane.b32.xlu0 %v601, 64
  %v606 = vpop.permute.xlu0 %605
  %607 = vrot.lane.b32.xlu0 %v602, 64
  %v608 = vpop.permute.xlu0 %607
  %s611 = scalar_lea.vmem %s9, 56
  %612 = vst.msk [vmem:[%s611] sm:$0xf] %vm475, %v606
  %613 = vst.msk [vmem:[%s611 + $0x4] sm:$0xf] %vm475, %v608
  %v614 = vsel %vm597, %v575, 0.0
  %v615 = vsel %vm598, %v576, 0.0
  %vm616 = vcmp.gt.s32.totalorder %v331, 1
  %vm617 = vcmp.gt.s32.totalorder %v332, 1
  %s618 = scalar_lea.vmem [#allocation2], 8
  %v619 = vld [vmem:[%s618] sm:$0xf]
  %v620 = vld [vmem:[%s618 + $0x4] sm:$0xf]
  %v621 = vunpack.c.l.bf16 %v619
  %v622 = vunpack.c.l.bf16 %v620
  %v623 = vunpack.c.l.b16 %v465
  %v624 = vunpack.c.l.b16 %v466
  %v625 = vpack.c.b16 %v624, %v623
  %626 = vrot.lane.b32.xlu0 %v625, 64
  %v627 = vpop.permute.xlu0 %626
  %v629 = vsel %vm359, %v627, 0
  %631 = vmatpush.bf16.msra.mxu0 0
  %632 = vmatpush.bf16.msra.mxu0 0
  %633 = vmatpush.bf16.msra.mxu0 0
  %634 = vmatpush.bf16.msra.mxu0 0
  %635 = vmatpush.bf16.msra.mxu0 0
  %636 = vmatpush.bf16.msra.mxu0 0
  %637 = vmatpush.bf16.msra.mxu0 %v356
  %638 = vmatpush.bf16.msra.mxu0 %v355
  %639 = vmatmul.bf16.gmra.mxu0 %v629
  %v640 = vpop.f32.mrf.mxu0
  %v641 = vadd.f32 0.0, %v640
  %v642 = vpop.f32.mrf.mxu0
  %v643 = vadd.f32 0.0, %v642
  %644 = vdwg.mxu0
  %v645 = vadd.f32 %v621, %v641
  %v646 = vadd.f32 %v622, %v643
  %v647 = vxor.u32 %v645, 2147483648
  %v648 = vxor.u32 %v646, 2147483648
  %v649 = vmul.f32 %v647, 1.442695
  %v650 = vpow.pop %v649
  %v651 = vmul.f32 %v648, 1.442695
  %v652 = vpow.pop %v651
  %v653 = vadd.f32 %v650, 1.0
  %v654 = vadd.f32 %v652, 1.0
  %v655 = vrcp.pop %v653
  %v656 = vmul.f32 %v653, %v655
  %v657 = vsub.f32 1.0, %v656
  %v658 = vmul.f32 %v655, %v657
  %v659 = vadd.f32 %v655, %v658
  %vm660 = vweird.f32 %v653
  %vm661 = vweird.f32 %v655
  %vm662 = vmor %vm660, %vm661
  %v663 = vsel %vm662, %v655, %v659
  %v664 = vand.u32 2147483647, %v653
  %vm665 = vcmp.eq.f32.partialorder %v664, 8.507059e+37
  %v666 = vand.u32 %v653, 2147483648
  %v667 = vor.u32 1.1754944e-38, %v666
  %v668 = vsel %vm665, %v667, %v663
  %v669 = vmul.f32 1.0, %v668
  %v670 = vrcp.pop %v654
  %v671 = vmul.f32 %v654, %v670
  %v672 = vsub.f32 1.0, %v671
  %v673 = vmul.f32 %v670, %v672
  %v674 = vadd.f32 %v670, %v673
  %vm675 = vweird.f32 %v654
  %vm676 = vweird.f32 %v670
  %vm677 = vmor %vm675, %vm676
  %v678 = vsel %vm677, %v670, %v674
  %v679 = vand.u32 2147483647, %v654
  %vm680 = vcmp.eq.f32.partialorder %v679, 8.507059e+37
  %v681 = vand.u32 %v654, 2147483648
  %v682 = vor.u32 1.1754944e-38, %v681
  %v683 = vsel %vm680, %v682, %v678
  %v684 = vmul.f32 1.0, %v683
  %v685 = vtanh.pop %v645
  %v686 = vtanh.pop %v646
  %v687 = vmul.f32 %v669, %v478
  %v688 = vmul.f32 %v684, %v479
  %691 = vrot.lane.b32.xlu0 %v685, 32
  %v692 = vpop.permute.xlu0 %691
  %693 = vrot.lane.b32.xlu0 %v686, 32
  %v694 = vpop.permute.xlu0 %693
  %v697 = vmul.f32 %v669, %v692
  %v698 = vmul.f32 %v684, %v694
  %701 = vrot.lane.b32.xlu0 %v697, 32
  %v702 = vpop.permute.xlu0 %701
  %703 = vrot.lane.b32.xlu0 %v698, 32
  %v704 = vpop.permute.xlu0 %703
  %v707 = vadd.f32 %v687, %v702
  %v708 = vadd.f32 %v688, %v704
  %v709 = vtanh.pop %v707
  %v710 = vtanh.pop %v708
  %713 = vrot.lane.b32.xlu0 %v709, 32
  %v714 = vpop.permute.xlu0 %713
  %715 = vrot.lane.b32.xlu0 %v710, 32
  %v716 = vpop.permute.xlu0 %715
  %v719 = vmul.f32 %v669, %v714
  %v720 = vmul.f32 %v684, %v716
  %v721 = vsel %vm616, 1, 0
  %v722 = vsel %vm617, 1, 0
  %723 = vset.pattern.permute.xlu0 0
  %724 = vperm.xlu0 %723, %v721
  %v725 = vpop.permute.xlu0 %724
  %726 = vset.pattern.permute.xlu0 0
  %727 = vperm.xlu0 %726, %v722
  %v728 = vpop.permute.xlu0 %727
  %vm729 = vcmp.eq.s32.totalorder %v725, 1
  %vm730 = vcmp.eq.s32.totalorder %v728, 1
  %v731 = vsel %vm729, %v719, 0.0
  %v732 = vsel %vm730, %v720, 0.0
  %v733 = vpack.c.bf16 %v731, %v731
  %v734 = vpack.c.bf16 %v732, %v732
  %737 = vrot.lane.b32.xlu0 %v733, 64
  %v738 = vpop.permute.xlu0 %737
  %739 = vrot.lane.b32.xlu0 %v734, 64
  %v740 = vpop.permute.xlu0 %739
  %s743 = scalar_lea.vmem %s8, 8
  %744 = vst.msk [vmem:[%s743] sm:$0xf] %vm475, %v738
  %745 = vst.msk [vmem:[%s743 + $0x4] sm:$0xf] %vm475, %v740
  %v746 = vsel %vm729, %v719, %v463
  %v747 = vsel %vm730, %v720, %v464
  %v748 = vsel %vm729, %v707, %v478
  %v749 = vsel %vm730, %v708, %v479
  %vm750 = vcmp.gt.s32.totalorder %v331, 6
  %vm751 = vcmp.gt.s32.totalorder %v332, 6
  %s752 = scalar_lea.vmem [#allocation3], 48
  %v753 = vld [vmem:[%s752] sm:$0xf]
  %v754 = vld [vmem:[%s752 + $0x4] sm:$0xf]
  %v755 = vunpack.c.l.bf16 %v753
  %v756 = vunpack.c.l.bf16 %v754
  %v757 = vunpack.c.l.b16 %v601
  %v758 = vunpack.c.l.b16 %v602
  %v759 = vpack.c.b16 %v758, %v757
  %760 = vrot.lane.b32.xlu0 %v759, 64
  %v761 = vpop.permute.xlu0 %760
  %v763 = vsel %vm359, %v761, 0
  %765 = vmatpush.bf16.msra.mxu0 0
  %766 = vmatpush.bf16.msra.mxu0 0
  %767 = vmatpush.bf16.msra.mxu0 0
  %768 = vmatpush.bf16.msra.mxu0 0
  %769 = vmatpush.bf16.msra.mxu0 0
  %770 = vmatpush.bf16.msra.mxu0 0
  %771 = vmatpush.bf16.msra.mxu0 %v496
  %772 = vmatpush.bf16.msra.mxu0 %v495
  %773 = vmatmul.bf16.gmra.mxu0 %v763
  %v774 = vpop.f32.mrf.mxu0
  %v775 = vadd.f32 0.0, %v774
  %v776 = vpop.f32.mrf.mxu0
  %v777 = vadd.f32 0.0, %v776
  %778 = vdwg.mxu0
  %v779 = vadd.f32 %v755, %v775
  %v780 = vadd.f32 %v756, %v777
  %v781 = vxor.u32 %v779, 2147483648
  %v782 = vxor.u32 %v780, 2147483648
  %v783 = vmul.f32 %v781, 1.442695
  %v784 = vpow.pop %v783
  %v785 = vmul.f32 %v782, 1.442695
  %v786 = vpow.pop %v785
  %v787 = vadd.f32 %v784, 1.0
  %v788 = vadd.f32 %v786, 1.0
  %v789 = vrcp.pop %v787
  %v790 = vmul.f32 %v787, %v789
  %v791 = vsub.f32 1.0, %v790
  %v792 = vmul.f32 %v789, %v791
  %v793 = vadd.f32 %v789, %v792
  %vm794 = vweird.f32 %v787
  %vm795 = vweird.f32 %v789
  %vm796 = vmor %vm794, %vm795
  %v797 = vsel %vm796, %v789, %v793
  %v798 = vand.u32 2147483647, %v787
  %vm799 = vcmp.eq.f32.partialorder %v798, 8.507059e+37
  %v800 = vand.u32 %v787, 2147483648
  %v801 = vor.u32 1.1754944e-38, %v800
  %v802 = vsel %vm799, %v801, %v797
  %v803 = vmul.f32 1.0, %v802
  %v804 = vrcp.pop %v788
  %v805 = vmul.f32 %v788, %v804
  %v806 = vsub.f32 1.0, %v805
  %v807 = vmul.f32 %v804, %v806
  %v808 = vadd.f32 %v804, %v807
  %vm809 = vweird.f32 %v788
  %vm810 = vweird.f32 %v804
  %vm811 = vmor %vm809, %vm810
  %v812 = vsel %vm811, %v804, %v808
  %v813 = vand.u32 2147483647, %v788
  %vm814 = vcmp.eq.f32.partialorder %v813, 8.507059e+37
  %v815 = vand.u32 %v788, 2147483648
  %v816 = vor.u32 1.1754944e-38, %v815
  %v817 = vsel %vm814, %v816, %v812
  %v818 = vmul.f32 1.0, %v817
  %v819 = vtanh.pop %v779
  %v820 = vtanh.pop %v780
  %v821 = vmul.f32 %v803, %v614
  %v822 = vmul.f32 %v818, %v615
  %825 = vrot.lane.b32.xlu0 %v819, 32
  %v826 = vpop.permute.xlu0 %825
  %827 = vrot.lane.b32.xlu0 %v820, 32
  %v828 = vpop.permute.xlu0 %827
  %v831 = vmul.f32 %v803, %v826
  %v832 = vmul.f32 %v818, %v828
  %835 = vrot.lane.b32.xlu0 %v831, 32
  %v836 = vpop.permute.xlu0 %835
  %837 = vrot.lane.b32.xlu0 %v832, 32
  %v838 = vpop.permute.xlu0 %837
  %v841 = vadd.f32 %v821, %v836
  %v842 = vadd.f32 %v822, %v838
  %v843 = vtanh.pop %v841
  %v844 = vtanh.pop %v842
  %847 = vrot.lane.b32.xlu0 %v843, 32
  %v848 = vpop.permute.xlu0 %847
  %849 = vrot.lane.b32.xlu0 %v844, 32
  %v850 = vpop.permute.xlu0 %849
  %v853 = vmul.f32 %v803, %v848
  %v854 = vmul.f32 %v818, %v850
  %v855 = vsel %vm750, 1, 0
  %v856 = vsel %vm751, 1, 0
  %857 = vset.pattern.permute.xlu0 0
  %858 = vperm.xlu0 %857, %v855
  %v859 = vpop.permute.xlu0 %858
  %860 = vset.pattern.permute.xlu0 0
  %861 = vperm.xlu0 %860, %v856
  %v862 = vpop.permute.xlu0 %861
  %vm863 = vcmp.eq.s32.totalorder %v859, 1
  %vm864 = vcmp.eq.s32.totalorder %v862, 1
  %v865 = vsel %vm863, %v853, 0.0
  %v866 = vsel %vm864, %v854, 0.0
  %v867 = vpack.c.bf16 %v865, %v865
  %v868 = vpack.c.bf16 %v866, %v866
  %871 = vrot.lane.b32.xlu0 %v867, 64
  %v872 = vpop.permute.xlu0 %871
  %873 = vrot.lane.b32.xlu0 %v868, 64
  %v874 = vpop.permute.xlu0 %873
  %s877 = scalar_lea.vmem %s9, 48
  %878 = vst.msk [vmem:[%s877] sm:$0xf] %vm475, %v872
  %879 = vst.msk [vmem:[%s877 + $0x4] sm:$0xf] %vm475, %v874
  %v880 = vsel %vm863, %v853, %v599
  %v881 = vsel %vm864, %v854, %v600
  %v882 = vsel %vm863, %v841, %v614
  %v883 = vsel %vm864, %v842, %v615
  %vm884 = vcmp.gt.s32.totalorder %v331, 2
  %vm885 = vcmp.gt.s32.totalorder %v332, 2
  %s886 = scalar_lea.vmem [#allocation2], 16
  %v887 = vld [vmem:[%s886] sm:$0xf]
  %v888 = vld [vmem:[%s886 + $0x4] sm:$0xf]
  %v889 = vunpack.c.l.bf16 %v887
  %v890 = vunpack.c.l.bf16 %v888
  %v891 = vpack.c.bf16 %v747, %v746
  %893 = vrot.lane.b32.xlu0 %v891, 64
  %v894 = vpop.permute.xlu0 %893
  %v896 = vsel %vm359, %v894, 0
  %898 = vmatpush.bf16.msra.mxu0 0
  %899 = vmatpush.bf16.msra.mxu0 0
  %900 = vmatpush.bf16.msra.mxu0 0
  %901 = vmatpush.bf16.msra.mxu0 0
  %902 = vmatpush.bf16.msra.mxu0 0
  %903 = vmatpush.bf16.msra.mxu0 0
  %904 = vmatpush.bf16.msra.mxu0 %v356
  %905 = vmatpush.bf16.msra.mxu0 %v355
  %906 = vmatmul.bf16.gmra.mxu0 %v896
  %v907 = vpop.f32.mrf.mxu0
  %v908 = vadd.f32 0.0, %v907
  %v909 = vpop.f32.mrf.mxu0
  %v910 = vadd.f32 0.0, %v909
  %911 = vdwg.mxu0
  %v912 = vadd.f32 %v889, %v908
  %v913 = vadd.f32 %v890, %v910
  %v914 = vxor.u32 %v912, 2147483648
  %v915 = vxor.u32 %v913, 2147483648
  %v916 = vmul.f32 %v914, 1.442695
  %v917 = vpow.pop %v916
  %v918 = vmul.f32 %v915, 1.442695
  %v919 = vpow.pop %v918
  %v920 = vadd.f32 %v917, 1.0
  %v921 = vadd.f32 %v919, 1.0
  %v922 = vrcp.pop %v920
  %v923 = vmul.f32 %v920, %v922
  %v924 = vsub.f32 1.0, %v923
  %v925 = vmul.f32 %v922, %v924
  %v926 = vadd.f32 %v922, %v925
  %vm927 = vweird.f32 %v920
  %vm928 = vweird.f32 %v922
  %vm929 = vmor %vm927, %vm928
  %v930 = vsel %vm929, %v922, %v926
  %v931 = vand.u32 2147483647, %v920
  %vm932 = vcmp.eq.f32.partialorder %v931, 8.507059e+37
  %v933 = vand.u32 %v920, 2147483648
  %v934 = vor.u32 1.1754944e-38, %v933
  %v935 = vsel %vm932, %v934, %v930
  %v936 = vmul.f32 1.0, %v935
  %v937 = vrcp.pop %v921
  %v938 = vmul.f32 %v921, %v937
  %v939 = vsub.f32 1.0, %v938
  %v940 = vmul.f32 %v937, %v939
  %v941 = vadd.f32 %v937, %v940
  %vm942 = vweird.f32 %v921
  %vm943 = vweird.f32 %v937
  %vm944 = vmor %vm942, %vm943
  %v945 = vsel %vm944, %v937, %v941
  %v946 = vand.u32 2147483647, %v921
  %vm947 = vcmp.eq.f32.partialorder %v946, 8.507059e+37
  %v948 = vand.u32 %v921, 2147483648
  %v949 = vor.u32 1.1754944e-38, %v948
  %v950 = vsel %vm947, %v949, %v945
  %v951 = vmul.f32 1.0, %v950
  %v952 = vtanh.pop %v912
  %v953 = vtanh.pop %v913
  %v954 = vmul.f32 %v936, %v748
  %v955 = vmul.f32 %v951, %v749
  %958 = vrot.lane.b32.xlu0 %v952, 32
  %v959 = vpop.permute.xlu0 %958
  %960 = vrot.lane.b32.xlu0 %v953, 32
  %v961 = vpop.permute.xlu0 %960
  %v964 = vmul.f32 %v936, %v959
  %v965 = vmul.f32 %v951, %v961
  %968 = vrot.lane.b32.xlu0 %v964, 32
  %v969 = vpop.permute.xlu0 %968
  %970 = vrot.lane.b32.xlu0 %v965, 32
  %v971 = vpop.permute.xlu0 %970
  %v974 = vadd.f32 %v954, %v969
  %v975 = vadd.f32 %v955, %v971
  %v976 = vtanh.pop %v974
  %v977 = vtanh.pop %v975
  %980 = vrot.lane.b32.xlu0 %v976, 32
  %v981 = vpop.permute.xlu0 %980
  %982 = vrot.lane.b32.xlu0 %v977, 32
  %v983 = vpop.permute.xlu0 %982
  %v986 = vmul.f32 %v936, %v981
  %v987 = vmul.f32 %v951, %v983
  %v988 = vsel %vm884, 1, 0
  %v989 = vsel %vm885, 1, 0
  %990 = vset.pattern.permute.xlu0 0
  %991 = vperm.xlu0 %990, %v988
  %v992 = vpop.permute.xlu0 %991
  %993 = vset.pattern.permute.xlu0 0
  %994 = vperm.xlu0 %993, %v989
  %v995 = vpop.permute.xlu0 %994
  %vm996 = vcmp.eq.s32.totalorder %v992, 1
  %vm997 = vcmp.eq.s32.totalorder %v995, 1
  %v998 = vsel %vm996, %v986, 0.0
  %v999 = vsel %vm997, %v987, 0.0
  %v1000 = vpack.c.bf16 %v998, %v998
  %v1001 = vpack.c.bf16 %v999, %v999
  %1004 = vrot.lane.b32.xlu0 %v1000, 64
  %v1005 = vpop.permute.xlu0 %1004
  %1006 = vrot.lane.b32.xlu0 %v1001, 64
  %v1007 = vpop.permute.xlu0 %1006
  %s1010 = scalar_lea.vmem %s8, 16
  %1011 = vst.msk [vmem:[%s1010] sm:$0xf] %vm475, %v1005
  %1012 = vst.msk [vmem:[%s1010 + $0x4] sm:$0xf] %vm475, %v1007
  %v1013 = vsel %vm996, %v986, %v746
  %v1014 = vsel %vm997, %v987, %v747
  %v1015 = vsel %vm996, %v974, %v748
  %v1016 = vsel %vm997, %v975, %v749
  %vm1017 = vcmp.gt.s32.totalorder %v331, 5
  %vm1018 = vcmp.gt.s32.totalorder %v332, 5
  %s1019 = scalar_lea.vmem [#allocation3], 40
  %v1020 = vld [vmem:[%s1019] sm:$0xf]
  %v1021 = vld [vmem:[%s1019 + $0x4] sm:$0xf]
  %v1022 = vunpack.c.l.bf16 %v1020
  %v1023 = vunpack.c.l.bf16 %v1021
  %v1024 = vpack.c.bf16 %v881, %v880
  %1026 = vrot.lane.b32.xlu0 %v1024, 64
  %v1027 = vpop.permute.xlu0 %1026
  %v1029 = vsel %vm359, %v1027, 0
  %1031 = vmatpush.bf16.msra.mxu0 0
  %1032 = vmatpush.bf16.msra.mxu0 0
  %1033 = vmatpush.bf16.msra.mxu0 0
  %1034 = vmatpush.bf16.msra.mxu0 0
  %1035 = vmatpush.bf16.msra.mxu0 0
  %1036 = vmatpush.bf16.msra.mxu0 0
  %1037 = vmatpush.bf16.msra.mxu0 %v496
  %1038 = vmatpush.bf16.msra.mxu0 %v495
  %1039 = vmatmul.bf16.gmra.mxu0 %v1029
  %v1040 = vpop.f32.mrf.mxu0
  %v1041 = vadd.f32 0.0, %v1040
  %v1042 = vpop.f32.mrf.mxu0
  %v1043 = vadd.f32 0.0, %v1042
  %1044 = vdwg.mxu0
  %v1045 = vadd.f32 %v1022, %v1041
  %v1046 = vadd.f32 %v1023, %v1043
  %v1047 = vxor.u32 %v1045, 2147483648
  %v1048 = vxor.u32 %v1046, 2147483648
  %v1049 = vmul.f32 %v1047, 1.442695
  %v1050 = vpow.pop %v1049
  %v1051 = vmul.f32 %v1048, 1.442695
  %v1052 = vpow.pop %v1051
  %v1053 = vadd.f32 %v1050, 1.0
  %v1054 = vadd.f32 %v1052, 1.0
  %v1055 = vrcp.pop %v1053
  %v1056 = vmul.f32 %v1053, %v1055
  %v1057 = vsub.f32 1.0, %v1056
  %v1058 = vmul.f32 %v1055, %v1057
  %v1059 = vadd.f32 %v1055, %v1058
  %vm1060 = vweird.f32 %v1053
  %vm1061 = vweird.f32 %v1055
  %vm1062 = vmor %vm1060, %vm1061
  %v1063 = vsel %vm1062, %v1055, %v1059
  %v1064 = vand.u32 2147483647, %v1053
  %vm1065 = vcmp.eq.f32.partialorder %v1064, 8.507059e+37
  %v1066 = vand.u32 %v1053, 2147483648
  %v1067 = vor.u32 1.1754944e-38, %v1066
  %v1068 = vsel %vm1065, %v1067, %v1063
  %v1069 = vmul.f32 1.0, %v1068
  %v1070 = vrcp.pop %v1054
  %v1071 = vmul.f32 %v1054, %v1070
  %v1072 = vsub.f32 1.0, %v1071
  %v1073 = vmul.f32 %v1070, %v1072
  %v1074 = vadd.f32 %v1070, %v1073
  %vm1075 = vweird.f32 %v1054
  %vm1076 = vweird.f32 %v1070
  %vm1077 = vmor %vm1075, %vm1076
  %v1078 = vsel %vm1077, %v1070, %v1074
  %v1079 = vand.u32 2147483647, %v1054
  %vm1080 = vcmp.eq.f32.partialorder %v1079, 8.507059e+37
  %v1081 = vand.u32 %v1054, 2147483648
  %v1082 = vor.u32 1.1754944e-38, %v1081
  %v1083 = vsel %vm1080, %v1082, %v1078
  %v1084 = vmul.f32 1.0, %v1083
  %v1085 = vtanh.pop %v1045
  %v1086 = vtanh.pop %v1046
  %v1087 = vmul.f32 %v1069, %v882
  %v1088 = vmul.f32 %v1084, %v883
  %1091 = vrot.lane.b32.xlu0 %v1085, 32
  %v1092 = vpop.permute.xlu0 %1091
  %1093 = vrot.lane.b32.xlu0 %v1086, 32
  %v1094 = vpop.permute.xlu0 %1093
  %v1097 = vmul.f32 %v1069, %v1092
  %v1098 = vmul.f32 %v1084, %v1094
  %1101 = vrot.lane.b32.xlu0 %v1097, 32
  %v1102 = vpop.permute.xlu0 %1101
  %1103 = vrot.lane.b32.xlu0 %v1098, 32
  %v1104 = vpop.permute.xlu0 %1103
  %v1107 = vadd.f32 %v1087, %v1102
  %v1108 = vadd.f32 %v1088, %v1104
  %v1109 = vtanh.pop %v1107
  %v1110 = vtanh.pop %v1108
  %1113 = vrot.lane.b32.xlu0 %v1109, 32
  %v1114 = vpop.permute.xlu0 %1113
  %1115 = vrot.lane.b32.xlu0 %v1110, 32
  %v1116 = vpop.permute.xlu0 %1115
  %v1119 = vmul.f32 %v1069, %v1114
  %v1120 = vmul.f32 %v1084, %v1116
  %v1121 = vsel %vm1017, 1, 0
  %v1122 = vsel %vm1018, 1, 0
  %1123 = vset.pattern.permute.xlu0 0
  %1124 = vperm.xlu0 %1123, %v1121
  %v1125 = vpop.permute.xlu0 %1124
  %1126 = vset.pattern.permute.xlu0 0
  %1127 = vperm.xlu0 %1126, %v1122
  %v1128 = vpop.permute.xlu0 %1127
  %vm1129 = vcmp.eq.s32.totalorder %v1125, 1
  %vm1130 = vcmp.eq.s32.totalorder %v1128, 1
  %v1131 = vsel %vm1129, %v1119, 0.0
  %v1132 = vsel %vm1130, %v1120, 0.0
  %v1133 = vpack.c.bf16 %v1131, %v1131
  %v1134 = vpack.c.bf16 %v1132, %v1132
  %1137 = vrot.lane.b32.xlu0 %v1133, 64
  %v1138 = vpop.permute.xlu0 %1137
  %1139 = vrot.lane.b32.xlu0 %v1134, 64
  %v1140 = vpop.permute.xlu0 %1139
  %s1143 = scalar_lea.vmem %s9, 40
  %1144 = vst.msk [vmem:[%s1143] sm:$0xf] %vm475, %v1138
  %1145 = vst.msk [vmem:[%s1143 + $0x4] sm:$0xf] %vm475, %v1140
  %v1146 = vsel %vm1129, %v1119, %v880
  %v1147 = vsel %vm1130, %v1120, %v881
  %v1148 = vsel %vm1129, %v1107, %v882
  %v1149 = vsel %vm1130, %v1108, %v883
  %vm1150 = vcmp.gt.s32.totalorder %v331, 3
  %vm1151 = vcmp.gt.s32.totalorder %v332, 3
  %s1152 = scalar_lea.vmem [#allocation2], 24
  %v1153 = vld [vmem:[%s1152] sm:$0xf]
  %v1154 = vld [vmem:[%s1152 + $0x4] sm:$0xf]
  %v1155 = vunpack.c.l.bf16 %v1153
  %v1156 = vunpack.c.l.bf16 %v1154
  %v1157 = vpack.c.bf16 %v1014, %v1013
  %1159 = vrot.lane.b32.xlu0 %v1157, 64
  %v1160 = vpop.permute.xlu0 %1159
  %v1162 = vsel %vm359, %v1160, 0
  %1164 = vmatpush.bf16.msra.mxu0 0
  %1165 = vmatpush.bf16.msra.mxu0 0
  %1166 = vmatpush.bf16.msra.mxu0 0
  %1167 = vmatpush.bf16.msra.mxu0 0
  %1168 = vmatpush.bf16.msra.mxu0 0
  %1169 = vmatpush.bf16.msra.mxu0 0
  %1170 = vmatpush.bf16.msra.mxu0 %v356
  %1171 = vmatpush.bf16.msra.mxu0 %v355
  %1172 = vmatmul.bf16.gmra.mxu0 %v1162
  %v1173 = vpop.f32.mrf.mxu0
  %v1174 = vadd.f32 0.0, %v1173
  %v1175 = vpop.f32.mrf.mxu0
  %v1176 = vadd.f32 0.0, %v1175
  %1177 = vdwg.mxu0
  %v1178 = vadd.f32 %v1155, %v1174
  %v1179 = vadd.f32 %v1156, %v1176
  %v1180 = vxor.u32 %v1178, 2147483648
  %v1181 = vxor.u32 %v1179, 2147483648
  %v1182 = vmul.f32 %v1180, 1.442695
  %v1183 = vpow.pop %v1182
  %v1184 = vmul.f32 %v1181, 1.442695
  %v1185 = vpow.pop %v1184
  %v1186 = vadd.f32 %v1183, 1.0
  %v1187 = vadd.f32 %v1185, 1.0
  %v1188 = vrcp.pop %v1186
  %v1189 = vmul.f32 %v1186, %v1188
  %v1190 = vsub.f32 1.0, %v1189
  %v1191 = vmul.f32 %v1188, %v1190
  %v1192 = vadd.f32 %v1188, %v1191
  %vm1193 = vweird.f32 %v1186
  %vm1194 = vweird.f32 %v1188
  %vm1195 = vmor %vm1193, %vm1194
  %v1196 = vsel %vm1195, %v1188, %v1192
  %v1197 = vand.u32 2147483647, %v1186
  %vm1198 = vcmp.eq.f32.partialorder %v1197, 8.507059e+37
  %v1199 = vand.u32 %v1186, 2147483648
  %v1200 = vor.u32 1.1754944e-38, %v1199
  %v1201 = vsel %vm1198, %v1200, %v1196
  %v1202 = vmul.f32 1.0, %v1201
  %v1203 = vrcp.pop %v1187
  %v1204 = vmul.f32 %v1187, %v1203
  %v1205 = vsub.f32 1.0, %v1204
  %v1206 = vmul.f32 %v1203, %v1205
  %v1207 = vadd.f32 %v1203, %v1206
  %vm1208 = vweird.f32 %v1187
  %vm1209 = vweird.f32 %v1203
  %vm1210 = vmor %vm1208, %vm1209
  %v1211 = vsel %vm1210, %v1203, %v1207
  %v1212 = vand.u32 2147483647, %v1187
  %vm1213 = vcmp.eq.f32.partialorder %v1212, 8.507059e+37
  %v1214 = vand.u32 %v1187, 2147483648
  %v1215 = vor.u32 1.1754944e-38, %v1214
  %v1216 = vsel %vm1213, %v1215, %v1211
  %v1217 = vmul.f32 1.0, %v1216
  %v1218 = vtanh.pop %v1178
  %v1219 = vtanh.pop %v1179
  %v1220 = vmul.f32 %v1202, %v1015
  %v1221 = vmul.f32 %v1217, %v1016
  %1224 = vrot.lane.b32.xlu0 %v1218, 32
  %v1225 = vpop.permute.xlu0 %1224
  %1226 = vrot.lane.b32.xlu0 %v1219, 32
  %v1227 = vpop.permute.xlu0 %1226
  %v1230 = vmul.f32 %v1202, %v1225
  %v1231 = vmul.f32 %v1217, %v1227
  %1234 = vrot.lane.b32.xlu0 %v1230, 32
  %v1235 = vpop.permute.xlu0 %1234
  %1236 = vrot.lane.b32.xlu0 %v1231, 32
  %v1237 = vpop.permute.xlu0 %1236
  %v1240 = vadd.f32 %v1220, %v1235
  %v1241 = vadd.f32 %v1221, %v1237
  %v1242 = vtanh.pop %v1240
  %v1243 = vtanh.pop %v1241
  %1246 = vrot.lane.b32.xlu0 %v1242, 32
  %v1247 = vpop.permute.xlu0 %1246
  %1248 = vrot.lane.b32.xlu0 %v1243, 32
  %v1249 = vpop.permute.xlu0 %1248
  %v1252 = vmul.f32 %v1202, %v1247
  %v1253 = vmul.f32 %v1217, %v1249
  %v1254 = vsel %vm1150, 1, 0
  %v1255 = vsel %vm1151, 1, 0
  %1256 = vset.pattern.permute.xlu0 0
  %1257 = vperm.xlu0 %1256, %v1254
  %v1258 = vpop.permute.xlu0 %1257
  %1259 = vset.pattern.permute.xlu0 0
  %1260 = vperm.xlu0 %1259, %v1255
  %v1261 = vpop.permute.xlu0 %1260
  %vm1262 = vcmp.eq.s32.totalorder %v1258, 1
  %vm1263 = vcmp.eq.s32.totalorder %v1261, 1
  %v1264 = vsel %vm1262, %v1252, 0.0
  %v1265 = vsel %vm1263, %v1253, 0.0
  %v1266 = vpack.c.bf16 %v1264, %v1264
  %v1267 = vpack.c.bf16 %v1265, %v1265
  %1270 = vrot.lane.b32.xlu0 %v1266, 64
  %v1271 = vpop.permute.xlu0 %1270
  %1272 = vrot.lane.b32.xlu0 %v1267, 64
  %v1273 = vpop.permute.xlu0 %1272
  %s1276 = scalar_lea.vmem %s8, 24
  %1277 = vst.msk [vmem:[%s1276] sm:$0xf] %vm475, %v1271
  %1278 = vst.msk [vmem:[%s1276 + $0x4] sm:$0xf] %vm475, %v1273
  %v1279 = vsel %vm1262, %v1252, %v1013
  %v1280 = vsel %vm1263, %v1253, %v1014
  %v1281 = vsel %vm1262, %v1240, %v1015
  %v1282 = vsel %vm1263, %v1241, %v1016
  %vm1283 = vcmp.gt.s32.totalorder %v331, 4
  %vm1284 = vcmp.gt.s32.totalorder %v332, 4
  %s1285 = scalar_lea.vmem [#allocation3], 32
  %v1286 = vld [vmem:[%s1285] sm:$0xf]
  %v1287 = vld [vmem:[%s1285 + $0x4] sm:$0xf]
  %v1288 = vunpack.c.l.bf16 %v1286
  %v1289 = vunpack.c.l.bf16 %v1287
  %v1290 = vpack.c.bf16 %v1147, %v1146
  %1292 = vrot.lane.b32.xlu0 %v1290, 64
  %v1293 = vpop.permute.xlu0 %1292
  %v1295 = vsel %vm359, %v1293, 0
  %1297 = vmatpush.bf16.msra.mxu0 0
  %1298 = vmatpush.bf16.msra.mxu0 0
  %1299 = vmatpush.bf16.msra.mxu0 0
  %1300 = vmatpush.bf16.msra.mxu0 0
  %1301 = vmatpush.bf16.msra.mxu0 0
  %1302 = vmatpush.bf16.msra.mxu0 0
  %1303 = vmatpush.bf16.msra.mxu0 %v496
  %1304 = vmatpush.bf16.msra.mxu0 %v495
  %1305 = vmatmul.bf16.gmra.mxu0 %v1295
  %v1306 = vpop.f32.mrf.mxu0
  %v1307 = vadd.f32 0.0, %v1306
  %v1308 = vpop.f32.mrf.mxu0
  %v1309 = vadd.f32 0.0, %v1308
  %1310 = vdwg.mxu0
  %v1311 = vadd.f32 %v1288, %v1307
  %v1312 = vadd.f32 %v1289, %v1309
  %v1313 = vxor.u32 %v1311, 2147483648
  %v1314 = vxor.u32 %v1312, 2147483648
  %v1315 = vmul.f32 %v1313, 1.442695
  %v1316 = vpow.pop %v1315
  %v1317 = vmul.f32 %v1314, 1.442695
  %v1318 = vpow.pop %v1317
  %v1319 = vadd.f32 %v1316, 1.0
  %v1320 = vadd.f32 %v1318, 1.0
  %v1321 = vrcp.pop %v1319
  %v1322 = vmul.f32 %v1319, %v1321
  %v1323 = vsub.f32 1.0, %v1322
  %v1324 = vmul.f32 %v1321, %v1323
  %v1325 = vadd.f32 %v1321, %v1324
  %vm1326 = vweird.f32 %v1319
  %vm1327 = vweird.f32 %v1321
  %vm1328 = vmor %vm1326, %vm1327
  %v1329 = vsel %vm1328, %v1321, %v1325
  %v1330 = vand.u32 2147483647, %v1319
  %vm1331 = vcmp.eq.f32.partialorder %v1330, 8.507059e+37
  %v1332 = vand.u32 %v1319, 2147483648
  %v1333 = vor.u32 1.1754944e-38, %v1332
  %v1334 = vsel %vm1331, %v1333, %v1329
  %v1335 = vmul.f32 1.0, %v1334
  %v1336 = vrcp.pop %v1320
  %v1337 = vmul.f32 %v1320, %v1336
  %v1338 = vsub.f32 1.0, %v1337
  %v1339 = vmul.f32 %v1336, %v1338
  %v1340 = vadd.f32 %v1336, %v1339
  %vm1341 = vweird.f32 %v1320
  %vm1342 = vweird.f32 %v1336
  %vm1343 = vmor %vm1341, %vm1342
  %v1344 = vsel %vm1343, %v1336, %v1340
  %v1345 = vand.u32 2147483647, %v1320
  %vm1346 = vcmp.eq.f32.partialorder %v1345, 8.507059e+37
  %v1347 = vand.u32 %v1320, 2147483648
  %v1348 = vor.u32 1.1754944e-38, %v1347
  %v1349 = vsel %vm1346, %v1348, %v1344
  %v1350 = vmul.f32 1.0, %v1349
  %v1351 = vtanh.pop %v1311
  %v1352 = vtanh.pop %v1312
  %v1353 = vmul.f32 %v1335, %v1148
  %v1354 = vmul.f32 %v1350, %v1149
  %1357 = vrot.lane.b32.xlu0 %v1351, 32
  %v1358 = vpop.permute.xlu0 %1357
  %1359 = vrot.lane.b32.xlu0 %v1352, 32
  %v1360 = vpop.permute.xlu0 %1359
  %v1363 = vmul.f32 %v1335, %v1358
  %v1364 = vmul.f32 %v1350, %v1360
  %1367 = vrot.lane.b32.xlu0 %v1363, 32
  %v1368 = vpop.permute.xlu0 %1367
  %1369 = vrot.lane.b32.xlu0 %v1364, 32
  %v1370 = vpop.permute.xlu0 %1369
  %v1373 = vadd.f32 %v1353, %v1368
  %v1374 = vadd.f32 %v1354, %v1370
  %v1375 = vtanh.pop %v1373
  %v1376 = vtanh.pop %v1374
  %1379 = vrot.lane.b32.xlu0 %v1375, 32
  %v1380 = vpop.permute.xlu0 %1379
  %1381 = vrot.lane.b32.xlu0 %v1376, 32
  %v1382 = vpop.permute.xlu0 %1381
  %v1385 = vmul.f32 %v1335, %v1380
  %v1386 = vmul.f32 %v1350, %v1382
  %v1387 = vsel %vm1283, 1, 0
  %v1388 = vsel %vm1284, 1, 0
  %1389 = vset.pattern.permute.xlu0 0
  %1390 = vperm.xlu0 %1389, %v1387
  %v1391 = vpop.permute.xlu0 %1390
  %1392 = vset.pattern.permute.xlu0 0
  %1393 = vperm.xlu0 %1392, %v1388
  %v1394 = vpop.permute.xlu0 %1393
  %vm1395 = vcmp.eq.s32.totalorder %v1391, 1
  %vm1396 = vcmp.eq.s32.totalorder %v1394, 1
  %v1397 = vsel %vm1395, %v1385, 0.0
  %v1398 = vsel %vm1396, %v1386, 0.0
  %v1399 = vpack.c.bf16 %v1397, %v1397
  %v1400 = vpack.c.bf16 %v1398, %v1398
  %1403 = vrot.lane.b32.xlu0 %v1399, 64
  %v1404 = vpop.permute.xlu0 %1403
  %1405 = vrot.lane.b32.xlu0 %v1400, 64
  %v1406 = vpop.permute.xlu0 %1405
  %s1409 = scalar_lea.vmem %s9, 32
  %1410 = vst.msk [vmem:[%s1409] sm:$0xf] %vm475, %v1404
  %1411 = vst.msk [vmem:[%s1409 + $0x4] sm:$0xf] %vm475, %v1406
  %v1412 = vsel %vm1395, %v1385, %v1146
  %v1413 = vsel %vm1396, %v1386, %v1147
  %v1414 = vsel %vm1395, %v1373, %v1148
  %v1415 = vsel %vm1396, %v1374, %v1149
  %s1416 = scalar_lea.vmem [#allocation2], 32
  %v1417 = vld [vmem:[%s1416] sm:$0xf]
  %v1418 = vld [vmem:[%s1416 + $0x4] sm:$0xf]
  %v1419 = vunpack.c.l.bf16 %v1417
  %v1420 = vunpack.c.l.bf16 %v1418
  %v1421 = vpack.c.bf16 %v1280, %v1279
  %1423 = vrot.lane.b32.xlu0 %v1421, 64
  %v1424 = vpop.permute.xlu0 %1423
  %v1426 = vsel %vm359, %v1424, 0
  %1428 = vmatpush.bf16.msra.mxu0 0
  %1429 = vmatpush.bf16.msra.mxu0 0
  %1430 = vmatpush.bf16.msra.mxu0 0
  %1431 = vmatpush.bf16.msra.mxu0 0
  %1432 = vmatpush.bf16.msra.mxu0 0
  %1433 = vmatpush.bf16.msra.mxu0 0
  %1434 = vmatpush.bf16.msra.mxu0 %v356
  %1435 = vmatpush.bf16.msra.mxu0 %v355
  %1436 = vmatmul.bf16.gmra.mxu0 %v1426
  %v1437 = vpop.f32.mrf.mxu0
  %v1438 = vadd.f32 0.0, %v1437
  %v1439 = vpop.f32.mrf.mxu0
  %v1440 = vadd.f32 0.0, %v1439
  %1441 = vdwg.mxu0
  %v1442 = vadd.f32 %v1419, %v1438
  %v1443 = vadd.f32 %v1420, %v1440
  %v1444 = vxor.u32 %v1442, 2147483648
  %v1445 = vxor.u32 %v1443, 2147483648
  %v1446 = vmul.f32 %v1444, 1.442695
  %v1447 = vpow.pop %v1446
  %v1448 = vmul.f32 %v1445, 1.442695
  %v1449 = vpow.pop %v1448
  %v1450 = vadd.f32 %v1447, 1.0
  %v1451 = vadd.f32 %v1449, 1.0
  %v1452 = vrcp.pop %v1450
  %v1453 = vmul.f32 %v1450, %v1452
  %v1454 = vsub.f32 1.0, %v1453
  %v1455 = vmul.f32 %v1452, %v1454
  %v1456 = vadd.f32 %v1452, %v1455
  %vm1457 = vweird.f32 %v1450
  %vm1458 = vweird.f32 %v1452
  %vm1459 = vmor %vm1457, %vm1458
  %v1460 = vsel %vm1459, %v1452, %v1456
  %v1461 = vand.u32 2147483647, %v1450
  %vm1462 = vcmp.eq.f32.partialorder %v1461, 8.507059e+37
  %v1463 = vand.u32 %v1450, 2147483648
  %v1464 = vor.u32 1.1754944e-38, %v1463
  %v1465 = vsel %vm1462, %v1464, %v1460
  %v1466 = vmul.f32 1.0, %v1465
  %v1467 = vrcp.pop %v1451
  %v1468 = vmul.f32 %v1451, %v1467
  %v1469 = vsub.f32 1.0, %v1468
  %v1470 = vmul.f32 %v1467, %v1469
  %v1471 = vadd.f32 %v1467, %v1470
  %vm1472 = vweird.f32 %v1451
  %vm1473 = vweird.f32 %v1467
  %vm1474 = vmor %vm1472, %vm1473
  %v1475 = vsel %vm1474, %v1467, %v1471
  %v1476 = vand.u32 2147483647, %v1451
  %vm1477 = vcmp.eq.f32.partialorder %v1476, 8.507059e+37
  %v1478 = vand.u32 %v1451, 2147483648
  %v1479 = vor.u32 1.1754944e-38, %v1478
  %v1480 = vsel %vm1477, %v1479, %v1475
  %v1481 = vmul.f32 1.0, %v1480
  %v1482 = vtanh.pop %v1442
  %v1483 = vtanh.pop %v1443
  %v1484 = vmul.f32 %v1466, %v1281
  %v1485 = vmul.f32 %v1481, %v1282
  %1488 = vrot.lane.b32.xlu0 %v1482, 32
  %v1489 = vpop.permute.xlu0 %1488
  %1490 = vrot.lane.b32.xlu0 %v1483, 32
  %v1491 = vpop.permute.xlu0 %1490
  %v1494 = vmul.f32 %v1466, %v1489
  %v1495 = vmul.f32 %v1481, %v1491
  %1498 = vrot.lane.b32.xlu0 %v1494, 32
  %v1499 = vpop.permute.xlu0 %1498
  %1500 = vrot.lane.b32.xlu0 %v1495, 32
  %v1501 = vpop.permute.xlu0 %1500
  %v1504 = vadd.f32 %v1484, %v1499
  %v1505 = vadd.f32 %v1485, %v1501
  %v1506 = vtanh.pop %v1504
  %v1507 = vtanh.pop %v1505
  %1510 = vrot.lane.b32.xlu0 %v1506, 32
  %v1511 = vpop.permute.xlu0 %1510
  %1512 = vrot.lane.b32.xlu0 %v1507, 32
  %v1513 = vpop.permute.xlu0 %1512
  %v1516 = vmul.f32 %v1466, %v1511
  %v1517 = vmul.f32 %v1481, %v1513
  %v1518 = vsel %vm1395, %v1516, 0.0
  %v1519 = vsel %vm1396, %v1517, 0.0
  %v1520 = vpack.c.bf16 %v1518, %v1518
  %v1521 = vpack.c.bf16 %v1519, %v1519
  %1524 = vrot.lane.b32.xlu0 %v1520, 64
  %v1525 = vpop.permute.xlu0 %1524
  %1526 = vrot.lane.b32.xlu0 %v1521, 64
  %v1527 = vpop.permute.xlu0 %1526
  %s1530 = scalar_lea.vmem %s8, 32
  %1531 = vst.msk [vmem:[%s1530] sm:$0xf] %vm475, %v1525
  %1532 = vst.msk [vmem:[%s1530 + $0x4] sm:$0xf] %vm475, %v1527
  %v1533 = vsel %vm1395, %v1516, %v1279
  %v1534 = vsel %vm1396, %v1517, %v1280
  %v1535 = vsel %vm1395, %v1504, %v1281
  %v1536 = vsel %vm1396, %v1505, %v1282
  %s1537 = scalar_lea.vmem [#allocation3], 24
  %v1538 = vld [vmem:[%s1537] sm:$0xf]
  %v1539 = vld [vmem:[%s1537 + $0x4] sm:$0xf]
  %v1540 = vunpack.c.l.bf16 %v1538
  %v1541 = vunpack.c.l.bf16 %v1539
  %v1542 = vpack.c.bf16 %v1413, %v1412
  %1544 = vrot.lane.b32.xlu0 %v1542, 64
  %v1545 = vpop.permute.xlu0 %1544
  %v1547 = vsel %vm359, %v1545, 0
  %1549 = vmatpush.bf16.msra.mxu0 0
  %1550 = vmatpush.bf16.msra.mxu0 0
  %1551 = vmatpush.bf16.msra.mxu0 0
  %1552 = vmatpush.bf16.msra.mxu0 0
  %1553 = vmatpush.bf16.msra.mxu0 0
  %1554 = vmatpush.bf16.msra.mxu0 0
  %1555 = vmatpush.bf16.msra.mxu0 %v496
  %1556 = vmatpush.bf16.msra.mxu0 %v495
  %1557 = vmatmul.bf16.gmra.mxu0 %v1547
  %v1558 = vpop.f32.mrf.mxu0
  %v1559 = vadd.f32 0.0, %v1558
  %v1560 = vpop.f32.mrf.mxu0
  %v1561 = vadd.f32 0.0, %v1560
  %1562 = vdwg.mxu0
  %v1563 = vadd.f32 %v1540, %v1559
  %v1564 = vadd.f32 %v1541, %v1561
  %v1565 = vxor.u32 %v1563, 2147483648
  %v1566 = vxor.u32 %v1564, 2147483648
  %v1567 = vmul.f32 %v1565, 1.442695
  %v1568 = vpow.pop %v1567
  %v1569 = vmul.f32 %v1566, 1.442695
  %v1570 = vpow.pop %v1569
  %v1571 = vadd.f32 %v1568, 1.0
  %v1572 = vadd.f32 %v1570, 1.0
  %v1573 = vrcp.pop %v1571
  %v1574 = vmul.f32 %v1571, %v1573
  %v1575 = vsub.f32 1.0, %v1574
  %v1576 = vmul.f32 %v1573, %v1575
  %v1577 = vadd.f32 %v1573, %v1576
  %vm1578 = vweird.f32 %v1571
  %vm1579 = vweird.f32 %v1573
  %vm1580 = vmor %vm1578, %vm1579
  %v1581 = vsel %vm1580, %v1573, %v1577
  %v1582 = vand.u32 2147483647, %v1571
  %vm1583 = vcmp.eq.f32.partialorder %v1582, 8.507059e+37
  %v1584 = vand.u32 %v1571, 2147483648
  %v1585 = vor.u32 1.1754944e-38, %v1584
  %v1586 = vsel %vm1583, %v1585, %v1581
  %v1587 = vmul.f32 1.0, %v1586
  %v1588 = vrcp.pop %v1572
  %v1589 = vmul.f32 %v1572, %v1588
  %v1590 = vsub.f32 1.0, %v1589
  %v1591 = vmul.f32 %v1588, %v1590
  %v1592 = vadd.f32 %v1588, %v1591
  %vm1593 = vweird.f32 %v1572
  %vm1594 = vweird.f32 %v1588
  %vm1595 = vmor %vm1593, %vm1594
  %v1596 = vsel %vm1595, %v1588, %v1592
  %v1597 = vand.u32 2147483647, %v1572
  %vm1598 = vcmp.eq.f32.partialorder %v1597, 8.507059e+37
  %v1599 = vand.u32 %v1572, 2147483648
  %v1600 = vor.u32 1.1754944e-38, %v1599
  %v1601 = vsel %vm1598, %v1600, %v1596
  %v1602 = vmul.f32 1.0, %v1601
  %v1603 = vtanh.pop %v1563
  %v1604 = vtanh.pop %v1564
  %v1605 = vmul.f32 %v1587, %v1414
  %v1606 = vmul.f32 %v1602, %v1415
  %1609 = vrot.lane.b32.xlu0 %v1603, 32
  %v1610 = vpop.permute.xlu0 %1609
  %1611 = vrot.lane.b32.xlu0 %v1604, 32
  %v1612 = vpop.permute.xlu0 %1611
  %v1615 = vmul.f32 %v1587, %v1610
  %v1616 = vmul.f32 %v1602, %v1612
  %1619 = vrot.lane.b32.xlu0 %v1615, 32
  %v1620 = vpop.permute.xlu0 %1619
  %1621 = vrot.lane.b32.xlu0 %v1616, 32
  %v1622 = vpop.permute.xlu0 %1621
  %v1625 = vadd.f32 %v1605, %v1620
  %v1626 = vadd.f32 %v1606, %v1622
  %v1627 = vtanh.pop %v1625
  %v1628 = vtanh.pop %v1626
  %1631 = vrot.lane.b32.xlu0 %v1627, 32
  %v1632 = vpop.permute.xlu0 %1631
  %1633 = vrot.lane.b32.xlu0 %v1628, 32
  %v1634 = vpop.permute.xlu0 %1633
  %v1637 = vmul.f32 %v1587, %v1632
  %v1638 = vmul.f32 %v1602, %v1634
  %v1639 = vsel %vm1262, %v1637, 0.0
  %v1640 = vsel %vm1263, %v1638, 0.0
  %v1641 = vpack.c.bf16 %v1639, %v1639
  %v1642 = vpack.c.bf16 %v1640, %v1640
  %1645 = vrot.lane.b32.xlu0 %v1641, 64
  %v1646 = vpop.permute.xlu0 %1645
  %1647 = vrot.lane.b32.xlu0 %v1642, 64
  %v1648 = vpop.permute.xlu0 %1647
  %s1651 = scalar_lea.vmem %s9, 24
  %1652 = vst.msk [vmem:[%s1651] sm:$0xf] %vm475, %v1646
  %1653 = vst.msk [vmem:[%s1651 + $0x4] sm:$0xf] %vm475, %v1648
  %v1654 = vsel %vm1262, %v1637, %v1412
  %v1655 = vsel %vm1263, %v1638, %v1413
  %v1656 = vsel %vm1262, %v1625, %v1414
  %v1657 = vsel %vm1263, %v1626, %v1415
  %s1658 = scalar_lea.vmem [#allocation2], 40
  %v1659 = vld [vmem:[%s1658] sm:$0xf]
  %v1660 = vld [vmem:[%s1658 + $0x4] sm:$0xf]
  %v1661 = vunpack.c.l.bf16 %v1659
  %v1662 = vunpack.c.l.bf16 %v1660
  %v1663 = vpack.c.bf16 %v1534, %v1533
  %1665 = vrot.lane.b32.xlu0 %v1663, 64
  %v1666 = vpop.permute.xlu0 %1665
  %v1668 = vsel %vm359, %v1666, 0
  %1670 = vmatpush.bf16.msra.mxu0 0
  %1671 = vmatpush.bf16.msra.mxu0 0
  %1672 = vmatpush.bf16.msra.mxu0 0
  %1673 = vmatpush.bf16.msra.mxu0 0
  %1674 = vmatpush.bf16.msra.mxu0 0
  %1675 = vmatpush.bf16.msra.mxu0 0
  %1676 = vmatpush.bf16.msra.mxu0 %v356
  %1677 = vmatpush.bf16.msra.mxu0 %v355
  %1678 = vmatmul.bf16.gmra.mxu0 %v1668
  %v1679 = vpop.f32.mrf.mxu0
  %v1680 = vadd.f32 0.0, %v1679
  %v1681 = vpop.f32.mrf.mxu0
  %v1682 = vadd.f32 0.0, %v1681
  %1683 = vdwg.mxu0
  %v1684 = vadd.f32 %v1661, %v1680
  %v1685 = vadd.f32 %v1662, %v1682
  %v1686 = vxor.u32 %v1684, 2147483648
  %v1687 = vxor.u32 %v1685, 2147483648
  %v1688 = vmul.f32 %v1686, 1.442695
  %v1689 = vpow.pop %v1688
  %v1690 = vmul.f32 %v1687, 1.442695
  %v1691 = vpow.pop %v1690
  %v1692 = vadd.f32 %v1689, 1.0
  %v1693 = vadd.f32 %v1691, 1.0
  %v1694 = vrcp.pop %v1692
  %v1695 = vmul.f32 %v1692, %v1694
  %v1696 = vsub.f32 1.0, %v1695
  %v1697 = vmul.f32 %v1694, %v1696
  %v1698 = vadd.f32 %v1694, %v1697
  %vm1699 = vweird.f32 %v1692
  %vm1700 = vweird.f32 %v1694
  %vm1701 = vmor %vm1699, %vm1700
  %v1702 = vsel %vm1701, %v1694, %v1698
  %v1703 = vand.u32 2147483647, %v1692
  %vm1704 = vcmp.eq.f32.partialorder %v1703, 8.507059e+37
  %v1705 = vand.u32 %v1692, 2147483648
  %v1706 = vor.u32 1.1754944e-38, %v1705
  %v1707 = vsel %vm1704, %v1706, %v1702
  %v1708 = vmul.f32 1.0, %v1707
  %v1709 = vrcp.pop %v1693
  %v1710 = vmul.f32 %v1693, %v1709
  %v1711 = vsub.f32 1.0, %v1710
  %v1712 = vmul.f32 %v1709, %v1711
  %v1713 = vadd.f32 %v1709, %v1712
  %vm1714 = vweird.f32 %v1693
  %vm1715 = vweird.f32 %v1709
  %vm1716 = vmor %vm1714, %vm1715
  %v1717 = vsel %vm1716, %v1709, %v1713
  %v1718 = vand.u32 2147483647, %v1693
  %vm1719 = vcmp.eq.f32.partialorder %v1718, 8.507059e+37
  %v1720 = vand.u32 %v1693, 2147483648
  %v1721 = vor.u32 1.1754944e-38, %v1720
  %v1722 = vsel %vm1719, %v1721, %v1717
  %v1723 = vmul.f32 1.0, %v1722
  %v1724 = vtanh.pop %v1684
  %v1725 = vtanh.pop %v1685
  %v1726 = vmul.f32 %v1708, %v1535
  %v1727 = vmul.f32 %v1723, %v1536
  %1730 = vrot.lane.b32.xlu0 %v1724, 32
  %v1731 = vpop.permute.xlu0 %1730
  %1732 = vrot.lane.b32.xlu0 %v1725, 32
  %v1733 = vpop.permute.xlu0 %1732
  %v1736 = vmul.f32 %v1708, %v1731
  %v1737 = vmul.f32 %v1723, %v1733
  %1740 = vrot.lane.b32.xlu0 %v1736, 32
  %v1741 = vpop.permute.xlu0 %1740
  %1742 = vrot.lane.b32.xlu0 %v1737, 32
  %v1743 = vpop.permute.xlu0 %1742
  %v1746 = vadd.f32 %v1726, %v1741
  %v1747 = vadd.f32 %v1727, %v1743
  %v1748 = vtanh.pop %v1746
  %v1749 = vtanh.pop %v1747
  %1752 = vrot.lane.b32.xlu0 %v1748, 32
  %v1753 = vpop.permute.xlu0 %1752
  %1754 = vrot.lane.b32.xlu0 %v1749, 32
  %v1755 = vpop.permute.xlu0 %1754
  %v1758 = vmul.f32 %v1708, %v1753
  %v1759 = vmul.f32 %v1723, %v1755
  %v1760 = vsel %vm1129, %v1758, 0.0
  %v1761 = vsel %vm1130, %v1759, 0.0
  %v1762 = vpack.c.bf16 %v1760, %v1760
  %v1763 = vpack.c.bf16 %v1761, %v1761
  %1766 = vrot.lane.b32.xlu0 %v1762, 64
  %v1767 = vpop.permute.xlu0 %1766
  %1768 = vrot.lane.b32.xlu0 %v1763, 64
  %v1769 = vpop.permute.xlu0 %1768
  %s1772 = scalar_lea.vmem %s8, 40
  %1773 = vst.msk [vmem:[%s1772] sm:$0xf] %vm475, %v1767
  %1774 = vst.msk [vmem:[%s1772 + $0x4] sm:$0xf] %vm475, %v1769
  %v1775 = vsel %vm1129, %v1758, %v1533
  %v1776 = vsel %vm1130, %v1759, %v1534
  %v1777 = vsel %vm1129, %v1746, %v1535
  %v1778 = vsel %vm1130, %v1747, %v1536
  %s1779 = scalar_lea.vmem [#allocation3], 16
  %v1780 = vld [vmem:[%s1779] sm:$0xf]
  %v1781 = vld [vmem:[%s1779 + $0x4] sm:$0xf]
  %v1782 = vunpack.c.l.bf16 %v1780
  %v1783 = vunpack.c.l.bf16 %v1781
  %v1784 = vpack.c.bf16 %v1655, %v1654
  %1786 = vrot.lane.b32.xlu0 %v1784, 64
  %v1787 = vpop.permute.xlu0 %1786
  %v1789 = vsel %vm359, %v1787, 0
  %1791 = vmatpush.bf16.msra.mxu0 0
  %1792 = vmatpush.bf16.msra.mxu0 0
  %1793 = vmatpush.bf16.msra.mxu0 0
  %1794 = vmatpush.bf16.msra.mxu0 0
  %1795 = vmatpush.bf16.msra.mxu0 0
  %1796 = vmatpush.bf16.msra.mxu0 0
  %1797 = vmatpush.bf16.msra.mxu0 %v496
  %1798 = vmatpush.bf16.msra.mxu0 %v495
  %1799 = vmatmul.bf16.gmra.mxu0 %v1789
  %v1800 = vpop.f32.mrf.mxu0
  %v1801 = vadd.f32 0.0, %v1800
  %v1802 = vpop.f32.mrf.mxu0
  %v1803 = vadd.f32 0.0, %v1802
  %1804 = vdwg.mxu0
  %v1805 = vadd.f32 %v1782, %v1801
  %v1806 = vadd.f32 %v1783, %v1803
  %v1807 = vxor.u32 %v1805, 2147483648
  %v1808 = vxor.u32 %v1806, 2147483648
  %v1809 = vmul.f32 %v1807, 1.442695
  %v1810 = vpow.pop %v1809
  %v1811 = vmul.f32 %v1808, 1.442695
  %v1812 = vpow.pop %v1811
  %v1813 = vadd.f32 %v1810, 1.0
  %v1814 = vadd.f32 %v1812, 1.0
  %v1815 = vrcp.pop %v1813
  %v1816 = vmul.f32 %v1813, %v1815
  %v1817 = vsub.f32 1.0, %v1816
  %v1818 = vmul.f32 %v1815, %v1817
  %v1819 = vadd.f32 %v1815, %v1818
  %vm1820 = vweird.f32 %v1813
  %vm1821 = vweird.f32 %v1815
  %vm1822 = vmor %vm1820, %vm1821
  %v1823 = vsel %vm1822, %v1815, %v1819
  %v1824 = vand.u32 2147483647, %v1813
  %vm1825 = vcmp.eq.f32.partialorder %v1824, 8.507059e+37
  %v1826 = vand.u32 %v1813, 2147483648
  %v1827 = vor.u32 1.1754944e-38, %v1826
  %v1828 = vsel %vm1825, %v1827, %v1823
  %v1829 = vmul.f32 1.0, %v1828
  %v1830 = vrcp.pop %v1814
  %v1831 = vmul.f32 %v1814, %v1830
  %v1832 = vsub.f32 1.0, %v1831
  %v1833 = vmul.f32 %v1830, %v1832
  %v1834 = vadd.f32 %v1830, %v1833
  %vm1835 = vweird.f32 %v1814
  %vm1836 = vweird.f32 %v1830
  %vm1837 = vmor %vm1835, %vm1836
  %v1838 = vsel %vm1837, %v1830, %v1834
  %v1839 = vand.u32 2147483647, %v1814
  %vm1840 = vcmp.eq.f32.partialorder %v1839, 8.507059e+37
  %v1841 = vand.u32 %v1814, 2147483648
  %v1842 = vor.u32 1.1754944e-38, %v1841
  %v1843 = vsel %vm1840, %v1842, %v1838
  %v1844 = vmul.f32 1.0, %v1843
  %v1845 = vtanh.pop %v1805
  %v1846 = vtanh.pop %v1806
  %v1847 = vmul.f32 %v1829, %v1656
  %v1848 = vmul.f32 %v1844, %v1657
  %1851 = vrot.lane.b32.xlu0 %v1845, 32
  %v1852 = vpop.permute.xlu0 %1851
  %1853 = vrot.lane.b32.xlu0 %v1846, 32
  %v1854 = vpop.permute.xlu0 %1853
  %v1857 = vmul.f32 %v1829, %v1852
  %v1858 = vmul.f32 %v1844, %v1854
  %1861 = vrot.lane.b32.xlu0 %v1857, 32
  %v1862 = vpop.permute.xlu0 %1861
  %1863 = vrot.lane.b32.xlu0 %v1858, 32
  %v1864 = vpop.permute.xlu0 %1863
  %v1867 = vadd.f32 %v1847, %v1862
  %v1868 = vadd.f32 %v1848, %v1864
  %v1869 = vtanh.pop %v1867
  %v1870 = vtanh.pop %v1868
  %1873 = vrot.lane.b32.xlu0 %v1869, 32
  %v1874 = vpop.permute.xlu0 %1873
  %1875 = vrot.lane.b32.xlu0 %v1870, 32
  %v1876 = vpop.permute.xlu0 %1875
  %v1879 = vmul.f32 %v1829, %v1874
  %v1880 = vmul.f32 %v1844, %v1876
  %v1881 = vsel %vm996, %v1879, 0.0
  %v1882 = vsel %vm997, %v1880, 0.0
  %v1883 = vpack.c.bf16 %v1881, %v1881
  %v1884 = vpack.c.bf16 %v1882, %v1882
  %1887 = vrot.lane.b32.xlu0 %v1883, 64
  %v1888 = vpop.permute.xlu0 %1887
  %1889 = vrot.lane.b32.xlu0 %v1884, 64
  %v1890 = vpop.permute.xlu0 %1889
  %s1893 = scalar_lea.vmem %s9, 16
  %1894 = vst.msk [vmem:[%s1893] sm:$0xf] %vm475, %v1888
  %1895 = vst.msk [vmem:[%s1893 + $0x4] sm:$0xf] %vm475, %v1890
  %v1896 = vsel %vm996, %v1879, %v1654
  %v1897 = vsel %vm997, %v1880, %v1655
  %v1898 = vsel %vm996, %v1867, %v1656
  %v1899 = vsel %vm997, %v1868, %v1657
  %s1900 = scalar_lea.vmem [#allocation2], 48
  %v1901 = vld [vmem:[%s1900] sm:$0xf]
  %v1902 = vld [vmem:[%s1900 + $0x4] sm:$0xf]
  %v1903 = vunpack.c.l.bf16 %v1901
  %v1904 = vunpack.c.l.bf16 %v1902
  %v1905 = vpack.c.bf16 %v1776, %v1775
  %1907 = vrot.lane.b32.xlu0 %v1905, 64
  %v1908 = vpop.permute.xlu0 %1907
  %v1910 = vsel %vm359, %v1908, 0
  %1912 = vmatpush.bf16.msra.mxu0 0
  %1913 = vmatpush.bf16.msra.mxu0 0
  %1914 = vmatpush.bf16.msra.mxu0 0
  %1915 = vmatpush.bf16.msra.mxu0 0
  %1916 = vmatpush.bf16.msra.mxu0 0
  %1917 = vmatpush.bf16.msra.mxu0 0
  %1918 = vmatpush.bf16.msra.mxu0 %v356
  %1919 = vmatpush.bf16.msra.mxu0 %v355
  %1920 = vmatmul.bf16.gmra.mxu0 %v1910
  %v1921 = vpop.f32.mrf.mxu0
  %v1922 = vadd.f32 0.0, %v1921
  %v1923 = vpop.f32.mrf.mxu0
  %v1924 = vadd.f32 0.0, %v1923
  %1925 = vdwg.mxu0
  %v1926 = vadd.f32 %v1903, %v1922
  %v1927 = vadd.f32 %v1904, %v1924
  %v1928 = vxor.u32 %v1926, 2147483648
  %v1929 = vxor.u32 %v1927, 2147483648
  %v1930 = vmul.f32 %v1928, 1.442695
  %v1931 = vpow.pop %v1930
  %v1932 = vmul.f32 %v1929, 1.442695
  %v1933 = vpow.pop %v1932
  %v1934 = vadd.f32 %v1931, 1.0
  %v1935 = vadd.f32 %v1933, 1.0
  %v1936 = vrcp.pop %v1934
  %v1937 = vmul.f32 %v1934, %v1936
  %v1938 = vsub.f32 1.0, %v1937
  %v1939 = vmul.f32 %v1936, %v1938
  %v1940 = vadd.f32 %v1936, %v1939
  %vm1941 = vweird.f32 %v1934
  %vm1942 = vweird.f32 %v1936
  %vm1943 = vmor %vm1941, %vm1942
  %v1944 = vsel %vm1943, %v1936, %v1940
  %v1945 = vand.u32 2147483647, %v1934
  %vm1946 = vcmp.eq.f32.partialorder %v1945, 8.507059e+37
  %v1947 = vand.u32 %v1934, 2147483648
  %v1948 = vor.u32 1.1754944e-38, %v1947
  %v1949 = vsel %vm1946, %v1948, %v1944
  %v1950 = vmul.f32 1.0, %v1949
  %v1951 = vrcp.pop %v1935
  %v1952 = vmul.f32 %v1935, %v1951
  %v1953 = vsub.f32 1.0, %v1952
  %v1954 = vmul.f32 %v1951, %v1953
  %v1955 = vadd.f32 %v1951, %v1954
  %vm1956 = vweird.f32 %v1935
  %vm1957 = vweird.f32 %v1951
  %vm1958 = vmor %vm1956, %vm1957
  %v1959 = vsel %vm1958, %v1951, %v1955
  %v1960 = vand.u32 2147483647, %v1935
  %vm1961 = vcmp.eq.f32.partialorder %v1960, 8.507059e+37
  %v1962 = vand.u32 %v1935, 2147483648
  %v1963 = vor.u32 1.1754944e-38, %v1962
  %v1964 = vsel %vm1961, %v1963, %v1959
  %v1965 = vmul.f32 1.0, %v1964
  %v1966 = vtanh.pop %v1926
  %v1967 = vtanh.pop %v1927
  %v1968 = vmul.f32 %v1950, %v1777
  %v1969 = vmul.f32 %v1965, %v1778
  %1972 = vrot.lane.b32.xlu0 %v1966, 32
  %v1973 = vpop.permute.xlu0 %1972
  %1974 = vrot.lane.b32.xlu0 %v1967, 32
  %v1975 = vpop.permute.xlu0 %1974
  %v1978 = vmul.f32 %v1950, %v1973
  %v1979 = vmul.f32 %v1965, %v1975
  %1982 = vrot.lane.b32.xlu0 %v1978, 32
  %v1983 = vpop.permute.xlu0 %1982
  %1984 = vrot.lane.b32.xlu0 %v1979, 32
  %v1985 = vpop.permute.xlu0 %1984
  %v1988 = vadd.f32 %v1968, %v1983
  %v1989 = vadd.f32 %v1969, %v1985
  %v1990 = vtanh.pop %v1988
  %v1991 = vtanh.pop %v1989
  %1994 = vrot.lane.b32.xlu0 %v1990, 32
  %v1995 = vpop.permute.xlu0 %1994
  %1996 = vrot.lane.b32.xlu0 %v1991, 32
  %v1997 = vpop.permute.xlu0 %1996
  %v2000 = vmul.f32 %v1950, %v1995
  %v2001 = vmul.f32 %v1965, %v1997
  %v2002 = vsel %vm863, %v2000, 0.0
  %v2003 = vsel %vm864, %v2001, 0.0
  %v2004 = vpack.c.bf16 %v2002, %v2002
  %v2005 = vpack.c.bf16 %v2003, %v2003
  %2008 = vrot.lane.b32.xlu0 %v2004, 64
  %v2009 = vpop.permute.xlu0 %2008
  %2010 = vrot.lane.b32.xlu0 %v2005, 64
  %v2011 = vpop.permute.xlu0 %2010
  %s2014 = scalar_lea.vmem %s8, 48
  %2015 = vst.msk [vmem:[%s2014] sm:$0xf] %vm475, %v2009
  %2016 = vst.msk [vmem:[%s2014 + $0x4] sm:$0xf] %vm475, %v2011
  %v2017 = vsel %vm863, %v2000, %v1775
  %v2018 = vsel %vm864, %v2001, %v1776
  %v2019 = vsel %vm863, %v1988, %v1777
  %v2020 = vsel %vm864, %v1989, %v1778
  %s2021 = scalar_lea.vmem [#allocation3], 8
  %v2022 = vld [vmem:[%s2021] sm:$0xf]
  %v2023 = vld [vmem:[%s2021 + $0x4] sm:$0xf]
  %v2024 = vunpack.c.l.bf16 %v2022
  %v2025 = vunpack.c.l.bf16 %v2023
  %v2026 = vpack.c.bf16 %v1897, %v1896
  %2028 = vrot.lane.b32.xlu0 %v2026, 64
  %v2029 = vpop.permute.xlu0 %2028
  %v2031 = vsel %vm359, %v2029, 0
  %2033 = vmatpush.bf16.msra.mxu0 0
  %2034 = vmatpush.bf16.msra.mxu0 0
  %2035 = vmatpush.bf16.msra.mxu0 0
  %2036 = vmatpush.bf16.msra.mxu0 0
  %2037 = vmatpush.bf16.msra.mxu0 0
  %2038 = vmatpush.bf16.msra.mxu0 0
  %2039 = vmatpush.bf16.msra.mxu0 %v496
  %2040 = vmatpush.bf16.msra.mxu0 %v495
  %2041 = vmatmul.bf16.gmra.mxu0 %v2031
  %v2042 = vpop.f32.mrf.mxu0
  %v2043 = vadd.f32 0.0, %v2042
  %v2044 = vpop.f32.mrf.mxu0
  %v2045 = vadd.f32 0.0, %v2044
  %2046 = vdwg.mxu0
  %v2047 = vadd.f32 %v2024, %v2043
  %v2048 = vadd.f32 %v2025, %v2045
  %v2049 = vxor.u32 %v2047, 2147483648
  %v2050 = vxor.u32 %v2048, 2147483648
  %v2051 = vmul.f32 %v2049, 1.442695
  %v2052 = vpow.pop %v2051
  %v2053 = vmul.f32 %v2050, 1.442695
  %v2054 = vpow.pop %v2053
  %v2055 = vadd.f32 %v2052, 1.0
  %v2056 = vadd.f32 %v2054, 1.0
  %v2057 = vrcp.pop %v2055
  %v2058 = vmul.f32 %v2055, %v2057
  %v2059 = vsub.f32 1.0, %v2058
  %v2060 = vmul.f32 %v2057, %v2059
  %v2061 = vadd.f32 %v2057, %v2060
  %vm2062 = vweird.f32 %v2055
  %vm2063 = vweird.f32 %v2057
  %vm2064 = vmor %vm2062, %vm2063
  %v2065 = vsel %vm2064, %v2057, %v2061
  %v2066 = vand.u32 2147483647, %v2055
  %vm2067 = vcmp.eq.f32.partialorder %v2066, 8.507059e+37
  %v2068 = vand.u32 %v2055, 2147483648
  %v2069 = vor.u32 1.1754944e-38, %v2068
  %v2070 = vsel %vm2067, %v2069, %v2065
  %v2071 = vmul.f32 1.0, %v2070
  %v2072 = vrcp.pop %v2056
  %v2073 = vmul.f32 %v2056, %v2072
  %v2074 = vsub.f32 1.0, %v2073
  %v2075 = vmul.f32 %v2072, %v2074
  %v2076 = vadd.f32 %v2072, %v2075
  %vm2077 = vweird.f32 %v2056
  %vm2078 = vweird.f32 %v2072
  %vm2079 = vmor %vm2077, %vm2078
  %v2080 = vsel %vm2079, %v2072, %v2076
  %v2081 = vand.u32 2147483647, %v2056
  %vm2082 = vcmp.eq.f32.partialorder %v2081, 8.507059e+37
  %v2083 = vand.u32 %v2056, 2147483648
  %v2084 = vor.u32 1.1754944e-38, %v2083
  %v2085 = vsel %vm2082, %v2084, %v2080
  %v2086 = vmul.f32 1.0, %v2085
  %v2087 = vtanh.pop %v2047
  %v2088 = vtanh.pop %v2048
  %v2089 = vmul.f32 %v2071, %v1898
  %v2090 = vmul.f32 %v2086, %v1899
  %2093 = vrot.lane.b32.xlu0 %v2087, 32
  %v2094 = vpop.permute.xlu0 %2093
  %2095 = vrot.lane.b32.xlu0 %v2088, 32
  %v2096 = vpop.permute.xlu0 %2095
  %v2099 = vmul.f32 %v2071, %v2094
  %v2100 = vmul.f32 %v2086, %v2096
  %2103 = vrot.lane.b32.xlu0 %v2099, 32
  %v2104 = vpop.permute.xlu0 %2103
  %2105 = vrot.lane.b32.xlu0 %v2100, 32
  %v2106 = vpop.permute.xlu0 %2105
  %v2109 = vadd.f32 %v2089, %v2104
  %v2110 = vadd.f32 %v2090, %v2106
  %v2111 = vtanh.pop %v2109
  %v2112 = vtanh.pop %v2110
  %2115 = vrot.lane.b32.xlu0 %v2111, 32
  %v2116 = vpop.permute.xlu0 %2115
  %2117 = vrot.lane.b32.xlu0 %v2112, 32
  %v2118 = vpop.permute.xlu0 %2117
  %v2121 = vmul.f32 %v2071, %v2116
  %v2122 = vmul.f32 %v2086, %v2118
  %v2123 = vsel %vm729, %v2121, 0.0
  %v2124 = vsel %vm730, %v2122, 0.0
  %v2125 = vpack.c.bf16 %v2123, %v2123
  %v2126 = vpack.c.bf16 %v2124, %v2124
  %2129 = vrot.lane.b32.xlu0 %v2125, 64
  %v2130 = vpop.permute.xlu0 %2129
  %2131 = vrot.lane.b32.xlu0 %v2126, 64
  %v2132 = vpop.permute.xlu0 %2131
  %s2135 = scalar_lea.vmem %s9, 8
  %2136 = vst.msk [vmem:[%s2135] sm:$0xf] %vm475, %v2130
  %2137 = vst.msk [vmem:[%s2135 + $0x4] sm:$0xf] %vm475, %v2132
  %v2138 = vsel %vm729, %v2121, %v1896
  %v2139 = vsel %vm730, %v2122, %v1897
  %v2140 = vsel %vm729, %v2109, %v1898
  %v2141 = vsel %vm730, %v2110, %v1899
  %s2142 = scalar_lea.vmem [#allocation2], 56
  %v2143 = vld [vmem:[%s2142] sm:$0xf]
  %v2144 = vld [vmem:[%s2142 + $0x4] sm:$0xf]
  %v2145 = vunpack.c.l.bf16 %v2143
  %v2146 = vunpack.c.l.bf16 %v2144
  %v2147 = vpack.c.bf16 %v2018, %v2017
  %2149 = vrot.lane.b32.xlu0 %v2147, 64
  %v2150 = vpop.permute.xlu0 %2149
  %v2152 = vsel %vm359, %v2150, 0
  %2154 = vmatpush.bf16.msra.mxu0 0
  %2155 = vmatpush.bf16.msra.mxu0 0
  %2156 = vmatpush.bf16.msra.mxu0 0
  %2157 = vmatpush.bf16.msra.mxu0 0
  %2158 = vmatpush.bf16.msra.mxu0 0
  %2159 = vmatpush.bf16.msra.mxu0 0
  %2160 = vmatpush.bf16.msra.mxu0 %v356
  %2161 = vmatpush.bf16.msra.mxu0 %v355
  %2162 = vmatmul.bf16.gmra.mxu0 %v2152
  %v2163 = vpop.f32.mrf.mxu0
  %v2164 = vadd.f32 0.0, %v2163
  %v2165 = vpop.f32.mrf.mxu0
  %v2166 = vadd.f32 0.0, %v2165
  %2167 = vdwg.mxu0
  %v2168 = vadd.f32 %v2145, %v2164
  %v2169 = vadd.f32 %v2146, %v2166
  %v2170 = vxor.u32 %v2168, 2147483648
  %v2171 = vxor.u32 %v2169, 2147483648
  %v2172 = vmul.f32 %v2170, 1.442695
  %v2173 = vpow.pop %v2172
  %v2174 = vmul.f32 %v2171, 1.442695
  %v2175 = vpow.pop %v2174
  %v2176 = vadd.f32 %v2173, 1.0
  %v2177 = vadd.f32 %v2175, 1.0
  %v2178 = vrcp.pop %v2176
  %v2179 = vmul.f32 %v2176, %v2178
  %v2180 = vsub.f32 1.0, %v2179
  %v2181 = vmul.f32 %v2178, %v2180
  %v2182 = vadd.f32 %v2178, %v2181
  %vm2183 = vweird.f32 %v2176
  %vm2184 = vweird.f32 %v2178
  %vm2185 = vmor %vm2183, %vm2184
  %v2186 = vsel %vm2185, %v2178, %v2182
  %v2187 = vand.u32 2147483647, %v2176
  %vm2188 = vcmp.eq.f32.partialorder %v2187, 8.507059e+37
  %v2189 = vand.u32 %v2176, 2147483648
  %v2190 = vor.u32 1.1754944e-38, %v2189
  %v2191 = vsel %vm2188, %v2190, %v2186
  %v2192 = vmul.f32 1.0, %v2191
  %v2193 = vrcp.pop %v2177
  %v2194 = vmul.f32 %v2177, %v2193
  %v2195 = vsub.f32 1.0, %v2194
  %v2196 = vmul.f32 %v2193, %v2195
  %v2197 = vadd.f32 %v2193, %v2196
  %vm2198 = vweird.f32 %v2177
  %vm2199 = vweird.f32 %v2193
  %vm2200 = vmor %vm2198, %vm2199
  %v2201 = vsel %vm2200, %v2193, %v2197
  %v2202 = vand.u32 2147483647, %v2177
  %vm2203 = vcmp.eq.f32.partialorder %v2202, 8.507059e+37
  %v2204 = vand.u32 %v2177, 2147483648
  %v2205 = vor.u32 1.1754944e-38, %v2204
  %v2206 = vsel %vm2203, %v2205, %v2201
  %v2207 = vmul.f32 1.0, %v2206
  %v2208 = vtanh.pop %v2168
  %v2209 = vtanh.pop %v2169
  %v2210 = vmul.f32 %v2192, %v2019
  %v2211 = vmul.f32 %v2207, %v2020
  %2214 = vrot.lane.b32.xlu0 %v2208, 32
  %v2215 = vpop.permute.xlu0 %2214
  %2216 = vrot.lane.b32.xlu0 %v2209, 32
  %v2217 = vpop.permute.xlu0 %2216
  %v2220 = vmul.f32 %v2192, %v2215
  %v2221 = vmul.f32 %v2207, %v2217
  %2224 = vrot.lane.b32.xlu0 %v2220, 32
  %v2225 = vpop.permute.xlu0 %2224
  %2226 = vrot.lane.b32.xlu0 %v2221, 32
  %v2227 = vpop.permute.xlu0 %2226
  %v2230 = vadd.f32 %v2210, %v2225
  %v2231 = vadd.f32 %v2211, %v2227
  %v2232 = vtanh.pop %v2230
  %v2233 = vtanh.pop %v2231
  %2236 = vrot.lane.b32.xlu0 %v2232, 32
  %v2237 = vpop.permute.xlu0 %2236
  %2238 = vrot.lane.b32.xlu0 %v2233, 32
  %v2239 = vpop.permute.xlu0 %2238
  %v2242 = vmul.f32 %v2192, %v2237
  %v2243 = vmul.f32 %v2207, %v2239
  %v2244 = vsel %vm597, %v2242, 0.0
  %v2245 = vsel %vm598, %v2243, 0.0
  %v2246 = vpack.c.bf16 %v2244, %v2244
  %v2247 = vpack.c.bf16 %v2245, %v2245
  %2250 = vrot.lane.b32.xlu0 %v2246, 64
  %v2251 = vpop.permute.xlu0 %2250
  %2252 = vrot.lane.b32.xlu0 %v2247, 64
  %v2253 = vpop.permute.xlu0 %2252
  %s2256 = scalar_lea.vmem %s8, 56
  %2257 = vst.msk [vmem:[%s2256] sm:$0xf] %vm475, %v2251
  %2258 = vst.msk [vmem:[%s2256 + $0x4] sm:$0xf] %vm475, %v2253
  %v2259 = vld [vmem:[#allocation3] sm:$0xf]
  %v2260 = vld [vmem:[#allocation3 + $0x4] sm:$0xf]
  %v2261 = vunpack.c.l.bf16 %v2259
  %v2262 = vunpack.c.l.bf16 %v2260
  %v2263 = vpack.c.bf16 %v2139, %v2138
  %2265 = vrot.lane.b32.xlu0 %v2263, 64
  %v2266 = vpop.permute.xlu0 %2265
  %v2268 = vsel %vm359, %v2266, 0
  %2270 = vmatpush.bf16.msra.mxu0 0
  %2271 = vmatpush.bf16.msra.mxu0 0
  %2272 = vmatpush.bf16.msra.mxu0 0
  %2273 = vmatpush.bf16.msra.mxu0 0
  %2274 = vmatpush.bf16.msra.mxu0 0
  %2275 = vmatpush.bf16.msra.mxu0 0
  %2276 = vmatpush.bf16.msra.mxu0 %v496
  %2277 = vmatpush.bf16.msra.mxu0 %v495
  %2278 = vmatmul.bf16.gmra.mxu0 %v2268
  %v2279 = vpop.f32.mrf.mxu0
  %v2280 = vadd.f32 0.0, %v2279
  %v2281 = vpop.f32.mrf.mxu0
  %v2282 = vadd.f32 0.0, %v2281
  %2283 = vdwg.mxu0
  %v2284 = vadd.f32 %v2261, %v2280
  %v2285 = vadd.f32 %v2262, %v2282
  %v2286 = vxor.u32 %v2284, 2147483648
  %v2287 = vxor.u32 %v2285, 2147483648
  %v2288 = vmul.f32 %v2286, 1.442695
  %v2289 = vpow.pop %v2288
  %v2290 = vmul.f32 %v2287, 1.442695
  %v2291 = vpow.pop %v2290
  %v2292 = vadd.f32 %v2289, 1.0
  %v2293 = vadd.f32 %v2291, 1.0
  %v2294 = vrcp.pop %v2292
  %v2295 = vmul.f32 %v2292, %v2294
  %v2296 = vsub.f32 1.0, %v2295
  %v2297 = vmul.f32 %v2294, %v2296
  %v2298 = vadd.f32 %v2294, %v2297
  %vm2299 = vweird.f32 %v2292
  %vm2300 = vweird.f32 %v2294
  %vm2301 = vmor %vm2299, %vm2300
  %v2302 = vsel %vm2301, %v2294, %v2298
  %v2303 = vand.u32 2147483647, %v2292
  %vm2304 = vcmp.eq.f32.partialorder %v2303, 8.507059e+37
  %v2305 = vand.u32 %v2292, 2147483648
  %v2306 = vor.u32 1.1754944e-38, %v2305
  %v2307 = vsel %vm2304, %v2306, %v2302
  %v2308 = vmul.f32 1.0, %v2307
  %v2309 = vrcp.pop %v2293
  %v2310 = vmul.f32 %v2293, %v2309
  %v2311 = vsub.f32 1.0, %v2310
  %v2312 = vmul.f32 %v2309, %v2311
  %v2313 = vadd.f32 %v2309, %v2312
  %vm2314 = vweird.f32 %v2293
  %vm2315 = vweird.f32 %v2309
  %vm2316 = vmor %vm2314, %vm2315
  %v2317 = vsel %vm2316, %v2309, %v2313
  %v2318 = vand.u32 2147483647, %v2293
  %vm2319 = vcmp.eq.f32.partialorder %v2318, 8.507059e+37
  %v2320 = vand.u32 %v2293, 2147483648
  %v2321 = vor.u32 1.1754944e-38, %v2320
  %v2322 = vsel %vm2319, %v2321, %v2317
  %v2323 = vmul.f32 1.0, %v2322
  %v2324 = vtanh.pop %v2284
  %v2325 = vtanh.pop %v2285
  %v2326 = vmul.f32 %v2308, %v2140
  %v2327 = vmul.f32 %v2323, %v2141
  %2330 = vrot.lane.b32.xlu0 %v2324, 32
  %v2331 = vpop.permute.xlu0 %2330
  %2332 = vrot.lane.b32.xlu0 %v2325, 32
  %v2333 = vpop.permute.xlu0 %2332
  %v2336 = vmul.f32 %v2308, %v2331
  %v2337 = vmul.f32 %v2323, %v2333
  %2340 = vrot.lane.b32.xlu0 %v2336, 32
  %v2341 = vpop.permute.xlu0 %2340
  %2342 = vrot.lane.b32.xlu0 %v2337, 32
  %v2343 = vpop.permute.xlu0 %2342
  %v2346 = vadd.f32 %v2326, %v2341
  %v2347 = vadd.f32 %v2327, %v2343
  %v2348 = vtanh.pop %v2346
  %v2349 = vtanh.pop %v2347
  %2352 = vrot.lane.b32.xlu0 %v2348, 32
  %v2353 = vpop.permute.xlu0 %2352
  %2354 = vrot.lane.b32.xlu0 %v2349, 32
  %v2355 = vpop.permute.xlu0 %2354
  %v2358 = vmul.f32 %v2308, %v2353
  %v2359 = vmul.f32 %v2323, %v2355
  %v2360 = vsel %vm461, %v2358, 0.0
  %v2361 = vsel %vm462, %v2359, 0.0
  %v2362 = vpack.c.bf16 %v2360, %v2360
  %v2363 = vpack.c.bf16 %v2361, %v2361
  %2366 = vrot.lane.b32.xlu0 %v2362, 64
  %v2367 = vpop.permute.xlu0 %2366
  %2368 = vrot.lane.b32.xlu0 %v2363, 64
  %v2369 = vpop.permute.xlu0 %2368
  %2372 = vst.msk [vmem:[%s9] sm:$0xf] %vm475, %v2367
  %2373 = vst.msk [vmem:[%s9 + $0x4] sm:$0xf] %vm475, %v2369
  // Predicated region
  $region34: #{lstm_crf_forward.2} parent=0 // pred_check
    _
  $region35: #{lstm_crf_forward.2} parent=0 // pred_check_branch
    %2375 = sbr.rel (0) target = $region37
  $region36: #{lstm_crf_forward.2} parent=0 // pred_region
    _
  $region37: #{lstm_crf_forward.2} parent=0 // pred_fallthru
    _
  // Predicated region
  $region38: #{lstm_crf_forward.2} parent=0 // pred_check
    _
  $region39: #{lstm_crf_forward.2} parent=0 // pred_check_branch
    %2377 = sbr.rel (0) target = $region41
  $region40: #{lstm_crf_forward.2} parent=0 // pred_region
    _
  $region41: #{lstm_crf_forward.2} parent=0 // pred_fallthru
    _
  // Predicated region
  $region42: #{lstm_crf_forward.2} parent=0 // pred_check
    _
  $region43: #{lstm_crf_forward.2} parent=0 // pred_check_branch
    %2379 = sbr.rel (0) target = $region45
  $region44: #{lstm_crf_forward.2} parent=0 // pred_region
    _
  $region45: #{lstm_crf_forward.2} parent=0 // pred_fallthru
    _
  // Predicated region
  $region46: #{lstm_crf_forward.2} parent=0 // pred_check
    _
  $region47: #{lstm_crf_forward.2} parent=0 // pred_check_branch
    %2381 = sbr.rel (0) target = $region49
  $region48: #{lstm_crf_forward.2} parent=0 // pred_region
    _
  $region49: #{lstm_crf_forward.2} parent=0 // pred_fallthru
    _

// kernel: lstm_crf_forward.3
$region0: #{lstm_crf_forward.3}
  #allocation0 [shape = 'u32[]', space=smem, size = 0x4, offset = 0x4, fixed_abs, tag = 'smem constant byte address 0x4 - core index']
  #allocation1 [shape = 'u32[72,128]{1,0:T(1,128)}', space=vmem, size = 0x9000, scoped, tag = 'internal scratch']
  #allocation2 [shape = 'bf16[128,128]{1,0:T(8,128)(2,1)}', space=vmem, size = 0x8000, scoped, tag = 'scratch operand']
  #allocation3 [shape = 'bf16[128,128]{1,0:T(8,128)(2,1)}', space=vmem, size = 0x8000, scoped, tag = 'scratch operand']
  #allocation4 [shape = 'bf16[128,32]{1,0:T(8,128)(2,1)}', space=vmem, size = 0x8000, scoped, tag = 'scratch operand']
  #allocation5 [shape = 'bf16[128,32]{1,0:T(8,128)(2,1)}', space=vmem, size = 0x8000, scoped, tag = 'scratch operand']
  %s0 = inlined_call_operand.vmem [shape: bf16[128,32], index: 0, kind: input, shape index: {}]
  %s1 = inlined_call_operand.vmem [shape: bf16[128,32], index: 1, kind: input, shape index: {}]
  %s2 = inlined_call_operand.vmem [shape: s32[16,1], index: 2, kind: input, shape index: {}]
  %s3 = inlined_call_operand.vmem [shape: bf16[32,128], index: 3, kind: input, shape index: {}]
  %s4 = inlined_call_operand.vmem [shape: bf16[32,128], index: 4, kind: input, shape index: {}]
  %s5 = inlined_call_operand.vmem [shape: bf16[32,128], index: 5, kind: input, shape index: {}]
  %s6 = inlined_call_operand.vmem [shape: bf16[32,128], index: 6, kind: input, shape index: {}]
  %s7 = inlined_call_operand.vmem [shape: f32[1,128], index: 7, kind: input, shape index: {}]
  %s8 = inlined_call_operand.vmem [shape: f32[1,128], index: 8, kind: input, shape index: {}]
  %s9 = inlined_call_operand.vmem [shape: bf16[32,128], index: 9, kind: input, shape index: {}]
  %s10 = inlined_call_operand.vmem [shape: bf16[32,128], index: 10, kind: input, shape index: {}]
  %s11 = inlined_call_operand.vmem [shape: bf16[32,128], index: 11, kind: input, shape index: {}]
  %s12 = inlined_call_operand.vmem [shape: bf16[32,128], index: 12, kind: input, shape index: {}]
  %s13 = inlined_call_operand.vmem [shape: f32[1,128], index: 13, kind: input, shape index: {}]
  %s14 = inlined_call_operand.vmem [shape: f32[128,128], index: 14, kind: output, shape index: {}]
  %s15 = sld [smem:[#allocation0]]
  $region66: #{lstm_crf_forward.3} parent=0
    _
  %s17 = ssub.s32 1, %s15
  %s18 = scalar_select 0, %s17, %s15
  // Predicated region
  $region2: #{lstm_crf_forward.3} parent=0 // pred_check
    _
  $region3: #{lstm_crf_forward.3} parent=0 // pred_check_branch
    %20 = sbr.rel (0) target = $region5
  $region4: #{lstm_crf_forward.3} parent=0 // pred_region
    _
  $region5: #{lstm_crf_forward.3} parent=0 // pred_fallthru
    _
  // Predicated region
  $region6: #{lstm_crf_forward.3} parent=0 // pred_check
    _
  $region7: #{lstm_crf_forward.3} parent=0 // pred_check_branch
    %22 = sbr.rel (0) target = $region9
  $region8: #{lstm_crf_forward.3} parent=0 // pred_region
    _
  $region9: #{lstm_crf_forward.3} parent=0 // pred_fallthru
    _
  // Predicated region
  $region10: #{lstm_crf_forward.3} parent=0 // pred_check
    _
  $region11: #{lstm_crf_forward.3} parent=0 // pred_check_branch
    %24 = sbr.rel (0) target = $region13
  $region12: #{lstm_crf_forward.3} parent=0 // pred_region
    _
  $region13: #{lstm_crf_forward.3} parent=0 // pred_fallthru
    _
  // Predicated region
  $region14: #{lstm_crf_forward.3} parent=0 // pred_check
    _
  $region15: #{lstm_crf_forward.3} parent=0 // pred_check_branch
    %26 = sbr.rel (0) target = $region17
  $region16: #{lstm_crf_forward.3} parent=0 // pred_region
    _
  $region17: #{lstm_crf_forward.3} parent=0 // pred_fallthru
    _
  // Predicated region
  $region18: #{lstm_crf_forward.3} parent=0 // pred_check
    _
  $region19: #{lstm_crf_forward.3} parent=0 // pred_check_branch
    %28 = sbr.rel (0) target = $region21
  $region20: #{lstm_crf_forward.3} parent=0 // pred_region
    _
  $region21: #{lstm_crf_forward.3} parent=0 // pred_fallthru
    _
  // Predicated region
  $region22: #{lstm_crf_forward.3} parent=0 // pred_check
    _
  $region23: #{lstm_crf_forward.3} parent=0 // pred_check_branch
    %30 = sbr.rel (0) target = $region25
  $region24: #{lstm_crf_forward.3} parent=0 // pred_region
    _
  $region25: #{lstm_crf_forward.3} parent=0 // pred_fallthru
    _
  // Predicated region
  $region26: #{lstm_crf_forward.3} parent=0 // pred_check
    _
  $region27: #{lstm_crf_forward.3} parent=0 // pred_check_branch
    %32 = sbr.rel (0) target = $region29
  $region28: #{lstm_crf_forward.3} parent=0 // pred_region
    _
  $region29: #{lstm_crf_forward.3} parent=0 // pred_fallthru
    _
  // Predicated region
  $region30: #{lstm_crf_forward.3} parent=0 // pred_check
    _
  $region31: #{lstm_crf_forward.3} parent=0 // pred_check_branch
    %34 = sbr.rel (0) target = $region33
  $region32: #{lstm_crf_forward.3} parent=0 // pred_region
    _
  $region33: #{lstm_crf_forward.3} parent=0 // pred_fallthru
    _
  // Predicated region
  $region34: #{lstm_crf_forward.3} parent=0 // pred_check
    _
  $region35: #{lstm_crf_forward.3} parent=0 // pred_check_branch
    %36 = sbr.rel (0) target = $region37
  $region36: #{lstm_crf_forward.3} parent=0 // pred_region
    _
  $region37: #{lstm_crf_forward.3} parent=0 // pred_fallthru
    _
  // Predicated region
  $region38: #{lstm_crf_forward.3} parent=0 // pred_check
    _
  $region39: #{lstm_crf_forward.3} parent=0 // pred_check_branch
    %38 = sbr.rel (0) target = $region41
  $region40: #{lstm_crf_forward.3} parent=0 // pred_region
    _
  $region41: #{lstm_crf_forward.3} parent=0 // pred_fallthru
    _
  // Predicated region
  $region42: #{lstm_crf_forward.3} parent=0 // pred_check
    _
  $region43: #{lstm_crf_forward.3} parent=0 // pred_check_branch
    %40 = sbr.rel (0) target = $region45
  $region44: #{lstm_crf_forward.3} parent=0 // pred_region
    _
  $region45: #{lstm_crf_forward.3} parent=0 // pred_fallthru
    _
  // Predicated region
  $region46: #{lstm_crf_forward.3} parent=0 // pred_check
    _
  $region47: #{lstm_crf_forward.3} parent=0 // pred_check_branch
    %42 = sbr.rel (0) target = $region49
  $region48: #{lstm_crf_forward.3} parent=0 // pred_region
    _
  $region49: #{lstm_crf_forward.3} parent=0 // pred_fallthru
    _
  // Predicated region
  $region50: #{lstm_crf_forward.3} parent=0 // pred_check
    _
  $region51: #{lstm_crf_forward.3} parent=0 // pred_check_branch
    %44 = sbr.rel (0) target = $region53
  $region52: #{lstm_crf_forward.3} parent=0 // pred_region
    _
  $region53: #{lstm_crf_forward.3} parent=0 // pred_fallthru
    _
  // Predicated region
  $region54: #{lstm_crf_forward.3} parent=0 // pred_check
    _
  $region55: #{lstm_crf_forward.3} parent=0 // pred_check_branch
    %46 = sbr.rel (0) target = $region57
  $region56: #{lstm_crf_forward.3} parent=0 // pred_region
    _
  $region57: #{lstm_crf_forward.3} parent=0 // pred_fallthru
    _
  %v48 = vld [vmem:[%s7] sm:$0x1]
  %v49 = vld [vmem:[%s8] sm:$0x1]
  %v50 = vld [vmem:[%s0] sm:$0xf]
  %v51 = vld [vmem:[%s0 + $0x4] sm:$0xf]
  %v52 = vld [vmem:[%s0 + $0x8] sm:$0xf]
  %v53 = vld [vmem:[%s0 + $0xc] sm:$0xf]
  %v54 = vld [vmem:[%s0 + $0x10] sm:$0xf]
  %v55 = vld [vmem:[%s0 + $0x14] sm:$0xf]
  %v56 = vld [vmem:[%s0 + $0x18] sm:$0xf]
  %v57 = vld [vmem:[%s0 + $0x1c] sm:$0xf]
  %v58 = vld [vmem:[%s0 + $0x20] sm:$0xf]
  %v59 = vld [vmem:[%s0 + $0x24] sm:$0xf]
  %v60 = vld [vmem:[%s0 + $0x28] sm:$0xf]
  %v61 = vld [vmem:[%s0 + $0x2c] sm:$0xf]
  %v62 = vld [vmem:[%s0 + $0x30] sm:$0xf]
  %v63 = vld [vmem:[%s0 + $0x34] sm:$0xf]
  %v64 = vld [vmem:[%s0 + $0x38] sm:$0xf]
  %v65 = vld [vmem:[%s0 + $0x3c] sm:$0xf]
  %v66 = vld [vmem:[%s3] sm:$0xf]
  %v67 = vld [vmem:[%s3 + $0x4] sm:$0xf]
  %v68 = vld [vmem:[%s3 + $0x8] sm:$0xf]
  %v69 = vld [vmem:[%s3 + $0xc] sm:$0xf]
  %v86 = vunpack.c.l.b16 %v50
  %v87 = vunpack.c.l.b16 %v51
  %v88 = vunpack.c.l.b16 %v52
  %v89 = vunpack.c.l.b16 %v53
  %v90 = vunpack.c.l.b16 %v54
  %v91 = vunpack.c.l.b16 %v55
  %v92 = vunpack.c.l.b16 %v56
  %v93 = vunpack.c.l.b16 %v57
  %v94 = vunpack.c.l.b16 %v58
  %v95 = vunpack.c.l.b16 %v59
  %v96 = vunpack.c.l.b16 %v60
  %v97 = vunpack.c.l.b16 %v61
  %v98 = vunpack.c.l.b16 %v62
  %v99 = vunpack.c.l.b16 %v63
  %v100 = vunpack.c.l.b16 %v64
  %v101 = vunpack.c.l.b16 %v65
  %v102 = vpack.c.b16 %v87, %v86
  %v103 = vpack.c.b16 %v89, %v88
  %v104 = vpack.c.b16 %v91, %v90
  %v105 = vpack.c.b16 %v93, %v92
  %v106 = vpack.c.b16 %v95, %v94
  %v107 = vpack.c.b16 %v97, %v96
  %v108 = vpack.c.b16 %v99, %v98
  %v109 = vpack.c.b16 %v101, %v100
  %v114 = vunpack.c.l.b16 %v66
  %v115 = vunpack.c.l.b16 %v67
  %v116 = vunpack.c.l.b16 %v68
  %v117 = vunpack.c.l.b16 %v69
  %v118 = vpack.c.b16 %v115, %v114
  %v119 = vpack.c.b16 %v117, %v116
  %vm122 = vcmask 261120
  %v124 = vsel %vm122, %v102, 0
  %v127 = vsel %vm122, %v103, 0
  %v130 = vsel %vm122, %v104, 0
  %v133 = vsel %vm122, %v105, 0
  %v136 = vsel %vm122, %v106, 0
  %v139 = vsel %vm122, %v107, 0
  %v142 = vsel %vm122, %v108, 0
  %v145 = vsel %vm122, %v109, 0
  %147 = vmatpush.bf16.msra.mxu0 0
  %148 = vmatpush.bf16.msra.mxu0 0
  %149 = vmatpush.bf16.msra.mxu0 0
  %150 = vmatpush.bf16.msra.mxu0 0
  %151 = vmatpush.bf16.msra.mxu0 0
  %152 = vmatpush.bf16.msra.mxu0 0
  %153 = vmatpush.bf16.msra.mxu0 %v119
  %154 = vmatpush.bf16.msra.mxu0 %v118
  %155 = vmatmul.bf16.gmra.mxu0 %v124
  %v156 = vpop.f32.mrf.mxu0
  %v157 = vadd.f32 0.0, %v156
  %v158 = vpop.f32.mrf.mxu0
  %v159 = vadd.f32 0.0, %v158
  %160 = vmatmul.bf16.gmra.mxu0 %v127
  %v161 = vpop.f32.mrf.mxu0
  %v162 = vadd.f32 0.0, %v161
  %v163 = vpop.f32.mrf.mxu0
  %v164 = vadd.f32 0.0, %v163
  %165 = vmatmul.bf16.gmra.mxu0 %v130
  %v166 = vpop.f32.mrf.mxu0
  %v167 = vadd.f32 0.0, %v166
  %v168 = vpop.f32.mrf.mxu0
  %v169 = vadd.f32 0.0, %v168
  %170 = vmatmul.bf16.gmra.mxu0 %v133
  %v171 = vpop.f32.mrf.mxu0
  %v172 = vadd.f32 0.0, %v171
  %v173 = vpop.f32.mrf.mxu0
  %v174 = vadd.f32 0.0, %v173
  %175 = vmatmul.bf16.gmra.mxu0 %v136
  %v176 = vpop.f32.mrf.mxu0
  %v177 = vadd.f32 0.0, %v176
  %v178 = vpop.f32.mrf.mxu0
  %v179 = vadd.f32 0.0, %v178
  %180 = vmatmul.bf16.gmra.mxu0 %v139
  %v181 = vpop.f32.mrf.mxu0
  %v182 = vadd.f32 0.0, %v181
  %v183 = vpop.f32.mrf.mxu0
  %v184 = vadd.f32 0.0, %v183
  %185 = vmatmul.bf16.gmra.mxu0 %v142
  %v186 = vpop.f32.mrf.mxu0
  %v187 = vadd.f32 0.0, %v186
  %v188 = vpop.f32.mrf.mxu0
  %v189 = vadd.f32 0.0, %v188
  %190 = vmatmul.bf16.gmra.mxu0 %v145
  %v191 = vpop.f32.mrf.mxu0
  %v192 = vadd.f32 0.0, %v191
  %v193 = vpop.f32.mrf.mxu0
  %v194 = vadd.f32 0.0, %v193
  %195 = vdwg.mxu0
  %v197 = vperm.slane %v48, 0
  %v199 = vadd.f32 %v197, %v157
  %v200 = vadd.f32 %v197, %v159
  %v201 = vadd.f32 %v197, %v162
  %v202 = vadd.f32 %v197, %v164
  %v203 = vadd.f32 %v197, %v167
  %v204 = vadd.f32 %v197, %v169
  %v205 = vadd.f32 %v197, %v172
  %v206 = vadd.f32 %v197, %v174
  %v207 = vadd.f32 %v197, %v177
  %v208 = vadd.f32 %v197, %v179
  %v209 = vadd.f32 %v197, %v182
  %v210 = vadd.f32 %v197, %v184
  %v211 = vadd.f32 %v197, %v187
  %v212 = vadd.f32 %v197, %v189
  %v213 = vadd.f32 %v197, %v192
  %v214 = vadd.f32 %v197, %v194
  %v215 = vld [vmem:[%s5] sm:$0xf]
  %v216 = vld [vmem:[%s5 + $0x4] sm:$0xf]
  %v217 = vld [vmem:[%s5 + $0x8] sm:$0xf]
  %v218 = vld [vmem:[%s5 + $0xc] sm:$0xf]
  %v223 = vunpack.c.l.b16 %v215
  %v224 = vunpack.c.l.b16 %v216
  %v225 = vunpack.c.l.b16 %v217
  %v226 = vunpack.c.l.b16 %v218
  %v227 = vpack.c.b16 %v224, %v223
  %v228 = vpack.c.b16 %v226, %v225
  %231 = vmatpush.bf16.msra.mxu0 0
  %232 = vmatpush.bf16.msra.mxu0 0
  %233 = vmatpush.bf16.msra.mxu0 0
  %234 = vmatpush.bf16.msra.mxu0 0
  %235 = vmatpush.bf16.msra.mxu0 0
  %236 = vmatpush.bf16.msra.mxu0 0
  %237 = vmatpush.bf16.msra.mxu0 %v228
  %238 = vmatpush.bf16.msra.mxu0 %v227
  %239 = vmatmul.bf16.gmra.mxu0 %v124
  %v240 = vpop.f32.mrf.mxu0
  %v241 = vadd.f32 0.0, %v240
  %v242 = vpop.f32.mrf.mxu0
  %v243 = vadd.f32 0.0, %v242
  %244 = vmatmul.bf16.gmra.mxu0 %v127
  %v245 = vpop.f32.mrf.mxu0
  %v246 = vadd.f32 0.0, %v245
  %v247 = vpop.f32.mrf.mxu0
  %v248 = vadd.f32 0.0, %v247
  %249 = vmatmul.bf16.gmra.mxu0 %v130
  %v250 = vpop.f32.mrf.mxu0
  %v251 = vadd.f32 0.0, %v250
  %v252 = vpop.f32.mrf.mxu0
  %v253 = vadd.f32 0.0, %v252
  %254 = vmatmul.bf16.gmra.mxu0 %v133
  %v255 = vpop.f32.mrf.mxu0
  %v256 = vadd.f32 0.0, %v255
  %v257 = vpop.f32.mrf.mxu0
  %v258 = vadd.f32 0.0, %v257
  %259 = vmatmul.bf16.gmra.mxu0 %v136
  %v260 = vpop.f32.mrf.mxu0
  %v261 = vadd.f32 0.0, %v260
  %v262 = vpop.f32.mrf.mxu0
  %v263 = vadd.f32 0.0, %v262
  %264 = vmatmul.bf16.gmra.mxu0 %v139
  %v265 = vpop.f32.mrf.mxu0
  %v266 = vadd.f32 0.0, %v265
  %v267 = vpop.f32.mrf.mxu0
  %v268 = vadd.f32 0.0, %v267
  %269 = vmatmul.bf16.gmra.mxu0 %v142
  %v270 = vpop.f32.mrf.mxu0
  %v271 = vadd.f32 0.0, %v270
  %v272 = vpop.f32.mrf.mxu0
  %v273 = vadd.f32 0.0, %v272
  %274 = vmatmul.bf16.gmra.mxu0 %v145
  %v275 = vpop.f32.mrf.mxu0
  %v276 = vadd.f32 0.0, %v275
  %v277 = vpop.f32.mrf.mxu0
  %v278 = vadd.f32 0.0, %v277
  %279 = vdwg.mxu0
  %v281 = vperm.slane %v49, 0
  %v283 = vadd.f32 %v281, %v241
  %v284 = vadd.f32 %v281, %v243
  %v285 = vadd.f32 %v281, %v246
  %v286 = vadd.f32 %v281, %v248
  %v287 = vadd.f32 %v281, %v251
  %v288 = vadd.f32 %v281, %v253
  %v289 = vadd.f32 %v281, %v256
  %v290 = vadd.f32 %v281, %v258
  %v291 = vadd.f32 %v281, %v261
  %v292 = vadd.f32 %v281, %v263
  %v293 = vadd.f32 %v281, %v266
  %v294 = vadd.f32 %v281, %v268
  %v295 = vadd.f32 %v281, %v271
  %v296 = vadd.f32 %v281, %v273
  %v297 = vadd.f32 %v281, %v276
  %v298 = vadd.f32 %v281, %v278
  %v299 = vld [vmem:[%s1] sm:$0xf]
  %v300 = vld [vmem:[%s1 + $0x4] sm:$0xf]
  %v301 = vld [vmem:[%s1 + $0x8] sm:$0xf]
  %v302 = vld [vmem:[%s1 + $0xc] sm:$0xf]
  %v303 = vld [vmem:[%s1 + $0x10] sm:$0xf]
  %v304 = vld [vmem:[%s1 + $0x14] sm:$0xf]
  %v305 = vld [vmem:[%s1 + $0x18] sm:$0xf]
  %v306 = vld [vmem:[%s1 + $0x1c] sm:$0xf]
  %v307 = vld [vmem:[%s1 + $0x20] sm:$0xf]
  %v308 = vld [vmem:[%s1 + $0x24] sm:$0xf]
  %v309 = vld [vmem:[%s1 + $0x28] sm:$0xf]
  %v310 = vld [vmem:[%s1 + $0x2c] sm:$0xf]
  %v311 = vld [vmem:[%s1 + $0x30] sm:$0xf]
  %v312 = vld [vmem:[%s1 + $0x34] sm:$0xf]
  %v313 = vld [vmem:[%s1 + $0x38] sm:$0xf]
  %v314 = vld [vmem:[%s1 + $0x3c] sm:$0xf]
  %v315 = vld [vmem:[%s4] sm:$0xf]
  %v316 = vld [vmem:[%s4 + $0x4] sm:$0xf]
  %v317 = vld [vmem:[%s4 + $0x8] sm:$0xf]
  %v318 = vld [vmem:[%s4 + $0xc] sm:$0xf]
  %v335 = vunpack.c.l.b16 %v299
  %v336 = vunpack.c.l.b16 %v300
  %v337 = vunpack.c.l.b16 %v301
  %v338 = vunpack.c.l.b16 %v302
  %v339 = vunpack.c.l.b16 %v303
  %v340 = vunpack.c.l.b16 %v304
  %v341 = vunpack.c.l.b16 %v305
  %v342 = vunpack.c.l.b16 %v306
  %v343 = vunpack.c.l.b16 %v307
  %v344 = vunpack.c.l.b16 %v308
  %v345 = vunpack.c.l.b16 %v309
  %v346 = vunpack.c.l.b16 %v310
  %v347 = vunpack.c.l.b16 %v311
  %v348 = vunpack.c.l.b16 %v312
  %v349 = vunpack.c.l.b16 %v313
  %v350 = vunpack.c.l.b16 %v314
  %v351 = vpack.c.b16 %v336, %v335
  %v352 = vpack.c.b16 %v338, %v337
  %v353 = vpack.c.b16 %v340, %v339
  %v354 = vpack.c.b16 %v342, %v341
  %v355 = vpack.c.b16 %v344, %v343
  %v356 = vpack.c.b16 %v346, %v345
  %v357 = vpack.c.b16 %v348, %v347
  %v358 = vpack.c.b16 %v350, %v349
  %v363 = vunpack.c.l.b16 %v315
  %v364 = vunpack.c.l.b16 %v316
  %v365 = vunpack.c.l.b16 %v317
  %v366 = vunpack.c.l.b16 %v318
  %v367 = vpack.c.b16 %v364, %v363
  %v368 = vpack.c.b16 %v366, %v365
  %v372 = vsel %vm122, %v351, 0
  %v375 = vsel %vm122, %v352, 0
  %v378 = vsel %vm122, %v353, 0
  %v381 = vsel %vm122, %v354, 0
  %v384 = vsel %vm122, %v355, 0
  %v387 = vsel %vm122, %v356, 0
  %v390 = vsel %vm122, %v357, 0
  %v393 = vsel %vm122, %v358, 0
  %395 = vmatpush.bf16.msra.mxu0 0
  %396 = vmatpush.bf16.msra.mxu0 0
  %397 = vmatpush.bf16.msra.mxu0 0
  %398 = vmatpush.bf16.msra.mxu0 0
  %399 = vmatpush.bf16.msra.mxu0 0
  %400 = vmatpush.bf16.msra.mxu0 0
  %401 = vmatpush.bf16.msra.mxu0 %v368
  %402 = vmatpush.bf16.msra.mxu0 %v367
  %403 = vmatmul.bf16.gmra.mxu0 %v372
  %v404 = vpop.f32.mrf.mxu0
  %v405 = vadd.f32 0.0, %v404
  %v406 = vpop.f32.mrf.mxu0
  %v407 = vadd.f32 0.0, %v406
  %408 = vmatmul.bf16.gmra.mxu0 %v375
  %v409 = vpop.f32.mrf.mxu0
  %v410 = vadd.f32 0.0, %v409
  %v411 = vpop.f32.mrf.mxu0
  %v412 = vadd.f32 0.0, %v411
  %413 = vmatmul.bf16.gmra.mxu0 %v378
  %v414 = vpop.f32.mrf.mxu0
  %v415 = vadd.f32 0.0, %v414
  %v416 = vpop.f32.mrf.mxu0
  %v417 = vadd.f32 0.0, %v416
  %418 = vmatmul.bf16.gmra.mxu0 %v381
  %v419 = vpop.f32.mrf.mxu0
  %v420 = vadd.f32 0.0, %v419
  %v421 = vpop.f32.mrf.mxu0
  %v422 = vadd.f32 0.0, %v421
  %423 = vmatmul.bf16.gmra.mxu0 %v384
  %v424 = vpop.f32.mrf.mxu0
  %v425 = vadd.f32 0.0, %v424
  %v426 = vpop.f32.mrf.mxu0
  %v427 = vadd.f32 0.0, %v426
  %428 = vmatmul.bf16.gmra.mxu0 %v387
  %v429 = vpop.f32.mrf.mxu0
  %v430 = vadd.f32 0.0, %v429
  %v431 = vpop.f32.mrf.mxu0
  %v432 = vadd.f32 0.0, %v431
  %433 = vmatmul.bf16.gmra.mxu0 %v390
  %v434 = vpop.f32.mrf.mxu0
  %v435 = vadd.f32 0.0, %v434
  %v436 = vpop.f32.mrf.mxu0
  %v437 = vadd.f32 0.0, %v436
  %438 = vmatmul.bf16.gmra.mxu0 %v393
  %v439 = vpop.f32.mrf.mxu0
  %v440 = vadd.f32 0.0, %v439
  %v441 = vpop.f32.mrf.mxu0
  %v442 = vadd.f32 0.0, %v441
  %443 = vdwg.mxu0
  %v444 = vadd.f32 %v199, %v405
  %v445 = vadd.f32 %v200, %v407
  %v446 = vadd.f32 %v201, %v410
  %v447 = vadd.f32 %v202, %v412
  %v448 = vadd.f32 %v203, %v415
  %v449 = vadd.f32 %v204, %v417
  %v450 = vadd.f32 %v205, %v420
  %v451 = vadd.f32 %v206, %v422
  %v452 = vadd.f32 %v207, %v425
  %v453 = vadd.f32 %v208, %v427
  %v454 = vadd.f32 %v209, %v430
  %v455 = vadd.f32 %v210, %v432
  %v456 = vadd.f32 %v211, %v435
  %v457 = vadd.f32 %v212, %v437
  %v458 = vadd.f32 %v213, %v440
  %v459 = vadd.f32 %v214, %v442
  %v460 = vld [vmem:[%s6] sm:$0xf]
  %v461 = vld [vmem:[%s6 + $0x4] sm:$0xf]
  %v462 = vld [vmem:[%s6 + $0x8] sm:$0xf]
  %v463 = vld [vmem:[%s6 + $0xc] sm:$0xf]
  %v468 = vunpack.c.l.b16 %v460
  %v469 = vunpack.c.l.b16 %v461
  %v470 = vunpack.c.l.b16 %v462
  %v471 = vunpack.c.l.b16 %v463
  %v472 = vpack.c.b16 %v469, %v468
  %v473 = vpack.c.b16 %v471, %v470
  %476 = vmatpush.bf16.msra.mxu0 0
  %477 = vmatpush.bf16.msra.mxu0 0
  %478 = vmatpush.bf16.msra.mxu0 0
  %479 = vmatpush.bf16.msra.mxu0 0
  %480 = vmatpush.bf16.msra.mxu0 0
  %481 = vmatpush.bf16.msra.mxu0 0
  %482 = vmatpush.bf16.msra.mxu0 %v473
  %483 = vmatpush.bf16.msra.mxu0 %v472
  %484 = vmatmul.bf16.gmra.mxu0 %v372
  %v485 = vpop.f32.mrf.mxu0
  %v486 = vadd.f32 0.0, %v485
  %v487 = vpop.f32.mrf.mxu0
  %v488 = vadd.f32 0.0, %v487
  %489 = vmatmul.bf16.gmra.mxu0 %v375
  %v490 = vpop.f32.mrf.mxu0
  %v491 = vadd.f32 0.0, %v490
  %v492 = vpop.f32.mrf.mxu0
  %v493 = vadd.f32 0.0, %v492
  %494 = vmatmul.bf16.gmra.mxu0 %v378
  %v495 = vpop.f32.mrf.mxu0
  %v496 = vadd.f32 0.0, %v495
  %v497 = vpop.f32.mrf.mxu0
  %v498 = vadd.f32 0.0, %v497
  %499 = vmatmul.bf16.gmra.mxu0 %v381
  %v500 = vpop.f32.mrf.mxu0
  %v501 = vadd.f32 0.0, %v500
  %v502 = vpop.f32.mrf.mxu0
  %v503 = vadd.f32 0.0, %v502
  %504 = vmatmul.bf16.gmra.mxu0 %v384
  %v505 = vpop.f32.mrf.mxu0
  %v506 = vadd.f32 0.0, %v505
  %v507 = vpop.f32.mrf.mxu0
  %v508 = vadd.f32 0.0, %v507
  %509 = vmatmul.bf16.gmra.mxu0 %v387
  %v510 = vpop.f32.mrf.mxu0
  %v511 = vadd.f32 0.0, %v510
  %v512 = vpop.f32.mrf.mxu0
  %v513 = vadd.f32 0.0, %v512
  %514 = vmatmul.bf16.gmra.mxu0 %v390
  %v515 = vpop.f32.mrf.mxu0
  %v516 = vadd.f32 0.0, %v515
  %v517 = vpop.f32.mrf.mxu0
  %v518 = vadd.f32 0.0, %v517
  %519 = vmatmul.bf16.gmra.mxu0 %v393
  %v520 = vpop.f32.mrf.mxu0
  %v521 = vadd.f32 0.0, %v520
  %v522 = vpop.f32.mrf.mxu0
  %v523 = vadd.f32 0.0, %v522
  %524 = vdwg.mxu0
  %v525 = vadd.f32 %v283, %v486
  %v526 = vadd.f32 %v284, %v488
  %v527 = vadd.f32 %v285, %v491
  %v528 = vadd.f32 %v286, %v493
  %v529 = vadd.f32 %v287, %v496
  %v530 = vadd.f32 %v288, %v498
  %v531 = vadd.f32 %v289, %v501
  %v532 = vadd.f32 %v290, %v503
  %v533 = vadd.f32 %v291, %v506
  %v534 = vadd.f32 %v292, %v508
  %v535 = vadd.f32 %v293, %v511
  %v536 = vadd.f32 %v294, %v513
  %v537 = vadd.f32 %v295, %v516
  %v538 = vadd.f32 %v296, %v518
  %v539 = vadd.f32 %v297, %v521
  %v540 = vadd.f32 %v298, %v523
  %v541 = vpack.c.bf16 %v444, %v444
  %v542 = vpack.c.bf16 %v445, %v445
  %v543 = vpack.c.bf16 %v446, %v446
  %v544 = vpack.c.bf16 %v447, %v447
  %v545 = vpack.c.bf16 %v448, %v448
  %v546 = vpack.c.bf16 %v449, %v449
  %v547 = vpack.c.bf16 %v450, %v450
  %v548 = vpack.c.bf16 %v451, %v451
  %v549 = vpack.c.bf16 %v452, %v452
  %v550 = vpack.c.bf16 %v453, %v453
  %v551 = vpack.c.bf16 %v454, %v454
  %v552 = vpack.c.bf16 %v455, %v455
  %v553 = vpack.c.bf16 %v456, %v456
  %v554 = vpack.c.bf16 %v457, %v457
  %v555 = vpack.c.bf16 %v458, %v458
  %v556 = vpack.c.bf16 %v459, %v459
  %557 = vst [vmem:[#allocation2] sm:$0xf] %v541
  %558 = vst [vmem:[#allocation2 + $0x4] sm:$0xf] %v542
  %559 = vst [vmem:[#allocation2 + $0x8] sm:$0xf] %v543
  %560 = vst [vmem:[#allocation2 + $0xc] sm:$0xf] %v544
  %561 = vst [vmem:[#allocation2 + $0x10] sm:$0xf] %v545
  %562 = vst [vmem:[#allocation2 + $0x14] sm:$0xf] %v546
  %563 = vst [vmem:[#allocation2 + $0x18] sm:$0xf] %v547
  %564 = vst [vmem:[#allocation2 + $0x1c] sm:$0xf] %v548
  %565 = vst [vmem:[#allocation2 + $0x20] sm:$0xf] %v549
  %566 = vst [vmem:[#allocation2 + $0x24] sm:$0xf] %v550
  %567 = vst [vmem:[#allocation2 + $0x28] sm:$0xf] %v551
  %568 = vst [vmem:[#allocation2 + $0x2c] sm:$0xf] %v552
  %569 = vst [vmem:[#allocation2 + $0x30] sm:$0xf] %v553
  %570 = vst [vmem:[#allocation2 + $0x34] sm:$0xf] %v554
  %571 = vst [vmem:[#allocation2 + $0x38] sm:$0xf] %v555
  %572 = vst [vmem:[#allocation2 + $0x3c] sm:$0xf] %v556
  %v573 = vpack.c.bf16 %v525, %v525
  %v574 = vpack.c.bf16 %v526, %v526
  %v575 = vpack.c.bf16 %v527, %v527
  %v576 = vpack.c.bf16 %v528, %v528
  %v577 = vpack.c.bf16 %v529, %v529
  %v578 = vpack.c.bf16 %v530, %v530
  %v579 = vpack.c.bf16 %v531, %v531
  %v580 = vpack.c.bf16 %v532, %v532
  %v581 = vpack.c.bf16 %v533, %v533
  %v582 = vpack.c.bf16 %v534, %v534
  %v583 = vpack.c.bf16 %v535, %v535
  %v584 = vpack.c.bf16 %v536, %v536
  %v585 = vpack.c.bf16 %v537, %v537
  %v586 = vpack.c.bf16 %v538, %v538
  %v587 = vpack.c.bf16 %v539, %v539
  %v588 = vpack.c.bf16 %v540, %v540
  %589 = vst [vmem:[#allocation3] sm:$0xf] %v573
  %590 = vst [vmem:[#allocation3 + $0x4] sm:$0xf] %v574
  %591 = vst [vmem:[#allocation3 + $0x8] sm:$0xf] %v575
  %592 = vst [vmem:[#allocation3 + $0xc] sm:$0xf] %v576
  %593 = vst [vmem:[#allocation3 + $0x10] sm:$0xf] %v577
  %594 = vst [vmem:[#allocation3 + $0x14] sm:$0xf] %v578
  %595 = vst [vmem:[#allocation3 + $0x18] sm:$0xf] %v579
  %596 = vst [vmem:[#allocation3 + $0x1c] sm:$0xf] %v580
  %597 = vst [vmem:[#allocation3 + $0x20] sm:$0xf] %v581
  %598 = vst [vmem:[#allocation3 + $0x24] sm:$0xf] %v582
  %599 = vst [vmem:[#allocation3 + $0x28] sm:$0xf] %v583
  %600 = vst [vmem:[#allocation3 + $0x2c] sm:$0xf] %v584
  %601 = vst [vmem:[#allocation3 + $0x30] sm:$0xf] %v585
  %602 = vst [vmem:[#allocation3 + $0x34] sm:$0xf] %v586
  %603 = vst [vmem:[#allocation3 + $0x38] sm:$0xf] %v587
  %604 = vst [vmem:[#allocation3 + $0x3c] sm:$0xf] %v588
  %v605 = vld [vmem:[%s2] sm:$0xff]
  %v606 = vld [vmem:[%s2 + $0x8] sm:$0xff]
  %v607 = vld [vmem:[%s9] sm:$0xf]
  %v608 = vld [vmem:[%s9 + $0x4] sm:$0xf]
  %v609 = vld [vmem:[%s9 + $0x8] sm:$0xf]
  %v610 = vld [vmem:[%s9 + $0xc] sm:$0xf]
  %v611 = vld [vmem:[%s10] sm:$0xf]
  %v612 = vld [vmem:[%s10 + $0x4] sm:$0xf]
  %v613 = vld [vmem:[%s10 + $0x8] sm:$0xf]
  %v614 = vld [vmem:[%s10 + $0xc] sm:$0xf]
  %vm615 = vcmp.gt.s32.totalorder %v605, 0
  %vm616 = vcmp.gt.s32.totalorder %v606, 0
  %v617 = vld [vmem:[#allocation2] sm:$0xf]
  %v618 = vld [vmem:[#allocation2 + $0x4] sm:$0xf]
  %v619 = vunpack.c.l.bf16 %v617
  %v620 = vunpack.c.l.bf16 %v618
  %v625 = vunpack.c.l.b16 %v607
  %v626 = vunpack.c.l.b16 %v608
  %v627 = vunpack.c.l.b16 %v609
  %v628 = vunpack.c.l.b16 %v610
  %v629 = vpack.c.b16 %v626, %v625
  %v630 = vpack.c.b16 %v628, %v627
  %v634 = vsel %vm122, 0, 0
  %636 = vmatpush.bf16.msra.mxu0 0
  %637 = vmatpush.bf16.msra.mxu0 0
  %638 = vmatpush.bf16.msra.mxu0 0
  %639 = vmatpush.bf16.msra.mxu0 0
  %640 = vmatpush.bf16.msra.mxu0 0
  %641 = vmatpush.bf16.msra.mxu0 0
  %642 = vmatpush.bf16.msra.mxu0 %v630
  %643 = vmatpush.bf16.msra.mxu0 %v629
  %644 = vmatmul.bf16.gmra.mxu0 %v634
  %v645 = vpop.f32.mrf.mxu0
  %v646 = vadd.f32 0.0, %v645
  %v647 = vpop.f32.mrf.mxu0
  %v648 = vadd.f32 0.0, %v647
  %649 = vdwg.mxu0
  %v650 = vadd.f32 %v619, %v646
  %v651 = vadd.f32 %v620, %v648
  %v652 = vxor.u32 %v650, 2147483648
  %v653 = vxor.u32 %v651, 2147483648
  %v654 = vmul.f32 %v652, 1.442695
  %v655 = vpow.pop %v654
  %v656 = vmul.f32 %v653, 1.442695
  %v657 = vpow.pop %v656
  %v658 = vadd.f32 %v655, 1.0
  %v659 = vadd.f32 %v657, 1.0
  %v660 = vrcp.pop %v658
  %v661 = vmul.f32 %v658, %v660
  %v662 = vsub.f32 1.0, %v661
  %v663 = vmul.f32 %v660, %v662
  %v664 = vadd.f32 %v660, %v663
  %vm665 = vweird.f32 %v658
  %vm666 = vweird.f32 %v660
  %vm667 = vmor %vm665, %vm666
  %v668 = vsel %vm667, %v660, %v664
  %v669 = vand.u32 2147483647, %v658
  %vm670 = vcmp.eq.f32.partialorder %v669, 8.507059e+37
  %v671 = vand.u32 %v658, 2147483648
  %v672 = vor.u32 1.1754944e-38, %v671
  %v673 = vsel %vm670, %v672, %v668
  %v674 = vmul.f32 1.0, %v673
  %v675 = vrcp.pop %v659
  %v676 = vmul.f32 %v659, %v675
  %v677 = vsub.f32 1.0, %v676
  %v678 = vmul.f32 %v675, %v677
  %v679 = vadd.f32 %v675, %v678
  %vm680 = vweird.f32 %v659
  %vm681 = vweird.f32 %v675
  %vm682 = vmor %vm680, %vm681
  %v683 = vsel %vm682, %v675, %v679
  %v684 = vand.u32 2147483647, %v659
  %vm685 = vcmp.eq.f32.partialorder %v684, 8.507059e+37
  %v686 = vand.u32 %v659, 2147483648
  %v687 = vor.u32 1.1754944e-38, %v686
  %v688 = vsel %vm685, %v687, %v683
  %v689 = vmul.f32 1.0, %v688
  %v690 = vtanh.pop %v650
  %v691 = vtanh.pop %v651
  %v692 = vmul.f32 %v674, 0.0
  %v693 = vmul.f32 %v689, 0.0
  %696 = vrot.lane.b32.xlu0 %v690, 32
  %v697 = vpop.permute.xlu0 %696
  %698 = vrot.lane.b32.xlu0 %v691, 32
  %v699 = vpop.permute.xlu0 %698
  %v702 = vmul.f32 %v674, %v697
  %v703 = vmul.f32 %v689, %v699
  %706 = vrot.lane.b32.xlu0 %v702, 32
  %v707 = vpop.permute.xlu0 %706
  %708 = vrot.lane.b32.xlu0 %v703, 32
  %v709 = vpop.permute.xlu0 %708
  %v712 = vadd.f32 %v692, %v707
  %v713 = vadd.f32 %v693, %v709
  %v714 = vtanh.pop %v712
  %v715 = vtanh.pop %v713
  %718 = vrot.lane.b32.xlu0 %v714, 32
  %v719 = vpop.permute.xlu0 %718
  %720 = vrot.lane.b32.xlu0 %v715, 32
  %v721 = vpop.permute.xlu0 %720
  %v724 = vmul.f32 %v674, %v719
  %v725 = vmul.f32 %v689, %v721
  %v726 = vsel %vm615, 1, 0
  %v727 = vsel %vm616, 1, 0
  %728 = vset.pattern.permute.xlu0 0
  %729 = vperm.xlu0 %728, %v726
  %v730 = vpop.permute.xlu0 %729
  %731 = vset.pattern.permute.xlu0 0
  %732 = vperm.xlu0 %731, %v727
  %v733 = vpop.permute.xlu0 %732
  %vm734 = vcmp.eq.s32.totalorder %v730, 1
  %vm735 = vcmp.eq.s32.totalorder %v733, 1
  %v736 = vsel %vm734, %v724, 0.0
  %v737 = vsel %vm735, %v725, 0.0
  %v738 = vpack.c.bf16 %v736, %v736
  %v739 = vpack.c.bf16 %v737, %v737
  %742 = vrot.lane.b32.xlu0 %v738, 64
  %v743 = vpop.permute.xlu0 %742
  %744 = vrot.lane.b32.xlu0 %v739, 64
  %v745 = vpop.permute.xlu0 %744
  %vm748 = vcmask 257024
  %749 = vst.msk [vmem:[#allocation4] sm:$0xf] %vm748, %v743
  %750 = vst.msk [vmem:[#allocation4 + $0x4] sm:$0xf] %vm748, %v745
  %v751 = vsel %vm734, %v712, 0.0
  %v752 = vsel %vm735, %v713, 0.0
  %vm753 = vcmp.gt.s32.totalorder %v605, 7
  %vm754 = vcmp.gt.s32.totalorder %v606, 7
  %s755 = scalar_lea.vmem [#allocation3], 56
  %v756 = vld [vmem:[%s755] sm:$0xf]
  %v757 = vld [vmem:[%s755 + $0x4] sm:$0xf]
  %v758 = vunpack.c.l.bf16 %v756
  %v759 = vunpack.c.l.bf16 %v757
  %v764 = vunpack.c.l.b16 %v611
  %v765 = vunpack.c.l.b16 %v612
  %v766 = vunpack.c.l.b16 %v613
  %v767 = vunpack.c.l.b16 %v614
  %v768 = vpack.c.b16 %v765, %v764
  %v769 = vpack.c.b16 %v767, %v766
  %772 = vmatpush.bf16.msra.mxu0 0
  %773 = vmatpush.bf16.msra.mxu0 0
  %774 = vmatpush.bf16.msra.mxu0 0
  %775 = vmatpush.bf16.msra.mxu0 0
  %776 = vmatpush.bf16.msra.mxu0 0
  %777 = vmatpush.bf16.msra.mxu0 0
  %778 = vmatpush.bf16.msra.mxu0 %v769
  %779 = vmatpush.bf16.msra.mxu0 %v768
  %780 = vmatmul.bf16.gmra.mxu0 %v634
  %v781 = vpop.f32.mrf.mxu0
  %v782 = vadd.f32 0.0, %v781
  %v783 = vpop.f32.mrf.mxu0
  %v784 = vadd.f32 0.0, %v783
  %785 = vdwg.mxu0
  %v786 = vadd.f32 %v758, %v782
  %v787 = vadd.f32 %v759, %v784
  %v788 = vxor.u32 %v786, 2147483648
  %v789 = vxor.u32 %v787, 2147483648
  %v790 = vmul.f32 %v788, 1.442695
  %v791 = vpow.pop %v790
  %v792 = vmul.f32 %v789, 1.442695
  %v793 = vpow.pop %v792
  %v794 = vadd.f32 %v791, 1.0
  %v795 = vadd.f32 %v793, 1.0
  %v796 = vrcp.pop %v794
  %v797 = vmul.f32 %v794, %v796
  %v798 = vsub.f32 1.0, %v797
  %v799 = vmul.f32 %v796, %v798
  %v800 = vadd.f32 %v796, %v799
  %vm801 = vweird.f32 %v794
  %vm802 = vweird.f32 %v796
  %vm803 = vmor %vm801, %vm802
  %v804 = vsel %vm803, %v796, %v800
  %v805 = vand.u32 2147483647, %v794
  %vm806 = vcmp.eq.f32.partialorder %v805, 8.507059e+37
  %v807 = vand.u32 %v794, 2147483648
  %v808 = vor.u32 1.1754944e-38, %v807
  %v809 = vsel %vm806, %v808, %v804
  %v810 = vmul.f32 1.0, %v809
  %v811 = vrcp.pop %v795
  %v812 = vmul.f32 %v795, %v811
  %v813 = vsub.f32 1.0, %v812
  %v814 = vmul.f32 %v811, %v813
  %v815 = vadd.f32 %v811, %v814
  %vm816 = vweird.f32 %v795
  %vm817 = vweird.f32 %v811
  %vm818 = vmor %vm816, %vm817
  %v819 = vsel %vm818, %v811, %v815
  %v820 = vand.u32 2147483647, %v795
  %vm821 = vcmp.eq.f32.partialorder %v820, 8.507059e+37
  %v822 = vand.u32 %v795, 2147483648
  %v823 = vor.u32 1.1754944e-38, %v822
  %v824 = vsel %vm821, %v823, %v819
  %v825 = vmul.f32 1.0, %v824
  %v826 = vtanh.pop %v786
  %v827 = vtanh.pop %v787
  %v828 = vmul.f32 %v810, 0.0
  %v829 = vmul.f32 %v825, 0.0
  %832 = vrot.lane.b32.xlu0 %v826, 32
  %v833 = vpop.permute.xlu0 %832
  %834 = vrot.lane.b32.xlu0 %v827, 32
  %v835 = vpop.permute.xlu0 %834
  %v838 = vmul.f32 %v810, %v833
  %v839 = vmul.f32 %v825, %v835
  %842 = vrot.lane.b32.xlu0 %v838, 32
  %v843 = vpop.permute.xlu0 %842
  %844 = vrot.lane.b32.xlu0 %v839, 32
  %v845 = vpop.permute.xlu0 %844
  %v848 = vadd.f32 %v828, %v843
  %v849 = vadd.f32 %v829, %v845
  %v850 = vtanh.pop %v848
  %v851 = vtanh.pop %v849
  %854 = vrot.lane.b32.xlu0 %v850, 32
  %v855 = vpop.permute.xlu0 %854
  %856 = vrot.lane.b32.xlu0 %v851, 32
  %v857 = vpop.permute.xlu0 %856
  %v860 = vmul.f32 %v810, %v855
  %v861 = vmul.f32 %v825, %v857
  %v862 = vsel %vm753, 1, 0
  %v863 = vsel %vm754, 1, 0
  %864 = vset.pattern.permute.xlu0 0
  %865 = vperm.xlu0 %864, %v862
  %v866 = vpop.permute.xlu0 %865
  %867 = vset.pattern.permute.xlu0 0
  %868 = vperm.xlu0 %867, %v863
  %v869 = vpop.permute.xlu0 %868
  %vm870 = vcmp.eq.s32.totalorder %v866, 1
  %vm871 = vcmp.eq.s32.totalorder %v869, 1
  %v872 = vsel %vm870, %v860, 0.0
  %v873 = vsel %vm871, %v861, 0.0
  %v874 = vpack.c.bf16 %v872, %v872
  %v875 = vpack.c.bf16 %v873, %v873
  %878 = vrot.lane.b32.xlu0 %v874, 64
  %v879 = vpop.permute.xlu0 %878
  %880 = vrot.lane.b32.xlu0 %v875, 64
  %v881 = vpop.permute.xlu0 %880
  %s884 = scalar_lea.vmem [#allocation5], 56
  %885 = vst.msk [vmem:[%s884] sm:$0xf] %vm748, %v879
  %886 = vst.msk [vmem:[%s884 + $0x4] sm:$0xf] %vm748, %v881
  %v887 = vsel %vm870, %v848, 0.0
  %v888 = vsel %vm871, %v849, 0.0
  %vm889 = vcmp.gt.s32.totalorder %v605, 1
  %vm890 = vcmp.gt.s32.totalorder %v606, 1
  %s891 = scalar_lea.vmem [#allocation2], 8
  %v892 = vld [vmem:[%s891] sm:$0xf]
  %v893 = vld [vmem:[%s891 + $0x4] sm:$0xf]
  %v894 = vunpack.c.l.bf16 %v892
  %v895 = vunpack.c.l.bf16 %v893
  %v896 = vunpack.c.l.b16 %v738
  %v897 = vunpack.c.l.b16 %v739
  %v898 = vpack.c.b16 %v897, %v896
  %899 = vrot.lane.b32.xlu0 %v898, 64
  %v900 = vpop.permute.xlu0 %899
  %v902 = vsel %vm122, %v900, 0
  %904 = vmatpush.bf16.msra.mxu0 0
  %905 = vmatpush.bf16.msra.mxu0 0
  %906 = vmatpush.bf16.msra.mxu0 0
  %907 = vmatpush.bf16.msra.mxu0 0
  %908 = vmatpush.bf16.msra.mxu0 0
  %909 = vmatpush.bf16.msra.mxu0 0
  %910 = vmatpush.bf16.msra.mxu0 %v630
  %911 = vmatpush.bf16.msra.mxu0 %v629
  %912 = vmatmul.bf16.gmra.mxu0 %v902
  %v913 = vpop.f32.mrf.mxu0
  %v914 = vadd.f32 0.0, %v913
  %v915 = vpop.f32.mrf.mxu0
  %v916 = vadd.f32 0.0, %v915
  %917 = vdwg.mxu0
  %v918 = vadd.f32 %v894, %v914
  %v919 = vadd.f32 %v895, %v916
  %v920 = vxor.u32 %v918, 2147483648
  %v921 = vxor.u32 %v919, 2147483648
  %v922 = vmul.f32 %v920, 1.442695
  %v923 = vpow.pop %v922
  %v924 = vmul.f32 %v921, 1.442695
  %v925 = vpow.pop %v924
  %v926 = vadd.f32 %v923, 1.0
  %v927 = vadd.f32 %v925, 1.0
  %v928 = vrcp.pop %v926
  %v929 = vmul.f32 %v926, %v928
  %v930 = vsub.f32 1.0, %v929
  %v931 = vmul.f32 %v928, %v930
  %v932 = vadd.f32 %v928, %v931
  %vm933 = vweird.f32 %v926
  %vm934 = vweird.f32 %v928
  %vm935 = vmor %vm933, %vm934
  %v936 = vsel %vm935, %v928, %v932
  %v937 = vand.u32 2147483647, %v926
  %vm938 = vcmp.eq.f32.partialorder %v937, 8.507059e+37
  %v939 = vand.u32 %v926, 2147483648
  %v940 = vor.u32 1.1754944e-38, %v939
  %v941 = vsel %vm938, %v940, %v936
  %v942 = vmul.f32 1.0, %v941
  %v943 = vrcp.pop %v927
  %v944 = vmul.f32 %v927, %v943
  %v945 = vsub.f32 1.0, %v944
  %v946 = vmul.f32 %v943, %v945
  %v947 = vadd.f32 %v943, %v946
  %vm948 = vweird.f32 %v927
  %vm949 = vweird.f32 %v943
  %vm950 = vmor %vm948, %vm949
  %v951 = vsel %vm950, %v943, %v947
  %v952 = vand.u32 2147483647, %v927
  %vm953 = vcmp.eq.f32.partialorder %v952, 8.507059e+37
  %v954 = vand.u32 %v927, 2147483648
  %v955 = vor.u32 1.1754944e-38, %v954
  %v956 = vsel %vm953, %v955, %v951
  %v957 = vmul.f32 1.0, %v956
  %v958 = vtanh.pop %v918
  %v959 = vtanh.pop %v919
  %v960 = vmul.f32 %v942, %v751
  %v961 = vmul.f32 %v957, %v752
  %964 = vrot.lane.b32.xlu0 %v958, 32
  %v965 = vpop.permute.xlu0 %964
  %966 = vrot.lane.b32.xlu0 %v959, 32
  %v967 = vpop.permute.xlu0 %966
  %v970 = vmul.f32 %v942, %v965
  %v971 = vmul.f32 %v957, %v967
  %974 = vrot.lane.b32.xlu0 %v970, 32
  %v975 = vpop.permute.xlu0 %974
  %976 = vrot.lane.b32.xlu0 %v971, 32
  %v977 = vpop.permute.xlu0 %976
  %v980 = vadd.f32 %v960, %v975
  %v981 = vadd.f32 %v961, %v977
  %v982 = vtanh.pop %v980
  %v983 = vtanh.pop %v981
  %986 = vrot.lane.b32.xlu0 %v982, 32
  %v987 = vpop.permute.xlu0 %986
  %988 = vrot.lane.b32.xlu0 %v983, 32
  %v989 = vpop.permute.xlu0 %988
  %v992 = vmul.f32 %v942, %v987
  %v993 = vmul.f32 %v957, %v989
  %v994 = vsel %vm889, 1, 0
  %v995 = vsel %vm890, 1, 0
  %996 = vset.pattern.permute.xlu0 0
  %997 = vperm.xlu0 %996, %v994
  %v998 = vpop.permute.xlu0 %997
  %999 = vset.pattern.permute.xlu0 0
  %1000 = vperm.xlu0 %999, %v995
  %v1001 = vpop.permute.xlu0 %1000
  %vm1002 = vcmp.eq.s32.totalorder %v998, 1
  %vm1003 = vcmp.eq.s32.totalorder %v1001, 1
  %v1004 = vsel %vm1002, %v992, 0.0
  %v1005 = vsel %vm1003, %v993, 0.0
  %v1006 = vpack.c.bf16 %v1004, %v1004
  %v1007 = vpack.c.bf16 %v1005, %v1005
  %1010 = vrot.lane.b32.xlu0 %v1006, 64
  %v1011 = vpop.permute.xlu0 %1010
  %1012 = vrot.lane.b32.xlu0 %v1007, 64
  %v1013 = vpop.permute.xlu0 %1012
  %s1016 = scalar_lea.vmem [#allocation4], 8
  %1017 = vst.msk [vmem:[%s1016] sm:$0xf] %vm748, %v1011
  %1018 = vst.msk [vmem:[%s1016 + $0x4] sm:$0xf] %vm748, %v1013
  %v1019 = vsel %vm1002, %v992, %v736
  %v1020 = vsel %vm1003, %v993, %v737
  %v1021 = vsel %vm1002, %v980, %v751
  %v1022 = vsel %vm1003, %v981, %v752
  %vm1023 = vcmp.gt.s32.totalorder %v605, 6
  %vm1024 = vcmp.gt.s32.totalorder %v606, 6
  %s1025 = scalar_lea.vmem [#allocation3], 48
  %v1026 = vld [vmem:[%s1025] sm:$0xf]
  %v1027 = vld [vmem:[%s1025 + $0x4] sm:$0xf]
  %v1028 = vunpack.c.l.bf16 %v1026
  %v1029 = vunpack.c.l.bf16 %v1027
  %v1030 = vunpack.c.l.b16 %v874
  %v1031 = vunpack.c.l.b16 %v875
  %v1032 = vpack.c.b16 %v1031, %v1030
  %1033 = vrot.lane.b32.xlu0 %v1032, 64
  %v1034 = vpop.permute.xlu0 %1033
  %v1036 = vsel %vm122, %v1034, 0
  %1038 = vmatpush.bf16.msra.mxu0 0
  %1039 = vmatpush.bf16.msra.mxu0 0
  %1040 = vmatpush.bf16.msra.mxu0 0
  %1041 = vmatpush.bf16.msra.mxu0 0
  %1042 = vmatpush.bf16.msra.mxu0 0
  %1043 = vmatpush.bf16.msra.mxu0 0
  %1044 = vmatpush.bf16.msra.mxu0 %v769
  %1045 = vmatpush.bf16.msra.mxu0 %v768
  %1046 = vmatmul.bf16.gmra.mxu0 %v1036
  %v1047 = vpop.f32.mrf.mxu0
  %v1048 = vadd.f32 0.0, %v1047
  %v1049 = vpop.f32.mrf.mxu0
  %v1050 = vadd.f32 0.0, %v1049
  %1051 = vdwg.mxu0
  %v1052 = vadd.f32 %v1028, %v1048
  %v1053 = vadd.f32 %v1029, %v1050
  %v1054 = vxor.u32 %v1052, 2147483648
  %v1055 = vxor.u32 %v1053, 2147483648
  %v1056 = vmul.f32 %v1054, 1.442695
  %v1057 = vpow.pop %v1056
  %v1058 = vmul.f32 %v1055, 1.442695
  %v1059 = vpow.pop %v1058
  %v1060 = vadd.f32 %v1057, 1.0
  %v1061 = vadd.f32 %v1059, 1.0
  %v1062 = vrcp.pop %v1060
  %v1063 = vmul.f32 %v1060, %v1062
  %v1064 = vsub.f32 1.0, %v1063
  %v1065 = vmul.f32 %v1062, %v1064
  %v1066 = vadd.f32 %v1062, %v1065
  %vm1067 = vweird.f32 %v1060
  %vm1068 = vweird.f32 %v1062
  %vm1069 = vmor %vm1067, %vm1068
  %v1070 = vsel %vm1069, %v1062, %v1066
  %v1071 = vand.u32 2147483647, %v1060
  %vm1072 = vcmp.eq.f32.partialorder %v1071, 8.507059e+37
  %v1073 = vand.u32 %v1060, 2147483648
  %v1074 = vor.u32 1.1754944e-38, %v1073
  %v1075 = vsel %vm1072, %v1074, %v1070
  %v1076 = vmul.f32 1.0, %v1075
  %v1077 = vrcp.pop %v1061
  %v1078 = vmul.f32 %v1061, %v1077
  %v1079 = vsub.f32 1.0, %v1078
  %v1080 = vmul.f32 %v1077, %v1079
  %v1081 = vadd.f32 %v1077, %v1080
  %vm1082 = vweird.f32 %v1061
  %vm1083 = vweird.f32 %v1077
  %vm1084 = vmor %vm1082, %vm1083
  %v1085 = vsel %vm1084, %v1077, %v1081
  %v1086 = vand.u32 2147483647, %v1061
  %vm1087 = vcmp.eq.f32.partialorder %v1086, 8.507059e+37
  %v1088 = vand.u32 %v1061, 2147483648
  %v1089 = vor.u32 1.1754944e-38, %v1088
  %v1090 = vsel %vm1087, %v1089, %v1085
  %v1091 = vmul.f32 1.0, %v1090
  %v1092 = vtanh.pop %v1052
  %v1093 = vtanh.pop %v1053
  %v1094 = vmul.f32 %v1076, %v887
  %v1095 = vmul.f32 %v1091, %v888
  %1098 = vrot.lane.b32.xlu0 %v1092, 32
  %v1099 = vpop.permute.xlu0 %1098
  %1100 = vrot.lane.b32.xlu0 %v1093, 32
  %v1101 = vpop.permute.xlu0 %1100
  %v1104 = vmul.f32 %v1076, %v1099
  %v1105 = vmul.f32 %v1091, %v1101
  %1108 = vrot.lane.b32.xlu0 %v1104, 32
  %v1109 = vpop.permute.xlu0 %1108
  %1110 = vrot.lane.b32.xlu0 %v1105, 32
  %v1111 = vpop.permute.xlu0 %1110
  %v1114 = vadd.f32 %v1094, %v1109
  %v1115 = vadd.f32 %v1095, %v1111
  %v1116 = vtanh.pop %v1114
  %v1117 = vtanh.pop %v1115
  %1120 = vrot.lane.b32.xlu0 %v1116, 32
  %v1121 = vpop.permute.xlu0 %1120
  %1122 = vrot.lane.b32.xlu0 %v1117, 32
  %v1123 = vpop.permute.xlu0 %1122
  %v1126 = vmul.f32 %v1076, %v1121
  %v1127 = vmul.f32 %v1091, %v1123
  %v1128 = vsel %vm1023, 1, 0
  %v1129 = vsel %vm1024, 1, 0
  %1130 = vset.pattern.permute.xlu0 0
  %1131 = vperm.xlu0 %1130, %v1128
  %v1132 = vpop.permute.xlu0 %1131
  %1133 = vset.pattern.permute.xlu0 0
  %1134 = vperm.xlu0 %1133, %v1129
  %v1135 = vpop.permute.xlu0 %1134
  %vm1136 = vcmp.eq.s32.totalorder %v1132, 1
  %vm1137 = vcmp.eq.s32.totalorder %v1135, 1
  %v1138 = vsel %vm1136, %v1126, 0.0
  %v1139 = vsel %vm1137, %v1127, 0.0
  %v1140 = vpack.c.bf16 %v1138, %v1138
  %v1141 = vpack.c.bf16 %v1139, %v1139
  %1144 = vrot.lane.b32.xlu0 %v1140, 64
  %v1145 = vpop.permute.xlu0 %1144
  %1146 = vrot.lane.b32.xlu0 %v1141, 64
  %v1147 = vpop.permute.xlu0 %1146
  %s1150 = scalar_lea.vmem [#allocation5], 48
  %1151 = vst.msk [vmem:[%s1150] sm:$0xf] %vm748, %v1145
  %1152 = vst.msk [vmem:[%s1150 + $0x4] sm:$0xf] %vm748, %v1147
  %v1153 = vsel %vm1136, %v1126, %v872
  %v1154 = vsel %vm1137, %v1127, %v873
  %v1155 = vsel %vm1136, %v1114, %v887
  %v1156 = vsel %vm1137, %v1115, %v888
  %vm1157 = vcmp.gt.s32.totalorder %v605, 2
  %vm1158 = vcmp.gt.s32.totalorder %v606, 2
  %s1159 = scalar_lea.vmem [#allocation2], 16
  %v1160 = vld [vmem:[%s1159] sm:$0xf]
  %v1161 = vld [vmem:[%s1159 + $0x4] sm:$0xf]
  %v1162 = vunpack.c.l.bf16 %v1160
  %v1163 = vunpack.c.l.bf16 %v1161
  %v1164 = vpack.c.bf16 %v1020, %v1019
  %1166 = vrot.lane.b32.xlu0 %v1164, 64
  %v1167 = vpop.permute.xlu0 %1166
  %v1169 = vsel %vm122, %v1167, 0
  %1171 = vmatpush.bf16.msra.mxu0 0
  %1172 = vmatpush.bf16.msra.mxu0 0
  %1173 = vmatpush.bf16.msra.mxu0 0
  %1174 = vmatpush.bf16.msra.mxu0 0
  %1175 = vmatpush.bf16.msra.mxu0 0
  %1176 = vmatpush.bf16.msra.mxu0 0
  %1177 = vmatpush.bf16.msra.mxu0 %v630
  %1178 = vmatpush.bf16.msra.mxu0 %v629
  %1179 = vmatmul.bf16.gmra.mxu0 %v1169
  %v1180 = vpop.f32.mrf.mxu0
  %v1181 = vadd.f32 0.0, %v1180
  %v1182 = vpop.f32.mrf.mxu0
  %v1183 = vadd.f32 0.0, %v1182
  %1184 = vdwg.mxu0
  %v1185 = vadd.f32 %v1162, %v1181
  %v1186 = vadd.f32 %v1163, %v1183
  %v1187 = vxor.u32 %v1185, 2147483648
  %v1188 = vxor.u32 %v1186, 2147483648
  %v1189 = vmul.f32 %v1187, 1.442695
  %v1190 = vpow.pop %v1189
  %v1191 = vmul.f32 %v1188, 1.442695
  %v1192 = vpow.pop %v1191
  %v1193 = vadd.f32 %v1190, 1.0
  %v1194 = vadd.f32 %v1192, 1.0
  %v1195 = vrcp.pop %v1193
  %v1196 = vmul.f32 %v1193, %v1195
  %v1197 = vsub.f32 1.0, %v1196
  %v1198 = vmul.f32 %v1195, %v1197
  %v1199 = vadd.f32 %v1195, %v1198
  %vm1200 = vweird.f32 %v1193
  %vm1201 = vweird.f32 %v1195
  %vm1202 = vmor %vm1200, %vm1201
  %v1203 = vsel %vm1202, %v1195, %v1199
  %v1204 = vand.u32 2147483647, %v1193
  %vm1205 = vcmp.eq.f32.partialorder %v1204, 8.507059e+37
  %v1206 = vand.u32 %v1193, 2147483648
  %v1207 = vor.u32 1.1754944e-38, %v1206
  %v1208 = vsel %vm1205, %v1207, %v1203
  %v1209 = vmul.f32 1.0, %v1208
  %v1210 = vrcp.pop %v1194
  %v1211 = vmul.f32 %v1194, %v1210
  %v1212 = vsub.f32 1.0, %v1211
  %v1213 = vmul.f32 %v1210, %v1212
  %v1214 = vadd.f32 %v1210, %v1213
  %vm1215 = vweird.f32 %v1194
  %vm1216 = vweird.f32 %v1210
  %vm1217 = vmor %vm1215, %vm1216
  %v1218 = vsel %vm1217, %v1210, %v1214
  %v1219 = vand.u32 2147483647, %v1194
  %vm1220 = vcmp.eq.f32.partialorder %v1219, 8.507059e+37
  %v1221 = vand.u32 %v1194, 2147483648
  %v1222 = vor.u32 1.1754944e-38, %v1221
  %v1223 = vsel %vm1220, %v1222, %v1218
  %v1224 = vmul.f32 1.0, %v1223
  %v1225 = vtanh.pop %v1185
  %v1226 = vtanh.pop %v1186
  %v1227 = vmul.f32 %v1209, %v1021
  %v1228 = vmul.f32 %v1224, %v1022
  %1231 = vrot.lane.b32.xlu0 %v1225, 32
  %v1232 = vpop.permute.xlu0 %1231
  %1233 = vrot.lane.b32.xlu0 %v1226, 32
  %v1234 = vpop.permute.xlu0 %1233
  %v1237 = vmul.f32 %v1209, %v1232
  %v1238 = vmul.f32 %v1224, %v1234
  %1241 = vrot.lane.b32.xlu0 %v1237, 32
  %v1242 = vpop.permute.xlu0 %1241
  %1243 = vrot.lane.b32.xlu0 %v1238, 32
  %v1244 = vpop.permute.xlu0 %1243
  %v1247 = vadd.f32 %v1227, %v1242
  %v1248 = vadd.f32 %v1228, %v1244
  %v1249 = vtanh.pop %v1247
  %v1250 = vtanh.pop %v1248
  %1253 = vrot.lane.b32.xlu0 %v1249, 32
  %v1254 = vpop.permute.xlu0 %1253
  %1255 = vrot.lane.b32.xlu0 %v1250, 32
  %v1256 = vpop.permute.xlu0 %1255
  %v1259 = vmul.f32 %v1209, %v1254
  %v1260 = vmul.f32 %v1224, %v1256
  %v1261 = vsel %vm1157, 1, 0
  %v1262 = vsel %vm1158, 1, 0
  %1263 = vset.pattern.permute.xlu0 0
  %1264 = vperm.xlu0 %1263, %v1261
  %v1265 = vpop.permute.xlu0 %1264
  %1266 = vset.pattern.permute.xlu0 0
  %1267 = vperm.xlu0 %1266, %v1262
  %v1268 = vpop.permute.xlu0 %1267
  %vm1269 = vcmp.eq.s32.totalorder %v1265, 1
  %vm1270 = vcmp.eq.s32.totalorder %v1268, 1
  %v1271 = vsel %vm1269, %v1259, 0.0
  %v1272 = vsel %vm1270, %v1260, 0.0
  %v1273 = vpack.c.bf16 %v1271, %v1271
  %v1274 = vpack.c.bf16 %v1272, %v1272
  %1277 = vrot.lane.b32.xlu0 %v1273, 64
  %v1278 = vpop.permute.xlu0 %1277
  %1279 = vrot.lane.b32.xlu0 %v1274, 64
  %v1280 = vpop.permute.xlu0 %1279
  %s1283 = scalar_lea.vmem [#allocation4], 16
  %1284 = vst.msk [vmem:[%s1283] sm:$0xf] %vm748, %v1278
  %1285 = vst.msk [vmem:[%s1283 + $0x4] sm:$0xf] %vm748, %v1280
  %v1286 = vsel %vm1269, %v1259, %v1019
  %v1287 = vsel %vm1270, %v1260, %v1020
  %v1288 = vsel %vm1269, %v1247, %v1021
  %v1289 = vsel %vm1270, %v1248, %v1022
  %vm1290 = vcmp.gt.s32.totalorder %v605, 5
  %vm1291 = vcmp.gt.s32.totalorder %v606, 5
  %s1292 = scalar_lea.vmem [#allocation3], 40
  %v1293 = vld [vmem:[%s1292] sm:$0xf]
  %v1294 = vld [vmem:[%s1292 + $0x4] sm:$0xf]
  %v1295 = vunpack.c.l.bf16 %v1293
  %v1296 = vunpack.c.l.bf16 %v1294
  %v1297 = vpack.c.bf16 %v1154, %v1153
  %1299 = vrot.lane.b32.xlu0 %v1297, 64
  %v1300 = vpop.permute.xlu0 %1299
  %v1302 = vsel %vm122, %v1300, 0
  %1304 = vmatpush.bf16.msra.mxu0 0
  %1305 = vmatpush.bf16.msra.mxu0 0
  %1306 = vmatpush.bf16.msra.mxu0 0
  %1307 = vmatpush.bf16.msra.mxu0 0
  %1308 = vmatpush.bf16.msra.mxu0 0
  %1309 = vmatpush.bf16.msra.mxu0 0
  %1310 = vmatpush.bf16.msra.mxu0 %v769
  %1311 = vmatpush.bf16.msra.mxu0 %v768
  %1312 = vmatmul.bf16.gmra.mxu0 %v1302
  %v1313 = vpop.f32.mrf.mxu0
  %v1314 = vadd.f32 0.0, %v1313
  %v1315 = vpop.f32.mrf.mxu0
  %v1316 = vadd.f32 0.0, %v1315
  %1317 = vdwg.mxu0
  %v1318 = vadd.f32 %v1295, %v1314
  %v1319 = vadd.f32 %v1296, %v1316
  %v1320 = vxor.u32 %v1318, 2147483648
  %v1321 = vxor.u32 %v1319, 2147483648
  %v1322 = vmul.f32 %v1320, 1.442695
  %v1323 = vpow.pop %v1322
  %v1324 = vmul.f32 %v1321, 1.442695
  %v1325 = vpow.pop %v1324
  %v1326 = vadd.f32 %v1323, 1.0
  %v1327 = vadd.f32 %v1325, 1.0
  %v1328 = vrcp.pop %v1326
  %v1329 = vmul.f32 %v1326, %v1328
  %v1330 = vsub.f32 1.0, %v1329
  %v1331 = vmul.f32 %v1328, %v1330
  %v1332 = vadd.f32 %v1328, %v1331
  %vm1333 = vweird.f32 %v1326
  %vm1334 = vweird.f32 %v1328
  %vm1335 = vmor %vm1333, %vm1334
  %v1336 = vsel %vm1335, %v1328, %v1332
  %v1337 = vand.u32 2147483647, %v1326
  %vm1338 = vcmp.eq.f32.partialorder %v1337, 8.507059e+37
  %v1339 = vand.u32 %v1326, 2147483648
  %v1340 = vor.u32 1.1754944e-38, %v1339
  %v1341 = vsel %vm1338, %v1340, %v1336
  %v1342 = vmul.f32 1.0, %v1341
  %v1343 = vrcp.pop %v1327
  %v1344 = vmul.f32 %v1327, %v1343
  %v1345 = vsub.f32 1.0, %v1344
  %v1346 = vmul.f32 %v1343, %v1345
  %v1347 = vadd.f32 %v1343, %v1346
  %vm1348 = vweird.f32 %v1327
  %vm1349 = vweird.f32 %v1343
  %vm1350 = vmor %vm1348, %vm1349
  %v1351 = vsel %vm1350, %v1343, %v1347
  %v1352 = vand.u32 2147483647, %v1327
  %vm1353 = vcmp.eq.f32.partialorder %v1352, 8.507059e+37
  %v1354 = vand.u32 %v1327, 2147483648
  %v1355 = vor.u32 1.1754944e-38, %v1354
  %v1356 = vsel %vm1353, %v1355, %v1351
  %v1357 = vmul.f32 1.0, %v1356
  %v1358 = vtanh.pop %v1318
  %v1359 = vtanh.pop %v1319
  %v1360 = vmul.f32 %v1342, %v1155
  %v1361 = vmul.f32 %v1357, %v1156
  %1364 = vrot.lane.b32.xlu0 %v1358, 32
  %v1365 = vpop.permute.xlu0 %1364
  %1366 = vrot.lane.b32.xlu0 %v1359, 32
  %v1367 = vpop.permute.xlu0 %1366
  %v1370 = vmul.f32 %v1342, %v1365
  %v1371 = vmul.f32 %v1357, %v1367
  %1374 = vrot.lane.b32.xlu0 %v1370, 32
  %v1375 = vpop.permute.xlu0 %1374
  %1376 = vrot.lane.b32.xlu0 %v1371, 32
  %v1377 = vpop.permute.xlu0 %1376
  %v1380 = vadd.f32 %v1360, %v1375
  %v1381 = vadd.f32 %v1361, %v1377
  %v1382 = vtanh.pop %v1380
  %v1383 = vtanh.pop %v1381
  %1386 = vrot.lane.b32.xlu0 %v1382, 32
  %v1387 = vpop.permute.xlu0 %1386
  %1388 = vrot.lane.b32.xlu0 %v1383, 32
  %v1389 = vpop.permute.xlu0 %1388
  %v1392 = vmul.f32 %v1342, %v1387
  %v1393 = vmul.f32 %v1357, %v1389
  %v1394 = vsel %vm1290, 1, 0
  %v1395 = vsel %vm1291, 1, 0
  %1396 = vset.pattern.permute.xlu0 0
  %1397 = vperm.xlu0 %1396, %v1394
  %v1398 = vpop.permute.xlu0 %1397
  %1399 = vset.pattern.permute.xlu0 0
  %1400 = vperm.xlu0 %1399, %v1395
  %v1401 = vpop.permute.xlu0 %1400
  %vm1402 = vcmp.eq.s32.totalorder %v1398, 1
  %vm1403 = vcmp.eq.s32.totalorder %v1401, 1
  %v1404 = vsel %vm1402, %v1392, 0.0
  %v1405 = vsel %vm1403, %v1393, 0.0
  %v1406 = vpack.c.bf16 %v1404, %v1404
  %v1407 = vpack.c.bf16 %v1405, %v1405
  %1410 = vrot.lane.b32.xlu0 %v1406, 64
  %v1411 = vpop.permute.xlu0 %1410
  %1412 = vrot.lane.b32.xlu0 %v1407, 64
  %v1413 = vpop.permute.xlu0 %1412
  %s1416 = scalar_lea.vmem [#allocation5], 40
  %1417 = vst.msk [vmem:[%s1416] sm:$0xf] %vm748, %v1411
  %1418 = vst.msk [vmem:[%s1416 + $0x4] sm:$0xf] %vm748, %v1413
  %v1419 = vsel %vm1402, %v1392, %v1153
  %v1420 = vsel %vm1403, %v1393, %v1154
  %v1421 = vsel %vm1402, %v1380, %v1155
  %v1422 = vsel %vm1403, %v1381, %v1156
  %vm1423 = vcmp.gt.s32.totalorder %v605, 3
  %vm1424 = vcmp.gt.s32.totalorder %v606, 3
  %s1425 = scalar_lea.vmem [#allocation2], 24
  %v1426 = vld [vmem:[%s1425] sm:$0xf]
  %v1427 = vld [vmem:[%s1425 + $0x4] sm:$0xf]
  %v1428 = vunpack.c.l.bf16 %v1426
  %v1429 = vunpack.c.l.bf16 %v1427
  %v1430 = vpack.c.bf16 %v1287, %v1286
  %1432 = vrot.lane.b32.xlu0 %v1430, 64
  %v1433 = vpop.permute.xlu0 %1432
  %v1435 = vsel %vm122, %v1433, 0
  %1437 = vmatpush.bf16.msra.mxu0 0
  %1438 = vmatpush.bf16.msra.mxu0 0
  %1439 = vmatpush.bf16.msra.mxu0 0
  %1440 = vmatpush.bf16.msra.mxu0 0
  %1441 = vmatpush.bf16.msra.mxu0 0
  %1442 = vmatpush.bf16.msra.mxu0 0
  %1443 = vmatpush.bf16.msra.mxu0 %v630
  %1444 = vmatpush.bf16.msra.mxu0 %v629
  %1445 = vmatmul.bf16.gmra.mxu0 %v1435
  %v1446 = vpop.f32.mrf.mxu0
  %v1447 = vadd.f32 0.0, %v1446
  %v1448 = vpop.f32.mrf.mxu0
  %v1449 = vadd.f32 0.0, %v1448
  %1450 = vdwg.mxu0
  %v1451 = vadd.f32 %v1428, %v1447
  %v1452 = vadd.f32 %v1429, %v1449
  %v1453 = vxor.u32 %v1451, 2147483648
  %v1454 = vxor.u32 %v1452, 2147483648
  %v1455 = vmul.f32 %v1453, 1.442695
  %v1456 = vpow.pop %v1455
  %v1457 = vmul.f32 %v1454, 1.442695
  %v1458 = vpow.pop %v1457
  %v1459 = vadd.f32 %v1456, 1.0
  %v1460 = vadd.f32 %v1458, 1.0
  %v1461 = vrcp.pop %v1459
  %v1462 = vmul.f32 %v1459, %v1461
  %v1463 = vsub.f32 1.0, %v1462
  %v1464 = vmul.f32 %v1461, %v1463
  %v1465 = vadd.f32 %v1461, %v1464
  %vm1466 = vweird.f32 %v1459
  %vm1467 = vweird.f32 %v1461
  %vm1468 = vmor %vm1466, %vm1467
  %v1469 = vsel %vm1468, %v1461, %v1465
  %v1470 = vand.u32 2147483647, %v1459
  %vm1471 = vcmp.eq.f32.partialorder %v1470, 8.507059e+37
  %v1472 = vand.u32 %v1459, 2147483648
  %v1473 = vor.u32 1.1754944e-38, %v1472
  %v1474 = vsel %vm1471, %v1473, %v1469
  %v1475 = vmul.f32 1.0, %v1474
  %v1476 = vrcp.pop %v1460
  %v1477 = vmul.f32 %v1460, %v1476
  %v1478 = vsub.f32 1.0, %v1477
  %v1479 = vmul.f32 %v1476, %v1478
  %v1480 = vadd.f32 %v1476, %v1479
  %vm1481 = vweird.f32 %v1460
  %vm1482 = vweird.f32 %v1476
  %vm1483 = vmor %vm1481, %vm1482
  %v1484 = vsel %vm1483, %v1476, %v1480
  %v1485 = vand.u32 2147483647, %v1460
  %vm1486 = vcmp.eq.f32.partialorder %v1485, 8.507059e+37
  %v1487 = vand.u32 %v1460, 2147483648
  %v1488 = vor.u32 1.1754944e-38, %v1487
  %v1489 = vsel %vm1486, %v1488, %v1484
  %v1490 = vmul.f32 1.0, %v1489
  %v1491 = vtanh.pop %v1451
  %v1492 = vtanh.pop %v1452
  %v1493 = vmul.f32 %v1475, %v1288
  %v1494 = vmul.f32 %v1490, %v1289
  %1497 = vrot.lane.b32.xlu0 %v1491, 32
  %v1498 = vpop.permute.xlu0 %1497
  %1499 = vrot.lane.b32.xlu0 %v1492, 32
  %v1500 = vpop.permute.xlu0 %1499
  %v1503 = vmul.f32 %v1475, %v1498
  %v1504 = vmul.f32 %v1490, %v1500
  %1507 = vrot.lane.b32.xlu0 %v1503, 32
  %v1508 = vpop.permute.xlu0 %1507
  %1509 = vrot.lane.b32.xlu0 %v1504, 32
  %v1510 = vpop.permute.xlu0 %1509
  %v1513 = vadd.f32 %v1493, %v1508
  %v1514 = vadd.f32 %v1494, %v1510
  %v1515 = vtanh.pop %v1513
  %v1516 = vtanh.pop %v1514
  %1519 = vrot.lane.b32.xlu0 %v1515, 32
  %v1520 = vpop.permute.xlu0 %1519
  %1521 = vrot.lane.b32.xlu0 %v1516, 32
  %v1522 = vpop.permute.xlu0 %1521
  %v1525 = vmul.f32 %v1475, %v1520
  %v1526 = vmul.f32 %v1490, %v1522
  %v1527 = vsel %vm1423, 1, 0
  %v1528 = vsel %vm1424, 1, 0
  %1529 = vset.pattern.permute.xlu0 0
  %1530 = vperm.xlu0 %1529, %v1527
  %v1531 = vpop.permute.xlu0 %1530
  %1532 = vset.pattern.permute.xlu0 0
  %1533 = vperm.xlu0 %1532, %v1528
  %v1534 = vpop.permute.xlu0 %1533
  %vm1535 = vcmp.eq.s32.totalorder %v1531, 1
  %vm1536 = vcmp.eq.s32.totalorder %v1534, 1
  %v1537 = vsel %vm1535, %v1525, 0.0
  %v1538 = vsel %vm1536, %v1526, 0.0
  %v1539 = vpack.c.bf16 %v1537, %v1537
  %v1540 = vpack.c.bf16 %v1538, %v1538
  %1543 = vrot.lane.b32.xlu0 %v1539, 64
  %v1544 = vpop.permute.xlu0 %1543
  %1545 = vrot.lane.b32.xlu0 %v1540, 64
  %v1546 = vpop.permute.xlu0 %1545
  %s1549 = scalar_lea.vmem [#allocation4], 24
  %1550 = vst.msk [vmem:[%s1549] sm:$0xf] %vm748, %v1544
  %1551 = vst.msk [vmem:[%s1549 + $0x4] sm:$0xf] %vm748, %v1546
  %v1552 = vsel %vm1535, %v1525, %v1286
  %v1553 = vsel %vm1536, %v1526, %v1287
  %v1554 = vsel %vm1535, %v1513, %v1288
  %v1555 = vsel %vm1536, %v1514, %v1289
  %vm1556 = vcmp.gt.s32.totalorder %v605, 4
  %vm1557 = vcmp.gt.s32.totalorder %v606, 4
  %s1558 = scalar_lea.vmem [#allocation3], 32
  %v1559 = vld [vmem:[%s1558] sm:$0xf]
  %v1560 = vld [vmem:[%s1558 + $0x4] sm:$0xf]
  %v1561 = vunpack.c.l.bf16 %v1559
  %v1562 = vunpack.c.l.bf16 %v1560
  %v1563 = vpack.c.bf16 %v1420, %v1419
  %1565 = vrot.lane.b32.xlu0 %v1563, 64
  %v1566 = vpop.permute.xlu0 %1565
  %v1568 = vsel %vm122, %v1566, 0
  %1570 = vmatpush.bf16.msra.mxu0 0
  %1571 = vmatpush.bf16.msra.mxu0 0
  %1572 = vmatpush.bf16.msra.mxu0 0
  %1573 = vmatpush.bf16.msra.mxu0 0
  %1574 = vmatpush.bf16.msra.mxu0 0
  %1575 = vmatpush.bf16.msra.mxu0 0
  %1576 = vmatpush.bf16.msra.mxu0 %v769
  %1577 = vmatpush.bf16.msra.mxu0 %v768
  %1578 = vmatmul.bf16.gmra.mxu0 %v1568
  %v1579 = vpop.f32.mrf.mxu0
  %v1580 = vadd.f32 0.0, %v1579
  %v1581 = vpop.f32.mrf.mxu0
  %v1582 = vadd.f32 0.0, %v1581
  %1583 = vdwg.mxu0
  %v1584 = vadd.f32 %v1561, %v1580
  %v1585 = vadd.f32 %v1562, %v1582
  %v1586 = vxor.u32 %v1584, 2147483648
  %v1587 = vxor.u32 %v1585, 2147483648
  %v1588 = vmul.f32 %v1586, 1.442695
  %v1589 = vpow.pop %v1588
  %v1590 = vmul.f32 %v1587, 1.442695
  %v1591 = vpow.pop %v1590
  %v1592 = vadd.f32 %v1589, 1.0
  %v1593 = vadd.f32 %v1591, 1.0
  %v1594 = vrcp.pop %v1592
  %v1595 = vmul.f32 %v1592, %v1594
  %v1596 = vsub.f32 1.0, %v1595
  %v1597 = vmul.f32 %v1594, %v1596
  %v1598 = vadd.f32 %v1594, %v1597
  %vm1599 = vweird.f32 %v1592
  %vm1600 = vweird.f32 %v1594
  %vm1601 = vmor %vm1599, %vm1600
  %v1602 = vsel %vm1601, %v1594, %v1598
  %v1603 = vand.u32 2147483647, %v1592
  %vm1604 = vcmp.eq.f32.partialorder %v1603, 8.507059e+37
  %v1605 = vand.u32 %v1592, 2147483648
  %v1606 = vor.u32 1.1754944e-38, %v1605
  %v1607 = vsel %vm1604, %v1606, %v1602
  %v1608 = vmul.f32 1.0, %v1607
  %v1609 = vrcp.pop %v1593
  %v1610 = vmul.f32 %v1593, %v1609
  %v1611 = vsub.f32 1.0, %v1610
  %v1612 = vmul.f32 %v1609, %v1611
  %v1613 = vadd.f32 %v1609, %v1612
  %vm1614 = vweird.f32 %v1593
  %vm1615 = vweird.f32 %v1609
  %vm1616 = vmor %vm1614, %vm1615
  %v1617 = vsel %vm1616, %v1609, %v1613
  %v1618 = vand.u32 2147483647, %v1593
  %vm1619 = vcmp.eq.f32.partialorder %v1618, 8.507059e+37
  %v1620 = vand.u32 %v1593, 2147483648
  %v1621 = vor.u32 1.1754944e-38, %v1620
  %v1622 = vsel %vm1619, %v1621, %v1617
  %v1623 = vmul.f32 1.0, %v1622
  %v1624 = vtanh.pop %v1584
  %v1625 = vtanh.pop %v1585
  %v1626 = vmul.f32 %v1608, %v1421
  %v1627 = vmul.f32 %v1623, %v1422
  %1630 = vrot.lane.b32.xlu0 %v1624, 32
  %v1631 = vpop.permute.xlu0 %1630
  %1632 = vrot.lane.b32.xlu0 %v1625, 32
  %v1633 = vpop.permute.xlu0 %1632
  %v1636 = vmul.f32 %v1608, %v1631
  %v1637 = vmul.f32 %v1623, %v1633
  %1640 = vrot.lane.b32.xlu0 %v1636, 32
  %v1641 = vpop.permute.xlu0 %1640
  %1642 = vrot.lane.b32.xlu0 %v1637, 32
  %v1643 = vpop.permute.xlu0 %1642
  %v1646 = vadd.f32 %v1626, %v1641
  %v1647 = vadd.f32 %v1627, %v1643
  %v1648 = vtanh.pop %v1646
  %v1649 = vtanh.pop %v1647
  %1652 = vrot.lane.b32.xlu0 %v1648, 32
  %v1653 = vpop.permute.xlu0 %1652
  %1654 = vrot.lane.b32.xlu0 %v1649, 32
  %v1655 = vpop.permute.xlu0 %1654
  %v1658 = vmul.f32 %v1608, %v1653
  %v1659 = vmul.f32 %v1623, %v1655
  %v1660 = vsel %vm1556, 1, 0
  %v1661 = vsel %vm1557, 1, 0
  %1662 = vset.pattern.permute.xlu0 0
  %1663 = vperm.xlu0 %1662, %v1660
  %v1664 = vpop.permute.xlu0 %1663
  %1665 = vset.pattern.permute.xlu0 0
  %1666 = vperm.xlu0 %1665, %v1661
  %v1667 = vpop.permute.xlu0 %1666
  %vm1668 = vcmp.eq.s32.totalorder %v1664, 1
  %vm1669 = vcmp.eq.s32.totalorder %v1667, 1
  %v1670 = vsel %vm1668, %v1658, 0.0
  %v1671 = vsel %vm1669, %v1659, 0.0
  %v1672 = vpack.c.bf16 %v1670, %v1670
  %v1673 = vpack.c.bf16 %v1671, %v1671
  %1676 = vrot.lane.b32.xlu0 %v1672, 64
  %v1677 = vpop.permute.xlu0 %1676
  %1678 = vrot.lane.b32.xlu0 %v1673, 64
  %v1679 = vpop.permute.xlu0 %1678
  %s1682 = scalar_lea.vmem [#allocation5], 32
  %1683 = vst.msk [vmem:[%s1682] sm:$0xf] %vm748, %v1677
  %1684 = vst.msk [vmem:[%s1682 + $0x4] sm:$0xf] %vm748, %v1679
  %v1685 = vsel %vm1668, %v1658, %v1419
  %v1686 = vsel %vm1669, %v1659, %v1420
  %v1687 = vsel %vm1668, %v1646, %v1421
  %v1688 = vsel %vm1669, %v1647, %v1422
  %s1689 = scalar_lea.vmem [#allocation2], 32
  %v1690 = vld [vmem:[%s1689] sm:$0xf]
  %v1691 = vld [vmem:[%s1689 + $0x4] sm:$0xf]
  %v1692 = vunpack.c.l.bf16 %v1690
  %v1693 = vunpack.c.l.bf16 %v1691
  %v1694 = vpack.c.bf16 %v1553, %v1552
  %1696 = vrot.lane.b32.xlu0 %v1694, 64
  %v1697 = vpop.permute.xlu0 %1696
  %v1699 = vsel %vm122, %v1697, 0
  %1701 = vmatpush.bf16.msra.mxu0 0
  %1702 = vmatpush.bf16.msra.mxu0 0
  %1703 = vmatpush.bf16.msra.mxu0 0
  %1704 = vmatpush.bf16.msra.mxu0 0
  %1705 = vmatpush.bf16.msra.mxu0 0
  %1706 = vmatpush.bf16.msra.mxu0 0
  %1707 = vmatpush.bf16.msra.mxu0 %v630
  %1708 = vmatpush.bf16.msra.mxu0 %v629
  %1709 = vmatmul.bf16.gmra.mxu0 %v1699
  %v1710 = vpop.f32.mrf.mxu0
  %v1711 = vadd.f32 0.0, %v1710
  %v1712 = vpop.f32.mrf.mxu0
  %v1713 = vadd.f32 0.0, %v1712
  %1714 = vdwg.mxu0
  %v1715 = vadd.f32 %v1692, %v1711
  %v1716 = vadd.f32 %v1693, %v1713
  %v1717 = vxor.u32 %v1715, 2147483648
  %v1718 = vxor.u32 %v1716, 2147483648
  %v1719 = vmul.f32 %v1717, 1.442695
  %v1720 = vpow.pop %v1719
  %v1721 = vmul.f32 %v1718, 1.442695
  %v1722 = vpow.pop %v1721
  %v1723 = vadd.f32 %v1720, 1.0
  %v1724 = vadd.f32 %v1722, 1.0
  %v1725 = vrcp.pop %v1723
  %v1726 = vmul.f32 %v1723, %v1725
  %v1727 = vsub.f32 1.0, %v1726
  %v1728 = vmul.f32 %v1725, %v1727
  %v1729 = vadd.f32 %v1725, %v1728
  %vm1730 = vweird.f32 %v1723
  %vm1731 = vweird.f32 %v1725
  %vm1732 = vmor %vm1730, %vm1731
  %v1733 = vsel %vm1732, %v1725, %v1729
  %v1734 = vand.u32 2147483647, %v1723
  %vm1735 = vcmp.eq.f32.partialorder %v1734, 8.507059e+37
  %v1736 = vand.u32 %v1723, 2147483648
  %v1737 = vor.u32 1.1754944e-38, %v1736
  %v1738 = vsel %vm1735, %v1737, %v1733
  %v1739 = vmul.f32 1.0, %v1738
  %v1740 = vrcp.pop %v1724
  %v1741 = vmul.f32 %v1724, %v1740
  %v1742 = vsub.f32 1.0, %v1741
  %v1743 = vmul.f32 %v1740, %v1742
  %v1744 = vadd.f32 %v1740, %v1743
  %vm1745 = vweird.f32 %v1724
  %vm1746 = vweird.f32 %v1740
  %vm1747 = vmor %vm1745, %vm1746
  %v1748 = vsel %vm1747, %v1740, %v1744
  %v1749 = vand.u32 2147483647, %v1724
  %vm1750 = vcmp.eq.f32.partialorder %v1749, 8.507059e+37
  %v1751 = vand.u32 %v1724, 2147483648
  %v1752 = vor.u32 1.1754944e-38, %v1751
  %v1753 = vsel %vm1750, %v1752, %v1748
  %v1754 = vmul.f32 1.0, %v1753
  %v1755 = vtanh.pop %v1715
  %v1756 = vtanh.pop %v1716
  %v1757 = vmul.f32 %v1739, %v1554
  %v1758 = vmul.f32 %v1754, %v1555
  %1761 = vrot.lane.b32.xlu0 %v1755, 32
  %v1762 = vpop.permute.xlu0 %1761
  %1763 = vrot.lane.b32.xlu0 %v1756, 32
  %v1764 = vpop.permute.xlu0 %1763
  %v1767 = vmul.f32 %v1739, %v1762
  %v1768 = vmul.f32 %v1754, %v1764
  %1771 = vrot.lane.b32.xlu0 %v1767, 32
  %v1772 = vpop.permute.xlu0 %1771
  %1773 = vrot.lane.b32.xlu0 %v1768, 32
  %v1774 = vpop.permute.xlu0 %1773
  %v1777 = vadd.f32 %v1757, %v1772
  %v1778 = vadd.f32 %v1758, %v1774
  %v1779 = vtanh.pop %v1777
  %v1780 = vtanh.pop %v1778
  %1783 = vrot.lane.b32.xlu0 %v1779, 32
  %v1784 = vpop.permute.xlu0 %1783
  %1785 = vrot.lane.b32.xlu0 %v1780, 32
  %v1786 = vpop.permute.xlu0 %1785
  %v1789 = vmul.f32 %v1739, %v1784
  %v1790 = vmul.f32 %v1754, %v1786
  %v1791 = vsel %vm1668, %v1789, 0.0
  %v1792 = vsel %vm1669, %v1790, 0.0
  %v1793 = vpack.c.bf16 %v1791, %v1791
  %v1794 = vpack.c.bf16 %v1792, %v1792
  %1797 = vrot.lane.b32.xlu0 %v1793, 64
  %v1798 = vpop.permute.xlu0 %1797
  %1799 = vrot.lane.b32.xlu0 %v1794, 64
  %v1800 = vpop.permute.xlu0 %1799
  %s1803 = scalar_lea.vmem [#allocation4], 32
  %1804 = vst.msk [vmem:[%s1803] sm:$0xf] %vm748, %v1798
  %1805 = vst.msk [vmem:[%s1803 + $0x4] sm:$0xf] %vm748, %v1800
  %v1806 = vsel %vm1668, %v1789, %v1552
  %v1807 = vsel %vm1669, %v1790, %v1553
  %v1808 = vsel %vm1668, %v1777, %v1554
  %v1809 = vsel %vm1669, %v1778, %v1555
  %s1810 = scalar_lea.vmem [#allocation3], 24
  %v1811 = vld [vmem:[%s1810] sm:$0xf]
  %v1812 = vld [vmem:[%s1810 + $0x4] sm:$0xf]
  %v1813 = vunpack.c.l.bf16 %v1811
  %v1814 = vunpack.c.l.bf16 %v1812
  %v1815 = vpack.c.bf16 %v1686, %v1685
  %1817 = vrot.lane.b32.xlu0 %v1815, 64
  %v1818 = vpop.permute.xlu0 %1817
  %v1820 = vsel %vm122, %v1818, 0
  %1822 = vmatpush.bf16.msra.mxu0 0
  %1823 = vmatpush.bf16.msra.mxu0 0
  %1824 = vmatpush.bf16.msra.mxu0 0
  %1825 = vmatpush.bf16.msra.mxu0 0
  %1826 = vmatpush.bf16.msra.mxu0 0
  %1827 = vmatpush.bf16.msra.mxu0 0
  %1828 = vmatpush.bf16.msra.mxu0 %v769
  %1829 = vmatpush.bf16.msra.mxu0 %v768
  %1830 = vmatmul.bf16.gmra.mxu0 %v1820
  %v1831 = vpop.f32.mrf.mxu0
  %v1832 = vadd.f32 0.0, %v1831
  %v1833 = vpop.f32.mrf.mxu0
  %v1834 = vadd.f32 0.0, %v1833
  %1835 = vdwg.mxu0
  %v1836 = vadd.f32 %v1813, %v1832
  %v1837 = vadd.f32 %v1814, %v1834
  %v1838 = vxor.u32 %v1836, 2147483648
  %v1839 = vxor.u32 %v1837, 2147483648
  %v1840 = vmul.f32 %v1838, 1.442695
  %v1841 = vpow.pop %v1840
  %v1842 = vmul.f32 %v1839, 1.442695
  %v1843 = vpow.pop %v1842
  %v1844 = vadd.f32 %v1841, 1.0
  %v1845 = vadd.f32 %v1843, 1.0
  %v1846 = vrcp.pop %v1844
  %v1847 = vmul.f32 %v1844, %v1846
  %v1848 = vsub.f32 1.0, %v1847
  %v1849 = vmul.f32 %v1846, %v1848
  %v1850 = vadd.f32 %v1846, %v1849
  %vm1851 = vweird.f32 %v1844
  %vm1852 = vweird.f32 %v1846
  %vm1853 = vmor %vm1851, %vm1852
  %v1854 = vsel %vm1853, %v1846, %v1850
  %v1855 = vand.u32 2147483647, %v1844
  %vm1856 = vcmp.eq.f32.partialorder %v1855, 8.507059e+37
  %v1857 = vand.u32 %v1844, 2147483648
  %v1858 = vor.u32 1.1754944e-38, %v1857
  %v1859 = vsel %vm1856, %v1858, %v1854
  %v1860 = vmul.f32 1.0, %v1859
  %v1861 = vrcp.pop %v1845
  %v1862 = vmul.f32 %v1845, %v1861
  %v1863 = vsub.f32 1.0, %v1862
  %v1864 = vmul.f32 %v1861, %v1863
  %v1865 = vadd.f32 %v1861, %v1864
  %vm1866 = vweird.f32 %v1845
  %vm1867 = vweird.f32 %v1861
  %vm1868 = vmor %vm1866, %vm1867
  %v1869 = vsel %vm1868, %v1861, %v1865
  %v1870 = vand.u32 2147483647, %v1845
  %vm1871 = vcmp.eq.f32.partialorder %v1870, 8.507059e+37
  %v1872 = vand.u32 %v1845, 2147483648
  %v1873 = vor.u32 1.1754944e-38, %v1872
  %v1874 = vsel %vm1871, %v1873, %v1869
  %v1875 = vmul.f32 1.0, %v1874
  %v1876 = vtanh.pop %v1836
  %v1877 = vtanh.pop %v1837
  %v1878 = vmul.f32 %v1860, %v1687
  %v1879 = vmul.f32 %v1875, %v1688
  %1882 = vrot.lane.b32.xlu0 %v1876, 32
  %v1883 = vpop.permute.xlu0 %1882
  %1884 = vrot.lane.b32.xlu0 %v1877, 32
  %v1885 = vpop.permute.xlu0 %1884
  %v1888 = vmul.f32 %v1860, %v1883
  %v1889 = vmul.f32 %v1875, %v1885
  %1892 = vrot.lane.b32.xlu0 %v1888, 32
  %v1893 = vpop.permute.xlu0 %1892
  %1894 = vrot.lane.b32.xlu0 %v1889, 32
  %v1895 = vpop.permute.xlu0 %1894
  %v1898 = vadd.f32 %v1878, %v1893
  %v1899 = vadd.f32 %v1879, %v1895
  %v1900 = vtanh.pop %v1898
  %v1901 = vtanh.pop %v1899
  %1904 = vrot.lane.b32.xlu0 %v1900, 32
  %v1905 = vpop.permute.xlu0 %1904
  %1906 = vrot.lane.b32.xlu0 %v1901, 32
  %v1907 = vpop.permute.xlu0 %1906
  %v1910 = vmul.f32 %v1860, %v1905
  %v1911 = vmul.f32 %v1875, %v1907
  %v1912 = vsel %vm1535, %v1910, 0.0
  %v1913 = vsel %vm1536, %v1911, 0.0
  %v1914 = vpack.c.bf16 %v1912, %v1912
  %v1915 = vpack.c.bf16 %v1913, %v1913
  %1918 = vrot.lane.b32.xlu0 %v1914, 64
  %v1919 = vpop.permute.xlu0 %1918
  %1920 = vrot.lane.b32.xlu0 %v1915, 64
  %v1921 = vpop.permute.xlu0 %1920
  %s1924 = scalar_lea.vmem [#allocation5], 24
  %1925 = vst.msk [vmem:[%s1924] sm:$0xf] %vm748, %v1919
  %1926 = vst.msk [vmem:[%s1924 + $0x4] sm:$0xf] %vm748, %v1921
  %v1927 = vsel %vm1535, %v1910, %v1685
  %v1928 = vsel %vm1536, %v1911, %v1686
  %v1929 = vsel %vm1535, %v1898, %v1687
  %v1930 = vsel %vm1536, %v1899, %v1688
  %s1931 = scalar_lea.vmem [#allocation2], 40
  %v1932 = vld [vmem:[%s1931] sm:$0xf]
  %v1933 = vld [vmem:[%s1931 + $0x4] sm:$0xf]
  %v1934 = vunpack.c.l.bf16 %v1932
  %v1935 = vunpack.c.l.bf16 %v1933
  %v1936 = vpack.c.bf16 %v1807, %v1806
  %1938 = vrot.lane.b32.xlu0 %v1936, 64
  %v1939 = vpop.permute.xlu0 %1938
  %v1941 = vsel %vm122, %v1939, 0
  %1943 = vmatpush.bf16.msra.mxu0 0
  %1944 = vmatpush.bf16.msra.mxu0 0
  %1945 = vmatpush.bf16.msra.mxu0 0
  %1946 = vmatpush.bf16.msra.mxu0 0
  %1947 = vmatpush.bf16.msra.mxu0 0
  %1948 = vmatpush.bf16.msra.mxu0 0
  %1949 = vmatpush.bf16.msra.mxu0 %v630
  %1950 = vmatpush.bf16.msra.mxu0 %v629
  %1951 = vmatmul.bf16.gmra.mxu0 %v1941
  %v1952 = vpop.f32.mrf.mxu0
  %v1953 = vadd.f32 0.0, %v1952
  %v1954 = vpop.f32.mrf.mxu0
  %v1955 = vadd.f32 0.0, %v1954
  %1956 = vdwg.mxu0
  %v1957 = vadd.f32 %v1934, %v1953
  %v1958 = vadd.f32 %v1935, %v1955
  %v1959 = vxor.u32 %v1957, 2147483648
  %v1960 = vxor.u32 %v1958, 2147483648
  %v1961 = vmul.f32 %v1959, 1.442695
  %v1962 = vpow.pop %v1961
  %v1963 = vmul.f32 %v1960, 1.442695
  %v1964 = vpow.pop %v1963
  %v1965 = vadd.f32 %v1962, 1.0
  %v1966 = vadd.f32 %v1964, 1.0
  %v1967 = vrcp.pop %v1965
  %v1968 = vmul.f32 %v1965, %v1967
  %v1969 = vsub.f32 1.0, %v1968
  %v1970 = vmul.f32 %v1967, %v1969
  %v1971 = vadd.f32 %v1967, %v1970
  %vm1972 = vweird.f32 %v1965
  %vm1973 = vweird.f32 %v1967
  %vm1974 = vmor %vm1972, %vm1973
  %v1975 = vsel %vm1974, %v1967, %v1971
  %v1976 = vand.u32 2147483647, %v1965
  %vm1977 = vcmp.eq.f32.partialorder %v1976, 8.507059e+37
  %v1978 = vand.u32 %v1965, 2147483648
  %v1979 = vor.u32 1.1754944e-38, %v1978
  %v1980 = vsel %vm1977, %v1979, %v1975
  %v1981 = vmul.f32 1.0, %v1980
  %v1982 = vrcp.pop %v1966
  %v1983 = vmul.f32 %v1966, %v1982
  %v1984 = vsub.f32 1.0, %v1983
  %v1985 = vmul.f32 %v1982, %v1984
  %v1986 = vadd.f32 %v1982, %v1985
  %vm1987 = vweird.f32 %v1966
  %vm1988 = vweird.f32 %v1982
  %vm1989 = vmor %vm1987, %vm1988
  %v1990 = vsel %vm1989, %v1982, %v1986
  %v1991 = vand.u32 2147483647, %v1966
  %vm1992 = vcmp.eq.f32.partialorder %v1991, 8.507059e+37
  %v1993 = vand.u32 %v1966, 2147483648
  %v1994 = vor.u32 1.1754944e-38, %v1993
  %v1995 = vsel %vm1992, %v1994, %v1990
  %v1996 = vmul.f32 1.0, %v1995
  %v1997 = vtanh.pop %v1957
  %v1998 = vtanh.pop %v1958
  %v1999 = vmul.f32 %v1981, %v1808
  %v2000 = vmul.f32 %v1996, %v1809
  %2003 = vrot.lane.b32.xlu0 %v1997, 32
  %v2004 = vpop.permute.xlu0 %2003
  %2005 = vrot.lane.b32.xlu0 %v1998, 32
  %v2006 = vpop.permute.xlu0 %2005
  %v2009 = vmul.f32 %v1981, %v2004
  %v2010 = vmul.f32 %v1996, %v2006
  %2013 = vrot.lane.b32.xlu0 %v2009, 32
  %v2014 = vpop.permute.xlu0 %2013
  %2015 = vrot.lane.b32.xlu0 %v2010, 32
  %v2016 = vpop.permute.xlu0 %2015
  %v2019 = vadd.f32 %v1999, %v2014
  %v2020 = vadd.f32 %v2000, %v2016
  %v2021 = vtanh.pop %v2019
  %v2022 = vtanh.pop %v2020
  %2025 = vrot.lane.b32.xlu0 %v2021, 32
  %v2026 = vpop.permute.xlu0 %2025
  %2027 = vrot.lane.b32.xlu0 %v2022, 32
  %v2028 = vpop.permute.xlu0 %2027
  %v2031 = vmul.f32 %v1981, %v2026
  %v2032 = vmul.f32 %v1996, %v2028
  %v2033 = vsel %vm1402, %v2031, 0.0
  %v2034 = vsel %vm1403, %v2032, 0.0
  %v2035 = vpack.c.bf16 %v2033, %v2033
  %v2036 = vpack.c.bf16 %v2034, %v2034
  %2039 = vrot.lane.b32.xlu0 %v2035, 64
  %v2040 = vpop.permute.xlu0 %2039
  %2041 = vrot.lane.b32.xlu0 %v2036, 64
  %v2042 = vpop.permute.xlu0 %2041
  %s2045 = scalar_lea.vmem [#allocation4], 40
  %2046 = vst.msk [vmem:[%s2045] sm:$0xf] %vm748, %v2040
  %2047 = vst.msk [vmem:[%s2045 + $0x4] sm:$0xf] %vm748, %v2042
  %v2048 = vsel %vm1402, %v2031, %v1806
  %v2049 = vsel %vm1403, %v2032, %v1807
  %v2050 = vsel %vm1402, %v2019, %v1808
  %v2051 = vsel %vm1403, %v2020, %v1809
  %s2052 = scalar_lea.vmem [#allocation3], 16
  %v2053 = vld [vmem:[%s2052] sm:$0xf]
  %v2054 = vld [vmem:[%s2052 + $0x4] sm:$0xf]
  %v2055 = vunpack.c.l.bf16 %v2053
  %v2056 = vunpack.c.l.bf16 %v2054
  %v2057 = vpack.c.bf16 %v1928, %v1927
  %2059 = vrot.lane.b32.xlu0 %v2057, 64
  %v2060 = vpop.permute.xlu0 %2059
  %v2062 = vsel %vm122, %v2060, 0
  %2064 = vmatpush.bf16.msra.mxu0 0
  %2065 = vmatpush.bf16.msra.mxu0 0
  %2066 = vmatpush.bf16.msra.mxu0 0
  %2067 = vmatpush.bf16.msra.mxu0 0
  %2068 = vmatpush.bf16.msra.mxu0 0
  %2069 = vmatpush.bf16.msra.mxu0 0
  %2070 = vmatpush.bf16.msra.mxu0 %v769
  %2071 = vmatpush.bf16.msra.mxu0 %v768
  %2072 = vmatmul.bf16.gmra.mxu0 %v2062
  %v2073 = vpop.f32.mrf.mxu0
  %v2074 = vadd.f32 0.0, %v2073
  %v2075 = vpop.f32.mrf.mxu0
  %v2076 = vadd.f32 0.0, %v2075
  %2077 = vdwg.mxu0
  %v2078 = vadd.f32 %v2055, %v2074
  %v2079 = vadd.f32 %v2056, %v2076
  %v2080 = vxor.u32 %v2078, 2147483648
  %v2081 = vxor.u32 %v2079, 2147483648
  %v2082 = vmul.f32 %v2080, 1.442695
  %v2083 = vpow.pop %v2082
  %v2084 = vmul.f32 %v2081, 1.442695
  %v2085 = vpow.pop %v2084
  %v2086 = vadd.f32 %v2083, 1.0
  %v2087 = vadd.f32 %v2085, 1.0
  %v2088 = vrcp.pop %v2086
  %v2089 = vmul.f32 %v2086, %v2088
  %v2090 = vsub.f32 1.0, %v2089
  %v2091 = vmul.f32 %v2088, %v2090
  %v2092 = vadd.f32 %v2088, %v2091
  %vm2093 = vweird.f32 %v2086
  %vm2094 = vweird.f32 %v2088
  %vm2095 = vmor %vm2093, %vm2094
  %v2096 = vsel %vm2095, %v2088, %v2092
  %v2097 = vand.u32 2147483647, %v2086
  %vm2098 = vcmp.eq.f32.partialorder %v2097, 8.507059e+37
  %v2099 = vand.u32 %v2086, 2147483648
  %v2100 = vor.u32 1.1754944e-38, %v2099
  %v2101 = vsel %vm2098, %v2100, %v2096
  %v2102 = vmul.f32 1.0, %v2101
  %v2103 = vrcp.pop %v2087
  %v2104 = vmul.f32 %v2087, %v2103
  %v2105 = vsub.f32 1.0, %v2104
  %v2106 = vmul.f32 %v2103, %v2105
  %v2107 = vadd.f32 %v2103, %v2106
  %vm2108 = vweird.f32 %v2087
  %vm2109 = vweird.f32 %v2103
  %vm2110 = vmor %vm2108, %vm2109
  %v2111 = vsel %vm2110, %v2103, %v2107
  %v2112 = vand.u32 2147483647, %v2087
  %vm2113 = vcmp.eq.f32.partialorder %v2112, 8.507059e+37
  %v2114 = vand.u32 %v2087, 2147483648
  %v2115 = vor.u32 1.1754944e-38, %v2114
  %v2116 = vsel %vm2113, %v2115, %v2111
  %v2117 = vmul.f32 1.0, %v2116
  %v2118 = vtanh.pop %v2078
  %v2119 = vtanh.pop %v2079
  %v2120 = vmul.f32 %v2102, %v1929
  %v2121 = vmul.f32 %v2117, %v1930
  %2124 = vrot.lane.b32.xlu0 %v2118, 32
  %v2125 = vpop.permute.xlu0 %2124
  %2126 = vrot.lane.b32.xlu0 %v2119, 32
  %v2127 = vpop.permute.xlu0 %2126
  %v2130 = vmul.f32 %v2102, %v2125
  %v2131 = vmul.f32 %v2117, %v2127
  %2134 = vrot.lane.b32.xlu0 %v2130, 32
  %v2135 = vpop.permute.xlu0 %2134
  %2136 = vrot.lane.b32.xlu0 %v2131, 32
  %v2137 = vpop.permute.xlu0 %2136
  %v2140 = vadd.f32 %v2120, %v2135
  %v2141 = vadd.f32 %v2121, %v2137
  %v2142 = vtanh.pop %v2140
  %v2143 = vtanh.pop %v2141
  %2146 = vrot.lane.b32.xlu0 %v2142, 32
  %v2147 = vpop.permute.xlu0 %2146
  %2148 = vrot.lane.b32.xlu0 %v2143, 32
  %v2149 = vpop.permute.xlu0 %2148
  %v2152 = vmul.f32 %v2102, %v2147
  %v2153 = vmul.f32 %v2117, %v2149
  %v2154 = vsel %vm1269, %v2152, 0.0
  %v2155 = vsel %vm1270, %v2153, 0.0
  %v2156 = vpack.c.bf16 %v2154, %v2154
  %v2157 = vpack.c.bf16 %v2155, %v2155
  %2160 = vrot.lane.b32.xlu0 %v2156, 64
  %v2161 = vpop.permute.xlu0 %2160
  %2162 = vrot.lane.b32.xlu0 %v2157, 64
  %v2163 = vpop.permute.xlu0 %2162
  %s2166 = scalar_lea.vmem [#allocation5], 16
  %2167 = vst.msk [vmem:[%s2166] sm:$0xf] %vm748, %v2161
  %2168 = vst.msk [vmem:[%s2166 + $0x4] sm:$0xf] %vm748, %v2163
  %v2169 = vsel %vm1269, %v2152, %v1927
  %v2170 = vsel %vm1270, %v2153, %v1928
  %v2171 = vsel %vm1269, %v2140, %v1929
  %v2172 = vsel %vm1270, %v2141, %v1930
  %s2173 = scalar_lea.vmem [#allocation2], 48
  %v2174 = vld [vmem:[%s2173] sm:$0xf]
  %v2175 = vld [vmem:[%s2173 + $0x4] sm:$0xf]
  %v2176 = vunpack.c.l.bf16 %v2174
  %v2177 = vunpack.c.l.bf16 %v2175
  %v2178 = vpack.c.bf16 %v2049, %v2048
  %2180 = vrot.lane.b32.xlu0 %v2178, 64
  %v2181 = vpop.permute.xlu0 %2180
  %v2183 = vsel %vm122, %v2181, 0
  %2185 = vmatpush.bf16.msra.mxu0 0
  %2186 = vmatpush.bf16.msra.mxu0 0
  %2187 = vmatpush.bf16.msra.mxu0 0
  %2188 = vmatpush.bf16.msra.mxu0 0
  %2189 = vmatpush.bf16.msra.mxu0 0
  %2190 = vmatpush.bf16.msra.mxu0 0
  %2191 = vmatpush.bf16.msra.mxu0 %v630
  %2192 = vmatpush.bf16.msra.mxu0 %v629
  %2193 = vmatmul.bf16.gmra.mxu0 %v2183
  %v2194 = vpop.f32.mrf.mxu0
  %v2195 = vadd.f32 0.0, %v2194
  %v2196 = vpop.f32.mrf.mxu0
  %v2197 = vadd.f32 0.0, %v2196
  %2198 = vdwg.mxu0
  %v2199 = vadd.f32 %v2176, %v2195
  %v2200 = vadd.f32 %v2177, %v2197
  %v2201 = vxor.u32 %v2199, 2147483648
  %v2202 = vxor.u32 %v2200, 2147483648
  %v2203 = vmul.f32 %v2201, 1.442695
  %v2204 = vpow.pop %v2203
  %v2205 = vmul.f32 %v2202, 1.442695
  %v2206 = vpow.pop %v2205
  %v2207 = vadd.f32 %v2204, 1.0
  %v2208 = vadd.f32 %v2206, 1.0
  %v2209 = vrcp.pop %v2207
  %v2210 = vmul.f32 %v2207, %v2209
  %v2211 = vsub.f32 1.0, %v2210
  %v2212 = vmul.f32 %v2209, %v2211
  %v2213 = vadd.f32 %v2209, %v2212
  %vm2214 = vweird.f32 %v2207
  %vm2215 = vweird.f32 %v2209
  %vm2216 = vmor %vm2214, %vm2215
  %v2217 = vsel %vm2216, %v2209, %v2213
  %v2218 = vand.u32 2147483647, %v2207
  %vm2219 = vcmp.eq.f32.partialorder %v2218, 8.507059e+37
  %v2220 = vand.u32 %v2207, 2147483648
  %v2221 = vor.u32 1.1754944e-38, %v2220
  %v2222 = vsel %vm2219, %v2221, %v2217
  %v2223 = vmul.f32 1.0, %v2222
  %v2224 = vrcp.pop %v2208
  %v2225 = vmul.f32 %v2208, %v2224
  %v2226 = vsub.f32 1.0, %v2225
  %v2227 = vmul.f32 %v2224, %v2226
  %v2228 = vadd.f32 %v2224, %v2227
  %vm2229 = vweird.f32 %v2208
  %vm2230 = vweird.f32 %v2224
  %vm2231 = vmor %vm2229, %vm2230
  %v2232 = vsel %vm2231, %v2224, %v2228
  %v2233 = vand.u32 2147483647, %v2208
  %vm2234 = vcmp.eq.f32.partialorder %v2233, 8.507059e+37
  %v2235 = vand.u32 %v2208, 2147483648
  %v2236 = vor.u32 1.1754944e-38, %v2235
  %v2237 = vsel %vm2234, %v2236, %v2232
  %v2238 = vmul.f32 1.0, %v2237
  %v2239 = vtanh.pop %v2199
  %v2240 = vtanh.pop %v2200
  %v2241 = vmul.f32 %v2223, %v2050
  %v2242 = vmul.f32 %v2238, %v2051
  %2245 = vrot.lane.b32.xlu0 %v2239, 32
  %v2246 = vpop.permute.xlu0 %2245
  %2247 = vrot.lane.b32.xlu0 %v2240, 32
  %v2248 = vpop.permute.xlu0 %2247
  %v2251 = vmul.f32 %v2223, %v2246
  %v2252 = vmul.f32 %v2238, %v2248
  %2255 = vrot.lane.b32.xlu0 %v2251, 32
  %v2256 = vpop.permute.xlu0 %2255
  %2257 = vrot.lane.b32.xlu0 %v2252, 32
  %v2258 = vpop.permute.xlu0 %2257
  %v2261 = vadd.f32 %v2241, %v2256
  %v2262 = vadd.f32 %v2242, %v2258
  %v2263 = vtanh.pop %v2261
  %v2264 = vtanh.pop %v2262
  %2267 = vrot.lane.b32.xlu0 %v2263, 32
  %v2268 = vpop.permute.xlu0 %2267
  %2269 = vrot.lane.b32.xlu0 %v2264, 32
  %v2270 = vpop.permute.xlu0 %2269
  %v2273 = vmul.f32 %v2223, %v2268
  %v2274 = vmul.f32 %v2238, %v2270
  %v2275 = vsel %vm1136, %v2273, 0.0
  %v2276 = vsel %vm1137, %v2274, 0.0
  %v2277 = vpack.c.bf16 %v2275, %v2275
  %v2278 = vpack.c.bf16 %v2276, %v2276
  %2281 = vrot.lane.b32.xlu0 %v2277, 64
  %v2282 = vpop.permute.xlu0 %2281
  %2283 = vrot.lane.b32.xlu0 %v2278, 64
  %v2284 = vpop.permute.xlu0 %2283
  %s2287 = scalar_lea.vmem [#allocation4], 48
  %2288 = vst.msk [vmem:[%s2287] sm:$0xf] %vm748, %v2282
  %2289 = vst.msk [vmem:[%s2287 + $0x4] sm:$0xf] %vm748, %v2284
  %v2290 = vsel %vm1136, %v2273, %v2048
  %v2291 = vsel %vm1137, %v2274, %v2049
  %v2292 = vsel %vm1136, %v2261, %v2050
  %v2293 = vsel %vm1137, %v2262, %v2051
  %s2294 = scalar_lea.vmem [#allocation3], 8
  %v2295 = vld [vmem:[%s2294] sm:$0xf]
  %v2296 = vld [vmem:[%s2294 + $0x4] sm:$0xf]
  %v2297 = vunpack.c.l.bf16 %v2295
  %v2298 = vunpack.c.l.bf16 %v2296
  %v2299 = vpack.c.bf16 %v2170, %v2169
  %2301 = vrot.lane.b32.xlu0 %v2299, 64
  %v2302 = vpop.permute.xlu0 %2301
  %v2304 = vsel %vm122, %v2302, 0
  %2306 = vmatpush.bf16.msra.mxu0 0
  %2307 = vmatpush.bf16.msra.mxu0 0
  %2308 = vmatpush.bf16.msra.mxu0 0
  %2309 = vmatpush.bf16.msra.mxu0 0
  %2310 = vmatpush.bf16.msra.mxu0 0
  %2311 = vmatpush.bf16.msra.mxu0 0
  %2312 = vmatpush.bf16.msra.mxu0 %v769
  %2313 = vmatpush.bf16.msra.mxu0 %v768
  %2314 = vmatmul.bf16.gmra.mxu0 %v2304
  %v2315 = vpop.f32.mrf.mxu0
  %v2316 = vadd.f32 0.0, %v2315
  %v2317 = vpop.f32.mrf.mxu0
  %v2318 = vadd.f32 0.0, %v2317
  %2319 = vdwg.mxu0
  %v2320 = vadd.f32 %v2297, %v2316
  %v2321 = vadd.f32 %v2298, %v2318
  %v2322 = vxor.u32 %v2320, 2147483648
  %v2323 = vxor.u32 %v2321, 2147483648
  %v2324 = vmul.f32 %v2322, 1.442695
  %v2325 = vpow.pop %v2324
  %v2326 = vmul.f32 %v2323, 1.442695
  %v2327 = vpow.pop %v2326
  %v2328 = vadd.f32 %v2325, 1.0
  %v2329 = vadd.f32 %v2327, 1.0
  %v2330 = vrcp.pop %v2328
  %v2331 = vmul.f32 %v2328, %v2330
  %v2332 = vsub.f32 1.0, %v2331
  %v2333 = vmul.f32 %v2330, %v2332
  %v2334 = vadd.f32 %v2330, %v2333
  %vm2335 = vweird.f32 %v2328
  %vm2336 = vweird.f32 %v2330
  %vm2337 = vmor %vm2335, %vm2336
  %v2338 = vsel %vm2337, %v2330, %v2334
  %v2339 = vand.u32 2147483647, %v2328
  %vm2340 = vcmp.eq.f32.partialorder %v2339, 8.507059e+37
  %v2341 = vand.u32 %v2328, 2147483648
  %v2342 = vor.u32 1.1754944e-38, %v2341
  %v2343 = vsel %vm2340, %v2342, %v2338
  %v2344 = vmul.f32 1.0, %v2343
  %v2345 = vrcp.pop %v2329
  %v2346 = vmul.f32 %v2329, %v2345
  %v2347 = vsub.f32 1.0, %v2346
  %v2348 = vmul.f32 %v2345, %v2347
  %v2349 = vadd.f32 %v2345, %v2348
  %vm2350 = vweird.f32 %v2329
  %vm2351 = vweird.f32 %v2345
  %vm2352 = vmor %vm2350, %vm2351
  %v2353 = vsel %vm2352, %v2345, %v2349
  %v2354 = vand.u32 2147483647, %v2329
  %vm2355 = vcmp.eq.f32.partialorder %v2354, 8.507059e+37
  %v2356 = vand.u32 %v2329, 2147483648
  %v2357 = vor.u32 1.1754944e-38, %v2356
  %v2358 = vsel %vm2355, %v2357, %v2353
  %v2359 = vmul.f32 1.0, %v2358
  %v2360 = vtanh.pop %v2320
  %v2361 = vtanh.pop %v2321
  %v2362 = vmul.f32 %v2344, %v2171
  %v2363 = vmul.f32 %v2359, %v2172
  %2366 = vrot.lane.b32.xlu0 %v2360, 32
  %v2367 = vpop.permute.xlu0 %2366
  %2368 = vrot.lane.b32.xlu0 %v2361, 32
  %v2369 = vpop.permute.xlu0 %2368
  %v2372 = vmul.f32 %v2344, %v2367
  %v2373 = vmul.f32 %v2359, %v2369
  %2376 = vrot.lane.b32.xlu0 %v2372, 32
  %v2377 = vpop.permute.xlu0 %2376
  %2378 = vrot.lane.b32.xlu0 %v2373, 32
  %v2379 = vpop.permute.xlu0 %2378
  %v2382 = vadd.f32 %v2362, %v2377
  %v2383 = vadd.f32 %v2363, %v2379
  %v2384 = vtanh.pop %v2382
  %v2385 = vtanh.pop %v2383
  %2388 = vrot.lane.b32.xlu0 %v2384, 32
  %v2389 = vpop.permute.xlu0 %2388
  %2390 = vrot.lane.b32.xlu0 %v2385, 32
  %v2391 = vpop.permute.xlu0 %2390
  %v2394 = vmul.f32 %v2344, %v2389
  %v2395 = vmul.f32 %v2359, %v2391
  %v2396 = vsel %vm1002, %v2394, 0.0
  %v2397 = vsel %vm1003, %v2395, 0.0
  %v2398 = vpack.c.bf16 %v2396, %v2396
  %v2399 = vpack.c.bf16 %v2397, %v2397
  %2402 = vrot.lane.b32.xlu0 %v2398, 64
  %v2403 = vpop.permute.xlu0 %2402
  %2404 = vrot.lane.b32.xlu0 %v2399, 64
  %v2405 = vpop.permute.xlu0 %2404
  %s2408 = scalar_lea.vmem [#allocation5], 8
  %2409 = vst.msk [vmem:[%s2408] sm:$0xf] %vm748, %v2403
  %2410 = vst.msk [vmem:[%s2408 + $0x4] sm:$0xf] %vm748, %v2405
  %v2411 = vsel %vm1002, %v2394, %v2169
  %v2412 = vsel %vm1003, %v2395, %v2170
  %v2413 = vsel %vm1002, %v2382, %v2171
  %v2414 = vsel %vm1003, %v2383, %v2172
  %s2415 = scalar_lea.vmem [#allocation2], 56
  %v2416 = vld [vmem:[%s2415] sm:$0xf]
  %v2417 = vld [vmem:[%s2415 + $0x4] sm:$0xf]
  %v2418 = vunpack.c.l.bf16 %v2416
  %v2419 = vunpack.c.l.bf16 %v2417
  %v2420 = vpack.c.bf16 %v2291, %v2290
  %2422 = vrot.lane.b32.xlu0 %v2420, 64
  %v2423 = vpop.permute.xlu0 %2422
  %v2425 = vsel %vm122, %v2423, 0
  %2427 = vmatpush.bf16.msra.mxu0 0
  %2428 = vmatpush.bf16.msra.mxu0 0
  %2429 = vmatpush.bf16.msra.mxu0 0
  %2430 = vmatpush.bf16.msra.mxu0 0
  %2431 = vmatpush.bf16.msra.mxu0 0
  %2432 = vmatpush.bf16.msra.mxu0 0
  %2433 = vmatpush.bf16.msra.mxu0 %v630
  %2434 = vmatpush.bf16.msra.mxu0 %v629
  %2435 = vmatmul.bf16.gmra.mxu0 %v2425
  %v2436 = vpop.f32.mrf.mxu0
  %v2437 = vadd.f32 0.0, %v2436
  %v2438 = vpop.f32.mrf.mxu0
  %v2439 = vadd.f32 0.0, %v2438
  %2440 = vdwg.mxu0
  %v2441 = vadd.f32 %v2418, %v2437
  %v2442 = vadd.f32 %v2419, %v2439
  %v2443 = vxor.u32 %v2441, 2147483648
  %v2444 = vxor.u32 %v2442, 2147483648
  %v2445 = vmul.f32 %v2443, 1.442695
  %v2446 = vpow.pop %v2445
  %v2447 = vmul.f32 %v2444, 1.442695
  %v2448 = vpow.pop %v2447
  %v2449 = vadd.f32 %v2446, 1.0
  %v2450 = vadd.f32 %v2448, 1.0
  %v2451 = vrcp.pop %v2449
  %v2452 = vmul.f32 %v2449, %v2451
  %v2453 = vsub.f32 1.0, %v2452
  %v2454 = vmul.f32 %v2451, %v2453
  %v2455 = vadd.f32 %v2451, %v2454
  %vm2456 = vweird.f32 %v2449
  %vm2457 = vweird.f32 %v2451
  %vm2458 = vmor %vm2456, %vm2457
  %v2459 = vsel %vm2458, %v2451, %v2455
  %v2460 = vand.u32 2147483647, %v2449
  %vm2461 = vcmp.eq.f32.partialorder %v2460, 8.507059e+37
  %v2462 = vand.u32 %v2449, 2147483648
  %v2463 = vor.u32 1.1754944e-38, %v2462
  %v2464 = vsel %vm2461, %v2463, %v2459
  %v2465 = vmul.f32 1.0, %v2464
  %v2466 = vrcp.pop %v2450
  %v2467 = vmul.f32 %v2450, %v2466
  %v2468 = vsub.f32 1.0, %v2467
  %v2469 = vmul.f32 %v2466, %v2468
  %v2470 = vadd.f32 %v2466, %v2469
  %vm2471 = vweird.f32 %v2450
  %vm2472 = vweird.f32 %v2466
  %vm2473 = vmor %vm2471, %vm2472
  %v2474 = vsel %vm2473, %v2466, %v2470
  %v2475 = vand.u32 2147483647, %v2450
  %vm2476 = vcmp.eq.f32.partialorder %v2475, 8.507059e+37
  %v2477 = vand.u32 %v2450, 2147483648
  %v2478 = vor.u32 1.1754944e-38, %v2477
  %v2479 = vsel %vm2476, %v2478, %v2474
  %v2480 = vmul.f32 1.0, %v2479
  %v2481 = vtanh.pop %v2441
  %v2482 = vtanh.pop %v2442
  %v2483 = vmul.f32 %v2465, %v2292
  %v2484 = vmul.f32 %v2480, %v2293
  %2487 = vrot.lane.b32.xlu0 %v2481, 32
  %v2488 = vpop.permute.xlu0 %2487
  %2489 = vrot.lane.b32.xlu0 %v2482, 32
  %v2490 = vpop.permute.xlu0 %2489
  %v2493 = vmul.f32 %v2465, %v2488
  %v2494 = vmul.f32 %v2480, %v2490
  %2497 = vrot.lane.b32.xlu0 %v2493, 32
  %v2498 = vpop.permute.xlu0 %2497
  %2499 = vrot.lane.b32.xlu0 %v2494, 32
  %v2500 = vpop.permute.xlu0 %2499
  %v2503 = vadd.f32 %v2483, %v2498
  %v2504 = vadd.f32 %v2484, %v2500
  %v2505 = vtanh.pop %v2503
  %v2506 = vtanh.pop %v2504
  %2509 = vrot.lane.b32.xlu0 %v2505, 32
  %v2510 = vpop.permute.xlu0 %2509
  %2511 = vrot.lane.b32.xlu0 %v2506, 32
  %v2512 = vpop.permute.xlu0 %2511
  %v2515 = vmul.f32 %v2465, %v2510
  %v2516 = vmul.f32 %v2480, %v2512
  %v2517 = vsel %vm870, %v2515, 0.0
  %v2518 = vsel %vm871, %v2516, 0.0
  %v2519 = vpack.c.bf16 %v2517, %v2517
  %v2520 = vpack.c.bf16 %v2518, %v2518
  %2523 = vrot.lane.b32.xlu0 %v2519, 64
  %v2524 = vpop.permute.xlu0 %2523
  %2525 = vrot.lane.b32.xlu0 %v2520, 64
  %v2526 = vpop.permute.xlu0 %2525
  %s2529 = scalar_lea.vmem [#allocation4], 56
  %2530 = vst.msk [vmem:[%s2529] sm:$0xf] %vm748, %v2524
  %2531 = vst.msk [vmem:[%s2529 + $0x4] sm:$0xf] %vm748, %v2526
  %v2532 = vld [vmem:[#allocation3] sm:$0xf]
  %v2533 = vld [vmem:[#allocation3 + $0x4] sm:$0xf]
  %v2534 = vunpack.c.l.bf16 %v2532
  %v2535 = vunpack.c.l.bf16 %v2533
  %v2536 = vpack.c.bf16 %v2412, %v2411
  %2538 = vrot.lane.b32.xlu0 %v2536, 64
  %v2539 = vpop.permute.xlu0 %2538
  %v2541 = vsel %vm122, %v2539, 0
  %2543 = vmatpush.bf16.msra.mxu0 0
  %2544 = vmatpush.bf16.msra.mxu0 0
  %2545 = vmatpush.bf16.msra.mxu0 0
  %2546 = vmatpush.bf16.msra.mxu0 0
  %2547 = vmatpush.bf16.msra.mxu0 0
  %2548 = vmatpush.bf16.msra.mxu0 0
  %2549 = vmatpush.bf16.msra.mxu0 %v769
  %2550 = vmatpush.bf16.msra.mxu0 %v768
  %2551 = vmatmul.bf16.gmra.mxu0 %v2541
  %v2552 = vpop.f32.mrf.mxu0
  %v2553 = vadd.f32 0.0, %v2552
  %v2554 = vpop.f32.mrf.mxu0
  %v2555 = vadd.f32 0.0, %v2554
  %2556 = vdwg.mxu0
  %v2557 = vadd.f32 %v2534, %v2553
  %v2558 = vadd.f32 %v2535, %v2555
  %v2559 = vxor.u32 %v2557, 2147483648
  %v2560 = vxor.u32 %v2558, 2147483648
  %v2561 = vmul.f32 %v2559, 1.442695
  %v2562 = vpow.pop %v2561
  %v2563 = vmul.f32 %v2560, 1.442695
  %v2564 = vpow.pop %v2563
  %v2565 = vadd.f32 %v2562, 1.0
  %v2566 = vadd.f32 %v2564, 1.0
  %v2567 = vrcp.pop %v2565
  %v2568 = vmul.f32 %v2565, %v2567
  %v2569 = vsub.f32 1.0, %v2568
  %v2570 = vmul.f32 %v2567, %v2569
  %v2571 = vadd.f32 %v2567, %v2570
  %vm2572 = vweird.f32 %v2565
  %vm2573 = vweird.f32 %v2567
  %vm2574 = vmor %vm2572, %vm2573
  %v2575 = vsel %vm2574, %v2567, %v2571
  %v2576 = vand.u32 2147483647, %v2565
  %vm2577 = vcmp.eq.f32.partialorder %v2576, 8.507059e+37
  %v2578 = vand.u32 %v2565, 2147483648
  %v2579 = vor.u32 1.1754944e-38, %v2578
  %v2580 = vsel %vm2577, %v2579, %v2575
  %v2581 = vmul.f32 1.0, %v2580
  %v2582 = vrcp.pop %v2566
  %v2583 = vmul.f32 %v2566, %v2582
  %v2584 = vsub.f32 1.0, %v2583
  %v2585 = vmul.f32 %v2582, %v2584
  %v2586 = vadd.f32 %v2582, %v2585
  %vm2587 = vweird.f32 %v2566
  %vm2588 = vweird.f32 %v2582
  %vm2589 = vmor %vm2587, %vm2588
  %v2590 = vsel %vm2589, %v2582, %v2586
  %v2591 = vand.u32 2147483647, %v2566
  %vm2592 = vcmp.eq.f32.partialorder %v2591, 8.507059e+37
  %v2593 = vand.u32 %v2566, 2147483648
  %v2594 = vor.u32 1.1754944e-38, %v2593
  %v2595 = vsel %vm2592, %v2594, %v2590
  %v2596 = vmul.f32 1.0, %v2595
  %v2597 = vtanh.pop %v2557
  %v2598 = vtanh.pop %v2558
  %v2599 = vmul.f32 %v2581, %v2413
  %v2600 = vmul.f32 %v2596, %v2414
  %2603 = vrot.lane.b32.xlu0 %v2597, 32
  %v2604 = vpop.permute.xlu0 %2603
  %2605 = vrot.lane.b32.xlu0 %v2598, 32
  %v2606 = vpop.permute.xlu0 %2605
  %v2609 = vmul.f32 %v2581, %v2604
  %v2610 = vmul.f32 %v2596, %v2606
  %2613 = vrot.lane.b32.xlu0 %v2609, 32
  %v2614 = vpop.permute.xlu0 %2613
  %2615 = vrot.lane.b32.xlu0 %v2610, 32
  %v2616 = vpop.permute.xlu0 %2615
  %v2619 = vadd.f32 %v2599, %v2614
  %v2620 = vadd.f32 %v2600, %v2616
  %v2621 = vtanh.pop %v2619
  %v2622 = vtanh.pop %v2620
  %2625 = vrot.lane.b32.xlu0 %v2621, 32
  %v2626 = vpop.permute.xlu0 %2625
  %2627 = vrot.lane.b32.xlu0 %v2622, 32
  %v2628 = vpop.permute.xlu0 %2627
  %v2631 = vmul.f32 %v2581, %v2626
  %v2632 = vmul.f32 %v2596, %v2628
  %v2633 = vsel %vm734, %v2631, 0.0
  %v2634 = vsel %vm735, %v2632, 0.0
  %v2635 = vpack.c.bf16 %v2633, %v2633
  %v2636 = vpack.c.bf16 %v2634, %v2634
  %2639 = vrot.lane.b32.xlu0 %v2635, 64
  %v2640 = vpop.permute.xlu0 %2639
  %2641 = vrot.lane.b32.xlu0 %v2636, 64
  %v2642 = vpop.permute.xlu0 %2641
  %2645 = vst.msk [vmem:[#allocation5] sm:$0xf] %vm748, %v2640
  %2646 = vst.msk [vmem:[#allocation5 + $0x4] sm:$0xf] %vm748, %v2642
  %v2647 = vld [vmem:[#allocation4] sm:$0xf]
  %v2648 = vld [vmem:[#allocation4 + $0x4] sm:$0xf]
  %v2649 = vld [vmem:[#allocation4 + $0x8] sm:$0xf]
  %v2650 = vld [vmem:[#allocation4 + $0xc] sm:$0xf]
  %v2651 = vld [vmem:[#allocation4 + $0x10] sm:$0xf]
  %v2652 = vld [vmem:[#allocation4 + $0x14] sm:$0xf]
  %v2653 = vld [vmem:[#allocation4 + $0x18] sm:$0xf]
  %v2654 = vld [vmem:[#allocation4 + $0x1c] sm:$0xf]
  %v2655 = vld [vmem:[#allocation4 + $0x20] sm:$0xf]
  %v2656 = vld [vmem:[#allocation4 + $0x24] sm:$0xf]
  %v2657 = vld [vmem:[#allocation4 + $0x28] sm:$0xf]
  %v2658 = vld [vmem:[#allocation4 + $0x2c] sm:$0xf]
  %v2659 = vld [vmem:[#allocation4 + $0x30] sm:$0xf]
  %v2660 = vld [vmem:[#allocation4 + $0x34] sm:$0xf]
  %v2661 = vld [vmem:[#allocation4 + $0x38] sm:$0xf]
  %v2662 = vld [vmem:[#allocation4 + $0x3c] sm:$0xf]
  %v2663 = vld [vmem:[%s11] sm:$0xf]
  %v2664 = vld [vmem:[%s11 + $0x4] sm:$0xf]
  %v2665 = vld [vmem:[%s11 + $0x8] sm:$0xf]
  %v2666 = vld [vmem:[%s11 + $0xc] sm:$0xf]
  %v2667 = vld [vmem:[#allocation5] sm:$0xf]
  %v2668 = vld [vmem:[#allocation5 + $0x4] sm:$0xf]
  %v2669 = vld [vmem:[#allocation5 + $0x8] sm:$0xf]
  %v2670 = vld [vmem:[#allocation5 + $0xc] sm:$0xf]
  %v2671 = vld [vmem:[#allocation5 + $0x10] sm:$0xf]
  %v2672 = vld [vmem:[#allocation5 + $0x14] sm:$0xf]
  %v2673 = vld [vmem:[#allocation5 + $0x18] sm:$0xf]
  %v2674 = vld [vmem:[#allocation5 + $0x1c] sm:$0xf]
  %v2675 = vld [vmem:[#allocation5 + $0x20] sm:$0xf]
  %v2676 = vld [vmem:[#allocation5 + $0x24] sm:$0xf]
  %v2677 = vld [vmem:[#allocation5 + $0x28] sm:$0xf]
  %v2678 = vld [vmem:[#allocation5 + $0x2c] sm:$0xf]
  %v2679 = vld [vmem:[#allocation5 + $0x30] sm:$0xf]
  %v2680 = vld [vmem:[#allocation5 + $0x34] sm:$0xf]
  %v2681 = vld [vmem:[#allocation5 + $0x38] sm:$0xf]
  %v2682 = vld [vmem:[#allocation5 + $0x3c] sm:$0xf]
  %v2683 = vld [vmem:[%s12] sm:$0xf]
  %v2684 = vld [vmem:[%s12 + $0x4] sm:$0xf]
  %v2685 = vld [vmem:[%s12 + $0x8] sm:$0xf]
  %v2686 = vld [vmem:[%s12 + $0xc] sm:$0xf]
  %v2703 = vunpack.c.l.b16 %v2667
  %v2704 = vunpack.c.l.b16 %v2668
  %v2705 = vunpack.c.l.b16 %v2669
  %v2706 = vunpack.c.l.b16 %v2670
  %v2707 = vunpack.c.l.b16 %v2671
  %v2708 = vunpack.c.l.b16 %v2672
  %v2709 = vunpack.c.l.b16 %v2673
  %v2710 = vunpack.c.l.b16 %v2674
  %v2711 = vunpack.c.l.b16 %v2675
  %v2712 = vunpack.c.l.b16 %v2676
  %v2713 = vunpack.c.l.b16 %v2677
  %v2714 = vunpack.c.l.b16 %v2678
  %v2715 = vunpack.c.l.b16 %v2679
  %v2716 = vunpack.c.l.b16 %v2680
  %v2717 = vunpack.c.l.b16 %v2681
  %v2718 = vunpack.c.l.b16 %v2682
  %v2719 = vpack.c.b16 %v2704, %v2703
  %v2720 = vpack.c.b16 %v2706, %v2705
  %v2721 = vpack.c.b16 %v2708, %v2707
  %v2722 = vpack.c.b16 %v2710, %v2709
  %v2723 = vpack.c.b16 %v2712, %v2711
  %v2724 = vpack.c.b16 %v2714, %v2713
  %v2725 = vpack.c.b16 %v2716, %v2715
  %v2726 = vpack.c.b16 %v2718, %v2717
  %v2731 = vunpack.c.l.b16 %v2683
  %v2732 = vunpack.c.l.b16 %v2684
  %v2733 = vunpack.c.l.b16 %v2685
  %v2734 = vunpack.c.l.b16 %v2686
  %v2735 = vpack.c.b16 %v2732, %v2731
  %v2736 = vpack.c.b16 %v2734, %v2733
  %v2740 = vsel %vm122, %v2719, 0
  %v2743 = vsel %vm122, %v2720, 0
  %v2746 = vsel %vm122, %v2721, 0
  %v2749 = vsel %vm122, %v2722, 0
  %v2752 = vsel %vm122, %v2723, 0
  %v2755 = vsel %vm122, %v2724, 0
  %v2758 = vsel %vm122, %v2725, 0
  %v2761 = vsel %vm122, %v2726, 0
  %2763 = vmatpush.bf16.msra.mxu0 0
  %2764 = vmatpush.bf16.msra.mxu0 0
  %2765 = vmatpush.bf16.msra.mxu0 0
  %2766 = vmatpush.bf16.msra.mxu0 0
  %2767 = vmatpush.bf16.msra.mxu0 0
  %2768 = vmatpush.bf16.msra.mxu0 0
  %2769 = vmatpush.bf16.msra.mxu0 %v2736
  %2770 = vmatpush.bf16.msra.mxu0 %v2735
  %2771 = vmatmul.bf16.gmra.mxu0 %v2740
  %v2772 = vpop.f32.mrf.mxu0
  %v2773 = vadd.f32 0.0, %v2772
  %v2774 = vpop.f32.mrf.mxu0
  %v2775 = vadd.f32 0.0, %v2774
  %2776 = vmatmul.bf16.gmra.mxu0 %v2743
  %v2777 = vpop.f32.mrf.mxu0
  %v2778 = vadd.f32 0.0, %v2777
  %v2779 = vpop.f32.mrf.mxu0
  %v2780 = vadd.f32 0.0, %v2779
  %2781 = vmatmul.bf16.gmra.mxu0 %v2746
  %v2782 = vpop.f32.mrf.mxu0
  %v2783 = vadd.f32 0.0, %v2782
  %v2784 = vpop.f32.mrf.mxu0
  %v2785 = vadd.f32 0.0, %v2784
  %2786 = vmatmul.bf16.gmra.mxu0 %v2749
  %v2787 = vpop.f32.mrf.mxu0
  %v2788 = vadd.f32 0.0, %v2787
  %v2789 = vpop.f32.mrf.mxu0
  %v2790 = vadd.f32 0.0, %v2789
  %2791 = vmatmul.bf16.gmra.mxu0 %v2752
  %v2792 = vpop.f32.mrf.mxu0
  %v2793 = vadd.f32 0.0, %v2792
  %v2794 = vpop.f32.mrf.mxu0
  %v2795 = vadd.f32 0.0, %v2794
  %2796 = vmatmul.bf16.gmra.mxu0 %v2755
  %v2797 = vpop.f32.mrf.mxu0
  %v2798 = vadd.f32 0.0, %v2797
  %v2799 = vpop.f32.mrf.mxu0
  %v2800 = vadd.f32 0.0, %v2799
  %2801 = vmatmul.bf16.gmra.mxu0 %v2758
  %v2802 = vpop.f32.mrf.mxu0
  %v2803 = vadd.f32 0.0, %v2802
  %v2804 = vpop.f32.mrf.mxu0
  %v2805 = vadd.f32 0.0, %v2804
  %2806 = vmatmul.bf16.gmra.mxu0 %v2761
  %v2807 = vpop.f32.mrf.mxu0
  %v2808 = vadd.f32 0.0, %v2807
  %v2809 = vpop.f32.mrf.mxu0
  %v2810 = vadd.f32 0.0, %v2809
  %2811 = vdwg.mxu0
  %v2828 = vunpack.c.l.b16 %v2647
  %v2829 = vunpack.c.l.b16 %v2648
  %v2830 = vunpack.c.l.b16 %v2649
  %v2831 = vunpack.c.l.b16 %v2650
  %v2832 = vunpack.c.l.b16 %v2651
  %v2833 = vunpack.c.l.b16 %v2652
  %v2834 = vunpack.c.l.b16 %v2653
  %v2835 = vunpack.c.l.b16 %v2654
  %v2836 = vunpack.c.l.b16 %v2655
  %v2837 = vunpack.c.l.b16 %v2656
  %v2838 = vunpack.c.l.b16 %v2657
  %v2839 = vunpack.c.l.b16 %v2658
  %v2840 = vunpack.c.l.b16 %v2659
  %v2841 = vunpack.c.l.b16 %v2660
  %v2842 = vunpack.c.l.b16 %v2661
  %v2843 = vunpack.c.l.b16 %v2662
  %v2844 = vpack.c.b16 %v2829, %v2828
  %v2845 = vpack.c.b16 %v2831, %v2830
  %v2846 = vpack.c.b16 %v2833, %v2832
  %v2847 = vpack.c.b16 %v2835, %v2834
  %v2848 = vpack.c.b16 %v2837, %v2836
  %v2849 = vpack.c.b16 %v2839, %v2838
  %v2850 = vpack.c.b16 %v2841, %v2840
  %v2851 = vpack.c.b16 %v2843, %v2842
  %v2856 = vunpack.c.l.b16 %v2663
  %v2857 = vunpack.c.l.b16 %v2664
  %v2858 = vunpack.c.l.b16 %v2665
  %v2859 = vunpack.c.l.b16 %v2666
  %v2860 = vpack.c.b16 %v2857, %v2856
  %v2861 = vpack.c.b16 %v2859, %v2858
  %v2865 = vsel %vm122, %v2844, 0
  %v2868 = vsel %vm122, %v2845, 0
  %v2871 = vsel %vm122, %v2846, 0
  %v2874 = vsel %vm122, %v2847, 0
  %v2877 = vsel %vm122, %v2848, 0
  %v2880 = vsel %vm122, %v2849, 0
  %v2883 = vsel %vm122, %v2850, 0
  %v2886 = vsel %vm122, %v2851, 0
  %2888 = vmatpush.bf16.msra.mxu0 0
  %2889 = vmatpush.bf16.msra.mxu0 0
  %2890 = vmatpush.bf16.msra.mxu0 0
  %2891 = vmatpush.bf16.msra.mxu0 0
  %2892 = vmatpush.bf16.msra.mxu0 0
  %2893 = vmatpush.bf16.msra.mxu0 0
  %2894 = vmatpush.bf16.msra.mxu0 %v2861
  %2895 = vmatpush.bf16.msra.mxu0 %v2860
  %2896 = vmatmul.bf16.gmra.mxu0 %v2865
  %v2897 = vpop.f32.mrf.mxu0
  %v2898 = vadd.f32 %v2773, %v2897
  %v2899 = vpop.f32.mrf.mxu0
  %v2900 = vadd.f32 %v2775, %v2899
  %2901 = vmatmul.bf16.gmra.mxu0 %v2868
  %v2902 = vpop.f32.mrf.mxu0
  %v2903 = vadd.f32 %v2778, %v2902
  %v2904 = vpop.f32.mrf.mxu0
  %v2905 = vadd.f32 %v2780, %v2904
  %2906 = vmatmul.bf16.gmra.mxu0 %v2871
  %v2907 = vpop.f32.mrf.mxu0
  %v2908 = vadd.f32 %v2783, %v2907
  %v2909 = vpop.f32.mrf.mxu0
  %v2910 = vadd.f32 %v2785, %v2909
  %2911 = vmatmul.bf16.gmra.mxu0 %v2874
  %v2912 = vpop.f32.mrf.mxu0
  %v2913 = vadd.f32 %v2788, %v2912
  %v2914 = vpop.f32.mrf.mxu0
  %v2915 = vadd.f32 %v2790, %v2914
  %2916 = vmatmul.bf16.gmra.mxu0 %v2877
  %v2917 = vpop.f32.mrf.mxu0
  %v2918 = vadd.f32 %v2793, %v2917
  %v2919 = vpop.f32.mrf.mxu0
  %v2920 = vadd.f32 %v2795, %v2919
  %2921 = vmatmul.bf16.gmra.mxu0 %v2880
  %v2922 = vpop.f32.mrf.mxu0
  %v2923 = vadd.f32 %v2798, %v2922
  %v2924 = vpop.f32.mrf.mxu0
  %v2925 = vadd.f32 %v2800, %v2924
  %2926 = vmatmul.bf16.gmra.mxu0 %v2883
  %v2927 = vpop.f32.mrf.mxu0
  %v2928 = vadd.f32 %v2803, %v2927
  %v2929 = vpop.f32.mrf.mxu0
  %v2930 = vadd.f32 %v2805, %v2929
  %2931 = vmatmul.bf16.gmra.mxu0 %v2886
  %v2932 = vpop.f32.mrf.mxu0
  %v2933 = vadd.f32 %v2808, %v2932
  %v2934 = vpop.f32.mrf.mxu0
  %v2935 = vadd.f32 %v2810, %v2934
  %2936 = vdwg.mxu0
  %v2937 = vld [vmem:[%s13] sm:$0x1]
  %v2939 = vperm.slane %v2937, 0
  %v2941 = vadd.f32 %v2898, %v2939
  %v2942 = vadd.f32 %v2900, %v2939
  %v2943 = vadd.f32 %v2903, %v2939
  %v2944 = vadd.f32 %v2905, %v2939
  %v2945 = vadd.f32 %v2908, %v2939
  %v2946 = vadd.f32 %v2910, %v2939
  %v2947 = vadd.f32 %v2913, %v2939
  %v2948 = vadd.f32 %v2915, %v2939
  %v2949 = vadd.f32 %v2918, %v2939
  %v2950 = vadd.f32 %v2920, %v2939
  %v2951 = vadd.f32 %v2923, %v2939
  %v2952 = vadd.f32 %v2925, %v2939
  %v2953 = vadd.f32 %v2928, %v2939
  %v2954 = vadd.f32 %v2930, %v2939
  %v2955 = vadd.f32 %v2933, %v2939
  %v2956 = vadd.f32 %v2935, %v2939
  %2957 = vst [vmem:[%s14] sm:$0xff] %v2941
  %2958 = vst [vmem:[%s14 + $0x8] sm:$0xff] %v2942
  %2959 = vst [vmem:[%s14 + $0x10] sm:$0xff] %v2943
  %2960 = vst [vmem:[%s14 + $0x18] sm:$0xff] %v2944
  %2961 = vst [vmem:[%s14 + $0x20] sm:$0xff] %v2945
  %2962 = vst [vmem:[%s14 + $0x28] sm:$0xff] %v2946
  %2963 = vst [vmem:[%s14 + $0x30] sm:$0xff] %v2947
  %2964 = vst [vmem:[%s14 + $0x38] sm:$0xff] %v2948
  %2965 = vst [vmem:[%s14 + $0x40] sm:$0xff] %v2949
  %2966 = vst [vmem:[%s14 + $0x48] sm:$0xff] %v2950
  %2967 = vst [vmem:[%s14 + $0x50] sm:$0xff] %v2951
  %2968 = vst [vmem:[%s14 + $0x58] sm:$0xff] %v2952
  %2969 = vst [vmem:[%s14 + $0x60] sm:$0xff] %v2953
  %2970 = vst [vmem:[%s14 + $0x68] sm:$0xff] %v2954
  %2971 = vst [vmem:[%s14 + $0x70] sm:$0xff] %v2955
  %2972 = vst [vmem:[%s14 + $0x78] sm:$0xff] %v2956
  // Predicated region
  $region58: #{lstm_crf_forward.3} parent=0 // pred_check
    _
  $region59: #{lstm_crf_forward.3} parent=0 // pred_check_branch
    %2974 = sbr.rel (0) target = $region61
  $region60: #{lstm_crf_forward.3} parent=0 // pred_region
    _
  $region61: #{lstm_crf_forward.3} parent=0 // pred_fallthru
    _
  // Predicated region
  $region62: #{lstm_crf_forward.3} parent=0 // pred_check
    _
  $region63: #{lstm_crf_forward.3} parent=0 // pred_check_branch
    %2976 = sbr.rel (0) target = $region65
  $region64: #{lstm_crf_forward.3} parent=0 // pred_region
    _
  $region65: #{lstm_crf_forward.3} parent=0 // pred_fallthru
    _

</llo_original>
